<compile_context>
chip_gen: v5e
topology: v5e:2x2
jax: 0.10.0
libtpu: 0.0.40
codegen_flags: <defaults>
</compile_context>

<pallas_src>
import functools

import jax
import jax.numpy as jnp
import numpy as np
from jax.experimental import pallas as pl
from jax.experimental.pallas import tpu as pltpu

EPS = 1e-3                       # BatchNorm eps from the PyTorch module
_VMEM_LIMIT = 32 * 1024 * 1024   # fits v7x's 64 MiB physical VMEM with headroom
_ROW_CHUNK = 256                 # slab rows per MXU pass (bounds live accumulator)


def _round_up(x, m):
    return (x + m - 1) // m * m


# ----------------------------- Pallas kernels ------------------------------

def _stem_kernel(x_ref, w_ref, b_ref, o_ref):
    # Fused branch0 / branch1.1x1 / branch2.1x1: one (tile_m,320)@(320,128) MXU pass.
    # Input already bf16 (cast in the wrapper, fused with the layout transpose).
    acc = jnp.dot(x_ref[...], w_ref[...], preferred_element_type=jnp.float32)
    o_ref[...] = jnp.maximum(acc + b_ref[...], 0.0).astype(o_ref.dtype)


def _conv3x3_kernel(x_ref, w_ref, b_ref, o_ref, slab_ref, *, H, W, base,
                    out_off, row_chunk):
    # 3x3 conv (stride 1, pad 1) + folded-BN bias + ReLU.
    # Input layout per image ("conv layout"): [E zeros | H*(W+2) right-padded rows
    # | E zeros].  Each tap (dy,dx) is then a plain row-offset window, and the 9
    # taps are packed into the K dimension of ONE matmul via a VMEM im2col slab.
    # The whole padded-width output slab is written with one dense store; the two
    # garbage pad columns per row are zeroed in-kernel (iota mask) so the output
    # can be chained directly into the next 3x3 conv.
    Wp = W + 2
    Ls = H * Wp
    cin = x_ref.shape[-1]
    cout = o_ref.shape[-1]
    out_len = o_ref.shape[1]
    wmat = w_ref[...]                       # (9*cin, cout) bf16
    bias = b_ref[...]                       # (1, cout) f32
    for b in range(x_ref.shape[0]):
        if out_off > 0:                     # chained layout: zero the front pad
            o_ref[b, :out_off, :] = jnp.zeros((out_off, cout), o_ref.dtype)
        tail = out_len - out_off - Ls
        if tail > 0:                        # chained layout: zero the tail pad
            o_ref[b, out_off + Ls:, :] = jnp.zeros((tail, cout), o_ref.dtype)
        c0 = 0
        while c0 < Ls:                      # static row chunks (bounds vreg use)
            rows = min(row_chunk, Ls - c0)
            for t in range(9):
                dy, dx = divmod(t, 3)
                off = base + c0 + dy * Wp + dx
                slab_ref[:rows, t * cin:(t + 1) * cin] = x_ref[b, off:off + rows, :]
            acc = jnp.dot(slab_ref[:rows, :], wmat,
                          preferred_element_type=jnp.float32)
            y = jnp.maximum(acc + bias, 0.0)
            col = (jax.lax.broadcasted_iota(jnp.int32, (rows, cout), 0) + c0) % Wp
            y = jnp.where(col < W, y, 0.0)  # zero the 2 wrap/pad columns
            o_ref[b, out_off + c0:out_off + c0 + rows, :] = y.astype(o_ref.dtype)
            c0 += rows


def _final_kernel(s_ref, x1_ref, x2_ref, r_ref, ws_ref, w1_ref, w2_ref, b_ref,
                  o_ref, *, scale):
    # Final 1x1 conv over cat(x0,x1,x2) without materializing the concat:
    # three accumulated dots, then (+bias) * scale + residual, ReLU (all f32).
    acc = jnp.dot(s_ref[...], ws_ref[...], preferred_element_type=jnp.float32)
    acc = acc + jnp.dot(x1_ref[...], w1_ref[...], preferred_element_type=jnp.float32)
    acc = acc + jnp.dot(x2_ref[...], w2_ref[...], preferred_element_type=jnp.float32)
    out = (acc + b_ref[...]) * scale + r_ref[...].astype(jnp.float32)
    o_ref[...] = jnp.maximum(out, 0.0)


# ----------------------------- kernel wrappers ------------------------------

def _pick_tile_m(m):
    # Largest power-of-two row tile that still gives >= 4 grid steps, so both v7x
    # TensorCores get >= 2 pipeline steps each; whole-M fallback for tiny inputs.
    for t in (1024, 512, 256, 128, 64, 32, 16, 8):
        if m >= 4 * t:
            return t
    return max(8, _round_up(m, 8))


def _imgs_per_step(n, h, w):
    # Batch several small images per conv grid step (divisor of n) to amortize the
    # ~0.35us per-step overhead, but keep >= 4 steps (>=2 per v7x core) if possible.
    target = max(1, 2048 // max(1, h * (w + 2)))
    divisors = [d for d in range(1, n + 1) if n % d == 0 and d <= target]
    for min_steps in (4, 2, 1):
        cand = [d for d in divisors if n // d >= min_steps]
        if cand:
            return max(cand)
    return 1


def _pad_rows(a, tile_m):
    pad = (-a.shape[0]) % tile_m
    if pad:
        a = jnp.pad(a, ((0, pad), (0, 0)))
    return a


def _compiler_params(n_axes):
    return pltpu.CompilerParams(dimension_semantics=("parallel",) * n_axes,
                                vmem_limit_bytes=_VMEM_LIMIT)


def stem_conv(x_bf16, w, b, tile_m):
    """relu(x @ w + b); x (M,320) bf16, w (320,128) bf16 (BN folded) -> (M,128) bf16."""
    m = x_bf16.shape[0]
    a = _pad_rows(x_bf16, tile_m)
    mp, k = a.shape
    cout = w.shape[1]
    out = pl.pallas_call(
        _stem_kernel,
        out_shape=jax.ShapeDtypeStruct((mp, cout), jnp.bfloat16),
        grid=(mp // tile_m,),
        in_specs=[
            pl.BlockSpec((tile_m, k), lambda i: (i, 0)),
            pl.BlockSpec((k, cout), lambda i: (0, 0)),
            pl.BlockSpec((1, cout), lambda i: (0, 0)),
        ],
        out_specs=pl.BlockSpec((tile_m, cout), lambda i: (i, 0)),
        compiler_params=_compiler_params(1),
    )(a, w, b)
    return out[:m]


def _to_conv_layout(x_flat, n, h, w):
    """(N*H*W, C) -> (N, E + H*(W+2) + E, C) conv layout (zero ring via flat pads)."""
    c = x_flat.shape[-1]
    wp = w + 2
    ext = _round_up(wp + 1, 8)
    xs = x_flat.reshape(n, h, w, c)
    xs = jnp.pad(xs, ((0, 0), (0, 0), (0, 2), (0, 0)))   # right-pad each row by 2
    xs = xs.reshape(n, h * wp, c)
    return jnp.pad(xs, ((0, 0), (ext, ext), (0, 0)))     # top/left + bottom zeros


def _from_conv_layout(y, n, h, w):
    """(N, H*(W+2), C) padded-width slab -> (N*H*W, C) unpadded rows."""
    wp = w + 2
    c = y.shape[-1]
    return y.reshape(n, h, wp, c)[:, :, :w, :].reshape(n * h * w, c)


def conv3x3_bn_relu(x_conv, w9, b, cout, *, n, h, w, chain_out):
    """3x3 conv (pad=1) + BN + ReLU on conv-layout input (N, Lin, Cin) bf16.

    chain_out=False -> (N, H*(W+2), cout) padded-width slab (zeroed pad columns).
    chain_out=True  -> (N, Lin, cout) full conv layout, directly consumable by the
                       next conv3x3_bn_relu call (no wrapper pad / HBM pass).
    """
    wp = w + 2
    ls = h * wp
    ext = _round_up(wp + 1, 8)
    lin = ext + ls + ext
    cin = x_conv.shape[-1]
    assert x_conv.shape == (n, lin, cin)
    nimg = _imgs_per_step(n, h, w)
    out_len = lin if chain_out else ls
    out_off = ext if chain_out else 0
    chunk = min(_ROW_CHUNK, _round_up(ls, 8))
    kern = functools.partial(_conv3x3_kernel, H=h, W=w, base=ext - (wp + 1),
                             out_off=out_off, row_chunk=chunk)
    return pl.pallas_call(
        kern,
        out_shape=jax.ShapeDtypeStruct((n, out_len, cout), jnp.bfloat16),
        grid=(n // nimg,),
        in_specs=[
            pl.BlockSpec((nimg, lin, cin), lambda i: (i, 0, 0)),
            pl.BlockSpec((9 * cin, cout), lambda i: (0, 0)),
            pl.BlockSpec((1, cout), lambda i: (0, 0)),
        ],
        out_specs=pl.BlockSpec((nimg, out_len, cout), lambda i: (i, 0, 0)),
        scratch_shapes=[pltpu.VMEM((chunk, 9 * cin), jnp.bfloat16)],
        compiler_params=_compiler_params(1),
    )(x_conv, w9, b)


def final_residual(stem, x1, x2, res_bf16, ws, w1, w2, bias, scale, tile_m):
    m, c = res_bf16.shape[0], ws.shape[1]
    sp = _pad_rows(stem, tile_m)
    x1p = _pad_rows(x1, tile_m)
    x2p = _pad_rows(x2, tile_m)
    rp = _pad_rows(res_bf16, tile_m)
    mp = rp.shape[0]
    out = pl.pallas_call(
        functools.partial(_final_kernel, scale=scale),
        out_shape=jax.ShapeDtypeStruct((mp, c), jnp.float32),
        grid=(mp // tile_m,),
        in_specs=[
            pl.BlockSpec((tile_m, stem.shape[1]), lambda i: (i, 0)),
            pl.BlockSpec((tile_m, x1.shape[1]), lambda i: (i, 0)),
            pl.BlockSpec((tile_m, x2.shape[1]), lambda i: (i, 0)),
            pl.BlockSpec((tile_m, rp.shape[1]), lambda i: (i, 0)),
            pl.BlockSpec(ws.shape, lambda i: (0, 0)),
            pl.BlockSpec(w1.shape, lambda i: (0, 0)),
            pl.BlockSpec(w2.shape, lambda i: (0, 0)),
            pl.BlockSpec((1, c), lambda i: (0, 0)),
        ],
        out_specs=pl.BlockSpec((tile_m, c), lambda i: (i, 0)),
        compiler_params=_compiler_params(1),
    )(sp, x1p, x2p, rp, ws, w1, w2, bias)
    return out[:m]


# --------------------------- parameter preparation ---------------------------

def fold_bn(gamma, beta, mean, var):
    s = gamma / jnp.sqrt(var + EPS)
    return s, beta - mean * s


def _stem_params(params, pad_to=128):
    ws, bs = [], []
    for key in ("b0", "b1_0", "b2_0"):
        p = params[key]
        s, b = fold_bn(**p["bn"])
        w = p["w"].reshape(p["w"].shape[0], p["w"].shape[1]).T * s[None, :]  # (320,32)
        ws.append(w)
        bs.append(b)
    w = jnp.concatenate(ws, axis=1)            # (320, 96)
    b = jnp.concatenate(bs)                    # (96,)
    pad = pad_to - w.shape[1]
    w = jnp.pad(w, ((0, 0), (0, pad)))         # lane-dense 128-wide output
    b = jnp.pad(b, (0, pad))
    return w.astype(jnp.bfloat16), b.reshape(1, pad_to).astype(jnp.float32)


def _w3x3_folded(p):
    # (Cout, Cin, 3, 3) -> K-packed (9*Cin, Cout) matching the in-kernel im2col slab.
    s, b = fold_bn(**p["bn"])
    cout, cin = p["w"].shape[0], p["w"].shape[1]
    w = p["w"] * s[:, None, None, None]
    w = jnp.transpose(w, (2, 3, 1, 0)).reshape(9 * cin, cout)
    return w.astype(jnp.bfloat16), b.reshape(1, -1).astype(jnp.float32)


def _final_params(params, stem_width=128):
    # TODO(synk): per review, x1/x2 could be merged into one lane-dense (M,128)
    # buffer so the final kernel needs only 2 dots; kept separate for simplicity.
    w2d = params["conv2d_w"].reshape(320, 128).T              # (Cin=128, Cout=320)
    ws = jnp.zeros((stem_width, 320), jnp.float32).at[:32].set(w2d[:32])  # x0 rows
    w1 = w2d[32:64]
    w2 = w2d[64:128]
    bias = params["conv2d_b"].reshape(1, 320).astype(jnp.float32)
    return (ws.astype(jnp.bfloat16), w1.astype(jnp.bfloat16),
            w2.astype(jnp.bfloat16), bias)


# ------------------------------ Block35 forward ------------------------------

def block35_forward(x_nchw, params, scale=0.17):
    n, c, h, w = x_nchw.shape
    x_nhwc = jnp.transpose(x_nchw, (0, 2, 3, 1))
    xf = x_nhwc.reshape(n * h * w, c)
    xbf = xf.astype(jnp.bfloat16)          # bf16 stem input; reused as the residual
    tile_m = _pick_tile_m(n * h * w)

    # fused stem: [branch0 | branch1.1x1 | branch2.1x1 | zeros] -> (M, 128) bf16
    w_stem, b_stem = _stem_params(params)
    stem = stem_conv(xbf, w_stem, b_stem, tile_m)

    # branch1: 3x3 on stem channels 32:64
    w9, b9 = _w3x3_folded(params["b1_1"])
    x1_pad = conv3x3_bn_relu(_to_conv_layout(stem[:, 32:64], n, h, w),
                             w9, b9, 32, n=n, h=h, w=w, chain_out=False)
    x1 = _from_conv_layout(x1_pad, n, h, w)

    # branch2: first 3x3 emits conv-layout output consumed directly by the second
    w9a, b9a = _w3x3_folded(params["b2_1"])
    x2_mid = conv3x3_bn_relu(_to_conv_layout(stem[:, 64:96], n, h, w),
                             w9a, b9a, 48, n=n, h=h, w=w, chain_out=True)
    w9b, b9b = _w3x3_folded(params["b2_2"])
    x2_pad = conv3x3_bn_relu(x2_mid, w9b, b9b, 64, n=n, h=h, w=w, chain_out=False)
    x2 = _from_conv_layout(x2_pad, n, h, w)

    # final 1x1 conv (+bias) * scale + residual, ReLU -- concat-free
    ws, w1, w2, bias = _final_params(params)
    out = final_residual(stem, x1, x2, xbf, ws, w1, w2, bias, scale, tile_m)
    return jnp.transpose(out.reshape(n, h, w, c), (0, 3, 1, 2))


# ------------------------- deterministic parameters -------------------------

def make_params(key):
    keys = iter(jax.random.split(key, 64))

    def conv_w(cout, cin, kh, kw):
        return 0.05 * jax.random.normal(next(keys), (cout, cin, kh, kw), jnp.float32)

    def bn(cch):
        return dict(
            gamma=1.0 + 0.1 * jax.random.normal(next(keys), (cch,), jnp.float32),
            beta=0.1 * jax.random.normal(next(keys), (cch,), jnp.float32),
            mean=0.1 * jax.random.normal(next(keys), (cch,), jnp.float32),
            var=0.5 + 0.5 * jnp.abs(jax.random.normal(next(keys), (cch,), jnp.float32)),
        )

    return {
        "b0":   dict(w=conv_w(32, 320, 1, 1), bn=bn(32)),
        "b1_0": dict(w=conv_w(32, 320, 1, 1), bn=bn(32)),
        "b1_1": dict(w=conv_w(32, 32, 3, 3), bn=bn(32)),
        "b2_0": dict(w=conv_w(32, 320, 1, 1), bn=bn(32)),
        "b2_1": dict(w=conv_w(48, 32, 3, 3), bn=bn(48)),
        "b2_2": dict(w=conv_w(64, 48, 3, 3), bn=bn(64)),
        "conv2d_w": conv_w(320, 128, 1, 1),
        "conv2d_b": 0.05 * jax.random.normal(next(keys), (320,), jnp.float32),
    }


# ------------------------------ pure JAX check ------------------------------

def ref_block35(x_nchw, params, scale):
    def conv(x, w, padding):
        w_hwio = jnp.transpose(w, (2, 3, 1, 0))
        return jax.lax.conv_general_dilated(
            x, w_hwio, (1, 1), padding,
            dimension_numbers=("NHWC", "HWIO", "NHWC"))

    def bcr(x, p, padding):
        y = conv(x, p["w"], padding)
        bn = p["bn"]
        y = (y - bn["mean"]) / jnp.sqrt(bn["var"] + EPS) * bn["gamma"] + bn["beta"]
        return jnp.maximum(y, 0.0)

    x = jnp.transpose(x_nchw, (0, 2, 3, 1))
    x0 = bcr(x, params["b0"], "VALID")
    x1 = bcr(bcr(x, params["b1_0"], "VALID"), params["b1_1"], "SAME")
    x2 = bcr(bcr(bcr(x, params["b2_0"], "VALID"), params["b2_1"], "SAME"),
             params["b2_2"], "SAME")
    cat = jnp.concatenate([x0, x1, x2], axis=-1)
    out = conv(cat, params["conv2d_w"], "VALID") + params["conv2d_b"]
    out = jnp.maximum(out * scale + x, 0.0)
    return jnp.transpose(out, (0, 3, 1, 2))


if __name__ == "__main__":
    key = jax.random.PRNGKey(0)
    kx, kp = jax.random.split(key)
    # Channels are fixed by the module (320); spatial/batch kept small.
    x = jax.random.normal(kx, (2, 320, 8, 8), jnp.float32)
    params = make_params(kp)

    fwd = jax.jit(functools.partial(block35_forward, scale=0.17))
    out = jax.block_until_ready(fwd(x, params))
    assert out.shape == x.shape

    ref = ref_block35(x, params, 0.17)
    np.testing.assert_allclose(np.asarray(out), np.asarray(ref), atol=1e-2, rtol=1e-2)
    print("KERNEL_OK")
</pallas_src>

<mosaic_0001>
module attributes {stable_mosaic.version = 11 : i64} {
  func.func @_stem_kernel(%arg0: i32, %arg1: memref<32x320xbf16, #tpu.memory_space<vmem>>, %arg2: memref<320x128xbf16, #tpu.memory_space<vmem>>, %arg3: memref<1x128xf32, #tpu.memory_space<vmem>>, %arg4: memref<32x128xbf16, #tpu.memory_space<vmem>>) attributes {dimension_semantics = [#tpu.dimension_semantics<parallel>], iteration_bounds = array<i64: 4>, scalar_prefetch = 0 : i64, scratch_operands = 0 : i64, tpu.core_type = #tpu.core_type<tc>, window_params = [{transform_indices = @transform_0, window_bounds = array<i64: 32, 320>}, {pipeline_mode = #tpu.pipeline_mode<synchronous>, transform_indices = @transform_1, window_bounds = array<i64: 320, 128>}, {pipeline_mode = #tpu.pipeline_mode<synchronous>, transform_indices = @transform_2, window_bounds = array<i64: 1, 128>}, {transform_indices = @transform_3, window_bounds = array<i64: 32, 128>}]} {
    %c0 = arith.constant 0 : index
    %c0_0 = arith.constant 0 : index
    %0 = vector.load %arg1[%c0, %c0_0] : memref<32x320xbf16, #tpu.memory_space<vmem>>, vector<32x320xbf16>
    %c0_1 = arith.constant 0 : index
    %c0_2 = arith.constant 0 : index
    %1 = vector.load %arg2[%c0_1, %c0_2] : memref<320x128xbf16, #tpu.memory_space<vmem>>, vector<320x128xbf16>
    %cst = arith.constant dense<0.000000e+00> : vector<32x128xf32>
    %2 = tpu.matmul %0, %1, %cst {dimension_numbers = #tpu.dot_dimension_numbers<[1], [0], [0], [1], [0, 0, 1, 1], [], []>} : vector<32x320xbf16>, vector<320x128xbf16>, vector<32x128xf32> -> vector<32x128xf32>
    %c0_3 = arith.constant 0 : index
    %c0_4 = arith.constant 0 : index
    %3 = vector.load %arg3[%c0_3, %c0_4] : memref<1x128xf32, #tpu.memory_space<vmem>>, vector<1x128xf32>
    %4 = vector.broadcast %3 : vector<1x128xf32> to vector<32x128xf32>
    %5 = arith.addf %2, %4 : vector<32x128xf32>
    %cst_5 = arith.constant 0.000000e+00 : f32
    %6 = vector.broadcast %cst_5 : f32 to vector<32x128xf32>
    %7 = arith.maximumf %5, %6 : vector<32x128xf32>
    %8 = arith.truncf %7 : vector<32x128xf32> to vector<32x128xbf16>
    %c0_6 = arith.constant 0 : index
    %c0_7 = arith.constant 0 : index
    %9 = vector.load %arg4[%c0_6, %c0_7] : memref<32x128xbf16, #tpu.memory_space<vmem>>, vector<32x128xbf16>
    tpu.vector_store %arg4[%c0_6, %c0_7], %8 {strides = array<i32>} : memref<32x128xbf16, #tpu.memory_space<vmem>>, vector<32x128xbf16>,
    return
  }
  func.func @transform_0(%arg0: i32) -> (i32, i32) {
    %c0_i32 = arith.constant 0 : i32
    %c0_i32_0 = arith.constant 0 : i32
    return %arg0, %c0_i32 : i32, i32
  }
  func.func @transform_1(%arg0: i32) -> (i32, i32) {
    %c0_i32 = arith.constant 0 : i32
    %c0_i32_0 = arith.constant 0 : i32
    %c0_i32_1 = arith.constant 0 : i32
    return %c0_i32, %c0_i32_0 : i32, i32
  }
  func.func @transform_2(%arg0: i32) -> (i32, i32) {
    %c0_i32 = arith.constant 0 : i32
    %c0_i32_0 = arith.constant 0 : i32
    %c0_i32_1 = arith.constant 0 : i32
    return %c0_i32, %c0_i32_0 : i32, i32
  }
  func.func @transform_3(%arg0: i32) -> (i32, i32) {
    %c0_i32 = arith.constant 0 : i32
    %c0_i32_0 = arith.constant 0 : i32
    return %arg0, %c0_i32 : i32, i32
  }
}

module attributes {stable_mosaic.version = 11 : i64} {
  func.func @_conv3x3_kernel(%arg0: i32, %arg1: memref<1x112x32xbf16, #tpu.memory_space<vmem>>, %arg2: memref<288x48xbf16, #tpu.memory_space<vmem>>, %arg3: memref<1x48xf32, #tpu.memory_space<vmem>>, %arg4: memref<1x112x48xbf16, #tpu.memory_space<vmem>>, %arg5: memref<80x288xbf16, #tpu.memory_space<vmem>>) attributes {dimension_semantics = [#tpu.dimension_semantics<parallel>], iteration_bounds = array<i64: 2>, scalar_prefetch = 0 : i64, scratch_operands = 1 : i64, tpu.core_type = #tpu.core_type<tc>, window_params = [{transform_indices = @transform_0, window_bounds = array<i64: 1, 112, 32>}, {pipeline_mode = #tpu.pipeline_mode<synchronous>, transform_indices = @transform_1, window_bounds = array<i64: 288, 48>}, {pipeline_mode = #tpu.pipeline_mode<synchronous>, transform_indices = @transform_2, window_bounds = array<i64: 1, 48>}, {transform_indices = @transform_3, window_bounds = array<i64: 1, 112, 48>}]} {
    %c0 = arith.constant 0 : index
    %c0_0 = arith.constant 0 : index
    %0 = vector.load %arg2[%c0, %c0_0] : memref<288x48xbf16, #tpu.memory_space<vmem>>, vector<288x48xbf16>
    %c0_1 = arith.constant 0 : index
    %c0_2 = arith.constant 0 : index
    %1 = vector.load %arg3[%c0_1, %c0_2] : memref<1x48xf32, #tpu.memory_space<vmem>>, vector<1x48xf32>
    %cst = arith.constant 0.000000e+00 : bf16
    %2 = vector.broadcast %cst : bf16 to vector<16x48xbf16>
    %c0_3 = arith.constant 0 : index
    %c0_4 = arith.constant 0 : index
    %c0_5 = arith.constant 0 : index
    %3 = vector.load %arg4[%c0_3, %c0_4, %c0_5] : memref<1x112x48xbf16, #tpu.memory_space<vmem>>, vector<1x16x48xbf16>
    %4 = vector.shape_cast %3 : vector<1x16x48xbf16> to vector<16x48xbf16>
    %5 = vector.shape_cast %2 : vector<16x48xbf16> to vector<1x16x48xbf16>
    tpu.vector_store %arg4[%c0_3, %c0_4, %c0_5], %5 {strides = array<i32>} : memref<1x112x48xbf16, #tpu.memory_space<vmem>>, vector<1x16x48xbf16>,
    %cst_6 = arith.constant 0.000000e+00 : bf16
    %6 = vector.broadcast %cst_6 : bf16 to vector<16x48xbf16>
    %c0_7 = arith.constant 0 : index
    %c96 = arith.constant 96 : index
    %c0_8 = arith.constant 0 : index
    %7 = vector.load %arg4[%c0_7, %c96, %c0_8] : memref<1x112x48xbf16, #tpu.memory_space<vmem>>, vector<1x16x48xbf16>
    %8 = vector.shape_cast %7 : vector<1x16x48xbf16> to vector<16x48xbf16>
    %9 = vector.shape_cast %6 : vector<16x48xbf16> to vector<1x16x48xbf16>
    tpu.vector_store %arg4[%c0_7, %c96, %c0_8], %9 {strides = array<i32>} : memref<1x112x48xbf16, #tpu.memory_space<vmem>>, vector<1x16x48xbf16>,
    %c0_9 = arith.constant 0 : index
    %c5 = arith.constant 5 : index
    %c0_10 = arith.constant 0 : index
    %10 = vector.load %arg1[%c0_9, %c5, %c0_10] : memref<1x112x32xbf16, #tpu.memory_space<vmem>>, vector<1x80x32xbf16>
    %11 = vector.shape_cast %10 : vector<1x80x32xbf16> to vector<80x32xbf16>
    %c0_11 = arith.constant 0 : index
    %c0_12 = arith.constant 0 : index
    %12 = vector.load %arg5[%c0_11, %c0_12] : memref<80x288xbf16, #tpu.memory_space<vmem>>, vector<80x32xbf16>
    tpu.vector_store %arg5[%c0_11, %c0_12], %11 {strides = array<i32>} : memref<80x288xbf16, #tpu.memory_space<vmem>>, vector<80x32xbf16>,
    %c0_13 = arith.constant 0 : index
    %c6 = arith.constant 6 : index
    %c0_14 = arith.constant 0 : index
    %13 = vector.load %arg1[%c0_13, %c6, %c0_14] : memref<1x112x32xbf16, #tpu.memory_space<vmem>>, vector<1x80x32xbf16>
    %14 = vector.shape_cast %13 : vector<1x80x32xbf16> to vector<80x32xbf16>
    %c0_15 = arith.constant 0 : index
    %c32 = arith.constant 32 : index
    %15 = vector.load %arg5[%c0_15, %c32] : memref<80x288xbf16, #tpu.memory_space<vmem>>, vector<80x32xbf16>
    tpu.vector_store %arg5[%c0_15, %c32], %14 {strides = array<i32>} : memref<80x288xbf16, #tpu.memory_space<vmem>>, vector<80x32xbf16>,
    %c0_16 = arith.constant 0 : index
    %c7 = arith.constant 7 : index
    %c0_17 = arith.constant 0 : index
    %16 = vector.load %arg1[%c0_16, %c7, %c0_17] : memref<1x112x32xbf16, #tpu.memory_space<vmem>>, vector<1x80x32xbf16>
    %17 = vector.shape_cast %16 : vector<1x80x32xbf16> to vector<80x32xbf16>
    %c0_18 = arith.constant 0 : index
    %c64 = arith.constant 64 : index
    %18 = vector.load %arg5[%c0_18, %c64] : memref<80x288xbf16, #tpu.memory_space<vmem>>, vector<80x32xbf16>
    tpu.vector_store %arg5[%c0_18, %c64], %17 {strides = array<i32>} : memref<80x288xbf16, #tpu.memory_space<vmem>>, vector<80x32xbf16>,
    %c0_19 = arith.constant 0 : index
    %c15 = arith.constant 15 : index
    %c0_20 = arith.constant 0 : index
    %19 = vector.load %arg1[%c0_19, %c15, %c0_20] : memref<1x112x32xbf16, #tpu.memory_space<vmem>>, vector<1x80x32xbf16>
    %20 = vector.shape_cast %19 : vector<1x80x32xbf16> to vector<80x32xbf16>
    %c0_21 = arith.constant 0 : index
    %c96_22 = arith.constant 96 : index
    %21 = vector.load %arg5[%c0_21, %c96_22] : memref<80x288xbf16, #tpu.memory_space<vmem>>, vector<80x32xbf16>
    tpu.vector_store %arg5[%c0_21, %c96_22], %20 {strides = array<i32>} : memref<80x288xbf16, #tpu.memory_space<vmem>>, vector<80x32xbf16>,
    %c0_23 = arith.constant 0 : index
    %c16 = arith.constant 16 : index
    %c0_24 = arith.constant 0 : index
    %22 = vector.load %arg1[%c0_23, %c16, %c0_24] : memref<1x112x32xbf16, #tpu.memory_space<vmem>>, vector<1x80x32xbf16>
    %23 = vector.shape_cast %22 : vector<1x80x32xbf16> to vector<80x32xbf16>
    %c0_25 = arith.constant 0 : index
    %c128 = arith.constant 128 : index
    %24 = vector.load %arg5[%c0_25, %c128] : memref<80x288xbf16, #tpu.memory_space<vmem>>, vector<80x32xbf16>
    tpu.vector_store %arg5[%c0_25, %c128], %23 {strides = array<i32>} : memref<80x288xbf16, #tpu.memory_space<vmem>>, vector<80x32xbf16>,
    %c0_26 = arith.constant 0 : index
    %c17 = arith.constant 17 : index
    %c0_27 = arith.constant 0 : index
    %25 = vector.load %arg1[%c0_26, %c17, %c0_27] : memref<1x112x32xbf16, #tpu.memory_space<vmem>>, vector<1x80x32xbf16>
    %26 = vector.shape_cast %25 : vector<1x80x32xbf16> to vector<80x32xbf16>
    %c0_28 = arith.constant 0 : index
    %c160 = arith.constant 160 : index
    %27 = vector.load %arg5[%c0_28, %c160] : memref<80x288xbf16, #tpu.memory_space<vmem>>, vector<80x32xbf16>
    tpu.vector_store %arg5[%c0_28, %c160], %26 {strides = array<i32>} : memref<80x288xbf16, #tpu.memory_space<vmem>>, vector<80x32xbf16>,
    %c0_29 = arith.constant 0 : index
    %c25 = arith.constant 25 : index
    %c0_30 = arith.constant 0 : index
    %28 = vector.load %arg1[%c0_29, %c25, %c0_30] : memref<1x112x32xbf16, #tpu.memory_space<vmem>>, vector<1x80x32xbf16>
    %29 = vector.shape_cast %28 : vector<1x80x32xbf16> to vector<80x32xbf16>
    %c0_31 = arith.constant 0 : index
    %c192 = arith.constant 192 : index
    %30 = vector.load %arg5[%c0_31, %c192] : memref<80x288xbf16, #tpu.memory_space<vmem>>, vector<80x32xbf16>
    tpu.vector_store %arg5[%c0_31, %c192], %29 {strides = array<i32>} : memref<80x288xbf16, #tpu.memory_space<vmem>>, vector<80x32xbf16>,
    %c0_32 = arith.constant 0 : index
    %c26 = arith.constant 26 : index
    %c0_33 = arith.constant 0 : index
    %31 = vector.load %arg1[%c0_32, %c26, %c0_33] : memref<1x112x32xbf16, #tpu.memory_space<vmem>>, vector<1x80x32xbf16>
    %32 = vector.shape_cast %31 : vector<1x80x32xbf16> to vector<80x32xbf16>
    %c0_34 = arith.constant 0 : index
    %c224 = arith.constant 224 : index
    %33 = vector.load %arg5[%c0_34, %c224] : memref<80x288xbf16, #tpu.memory_space<vmem>>, vector<80x32xbf16>
    tpu.vector_store %arg5[%c0_34, %c224], %32 {strides = array<i32>} : memref<80x288xbf16, #tpu.memory_space<vmem>>, vector<80x32xbf16>,
    %c0_35 = arith.constant 0 : index
    %c27 = arith.constant 27 : index
    %c0_36 = arith.constant 0 : index
    %34 = vector.load %arg1[%c0_35, %c27, %c0_36] : memref<1x112x32xbf16, #tpu.memory_space<vmem>>, vector<1x80x32xbf16>
    %35 = vector.shape_cast %34 : vector<1x80x32xbf16> to vector<80x32xbf16>
    %c0_37 = arith.constant 0 : index
    %c256 = arith.constant 256 : index
    %36 = vector.load %arg5[%c0_37, %c256] : memref<80x288xbf16, #tpu.memory_space<vmem>>, vector<80x32xbf16>
    tpu.vector_store %arg5[%c0_37, %c256], %35 {strides = array<i32>} : memref<80x288xbf16, #tpu.memory_space<vmem>>, vector<80x32xbf16>,
    %c0_38 = arith.constant 0 : index
    %c0_39 = arith.constant 0 : index
    %37 = vector.load %arg5[%c0_38, %c0_39] : memref<80x288xbf16, #tpu.memory_space<vmem>>, vector<80x288xbf16>
    %cst_40 = arith.constant dense<0.000000e+00> : vector<80x48xf32>
    %38 = tpu.matmul %37, %0, %cst_40 {dimension_numbers = #tpu.dot_dimension_numbers<[1], [0], [0], [1], [0, 0, 1, 1], [], []>} : vector<80x288xbf16>, vector<288x48xbf16>, vector<80x48xf32> -> vector<80x48xf32>
    %39 = vector.broadcast %1 : vector<1x48xf32> to vector<80x48xf32>
    %40 = arith.addf %38, %39 : vector<80x48xf32>
    %cst_41 = arith.constant 0.000000e+00 : f32
    %41 = vector.broadcast %cst_41 : f32 to vector<80x48xf32>
    %42 = arith.maximumf %40, %41 : vector<80x48xf32>
    %43 = tpu.iota {dimensions = array<i32: 0>} : vector<80x48xi32>
    %c0_i32 = arith.constant 0 : i32
    %44 = vector.broadcast %c0_i32 : i32 to vector<80x48xi32>
    %45 = arith.addi %43, %44 : vector<80x48xi32>
    %c10_i32 = arith.constant 10 : i32
    %c0_i32_42 = arith.constant 0 : i32
    %46 = arith.cmpi eq, %c10_i32, %c0_i32_42 : i32
    %c1_i32 = arith.constant 1 : i32
    %47 = arith.select %46, %c1_i32, %c10_i32 : i32
    %48 = vector.broadcast %47 : i32 to vector<80x48xi32>
    %49 = arith.remsi %45, %48 : vector<80x48xi32>
    %c0_i32_43 = arith.constant 0 : i32
    %50 = vector.broadcast %c0_i32_43 : i32 to vector<80x48xi32>
    %51 = arith.cmpi ne, %49, %50 : vector<80x48xi32>
    %c0_i32_44 = arith.constant 0 : i32
    %52 = vector.broadcast %c0_i32_44 : i32 to vector<80x48xi32>
    %53 = arith.cmpi slt, %49, %52 : vector<80x48xi32>
    %c0_i32_45 = arith.constant 0 : i32
    %54 = arith.cmpi slt, %47, %c0_i32_45 : i32
    %55 = vector.broadcast %54 : i1 to vector<80x48xi1>
    %56 = vector.broadcast %55 : vector<80x48xi1> to vector<80x48xi1>
    %57 = arith.xori %53, %56 : vector<80x48xi1>
    %58 = arith.andi %57, %51 : vector<80x48xi1>
    %59 = vector.broadcast %47 : i32 to vector<80x48xi32>
    %60 = arith.addi %49, %59 : vector<80x48xi32>
    %61 = arith.select %58, %60, %49 : vector<80x48xi1>, vector<80x48xi32>
    %c8_i32 = arith.constant 8 : i32
    %62 = vector.broadcast %c8_i32 : i32 to vector<80x48xi32>
    %63 = arith.cmpi slt, %61, %62 : vector<80x48xi32>
    %cst_46 = arith.constant 0.000000e+00 : f32
    %64 = vector.broadcast %cst_46 : f32 to vector<80x48xf32>
    %65 = arith.select %63, %42, %64 : vector<80x48xi1>, vector<80x48xf32>
    %66 = arith.truncf %65 : vector<80x48xf32> to vector<80x48xbf16>
    %c0_47 = arith.constant 0 : index
    %c16_48 = arith.constant 16 : index
    %c0_49 = arith.constant 0 : index
    %67 = vector.load %arg4[%c0_47, %c16_48, %c0_49] : memref<1x112x48xbf16, #tpu.memory_space<vmem>>, vector<1x80x48xbf16>
    %68 = vector.shape_cast %67 : vector<1x80x48xbf16> to vector<80x48xbf16>
    %69 = vector.shape_cast %66 : vector<80x48xbf16> to vector<1x80x48xbf16>
    tpu.vector_store %arg4[%c0_47, %c16_48, %c0_49], %69 {strides = array<i32>} : memref<1x112x48xbf16, #tpu.memory_space<vmem>>, vector<1x80x48xbf16>,
    return
  }
  func.func @transform_0(%arg0: i32) -> (i32, i32, i32) {
    %c0_i32 = arith.constant 0 : i32
    %c0_i32_0 = arith.constant 0 : i32
    %c0_i32_1 = arith.constant 0 : i32
    return %arg0, %c0_i32, %c0_i32_0 : i32, i32, i32
  }
  func.func @transform_1(%arg0: i32) -> (i32, i32) {
    %c0_i32 = arith.constant 0 : i32
    %c0_i32_0 = arith.constant 0 : i32
    %c0_i32_1 = arith.constant 0 : i32
    return %c0_i32, %c0_i32_0 : i32, i32
  }
  func.func @transform_2(%arg0: i32) -> (i32, i32) {
    %c0_i32 = arith.constant 0 : i32
    %c0_i32_0 = arith.constant 0 : i32
    %c0_i32_1 = arith.constant 0 : i32
    return %c0_i32, %c0_i32_0 : i32, i32
  }
  func.func @transform_3(%arg0: i32) -> (i32, i32, i32) {
    %c0_i32 = arith.constant 0 : i32
    %c0_i32_0 = arith.constant 0 : i32
    %c0_i32_1 = arith.constant 0 : i32
    return %arg0, %c0_i32, %c0_i32_0 : i32, i32, i32
  }
}

module attributes {stable_mosaic.version = 11 : i64} {
  func.func @_conv3x3_kernel(%arg0: i32, %arg1: memref<1x112x48xbf16, #tpu.memory_space<vmem>>, %arg2: memref<432x64xbf16, #tpu.memory_space<vmem>>, %arg3: memref<1x64xf32, #tpu.memory_space<vmem>>, %arg4: memref<1x80x64xbf16, #tpu.memory_space<vmem>>, %arg5: memref<80x432xbf16, #tpu.memory_space<vmem>>) attributes {dimension_semantics = [#tpu.dimension_semantics<parallel>], iteration_bounds = array<i64: 2>, scalar_prefetch = 0 : i64, scratch_operands = 1 : i64, tpu.core_type = #tpu.core_type<tc>, window_params = [{transform_indices = @transform_0, window_bounds = array<i64: 1, 112, 48>}, {pipeline_mode = #tpu.pipeline_mode<synchronous>, transform_indices = @transform_1, window_bounds = array<i64: 432, 64>}, {pipeline_mode = #tpu.pipeline_mode<synchronous>, transform_indices = @transform_2, window_bounds = array<i64: 1, 64>}, {transform_indices = @transform_3, window_bounds = array<i64: 1, 80, 64>}]} {
    %c0 = arith.constant 0 : index
    %c0_0 = arith.constant 0 : index
    %0 = vector.load %arg2[%c0, %c0_0] : memref<432x64xbf16, #tpu.memory_space<vmem>>, vector<432x64xbf16>
    %c0_1 = arith.constant 0 : index
    %c0_2 = arith.constant 0 : index
    %1 = vector.load %arg3[%c0_1, %c0_2] : memref<1x64xf32, #tpu.memory_space<vmem>>, vector<1x64xf32>
    %c0_3 = arith.constant 0 : index
    %c5 = arith.constant 5 : index
    %c0_4 = arith.constant 0 : index
    %2 = vector.load %arg1[%c0_3, %c5, %c0_4] : memref<1x112x48xbf16, #tpu.memory_space<vmem>>, vector<1x80x48xbf16>
    %3 = vector.shape_cast %2 : vector<1x80x48xbf16> to vector<80x48xbf16>
    %c0_5 = arith.constant 0 : index
    %c0_6 = arith.constant 0 : index
    %4 = vector.load %arg5[%c0_5, %c0_6] : memref<80x432xbf16, #tpu.memory_space<vmem>>, vector<80x48xbf16>
    tpu.vector_store %arg5[%c0_5, %c0_6], %3 {strides = array<i32>} : memref<80x432xbf16, #tpu.memory_space<vmem>>, vector<80x48xbf16>,
    %c0_7 = arith.constant 0 : index
    %c6 = arith.constant 6 : index
    %c0_8 = arith.constant 0 : index
    %5 = vector.load %arg1[%c0_7, %c6, %c0_8] : memref<1x112x48xbf16, #tpu.memory_space<vmem>>, vector<1x80x48xbf16>
    %6 = vector.shape_cast %5 : vector<1x80x48xbf16> to vector<80x48xbf16>
    %c0_9 = arith.constant 0 : index
    %c48 = arith.constant 48 : index
    %7 = vector.load %arg5[%c0_9, %c48] : memref<80x432xbf16, #tpu.memory_space<vmem>>, vector<80x48xbf16>
    tpu.vector_store %arg5[%c0_9, %c48], %6 {strides = array<i32>} : memref<80x432xbf16, #tpu.memory_space<vmem>>, vector<80x48xbf16>,
    %c0_10 = arith.constant 0 : index
    %c7 = arith.constant 7 : index
    %c0_11 = arith.constant 0 : index
    %8 = vector.load %arg1[%c0_10, %c7, %c0_11] : memref<1x112x48xbf16, #tpu.memory_space<vmem>>, vector<1x80x48xbf16>
    %9 = vector.shape_cast %8 : vector<1x80x48xbf16> to vector<80x48xbf16>
    %c0_12 = arith.constant 0 : index
    %c96 = arith.constant 96 : index
    %10 = vector.load %arg5[%c0_12, %c96] : memref<80x432xbf16, #tpu.memory_space<vmem>>, vector<80x48xbf16>
    tpu.vector_store %arg5[%c0_12, %c96], %9 {strides = array<i32>} : memref<80x432xbf16, #tpu.memory_space<vmem>>, vector<80x48xbf16>,
    %c0_13 = arith.constant 0 : index
    %c15 = arith.constant 15 : index
    %c0_14 = arith.constant 0 : index
    %11 = vector.load %arg1[%c0_13, %c15, %c0_14] : memref<1x112x48xbf16, #tpu.memory_space<vmem>>, vector<1x80x48xbf16>
    %12 = vector.shape_cast %11 : vector<1x80x48xbf16> to vector<80x48xbf16>
    %c0_15 = arith.constant 0 : index
    %c144 = arith.constant 144 : index
    %13 = vector.load %arg5[%c0_15, %c144] : memref<80x432xbf16, #tpu.memory_space<vmem>>, vector<80x48xbf16>
    tpu.vector_store %arg5[%c0_15, %c144], %12 {strides = array<i32>} : memref<80x432xbf16, #tpu.memory_space<vmem>>, vector<80x48xbf16>,
    %c0_16 = arith.constant 0 : index
    %c16 = arith.constant 16 : index
    %c0_17 = arith.constant 0 : index
    %14 = vector.load %arg1[%c0_16, %c16, %c0_17] : memref<1x112x48xbf16, #tpu.memory_space<vmem>>, vector<1x80x48xbf16>
    %15 = vector.shape_cast %14 : vector<1x80x48xbf16> to vector<80x48xbf16>
    %c0_18 = arith.constant 0 : index
    %c192 = arith.constant 192 : index
    %16 = vector.load %arg5[%c0_18, %c192] : memref<80x432xbf16, #tpu.memory_space<vmem>>, vector<80x48xbf16>
    tpu.vector_store %arg5[%c0_18, %c192], %15 {strides = array<i32>} : memref<80x432xbf16, #tpu.memory_space<vmem>>, vector<80x48xbf16>,
    %c0_19 = arith.constant 0 : index
    %c17 = arith.constant 17 : index
    %c0_20 = arith.constant 0 : index
    %17 = vector.load %arg1[%c0_19, %c17, %c0_20] : memref<1x112x48xbf16, #tpu.memory_space<vmem>>, vector<1x80x48xbf16>
    %18 = vector.shape_cast %17 : vector<1x80x48xbf16> to vector<80x48xbf16>
    %c0_21 = arith.constant 0 : index
    %c240 = arith.constant 240 : index
    %19 = vector.load %arg5[%c0_21, %c240] : memref<80x432xbf16, #tpu.memory_space<vmem>>, vector<80x48xbf16>
    tpu.vector_store %arg5[%c0_21, %c240], %18 {strides = array<i32>} : memref<80x432xbf16, #tpu.memory_space<vmem>>, vector<80x48xbf16>,
    %c0_22 = arith.constant 0 : index
    %c25 = arith.constant 25 : index
    %c0_23 = arith.constant 0 : index
    %20 = vector.load %arg1[%c0_22, %c25, %c0_23] : memref<1x112x48xbf16, #tpu.memory_space<vmem>>, vector<1x80x48xbf16>
    %21 = vector.shape_cast %20 : vector<1x80x48xbf16> to vector<80x48xbf16>
    %c0_24 = arith.constant 0 : index
    %c288 = arith.constant 288 : index
    %22 = vector.load %arg5[%c0_24, %c288] : memref<80x432xbf16, #tpu.memory_space<vmem>>, vector<80x48xbf16>
    tpu.vector_store %arg5[%c0_24, %c288], %21 {strides = array<i32>} : memref<80x432xbf16, #tpu.memory_space<vmem>>, vector<80x48xbf16>,
    %c0_25 = arith.constant 0 : index
    %c26 = arith.constant 26 : index
    %c0_26 = arith.constant 0 : index
    %23 = vector.load %arg1[%c0_25, %c26, %c0_26] : memref<1x112x48xbf16, #tpu.memory_space<vmem>>, vector<1x80x48xbf16>
    %24 = vector.shape_cast %23 : vector<1x80x48xbf16> to vector<80x48xbf16>
    %c0_27 = arith.constant 0 : index
    %c336 = arith.constant 336 : index
    %25 = vector.load %arg5[%c0_27, %c336] : memref<80x432xbf16, #tpu.memory_space<vmem>>, vector<80x48xbf16>
    tpu.vector_store %arg5[%c0_27, %c336], %24 {strides = array<i32>} : memref<80x432xbf16, #tpu.memory_space<vmem>>, vector<80x48xbf16>,
    %c0_28 = arith.constant 0 : index
    %c27 = arith.constant 27 : index
    %c0_29 = arith.constant 0 : index
    %26 = vector.load %arg1[%c0_28, %c27, %c0_29] : memref<1x112x48xbf16, #tpu.memory_space<vmem>>, vector<1x80x48xbf16>
    %27 = vector.shape_cast %26 : vector<1x80x48xbf16> to vector<80x48xbf16>
    %c0_30 = arith.constant 0 : index
    %c384 = arith.constant 384 : index
    %28 = vector.load %arg5[%c0_30, %c384] : memref<80x432xbf16, #tpu.memory_space<vmem>>, vector<80x48xbf16>
    tpu.vector_store %arg5[%c0_30, %c384], %27 {strides = array<i32>} : memref<80x432xbf16, #tpu.memory_space<vmem>>, vector<80x48xbf16>,
    %c0_31 = arith.constant 0 : index
    %c0_32 = arith.constant 0 : index
    %29 = vector.load %arg5[%c0_31, %c0_32] : memref<80x432xbf16, #tpu.memory_space<vmem>>, vector<80x432xbf16>
    %cst = arith.constant dense<0.000000e+00> : vector<80x64xf32>
    %30 = tpu.matmul %29, %0, %cst {dimension_numbers = #tpu.dot_dimension_numbers<[1], [0], [0], [1], [0, 0, 1, 1], [], []>} : vector<80x432xbf16>, vector<432x64xbf16>, vector<80x64xf32> -> vector<80x64xf32>
    %31 = vector.broadcast %1 : vector<1x64xf32> to vector<80x64xf32>
    %32 = arith.addf %30, %31 : vector<80x64xf32>
    %cst_33 = arith.constant 0.000000e+00 : f32
    %33 = vector.broadcast %cst_33 : f32 to vector<80x64xf32>
    %34 = arith.maximumf %32, %33 : vector<80x64xf32>
    %35 = tpu.iota {dimensions = array<i32: 0>} : vector<80x64xi32>
    %c0_i32 = arith.constant 0 : i32
    %36 = vector.broadcast %c0_i32 : i32 to vector<80x64xi32>
    %37 = arith.addi %35, %36 : vector<80x64xi32>
    %c10_i32 = arith.constant 10 : i32
    %c0_i32_34 = arith.constant 0 : i32
    %38 = arith.cmpi eq, %c10_i32, %c0_i32_34 : i32
    %c1_i32 = arith.constant 1 : i32
    %39 = arith.select %38, %c1_i32, %c10_i32 : i32
    %40 = vector.broadcast %39 : i32 to vector<80x64xi32>
    %41 = arith.remsi %37, %40 : vector<80x64xi32>
    %c0_i32_35 = arith.constant 0 : i32
    %42 = vector.broadcast %c0_i32_35 : i32 to vector<80x64xi32>
    %43 = arith.cmpi ne, %41, %42 : vector<80x64xi32>
    %c0_i32_36 = arith.constant 0 : i32
    %44 = vector.broadcast %c0_i32_36 : i32 to vector<80x64xi32>
    %45 = arith.cmpi slt, %41, %44 : vector<80x64xi32>
    %c0_i32_37 = arith.constant 0 : i32
    %46 = arith.cmpi slt, %39, %c0_i32_37 : i32
    %47 = vector.broadcast %46 : i1 to vector<80x64xi1>
    %48 = vector.broadcast %47 : vector<80x64xi1> to vector<80x64xi1>
    %49 = arith.xori %45, %48 : vector<80x64xi1>
    %50 = arith.andi %49, %43 : vector<80x64xi1>
    %51 = vector.broadcast %39 : i32 to vector<80x64xi32>
    %52 = arith.addi %41, %51 : vector<80x64xi32>
    %53 = arith.select %50, %52, %41 : vector<80x64xi1>, vector<80x64xi32>
    %c8_i32 = arith.constant 8 : i32
    %54 = vector.broadcast %c8_i32 : i32 to vector<80x64xi32>
    %55 = arith.cmpi slt, %53, %54 : vector<80x64xi32>
    %cst_38 = arith.constant 0.000000e+00 : f32
    %56 = vector.broadcast %cst_38 : f32 to vector<80x64xf32>
    %57 = arith.select %55, %34, %56 : vector<80x64xi1>, vector<80x64xf32>
    %58 = arith.truncf %57 : vector<80x64xf32> to vector<80x64xbf16>
    %c0_39 = arith.constant 0 : index
    %c0_40 = arith.constant 0 : index
    %c0_41 = arith.constant 0 : index
    %59 = vector.load %arg4[%c0_39, %c0_40, %c0_41] : memref<1x80x64xbf16, #tpu.memory_space<vmem>>, vector<1x80x64xbf16>
    %60 = vector.shape_cast %59 : vector<1x80x64xbf16> to vector<80x64xbf16>
    %61 = vector.shape_cast %58 : vector<80x64xbf16> to vector<1x80x64xbf16>
    tpu.vector_store %arg4[%c0_39, %c0_40, %c0_41], %61 {strides = array<i32>} : memref<1x80x64xbf16, #tpu.memory_space<vmem>>, vector<1x80x64xbf16>,
    return
  }
  func.func @transform_0(%arg0: i32) -> (i32, i32, i32) {
    %c0_i32 = arith.constant 0 : i32
    %c0_i32_0 = arith.constant 0 : i32
    %c0_i32_1 = arith.constant 0 : i32
    return %arg0, %c0_i32, %c0_i32_0 : i32, i32, i32
  }
  func.func @transform_1(%arg0: i32) -> (i32, i32) {
    %c0_i32 = arith.constant 0 : i32
    %c0_i32_0 = arith.constant 0 : i32
    %c0_i32_1 = arith.constant 0 : i32
    return %c0_i32, %c0_i32_0 : i32, i32
  }
  func.func @transform_2(%arg0: i32) -> (i32, i32) {
    %c0_i32 = arith.constant 0 : i32
    %c0_i32_0 = arith.constant 0 : i32
    %c0_i32_1 = arith.constant 0 : i32
    return %c0_i32, %c0_i32_0 : i32, i32
  }
  func.func @transform_3(%arg0: i32) -> (i32, i32, i32) {
    %c0_i32 = arith.constant 0 : i32
    %c0_i32_0 = arith.constant 0 : i32
    %c0_i32_1 = arith.constant 0 : i32
    return %arg0, %c0_i32, %c0_i32_0 : i32, i32, i32
  }
}

module attributes {stable_mosaic.version = 11 : i64} {
  func.func @_conv3x3_kernel(%arg0: i32, %arg1: memref<1x112x32xbf16, #tpu.memory_space<vmem>>, %arg2: memref<288x32xbf16, #tpu.memory_space<vmem>>, %arg3: memref<1x32xf32, #tpu.memory_space<vmem>>, %arg4: memref<1x80x32xbf16, #tpu.memory_space<vmem>>, %arg5: memref<80x288xbf16, #tpu.memory_space<vmem>>) attributes {dimension_semantics = [#tpu.dimension_semantics<parallel>], iteration_bounds = array<i64: 2>, scalar_prefetch = 0 : i64, scratch_operands = 1 : i64, tpu.core_type = #tpu.core_type<tc>, window_params = [{transform_indices = @transform_0, window_bounds = array<i64: 1, 112, 32>}, {pipeline_mode = #tpu.pipeline_mode<synchronous>, transform_indices = @transform_1, window_bounds = array<i64: 288, 32>}, {pipeline_mode = #tpu.pipeline_mode<synchronous>, transform_indices = @transform_2, window_bounds = array<i64: 1, 32>}, {transform_indices = @transform_3, window_bounds = array<i64: 1, 80, 32>}]} {
    %c0 = arith.constant 0 : index
    %c0_0 = arith.constant 0 : index
    %0 = vector.load %arg2[%c0, %c0_0] : memref<288x32xbf16, #tpu.memory_space<vmem>>, vector<288x32xbf16>
    %c0_1 = arith.constant 0 : index
    %c0_2 = arith.constant 0 : index
    %1 = vector.load %arg3[%c0_1, %c0_2] : memref<1x32xf32, #tpu.memory_space<vmem>>, vector<1x32xf32>
    %c0_3 = arith.constant 0 : index
    %c5 = arith.constant 5 : index
    %c0_4 = arith.constant 0 : index
    %2 = vector.load %arg1[%c0_3, %c5, %c0_4] : memref<1x112x32xbf16, #tpu.memory_space<vmem>>, vector<1x80x32xbf16>
    %3 = vector.shape_cast %2 : vector<1x80x32xbf16> to vector<80x32xbf16>
    %c0_5 = arith.constant 0 : index
    %c0_6 = arith.constant 0 : index
    %4 = vector.load %arg5[%c0_5, %c0_6] : memref<80x288xbf16, #tpu.memory_space<vmem>>, vector<80x32xbf16>
    tpu.vector_store %arg5[%c0_5, %c0_6], %3 {strides = array<i32>} : memref<80x288xbf16, #tpu.memory_space<vmem>>, vector<80x32xbf16>,
    %c0_7 = arith.constant 0 : index
    %c6 = arith.constant 6 : index
    %c0_8 = arith.constant 0 : index
    %5 = vector.load %arg1[%c0_7, %c6, %c0_8] : memref<1x112x32xbf16, #tpu.memory_space<vmem>>, vector<1x80x32xbf16>
    %6 = vector.shape_cast %5 : vector<1x80x32xbf16> to vector<80x32xbf16>
    %c0_9 = arith.constant 0 : index
    %c32 = arith.constant 32 : index
    %7 = vector.load %arg5[%c0_9, %c32] : memref<80x288xbf16, #tpu.memory_space<vmem>>, vector<80x32xbf16>
    tpu.vector_store %arg5[%c0_9, %c32], %6 {strides = array<i32>} : memref<80x288xbf16, #tpu.memory_space<vmem>>, vector<80x32xbf16>,
    %c0_10 = arith.constant 0 : index
    %c7 = arith.constant 7 : index
    %c0_11 = arith.constant 0 : index
    %8 = vector.load %arg1[%c0_10, %c7, %c0_11] : memref<1x112x32xbf16, #tpu.memory_space<vmem>>, vector<1x80x32xbf16>
    %9 = vector.shape_cast %8 : vector<1x80x32xbf16> to vector<80x32xbf16>
    %c0_12 = arith.constant 0 : index
    %c64 = arith.constant 64 : index
    %10 = vector.load %arg5[%c0_12, %c64] : memref<80x288xbf16, #tpu.memory_space<vmem>>, vector<80x32xbf16>
    tpu.vector_store %arg5[%c0_12, %c64], %9 {strides = array<i32>} : memref<80x288xbf16, #tpu.memory_space<vmem>>, vector<80x32xbf16>,
    %c0_13 = arith.constant 0 : index
    %c15 = arith.constant 15 : index
    %c0_14 = arith.constant 0 : index
    %11 = vector.load %arg1[%c0_13, %c15, %c0_14] : memref<1x112x32xbf16, #tpu.memory_space<vmem>>, vector<1x80x32xbf16>
    %12 = vector.shape_cast %11 : vector<1x80x32xbf16> to vector<80x32xbf16>
    %c0_15 = arith.constant 0 : index
    %c96 = arith.constant 96 : index
    %13 = vector.load %arg5[%c0_15, %c96] : memref<80x288xbf16, #tpu.memory_space<vmem>>, vector<80x32xbf16>
    tpu.vector_store %arg5[%c0_15, %c96], %12 {strides = array<i32>} : memref<80x288xbf16, #tpu.memory_space<vmem>>, vector<80x32xbf16>,
    %c0_16 = arith.constant 0 : index
    %c16 = arith.constant 16 : index
    %c0_17 = arith.constant 0 : index
    %14 = vector.load %arg1[%c0_16, %c16, %c0_17] : memref<1x112x32xbf16, #tpu.memory_space<vmem>>, vector<1x80x32xbf16>
    %15 = vector.shape_cast %14 : vector<1x80x32xbf16> to vector<80x32xbf16>
    %c0_18 = arith.constant 0 : index
    %c128 = arith.constant 128 : index
    %16 = vector.load %arg5[%c0_18, %c128] : memref<80x288xbf16, #tpu.memory_space<vmem>>, vector<80x32xbf16>
    tpu.vector_store %arg5[%c0_18, %c128], %15 {strides = array<i32>} : memref<80x288xbf16, #tpu.memory_space<vmem>>, vector<80x32xbf16>,
    %c0_19 = arith.constant 0 : index
    %c17 = arith.constant 17 : index
    %c0_20 = arith.constant 0 : index
    %17 = vector.load %arg1[%c0_19, %c17, %c0_20] : memref<1x112x32xbf16, #tpu.memory_space<vmem>>, vector<1x80x32xbf16>
    %18 = vector.shape_cast %17 : vector<1x80x32xbf16> to vector<80x32xbf16>
    %c0_21 = arith.constant 0 : index
    %c160 = arith.constant 160 : index
    %19 = vector.load %arg5[%c0_21, %c160] : memref<80x288xbf16, #tpu.memory_space<vmem>>, vector<80x32xbf16>
    tpu.vector_store %arg5[%c0_21, %c160], %18 {strides = array<i32>} : memref<80x288xbf16, #tpu.memory_space<vmem>>, vector<80x32xbf16>,
    %c0_22 = arith.constant 0 : index
    %c25 = arith.constant 25 : index
    %c0_23 = arith.constant 0 : index
    %20 = vector.load %arg1[%c0_22, %c25, %c0_23] : memref<1x112x32xbf16, #tpu.memory_space<vmem>>, vector<1x80x32xbf16>
    %21 = vector.shape_cast %20 : vector<1x80x32xbf16> to vector<80x32xbf16>
    %c0_24 = arith.constant 0 : index
    %c192 = arith.constant 192 : index
    %22 = vector.load %arg5[%c0_24, %c192] : memref<80x288xbf16, #tpu.memory_space<vmem>>, vector<80x32xbf16>
    tpu.vector_store %arg5[%c0_24, %c192], %21 {strides = array<i32>} : memref<80x288xbf16, #tpu.memory_space<vmem>>, vector<80x32xbf16>,
    %c0_25 = arith.constant 0 : index
    %c26 = arith.constant 26 : index
    %c0_26 = arith.constant 0 : index
    %23 = vector.load %arg1[%c0_25, %c26, %c0_26] : memref<1x112x32xbf16, #tpu.memory_space<vmem>>, vector<1x80x32xbf16>
    %24 = vector.shape_cast %23 : vector<1x80x32xbf16> to vector<80x32xbf16>
    %c0_27 = arith.constant 0 : index
    %c224 = arith.constant 224 : index
    %25 = vector.load %arg5[%c0_27, %c224] : memref<80x288xbf16, #tpu.memory_space<vmem>>, vector<80x32xbf16>
    tpu.vector_store %arg5[%c0_27, %c224], %24 {strides = array<i32>} : memref<80x288xbf16, #tpu.memory_space<vmem>>, vector<80x32xbf16>,
    %c0_28 = arith.constant 0 : index
    %c27 = arith.constant 27 : index
    %c0_29 = arith.constant 0 : index
    %26 = vector.load %arg1[%c0_28, %c27, %c0_29] : memref<1x112x32xbf16, #tpu.memory_space<vmem>>, vector<1x80x32xbf16>
    %27 = vector.shape_cast %26 : vector<1x80x32xbf16> to vector<80x32xbf16>
    %c0_30 = arith.constant 0 : index
    %c256 = arith.constant 256 : index
    %28 = vector.load %arg5[%c0_30, %c256] : memref<80x288xbf16, #tpu.memory_space<vmem>>, vector<80x32xbf16>
    tpu.vector_store %arg5[%c0_30, %c256], %27 {strides = array<i32>} : memref<80x288xbf16, #tpu.memory_space<vmem>>, vector<80x32xbf16>,
    %c0_31 = arith.constant 0 : index
    %c0_32 = arith.constant 0 : index
    %29 = vector.load %arg5[%c0_31, %c0_32] : memref<80x288xbf16, #tpu.memory_space<vmem>>, vector<80x288xbf16>
    %cst = arith.constant dense<0.000000e+00> : vector<80x32xf32>
    %30 = tpu.matmul %29, %0, %cst {dimension_numbers = #tpu.dot_dimension_numbers<[1], [0], [0], [1], [0, 0, 1, 1], [], []>} : vector<80x288xbf16>, vector<288x32xbf16>, vector<80x32xf32> -> vector<80x32xf32>
    %31 = vector.broadcast %1 : vector<1x32xf32> to vector<80x32xf32>
    %32 = arith.addf %30, %31 : vector<80x32xf32>
    %cst_33 = arith.constant 0.000000e+00 : f32
    %33 = vector.broadcast %cst_33 : f32 to vector<80x32xf32>
    %34 = arith.maximumf %32, %33 : vector<80x32xf32>
    %35 = tpu.iota {dimensions = array<i32: 0>} : vector<80x32xi32>
    %c0_i32 = arith.constant 0 : i32
    %36 = vector.broadcast %c0_i32 : i32 to vector<80x32xi32>
    %37 = arith.addi %35, %36 : vector<80x32xi32>
    %c10_i32 = arith.constant 10 : i32
    %c0_i32_34 = arith.constant 0 : i32
    %38 = arith.cmpi eq, %c10_i32, %c0_i32_34 : i32
    %c1_i32 = arith.constant 1 : i32
    %39 = arith.select %38, %c1_i32, %c10_i32 : i32
    %40 = vector.broadcast %39 : i32 to vector<80x32xi32>
    %41 = arith.remsi %37, %40 : vector<80x32xi32>
    %c0_i32_35 = arith.constant 0 : i32
    %42 = vector.broadcast %c0_i32_35 : i32 to vector<80x32xi32>
    %43 = arith.cmpi ne, %41, %42 : vector<80x32xi32>
    %c0_i32_36 = arith.constant 0 : i32
    %44 = vector.broadcast %c0_i32_36 : i32 to vector<80x32xi32>
    %45 = arith.cmpi slt, %41, %44 : vector<80x32xi32>
    %c0_i32_37 = arith.constant 0 : i32
    %46 = arith.cmpi slt, %39, %c0_i32_37 : i32
    %47 = vector.broadcast %46 : i1 to vector<80x32xi1>
    %48 = vector.broadcast %47 : vector<80x32xi1> to vector<80x32xi1>
    %49 = arith.xori %45, %48 : vector<80x32xi1>
    %50 = arith.andi %49, %43 : vector<80x32xi1>
    %51 = vector.broadcast %39 : i32 to vector<80x32xi32>
    %52 = arith.addi %41, %51 : vector<80x32xi32>
    %53 = arith.select %50, %52, %41 : vector<80x32xi1>, vector<80x32xi32>
    %c8_i32 = arith.constant 8 : i32
    %54 = vector.broadcast %c8_i32 : i32 to vector<80x32xi32>
    %55 = arith.cmpi slt, %53, %54 : vector<80x32xi32>
    %cst_38 = arith.constant 0.000000e+00 : f32
    %56 = vector.broadcast %cst_38 : f32 to vector<80x32xf32>
    %57 = arith.select %55, %34, %56 : vector<80x32xi1>, vector<80x32xf32>
    %58 = arith.truncf %57 : vector<80x32xf32> to vector<80x32xbf16>
    %c0_39 = arith.constant 0 : index
    %c0_40 = arith.constant 0 : index
    %c0_41 = arith.constant 0 : index
    %59 = vector.load %arg4[%c0_39, %c0_40, %c0_41] : memref<1x80x32xbf16, #tpu.memory_space<vmem>>, vector<1x80x32xbf16>
    %60 = vector.shape_cast %59 : vector<1x80x32xbf16> to vector<80x32xbf16>
    %61 = vector.shape_cast %58 : vector<80x32xbf16> to vector<1x80x32xbf16>
    tpu.vector_store %arg4[%c0_39, %c0_40, %c0_41], %61 {strides = array<i32>} : memref<1x80x32xbf16, #tpu.memory_space<vmem>>, vector<1x80x32xbf16>,
    return
  }
  func.func @transform_0(%arg0: i32) -> (i32, i32, i32) {
    %c0_i32 = arith.constant 0 : i32
    %c0_i32_0 = arith.constant 0 : i32
    %c0_i32_1 = arith.constant 0 : i32
    return %arg0, %c0_i32, %c0_i32_0 : i32, i32, i32
  }
  func.func @transform_1(%arg0: i32) -> (i32, i32) {
    %c0_i32 = arith.constant 0 : i32
    %c0_i32_0 = arith.constant 0 : i32
    %c0_i32_1 = arith.constant 0 : i32
    return %c0_i32, %c0_i32_0 : i32, i32
  }
  func.func @transform_2(%arg0: i32) -> (i32, i32) {
    %c0_i32 = arith.constant 0 : i32
    %c0_i32_0 = arith.constant 0 : i32
    %c0_i32_1 = arith.constant 0 : i32
    return %c0_i32, %c0_i32_0 : i32, i32
  }
  func.func @transform_3(%arg0: i32) -> (i32, i32, i32) {
    %c0_i32 = arith.constant 0 : i32
    %c0_i32_0 = arith.constant 0 : i32
    %c0_i32_1 = arith.constant 0 : i32
    return %arg0, %c0_i32, %c0_i32_0 : i32, i32, i32
  }
}

module attributes {stable_mosaic.version = 11 : i64} {
  func.func @_final_kernel(%arg0: i32, %arg1: memref<32x128xbf16, #tpu.memory_space<vmem>>, %arg2: memref<32x32xbf16, #tpu.memory_space<vmem>>, %arg3: memref<32x64xbf16, #tpu.memory_space<vmem>>, %arg4: memref<32x320xbf16, #tpu.memory_space<vmem>>, %arg5: memref<128x320xbf16, #tpu.memory_space<vmem>>, %arg6: memref<32x320xbf16, #tpu.memory_space<vmem>>, %arg7: memref<64x320xbf16, #tpu.memory_space<vmem>>, %arg8: memref<1x320xf32, #tpu.memory_space<vmem>>, %arg9: memref<32x320xf32, #tpu.memory_space<vmem>>) attributes {dimension_semantics = [#tpu.dimension_semantics<parallel>], iteration_bounds = array<i64: 4>, scalar_prefetch = 0 : i64, scratch_operands = 0 : i64, tpu.core_type = #tpu.core_type<tc>, window_params = [{transform_indices = @transform_0, window_bounds = array<i64: 32, 128>}, {transform_indices = @transform_1, window_bounds = array<i64: 32, 32>}, {transform_indices = @transform_2, window_bounds = array<i64: 32, 64>}, {transform_indices = @transform_3, window_bounds = array<i64: 32, 320>}, {pipeline_mode = #tpu.pipeline_mode<synchronous>, transform_indices = @transform_4, window_bounds = array<i64: 128, 320>}, {pipeline_mode = #tpu.pipeline_mode<synchronous>, transform_indices = @transform_5, window_bounds = array<i64: 32, 320>}, {pipeline_mode = #tpu.pipeline_mode<synchronous>, transform_indices = @transform_6, window_bounds = array<i64: 64, 320>}, {pipeline_mode = #tpu.pipeline_mode<synchronous>, transform_indices = @transform_7, window_bounds = array<i64: 1, 320>}, {transform_indices = @transform_8, window_bounds = array<i64: 32, 320>}]} {
    %c0 = arith.constant 0 : index
    %c0_0 = arith.constant 0 : index
    %0 = vector.load %arg1[%c0, %c0_0] : memref<32x128xbf16, #tpu.memory_space<vmem>>, vector<32x128xbf16>
    %c0_1 = arith.constant 0 : index
    %c0_2 = arith.constant 0 : index
    %1 = vector.load %arg5[%c0_1, %c0_2] : memref<128x320xbf16, #tpu.memory_space<vmem>>, vector<128x320xbf16>
    %cst = arith.constant dense<0.000000e+00> : vector<32x320xf32>
    %2 = tpu.matmul %0, %1, %cst {dimension_numbers = #tpu.dot_dimension_numbers<[1], [0], [0], [1], [0, 0, 1, 1], [], []>} : vector<32x128xbf16>, vector<128x320xbf16>, vector<32x320xf32> -> vector<32x320xf32>
    %c0_3 = arith.constant 0 : index
    %c0_4 = arith.constant 0 : index
    %3 = vector.load %arg2[%c0_3, %c0_4] : memref<32x32xbf16, #tpu.memory_space<vmem>>, vector<32x32xbf16>
    %c0_5 = arith.constant 0 : index
    %c0_6 = arith.constant 0 : index
    %4 = vector.load %arg6[%c0_5, %c0_6] : memref<32x320xbf16, #tpu.memory_space<vmem>>, vector<32x320xbf16>
    %cst_7 = arith.constant dense<0.000000e+00> : vector<32x320xf32>
    %5 = tpu.matmul %3, %4, %cst_7 {dimension_numbers = #tpu.dot_dimension_numbers<[1], [0], [0], [1], [0, 0, 1, 1], [], []>} : vector<32x32xbf16>, vector<32x320xbf16>, vector<32x320xf32> -> vector<32x320xf32>
    %6 = arith.addf %2, %5 : vector<32x320xf32>
    %c0_8 = arith.constant 0 : index
    %c0_9 = arith.constant 0 : index
    %7 = vector.load %arg3[%c0_8, %c0_9] : memref<32x64xbf16, #tpu.memory_space<vmem>>, vector<32x64xbf16>
    %c0_10 = arith.constant 0 : index
    %c0_11 = arith.constant 0 : index
    %8 = vector.load %arg7[%c0_10, %c0_11] : memref<64x320xbf16, #tpu.memory_space<vmem>>, vector<64x320xbf16>
    %cst_12 = arith.constant dense<0.000000e+00> : vector<32x320xf32>
    %9 = tpu.matmul %7, %8, %cst_12 {dimension_numbers = #tpu.dot_dimension_numbers<[1], [0], [0], [1], [0, 0, 1, 1], [], []>} : vector<32x64xbf16>, vector<64x320xbf16>, vector<32x320xf32> -> vector<32x320xf32>
    %10 = arith.addf %6, %9 : vector<32x320xf32>
    %c0_13 = arith.constant 0 : index
    %c0_14 = arith.constant 0 : index
    %11 = vector.load %arg8[%c0_13, %c0_14] : memref<1x320xf32, #tpu.memory_space<vmem>>, vector<1x320xf32>
    %12 = vector.broadcast %11 : vector<1x320xf32> to vector<32x320xf32>
    %13 = arith.addf %10, %12 : vector<32x320xf32>
    %cst_15 = arith.constant 1.700000e-01 : f32
    %14 = vector.broadcast %cst_15 : f32 to vector<32x320xf32>
    %15 = arith.mulf %13, %14 : vector<32x320xf32>
    %c0_16 = arith.constant 0 : index
    %c0_17 = arith.constant 0 : index
    %16 = vector.load %arg4[%c0_16, %c0_17] : memref<32x320xbf16, #tpu.memory_space<vmem>>, vector<32x320xbf16>
    %17 = arith.extf %16 : vector<32x320xbf16> to vector<32x320xf32>
    %18 = arith.addf %15, %17 : vector<32x320xf32>
    %cst_18 = arith.constant 0.000000e+00 : f32
    %19 = vector.broadcast %cst_18 : f32 to vector<32x320xf32>
    %20 = arith.maximumf %18, %19 : vector<32x320xf32>
    %c0_19 = arith.constant 0 : index
    %c0_20 = arith.constant 0 : index
    %21 = vector.load %arg9[%c0_19, %c0_20] : memref<32x320xf32, #tpu.memory_space<vmem>>, vector<32x320xf32>
    tpu.vector_store %arg9[%c0_19, %c0_20], %20 {strides = array<i32>} : memref<32x320xf32, #tpu.memory_space<vmem>>, vector<32x320xf32>,
    return
  }
  func.func @transform_0(%arg0: i32) -> (i32, i32) {
    %c0_i32 = arith.constant 0 : i32
    %c0_i32_0 = arith.constant 0 : i32
    return %arg0, %c0_i32 : i32, i32
  }
  func.func @transform_1(%arg0: i32) -> (i32, i32) {
    %c0_i32 = arith.constant 0 : i32
    %c0_i32_0 = arith.constant 0 : i32
    return %arg0, %c0_i32 : i32, i32
  }
  func.func @transform_2(%arg0: i32) -> (i32, i32) {
    %c0_i32 = arith.constant 0 : i32
    %c0_i32_0 = arith.constant 0 : i32
    return %arg0, %c0_i32 : i32, i32
  }
  func.func @transform_3(%arg0: i32) -> (i32, i32) {
    %c0_i32 = arith.constant 0 : i32
    %c0_i32_0 = arith.constant 0 : i32
    return %arg0, %c0_i32 : i32, i32
  }
  func.func @transform_4(%arg0: i32) -> (i32, i32) {
    %c0_i32 = arith.constant 0 : i32
    %c0_i32_0 = arith.constant 0 : i32
    %c0_i32_1 = arith.constant 0 : i32
    return %c0_i32, %c0_i32_0 : i32, i32
  }
  func.func @transform_5(%arg0: i32) -> (i32, i32) {
    %c0_i32 = arith.constant 0 : i32
    %c0_i32_0 = arith.constant 0 : i32
    %c0_i32_1 = arith.constant 0 : i32
    return %c0_i32, %c0_i32_0 : i32, i32
  }
  func.func @transform_6(%arg0: i32) -> (i32, i32) {
    %c0_i32 = arith.constant 0 : i32
    %c0_i32_0 = arith.constant 0 : i32
    %c0_i32_1 = arith.constant 0 : i32
    return %c0_i32, %c0_i32_0 : i32, i32
  }
  func.func @transform_7(%arg0: i32) -> (i32, i32) {
    %c0_i32 = arith.constant 0 : i32
    %c0_i32_0 = arith.constant 0 : i32
    %c0_i32_1 = arith.constant 0 : i32
    return %c0_i32, %c0_i32_0 : i32, i32
  }
  func.func @transform_8(%arg0: i32) -> (i32, i32) {
    %c0_i32 = arith.constant 0 : i32
    %c0_i32_0 = arith.constant 0 : i32
    return %arg0, %c0_i32 : i32, i32
  }
}

</mosaic_0001>

<llo_original>
// kernel: block35_forward.5
$region0: #{block35_forward.5}
  #allocation0 [shape = 'u32[]', space=smem, size = 0x4, offset = 0x4, fixed_abs, tag = 'smem constant byte address 0x4 - core index']
  #allocation1 [shape = 'u32[72,128]{1,0:T(1,128)}', space=vmem, size = 0x9000, scoped, tag = 'internal scratch']
  %s0 = inlined_call_operand.vmem [shape: bf16[128,320], index: 0, kind: input, shape index: {}]
  %s1 = inlined_call_operand.vmem [shape: bf16[320,128], index: 1, kind: input, shape index: {}]
  %s2 = inlined_call_operand.vmem [shape: f32[1,128], index: 2, kind: input, shape index: {}]
  %s3 = inlined_call_operand.vmem [shape: bf16[128,128], index: 3, kind: output, shape index: {}]
  %s4 = sld [smem:[#allocation0]]
  $region45: #{block35_forward.5} parent=0
    _
  %s6 = ssub.s32 1, %s4
  %s7 = scalar_select 0, %s6, %s4
  loop: start=0, step=1, limit=6
  $region2: #{block35_forward.5} parent=0 // loop_pre_header
    _
  $region3: #{block35_forward.5} parent=0 // loop_header
    %s9 = sphi 0, %s13
    %p10 = scmp.ge.s32.totalorder %s9, 6
    %s19 = sphi 0, %s21
    %s22 = sphi 0, %s19
    %s23 = sphi 0, %s22
    %s39 = sphi 0, %s23
    %s43 = sphi 0, %s43
    %s45 = sphi 0, %s43
    %s46 = sphi 0, %s45
    %s60 = sphi 0, %s46
    %s64 = sphi 0, %s64
    %s66 = sphi 0, %s64
    %s67 = sphi 0, %s66
    %s81 = sphi 0, %s67
    %s87 = sphi 0, %s89
    %s90 = sphi 0, %s87
    %s91 = sphi 0, %s90
    %s107 = sphi 0, %s91
  $region4: #{block35_forward.5} parent=0 // loop_header_branch
    %12 = sbr.rel (%p10) target = $region8
  $region5: #{block35_forward.5} parent=0 // loop_body
    %s14 = ssub.s32 %s9, 1
    %s15 = ssub.s32 %s9, 2
    %s16 = sadd.s32 %s9, 1
    %s17 = ssub.s32 %s9, %s16
    %p18 = scmp.eq.s32.totalorder %s17, 0
    %s20 = sadd.s32 %s19, 1
    %s21 = scalar_select %p18, %s19, %s20
    %p24 = pneg %p18
    %p25 = scmp.eq.s32.totalorder %s9, 3
    %p26 = por %p24, %p25
    %p27 = scmp.ne.s32.totalorder %s19, %s22
    %p28 = scmp.eq.s32.totalorder %s9, 0
    %p29 = por %p27, %p28
    %p30 = scmp.ne.s32.totalorder %s19, %s22
    %p31 = scmp.eq.s32.totalorder %s14, 3
    %p32 = por %p30, %p31
    %p33 = scmp.ne.s32.totalorder %s22, %s23
    %p34 = scmp.eq.s32.totalorder %s14, 0
    %p35 = por %p33, %p34
    %p36 = scmp.ne.s32.totalorder %s22, %s23
    %p37 = scmp.eq.s32.totalorder %s15, 3
    %p38 = por %p36, %p37
    %p40 = scmp.ne.s32.totalorder %s23, %s39
    %p41 = scmp.eq.s32.totalorder %s15, 0
    %p42 = por %p40, %p41
    %s44 = sadd.s32 %s43, 1
    %p47 = scmp.eq.s32.totalorder %s9, 3
    %p48 = scmp.ne.s32.totalorder %s43, %s45
    %p49 = scmp.eq.s32.totalorder %s9, 0
    %p50 = por %p48, %p49
    %p51 = scmp.ne.s32.totalorder %s43, %s45
    %p52 = scmp.eq.s32.totalorder %s14, 3
    %p53 = por %p51, %p52
    %p54 = scmp.ne.s32.totalorder %s45, %s46
    %p55 = scmp.eq.s32.totalorder %s14, 0
    %p56 = por %p54, %p55
    %p57 = scmp.ne.s32.totalorder %s45, %s46
    %p58 = scmp.eq.s32.totalorder %s15, 3
    %p59 = por %p57, %p58
    %p61 = scmp.ne.s32.totalorder %s46, %s60
    %p62 = scmp.eq.s32.totalorder %s15, 0
    %p63 = por %p61, %p62
    %s65 = sadd.s32 %s64, 1
    %p68 = scmp.eq.s32.totalorder %s9, 3
    %p69 = scmp.ne.s32.totalorder %s64, %s66
    %p70 = scmp.eq.s32.totalorder %s9, 0
    %p71 = por %p69, %p70
    %p72 = scmp.ne.s32.totalorder %s64, %s66
    %p73 = scmp.eq.s32.totalorder %s14, 3
    %p74 = por %p72, %p73
    %p75 = scmp.ne.s32.totalorder %s66, %s67
    %p76 = scmp.eq.s32.totalorder %s14, 0
    %p77 = por %p75, %p76
    %p78 = scmp.ne.s32.totalorder %s66, %s67
    %p79 = scmp.eq.s32.totalorder %s15, 3
    %p80 = por %p78, %p79
    %p82 = scmp.ne.s32.totalorder %s67, %s81
    %p83 = scmp.eq.s32.totalorder %s15, 0
    %p84 = por %p82, %p83
    %s85 = ssub.s32 %s9, %s16
    %p86 = scmp.eq.s32.totalorder %s85, 0
    %s88 = sadd.s32 %s87, 1
    %s89 = scalar_select %p86, %s87, %s88
    %p92 = pneg %p86
    %p93 = scmp.eq.s32.totalorder %s9, 3
    %p94 = por %p92, %p93
    %p95 = scmp.ne.s32.totalorder %s87, %s90
    %p96 = scmp.eq.s32.totalorder %s9, 0
    %p97 = por %p95, %p96
    %p98 = scmp.ne.s32.totalorder %s87, %s90
    %p99 = scmp.eq.s32.totalorder %s14, 3
    %p100 = por %p98, %p99
    %p101 = scmp.ne.s32.totalorder %s90, %s91
    %p102 = scmp.eq.s32.totalorder %s14, 0
    %p103 = por %p101, %p102
    %p104 = scmp.ne.s32.totalorder %s90, %s91
    %p105 = scmp.eq.s32.totalorder %s15, 3
    %p106 = por %p104, %p105
    %p108 = scmp.ne.s32.totalorder %s91, %s107
    %p109 = scmp.eq.s32.totalorder %s15, 0
    %p110 = por %p108, %p109
    %p111 = scmp.le.s32.totalorder 1, %s9
    %p112 = scmp.lt.s32.totalorder %s9, 5
    %p113 = pnand %p111, %p112
    %p114 = pneg %p113
    // Predicated region
    $region9: #{block35_forward.5} parent=5 // pred_check
      _
    $region10: #{block35_forward.5} parent=5 // pred_check_branch
      %116 = sbr.rel (%p113) target = $region12
    $region11: #{block35_forward.5} parent=5 // pred_region
      %s117 = ssub.s32 %s9, 1
      // Predicated region
      $region13: #{block35_forward.5} parent=11 // pred_check
        %p118 = pneg %p56
      $region14: #{block35_forward.5} parent=11 // pred_check_branch
        %120 = sbr.rel (%p118) target = $region16
      $region15: #{block35_forward.5} parent=11 // pred_region
        _
      $region16: #{block35_forward.5} parent=11 // pred_fallthru
        _
      // Predicated region
      $region17: #{block35_forward.5} parent=11 // pred_check
        %p121 = pneg %p77
      $region18: #{block35_forward.5} parent=11 // pred_check_branch
        %123 = sbr.rel (%p121) target = $region20
      $region19: #{block35_forward.5} parent=11 // pred_region
        _
      $region20: #{block35_forward.5} parent=11 // pred_fallthru
        _
    $region12: #{block35_forward.5} parent=5 // pred_fallthru
      _
    %p124 = scmp.lt.s32.totalorder %s9, 4
    // Predicated region
    $region21: #{block35_forward.5} parent=5 // pred_check
      %p125 = pneg %p124
    $region22: #{block35_forward.5} parent=5 // pred_check_branch
      %127 = sbr.rel (%p125) target = $region24
    $region23: #{block35_forward.5} parent=5 // pred_region
      // Predicated region
      $region25: #{block35_forward.5} parent=23 // pred_check
        %p128 = pneg %p29
      $region26: #{block35_forward.5} parent=23 // pred_check_branch
        %130 = sbr.rel (%p128) target = $region28
      $region27: #{block35_forward.5} parent=23 // pred_region
        %s131 = smul.u32 4, %s9
        %p132 = scmp.lt.s32.totalorder %s131, 15
        %s133 = scalar_select %p132, %s131, 15
        %s134 = smul.addr %s133, 3
        %s135 = smul.addr %s134, 4
        %s136 = scalar_lea.vmem %s0, %s135
        %s137 = smul.u32 4, %s9
      $region28: #{block35_forward.5} parent=23 // pred_fallthru
        _
    $region24: #{block35_forward.5} parent=5 // pred_fallthru
      _
    %p138 = scmp.le.s32.totalorder 1, %s9
    %p139 = scmp.lt.s32.totalorder %s9, 5
    %p140 = pnand %p138, %p139
    %p141 = pneg %p140
    // Predicated region
    $region29: #{block35_forward.5} parent=5 // pred_check
      _
    $region30: #{block35_forward.5} parent=5 // pred_check_branch
      %143 = sbr.rel (%p140) target = $region32
    $region31: #{block35_forward.5} parent=5 // pred_region
      %s144 = ssub.s32 %s9, 1
      %s145 = smul.u32 4, %s14
      %p146 = scmp.lt.s32.totalorder %s145, 15
      %s147 = scalar_select %p146, %s145, 15
      %s148 = smul.addr %s147, 3
      %s149 = smul.addr %s148, 4
      %s150 = scalar_lea.vmem %s0, %s149
      %p151 = pneg %p35
      %p152 = pneg %p32
      %p153 = pneg %p56
      %p154 = pneg %p53
      %p155 = pneg %p77
      %p156 = pneg %p74
      %p157 = pneg %p103
      %p158 = pneg %p100
      %s159 = smul.u32 4, %s14
      %p160 = scmp.lt.s32.totalorder %s159, 15
      %s161 = scalar_select %p160, %s159, 15
      %s162 = smul.addr %s161, 4
      %s163 = scalar_lea.vmem %s3, %s162
      %s164 = smul.u32 4, %s14
      %p165 = scmp.lt.s32.totalorder %s164, 15
      %s166 = scalar_select %p165, %s164, 15
      %s167 = smul.addr %s166, 3
      %s168 = smul.addr %s167, 4
      %s169 = scalar_lea.vmem %s0, %s168
      %s170 = smul.u32 4, %s14
      %s171 = smul.u32 4, %s14
      %p172 = scmp.lt.s32.totalorder %s171, 15
      %s173 = scalar_select %p172, %s171, 15
      %s174 = smul.addr %s173, 4
      %s175 = scalar_lea.vmem %s3, %s174
      %s176 = smul.u32 4, %s14
      %v178 = vld [vmem:[%s169] sm:$0xff]
      %v179 = vld [vmem:[%s169 + $0x8] sm:$0xf]
      %v180 = vld [vmem:[%s169 + $0xc] sm:$0xff]
      %v181 = vld [vmem:[%s169 + $0x14] sm:$0xf]
      %v182 = vld [vmem:[%s169 + $0x18] sm:$0xff]
      %v183 = vld [vmem:[%s169 + $0x20] sm:$0xf]
      %v184 = vld [vmem:[%s169 + $0x24] sm:$0xff]
      %v185 = vld [vmem:[%s169 + $0x2c] sm:$0xf]
      %v186 = vld [vmem:[%s1] sm:$0xf]
      %v187 = vld [vmem:[%s1 + $0x4] sm:$0xf]
      %v188 = vld [vmem:[%s1 + $0x8] sm:$0xf]
      %v189 = vld [vmem:[%s1 + $0xc] sm:$0xf]
      %v190 = vld [vmem:[%s1 + $0x10] sm:$0xf]
      %v191 = vld [vmem:[%s1 + $0x14] sm:$0xf]
      %v192 = vld [vmem:[%s1 + $0x18] sm:$0xf]
      %v193 = vld [vmem:[%s1 + $0x1c] sm:$0xf]
      %v194 = vld [vmem:[%s1 + $0x20] sm:$0xf]
      %v195 = vld [vmem:[%s1 + $0x24] sm:$0xf]
      %v196 = vld [vmem:[%s1 + $0x28] sm:$0xf]
      %v197 = vld [vmem:[%s1 + $0x2c] sm:$0xf]
      %v198 = vld [vmem:[%s1 + $0x30] sm:$0xf]
      %v199 = vld [vmem:[%s1 + $0x34] sm:$0xf]
      %v200 = vld [vmem:[%s1 + $0x38] sm:$0xf]
      %v201 = vld [vmem:[%s1 + $0x3c] sm:$0xf]
      %v202 = vld [vmem:[%s1 + $0x40] sm:$0xf]
      %v203 = vld [vmem:[%s1 + $0x44] sm:$0xf]
      %v204 = vld [vmem:[%s1 + $0x48] sm:$0xf]
      %v205 = vld [vmem:[%s1 + $0x4c] sm:$0xf]
      %v206 = vld [vmem:[%s1 + $0x50] sm:$0xf]
      %v207 = vld [vmem:[%s1 + $0x54] sm:$0xf]
      %v208 = vld [vmem:[%s1 + $0x58] sm:$0xf]
      %v209 = vld [vmem:[%s1 + $0x5c] sm:$0xf]
      %v210 = vld [vmem:[%s1 + $0x60] sm:$0xf]
      %v211 = vld [vmem:[%s1 + $0x64] sm:$0xf]
      %v212 = vld [vmem:[%s1 + $0x68] sm:$0xf]
      %v213 = vld [vmem:[%s1 + $0x6c] sm:$0xf]
      %v214 = vld [vmem:[%s1 + $0x70] sm:$0xf]
      %v215 = vld [vmem:[%s1 + $0x74] sm:$0xf]
      %v216 = vld [vmem:[%s1 + $0x78] sm:$0xf]
      %v217 = vld [vmem:[%s1 + $0x7c] sm:$0xf]
      %v218 = vld [vmem:[%s1 + $0x80] sm:$0xf]
      %v219 = vld [vmem:[%s1 + $0x84] sm:$0xf]
      %v220 = vld [vmem:[%s1 + $0x88] sm:$0xf]
      %v221 = vld [vmem:[%s1 + $0x8c] sm:$0xf]
      %v222 = vld [vmem:[%s1 + $0x90] sm:$0xf]
      %v223 = vld [vmem:[%s1 + $0x94] sm:$0xf]
      %v224 = vld [vmem:[%s1 + $0x98] sm:$0xf]
      %v225 = vld [vmem:[%s1 + $0x9c] sm:$0xf]
      %v226 = vld [vmem:[%s2] sm:$0x1]
      %v228 = vperm.slane %v226, 0
      %v238 = vunpack.c.l.b16 %v178
      %v239 = vunpack.c.h.b16 %v178
      %v240 = vunpack.c.l.b16 %v179
      %v241 = vunpack.c.l.b16 %v180
      %v242 = vunpack.c.h.b16 %v180
      %v243 = vunpack.c.l.b16 %v181
      %v244 = vunpack.c.l.b16 %v182
      %v245 = vunpack.c.h.b16 %v182
      %v246 = vunpack.c.l.b16 %v183
      %v247 = vunpack.c.l.b16 %v184
      %v248 = vunpack.c.h.b16 %v184
      %v249 = vunpack.c.l.b16 %v185
      %v250 = vpack.c.b16 %v241, %v238
      %v251 = vpack.c.b16 %v242, %v239
      %v252 = vpack.c.b16 %v243, %v240
      %v253 = vpack.c.b16 %v247, %v244
      %v254 = vpack.c.b16 %v248, %v245
      %v255 = vpack.c.b16 %v249, %v246
      %v300 = vunpack.c.l.b16 %v186
      %v301 = vunpack.c.l.b16 %v187
      %v302 = vunpack.c.l.b16 %v188
      %v303 = vunpack.c.l.b16 %v189
      %v304 = vunpack.c.l.b16 %v190
      %v305 = vunpack.c.l.b16 %v191
      %v306 = vunpack.c.l.b16 %v192
      %v307 = vunpack.c.l.b16 %v193
      %v308 = vunpack.c.l.b16 %v194
      %v309 = vunpack.c.l.b16 %v195
      %v310 = vunpack.c.l.b16 %v196
      %v311 = vunpack.c.l.b16 %v197
      %v312 = vunpack.c.l.b16 %v198
      %v313 = vunpack.c.l.b16 %v199
      %v314 = vunpack.c.l.b16 %v200
      %v315 = vunpack.c.l.b16 %v201
      %v316 = vunpack.c.l.b16 %v202
      %v317 = vunpack.c.l.b16 %v203
      %v318 = vunpack.c.l.b16 %v204
      %v319 = vunpack.c.l.b16 %v205
      %v320 = vunpack.c.l.b16 %v206
      %v321 = vunpack.c.l.b16 %v207
      %v322 = vunpack.c.l.b16 %v208
      %v323 = vunpack.c.l.b16 %v209
      %v324 = vunpack.c.l.b16 %v210
      %v325 = vunpack.c.l.b16 %v211
      %v326 = vunpack.c.l.b16 %v212
      %v327 = vunpack.c.l.b16 %v213
      %v328 = vunpack.c.l.b16 %v214
      %v329 = vunpack.c.l.b16 %v215
      %v330 = vunpack.c.l.b16 %v216
      %v331 = vunpack.c.l.b16 %v217
      %v332 = vunpack.c.l.b16 %v218
      %v333 = vunpack.c.l.b16 %v219
      %v334 = vunpack.c.l.b16 %v220
      %v335 = vunpack.c.l.b16 %v221
      %v336 = vunpack.c.l.b16 %v222
      %v337 = vunpack.c.l.b16 %v223
      %v338 = vunpack.c.l.b16 %v224
      %v339 = vunpack.c.l.b16 %v225
      %v340 = vpack.c.b16 %v301, %v300
      %v341 = vpack.c.b16 %v303, %v302
      %v342 = vpack.c.b16 %v305, %v304
      %v343 = vpack.c.b16 %v307, %v306
      %v344 = vpack.c.b16 %v309, %v308
      %v345 = vpack.c.b16 %v311, %v310
      %v346 = vpack.c.b16 %v313, %v312
      %v347 = vpack.c.b16 %v315, %v314
      %v348 = vpack.c.b16 %v317, %v316
      %v349 = vpack.c.b16 %v319, %v318
      %v350 = vpack.c.b16 %v321, %v320
      %v351 = vpack.c.b16 %v323, %v322
      %v352 = vpack.c.b16 %v325, %v324
      %v353 = vpack.c.b16 %v327, %v326
      %v354 = vpack.c.b16 %v329, %v328
      %v355 = vpack.c.b16 %v331, %v330
      %v356 = vpack.c.b16 %v333, %v332
      %v357 = vpack.c.b16 %v335, %v334
      %v358 = vpack.c.b16 %v337, %v336
      %v359 = vpack.c.b16 %v339, %v338
      %vm380 = vcmask 523264
      %v382 = vsel %vm380, %v252, 0
      %v385 = vsel %vm380, %v255, 0
      %387 = vmatpush.bf16.msra.mxu0 %v347
      %388 = vmatpush.bf16.msra.mxu0 %v346
      %389 = vmatpush.bf16.msra.mxu0 %v345
      %390 = vmatpush.bf16.msra.mxu0 %v344
      %391 = vmatpush.bf16.msra.mxu0 %v343
      %392 = vmatpush.bf16.msra.mxu0 %v342
      %393 = vmatpush.bf16.msra.mxu0 %v341
      %394 = vmatpush.bf16.msra.mxu0 %v340
      %395 = vmatmul.bf16.gmra.mxu0 %v250
      %v396 = vpop.f32.mrf.mxu0
      %v397 = vadd.f32 %v228, %v396
      %v398 = vpop.f32.mrf.mxu0
      %v399 = vadd.f32 %v228, %v398
      %400 = vmatmul.bf16.gmra.mxu0 %v253
      %v401 = vpop.f32.mrf.mxu0
      %v402 = vadd.f32 %v228, %v401
      %v403 = vpop.f32.mrf.mxu0
      %v404 = vadd.f32 %v228, %v403
      %405 = vdwg.mxu0
      %406 = vmatpush.bf16.msra.mxu0 %v355
      %407 = vmatpush.bf16.msra.mxu0 %v354
      %408 = vmatpush.bf16.msra.mxu0 %v353
      %409 = vmatpush.bf16.msra.mxu0 %v352
      %410 = vmatpush.bf16.msra.mxu0 %v351
      %411 = vmatpush.bf16.msra.mxu0 %v350
      %412 = vmatpush.bf16.msra.mxu0 %v349
      %413 = vmatpush.bf16.msra.mxu0 %v348
      %414 = vmatmul.bf16.gmra.mxu0 %v251
      %v415 = vpop.f32.mrf.mxu0
      %v416 = vadd.f32 %v397, %v415
      %v417 = vpop.f32.mrf.mxu0
      %v418 = vadd.f32 %v399, %v417
      %419 = vmatmul.bf16.gmra.mxu0 %v254
      %v420 = vpop.f32.mrf.mxu0
      %v421 = vadd.f32 %v402, %v420
      %v422 = vpop.f32.mrf.mxu0
      %v423 = vadd.f32 %v404, %v422
      %424 = vdwg.mxu0
      %425 = vmatpush.bf16.msra.mxu0 0
      %426 = vmatpush.bf16.msra.mxu0 0
      %427 = vmatpush.bf16.msra.mxu0 0
      %428 = vmatpush.bf16.msra.mxu0 0
      %429 = vmatpush.bf16.msra.mxu0 %v359
      %430 = vmatpush.bf16.msra.mxu0 %v358
      %431 = vmatpush.bf16.msra.mxu0 %v357
      %432 = vmatpush.bf16.msra.mxu0 %v356
      %433 = vmatmul.bf16.gmra.mxu0 %v382
      %v434 = vpop.f32.mrf.mxu0
      %v435 = vadd.f32 %v416, %v434
      %v436 = vpop.f32.mrf.mxu0
      %v437 = vadd.f32 %v418, %v436
      %438 = vmatmul.bf16.gmra.mxu0 %v385
      %v439 = vpop.f32.mrf.mxu0
      %v440 = vadd.f32 %v421, %v439
      %v441 = vpop.f32.mrf.mxu0
      %v442 = vadd.f32 %v423, %v441
      %443 = vdwg.mxu0
      %v444 = vmax.f32 %v435, 0.0
      %v445 = vmax.f32 %v437, 0.0
      %v446 = vmax.f32 %v440, 0.0
      %v447 = vmax.f32 %v442, 0.0
      %v448 = vpack.c.bf16 %v444, %v444
      %v449 = vpack.c.bf16 %v445, %v445
      %v450 = vpack.c.bf16 %v446, %v446
      %v451 = vpack.c.bf16 %v447, %v447
      %452 = vst [vmem:[%s175] sm:$0xf] %v448
      %453 = vst [vmem:[%s175 + $0x4] sm:$0xf] %v449
      %454 = vst [vmem:[%s175 + $0x8] sm:$0xf] %v450
      %455 = vst [vmem:[%s175 + $0xc] sm:$0xf] %v451
      %s456 = smul.u32 4, %s14
      %p457 = scmp.lt.s32.totalorder %s456, 15
      %s458 = scalar_select %p457, %s456, 15
      %s459 = smul.addr %s458, 4
      %s460 = scalar_lea.vmem %s3, %s459
      // Predicated region
      $region33: #{block35_forward.5} parent=31 // pred_check
        %p461 = pneg %p100
      $region34: #{block35_forward.5} parent=31 // pred_check_branch
        %463 = sbr.rel (%p461) target = $region36
      $region35: #{block35_forward.5} parent=31 // pred_region
        %s464 = smul.u32 4, %s14
      $region36: #{block35_forward.5} parent=31 // pred_fallthru
        _
    $region32: #{block35_forward.5} parent=5 // pred_fallthru
      _
    %p465 = scmp.le.s32.totalorder 2, %s9
    // Predicated region
    $region37: #{block35_forward.5} parent=5 // pred_check
      %p466 = pneg %p465
    $region38: #{block35_forward.5} parent=5 // pred_check_branch
      %468 = sbr.rel (%p466) target = $region40
    $region39: #{block35_forward.5} parent=5 // pred_region
      %s469 = ssub.s32 %s9, 2
      // Predicated region
      $region41: #{block35_forward.5} parent=39 // pred_check
        %p470 = pneg %p106
      $region42: #{block35_forward.5} parent=39 // pred_check_branch
        %472 = sbr.rel (%p470) target = $region44
      $region43: #{block35_forward.5} parent=39 // pred_region
        %s473 = smul.u32 4, %s15
        %p474 = scmp.lt.s32.totalorder %s473, 15
        %s475 = scalar_select %p474, %s473, 15
        %s476 = smul.addr %s475, 4
        %s477 = scalar_lea.vmem %s3, %s476
      $region44: #{block35_forward.5} parent=39 // pred_fallthru
        _
    $region40: #{block35_forward.5} parent=5 // pred_fallthru
      _
  $region6: #{block35_forward.5} parent=0 // loop_footer
    %s13 = sadd.s32 1, %s9
  $region7: #{block35_forward.5} parent=0 // loop_footer_branch
    %8 = sbr.rel target = $region3
  $region8: #{block35_forward.5} parent=0 // loop_exit
    _

// kernel: block35_forward.7
$region0: #{block35_forward.7}
  #allocation0 [shape = 'u32[]', space=smem, size = 0x4, offset = 0x4, fixed_abs, tag = 'smem constant byte address 0x4 - core index']
  #allocation1 [shape = 'u32[72,128]{1,0:T(1,128)}', space=vmem, size = 0x9000, scoped, tag = 'internal scratch']
  #allocation2 [shape = 'bf16[80,288]{1,0:T(8,128)(2,1)}', space=vmem, size = 0xf000, scoped, tag = 'scratch operand']
  %s0 = inlined_call_operand.vmem [shape: bf16[2,112,32], index: 0, kind: input, shape index: {}]
  %s1 = inlined_call_operand.vmem [shape: bf16[288,48], index: 1, kind: input, shape index: {}]
  %s2 = inlined_call_operand.vmem [shape: f32[1,48], index: 2, kind: input, shape index: {}]
  %s3 = inlined_call_operand.vmem [shape: bf16[2,112,48], index: 3, kind: output, shape index: {}]
  %s4 = sld [smem:[#allocation0]]
  $region45: #{block35_forward.7} parent=0
    _
  %s6 = ssub.s32 1, %s4
  %s7 = scalar_select 0, %s6, %s4
  loop: start=0, step=1, limit=4
  $region2: #{block35_forward.7} parent=0 // loop_pre_header
    _
  $region3: #{block35_forward.7} parent=0 // loop_header
    %s9 = sphi 0, %s13
    %p10 = scmp.ge.s32.totalorder %s9, 4
    %s19 = sphi 0, %s21
    %s22 = sphi 0, %s19
    %s23 = sphi 0, %s22
    %s39 = sphi 0, %s23
    %s43 = sphi 0, %s43
    %s45 = sphi 0, %s43
    %s46 = sphi 0, %s45
    %s60 = sphi 0, %s46
    %s64 = sphi 0, %s64
    %s66 = sphi 0, %s64
    %s67 = sphi 0, %s66
    %s81 = sphi 0, %s67
    %s87 = sphi 0, %s89
    %s90 = sphi 0, %s87
    %s91 = sphi 0, %s90
    %s107 = sphi 0, %s91
  $region4: #{block35_forward.7} parent=0 // loop_header_branch
    %12 = sbr.rel (%p10) target = $region8
  $region5: #{block35_forward.7} parent=0 // loop_body
    %s14 = ssub.s32 %s9, 1
    %s15 = ssub.s32 %s9, 2
    %s16 = sadd.s32 %s9, 1
    %s17 = ssub.s32 %s9, %s16
    %p18 = scmp.eq.s32.totalorder %s17, 0
    %s20 = sadd.s32 %s19, 1
    %s21 = scalar_select %p18, %s19, %s20
    %p24 = pneg %p18
    %p25 = scmp.eq.s32.totalorder %s9, 1
    %p26 = por %p24, %p25
    %p27 = scmp.ne.s32.totalorder %s19, %s22
    %p28 = scmp.eq.s32.totalorder %s9, 0
    %p29 = por %p27, %p28
    %p30 = scmp.ne.s32.totalorder %s19, %s22
    %p31 = scmp.eq.s32.totalorder %s14, 1
    %p32 = por %p30, %p31
    %p33 = scmp.ne.s32.totalorder %s22, %s23
    %p34 = scmp.eq.s32.totalorder %s14, 0
    %p35 = por %p33, %p34
    %p36 = scmp.ne.s32.totalorder %s22, %s23
    %p37 = scmp.eq.s32.totalorder %s15, 1
    %p38 = por %p36, %p37
    %p40 = scmp.ne.s32.totalorder %s23, %s39
    %p41 = scmp.eq.s32.totalorder %s15, 0
    %p42 = por %p40, %p41
    %s44 = sadd.s32 %s43, 1
    %p47 = scmp.eq.s32.totalorder %s9, 1
    %p48 = scmp.ne.s32.totalorder %s43, %s45
    %p49 = scmp.eq.s32.totalorder %s9, 0
    %p50 = por %p48, %p49
    %p51 = scmp.ne.s32.totalorder %s43, %s45
    %p52 = scmp.eq.s32.totalorder %s14, 1
    %p53 = por %p51, %p52
    %p54 = scmp.ne.s32.totalorder %s45, %s46
    %p55 = scmp.eq.s32.totalorder %s14, 0
    %p56 = por %p54, %p55
    %p57 = scmp.ne.s32.totalorder %s45, %s46
    %p58 = scmp.eq.s32.totalorder %s15, 1
    %p59 = por %p57, %p58
    %p61 = scmp.ne.s32.totalorder %s46, %s60
    %p62 = scmp.eq.s32.totalorder %s15, 0
    %p63 = por %p61, %p62
    %s65 = sadd.s32 %s64, 1
    %p68 = scmp.eq.s32.totalorder %s9, 1
    %p69 = scmp.ne.s32.totalorder %s64, %s66
    %p70 = scmp.eq.s32.totalorder %s9, 0
    %p71 = por %p69, %p70
    %p72 = scmp.ne.s32.totalorder %s64, %s66
    %p73 = scmp.eq.s32.totalorder %s14, 1
    %p74 = por %p72, %p73
    %p75 = scmp.ne.s32.totalorder %s66, %s67
    %p76 = scmp.eq.s32.totalorder %s14, 0
    %p77 = por %p75, %p76
    %p78 = scmp.ne.s32.totalorder %s66, %s67
    %p79 = scmp.eq.s32.totalorder %s15, 1
    %p80 = por %p78, %p79
    %p82 = scmp.ne.s32.totalorder %s67, %s81
    %p83 = scmp.eq.s32.totalorder %s15, 0
    %p84 = por %p82, %p83
    %s85 = ssub.s32 %s9, %s16
    %p86 = scmp.eq.s32.totalorder %s85, 0
    %s88 = sadd.s32 %s87, 1
    %s89 = scalar_select %p86, %s87, %s88
    %p92 = pneg %p86
    %p93 = scmp.eq.s32.totalorder %s9, 1
    %p94 = por %p92, %p93
    %p95 = scmp.ne.s32.totalorder %s87, %s90
    %p96 = scmp.eq.s32.totalorder %s9, 0
    %p97 = por %p95, %p96
    %p98 = scmp.ne.s32.totalorder %s87, %s90
    %p99 = scmp.eq.s32.totalorder %s14, 1
    %p100 = por %p98, %p99
    %p101 = scmp.ne.s32.totalorder %s90, %s91
    %p102 = scmp.eq.s32.totalorder %s14, 0
    %p103 = por %p101, %p102
    %p104 = scmp.ne.s32.totalorder %s90, %s91
    %p105 = scmp.eq.s32.totalorder %s15, 1
    %p106 = por %p104, %p105
    %p108 = scmp.ne.s32.totalorder %s91, %s107
    %p109 = scmp.eq.s32.totalorder %s15, 0
    %p110 = por %p108, %p109
    %p111 = scmp.le.s32.totalorder 1, %s9
    %p112 = scmp.lt.s32.totalorder %s9, 3
    %p113 = pnand %p111, %p112
    %p114 = pneg %p113
    // Predicated region
    $region9: #{block35_forward.7} parent=5 // pred_check
      _
    $region10: #{block35_forward.7} parent=5 // pred_check_branch
      %116 = sbr.rel (%p113) target = $region12
    $region11: #{block35_forward.7} parent=5 // pred_region
      %s117 = ssub.s32 %s9, 1
      // Predicated region
      $region13: #{block35_forward.7} parent=11 // pred_check
        %p118 = pneg %p56
      $region14: #{block35_forward.7} parent=11 // pred_check_branch
        %120 = sbr.rel (%p118) target = $region16
      $region15: #{block35_forward.7} parent=11 // pred_region
        _
      $region16: #{block35_forward.7} parent=11 // pred_fallthru
        _
      // Predicated region
      $region17: #{block35_forward.7} parent=11 // pred_check
        %p121 = pneg %p77
      $region18: #{block35_forward.7} parent=11 // pred_check_branch
        %123 = sbr.rel (%p121) target = $region20
      $region19: #{block35_forward.7} parent=11 // pred_region
        _
      $region20: #{block35_forward.7} parent=11 // pred_fallthru
        _
    $region12: #{block35_forward.7} parent=5 // pred_fallthru
      _
    %p124 = scmp.lt.s32.totalorder %s9, 2
    // Predicated region
    $region21: #{block35_forward.7} parent=5 // pred_check
      %p125 = pneg %p124
    $region22: #{block35_forward.7} parent=5 // pred_check_branch
      %127 = sbr.rel (%p125) target = $region24
    $region23: #{block35_forward.7} parent=5 // pred_region
      // Predicated region
      $region25: #{block35_forward.7} parent=23 // pred_check
        %p128 = pneg %p29
      $region26: #{block35_forward.7} parent=23 // pred_check_branch
        %130 = sbr.rel (%p128) target = $region28
      $region27: #{block35_forward.7} parent=23 // pred_region
        %p131 = scmp.lt.s32.totalorder %s9, 1
        %s132 = scalar_select %p131, %s9, 1
        %s133 = smul.addr %s132, 14
        %s134 = smul.addr %s133, 4
        %s135 = scalar_lea.vmem %s0, %s134
      $region28: #{block35_forward.7} parent=23 // pred_fallthru
        _
    $region24: #{block35_forward.7} parent=5 // pred_fallthru
      _
    %p136 = scmp.le.s32.totalorder 1, %s9
    %p137 = scmp.lt.s32.totalorder %s9, 3
    %p138 = pnand %p136, %p137
    %p139 = pneg %p138
    // Predicated region
    $region29: #{block35_forward.7} parent=5 // pred_check
      _
    $region30: #{block35_forward.7} parent=5 // pred_check_branch
      %141 = sbr.rel (%p138) target = $region32
    $region31: #{block35_forward.7} parent=5 // pred_region
      %s142 = ssub.s32 %s9, 1
      %p143 = scmp.lt.s32.totalorder %s14, 1
      %s144 = scalar_select %p143, %s14, 1
      %s145 = smul.addr %s144, 14
      %s146 = smul.addr %s145, 4
      %s147 = scalar_lea.vmem %s0, %s146
      %p148 = pneg %p35
      %p149 = pneg %p32
      %p150 = pneg %p56
      %p151 = pneg %p53
      %p152 = pneg %p77
      %p153 = pneg %p74
      %p154 = pneg %p103
      %p155 = pneg %p100
      %p156 = scmp.lt.s32.totalorder %s14, 1
      %s157 = scalar_select %p156, %s14, 1
      %s158 = smul.addr %s157, 14
      %s159 = smul.addr %s158, 4
      %s160 = scalar_lea.vmem %s3, %s159
      %p161 = scmp.lt.s32.totalorder %s14, 1
      %s162 = scalar_select %p161, %s14, 1
      %s163 = smul.addr %s162, 14
      %s164 = smul.addr %s163, 4
      %s165 = scalar_lea.vmem %s0, %s164
      %p166 = scmp.lt.s32.totalorder %s14, 1
      %s167 = scalar_select %p166, %s14, 1
      %s168 = smul.addr %s167, 14
      %s169 = smul.addr %s168, 4
      %s170 = scalar_lea.vmem %s3, %s169
      %v172 = vld [vmem:[%s1] sm:$0xf]
      %v173 = vld [vmem:[%s1 + $0x4] sm:$0xf]
      %v174 = vld [vmem:[%s1 + $0x8] sm:$0xf]
      %v175 = vld [vmem:[%s1 + $0xc] sm:$0xf]
      %v176 = vld [vmem:[%s1 + $0x10] sm:$0xf]
      %v177 = vld [vmem:[%s1 + $0x14] sm:$0xf]
      %v178 = vld [vmem:[%s1 + $0x18] sm:$0xf]
      %v179 = vld [vmem:[%s1 + $0x1c] sm:$0xf]
      %v180 = vld [vmem:[%s1 + $0x20] sm:$0xf]
      %v181 = vld [vmem:[%s1 + $0x24] sm:$0xf]
      %v182 = vld [vmem:[%s1 + $0x28] sm:$0xf]
      %v183 = vld [vmem:[%s1 + $0x2c] sm:$0xf]
      %v184 = vld [vmem:[%s1 + $0x30] sm:$0xf]
      %v185 = vld [vmem:[%s1 + $0x34] sm:$0xf]
      %v186 = vld [vmem:[%s1 + $0x38] sm:$0xf]
      %v187 = vld [vmem:[%s1 + $0x3c] sm:$0xf]
      %v188 = vld [vmem:[%s1 + $0x40] sm:$0xf]
      %v189 = vld [vmem:[%s1 + $0x44] sm:$0xf]
      %v190 = vld [vmem:[%s1 + $0x48] sm:$0xf]
      %v191 = vld [vmem:[%s1 + $0x4c] sm:$0xf]
      %v192 = vld [vmem:[%s1 + $0x50] sm:$0xf]
      %v193 = vld [vmem:[%s1 + $0x54] sm:$0xf]
      %v194 = vld [vmem:[%s1 + $0x58] sm:$0xf]
      %v195 = vld [vmem:[%s1 + $0x5c] sm:$0xf]
      %v196 = vld [vmem:[%s1 + $0x60] sm:$0xf]
      %v197 = vld [vmem:[%s1 + $0x64] sm:$0xf]
      %v198 = vld [vmem:[%s1 + $0x68] sm:$0xf]
      %v199 = vld [vmem:[%s1 + $0x6c] sm:$0xf]
      %v200 = vld [vmem:[%s1 + $0x70] sm:$0xf]
      %v201 = vld [vmem:[%s1 + $0x74] sm:$0xf]
      %v202 = vld [vmem:[%s1 + $0x78] sm:$0xf]
      %v203 = vld [vmem:[%s1 + $0x7c] sm:$0xf]
      %v204 = vld [vmem:[%s1 + $0x80] sm:$0xf]
      %v205 = vld [vmem:[%s1 + $0x84] sm:$0xf]
      %v206 = vld [vmem:[%s1 + $0x88] sm:$0xf]
      %v207 = vld [vmem:[%s1 + $0x8c] sm:$0xf]
      %v208 = vld [vmem:[%s2] sm:$0x1]
      %vm209 = vcmask 388096
      %210 = vst.msk [vmem:[%s170] sm:$0xf] %vm209, 0
      %211 = vst.msk [vmem:[%s170 + $0x4] sm:$0xf] %vm209, 0
      %212 = vst.msk [vmem:[%s170 + $0x30] sm:$0xf] %vm209, 0
      %213 = vst.msk [vmem:[%s170 + $0x34] sm:$0xf] %vm209, 0
      %v214 = vld [vmem:[%s165] sm:$0xc]
      %v215 = vld [vmem:[%s165 + $0x4] sm:$0xf]
      %v216 = vld [vmem:[%s165 + $0x8] sm:$0xf]
      %v217 = vld [vmem:[%s165 + $0xc] sm:$0xf]
      %v218 = vld [vmem:[%s165 + $0x10] sm:$0xf]
      %v219 = vld [vmem:[%s165 + $0x14] sm:$0xf]
      %v220 = vld [vmem:[%s165 + $0x18] sm:$0xf]
      %v221 = vld [vmem:[%s165 + $0x1c] sm:$0xf]
      %v222 = vld [vmem:[%s165 + $0x20] sm:$0xf]
      %v223 = vld [vmem:[%s165 + $0x24] sm:$0xf]
      %v224 = vld [vmem:[%s165 + $0x28] sm:$0x7]
      %vm225 = vsmask.f32 1280
      %vm226 = vsmask.f32 5392
      %vm227 = vmor %vm225, %vm226
      %v229 = vshrl.u32 %v214, 16
      %v231 = vrot.slane %v229, 6
      %v232 = vshll.u32 %v214, 16
      %v234 = vrot.slane %v232, 7
      %v235 = vor.u32 %v231, %v234
      %v236 = vrot.slane %v235, 4
      %v238 = vshrl.u32 %v215, 16
      %v240 = vrot.slane %v238, 6
      %v241 = vshll.u32 %v215, 16
      %v243 = vrot.slane %v241, 7
      %v244 = vor.u32 %v240, %v243
      %v245 = vsel %vm227, %v236, %v244
      %v246 = vrot.slane %v244, 4
      %v248 = vshrl.u32 %v216, 16
      %v250 = vrot.slane %v248, 6
      %v251 = vshll.u32 %v216, 16
      %v253 = vrot.slane %v251, 7
      %v254 = vor.u32 %v250, %v253
      %v255 = vsel %vm227, %v246, %v254
      %v256 = vrot.slane %v254, 4
      %v258 = vshrl.u32 %v217, 16
      %v260 = vrot.slane %v258, 6
      %v261 = vshll.u32 %v217, 16
      %v263 = vrot.slane %v261, 7
      %v264 = vor.u32 %v260, %v263
      %v265 = vsel %vm227, %v256, %v264
      %v266 = vrot.slane %v264, 4
      %v268 = vshrl.u32 %v218, 16
      %v270 = vrot.slane %v268, 6
      %v271 = vshll.u32 %v218, 16
      %v273 = vrot.slane %v271, 7
      %v274 = vor.u32 %v270, %v273
      %v275 = vsel %vm227, %v266, %v274
      %v276 = vrot.slane %v274, 4
      %v278 = vshrl.u32 %v219, 16
      %v280 = vrot.slane %v278, 6
      %v281 = vshll.u32 %v219, 16
      %v283 = vrot.slane %v281, 7
      %v284 = vor.u32 %v280, %v283
      %v285 = vsel %vm227, %v276, %v284
      %v286 = vrot.slane %v284, 4
      %v288 = vshrl.u32 %v220, 16
      %v290 = vrot.slane %v288, 6
      %v291 = vshll.u32 %v220, 16
      %v293 = vrot.slane %v291, 7
      %v294 = vor.u32 %v290, %v293
      %v295 = vsel %vm227, %v286, %v294
      %v296 = vrot.slane %v294, 4
      %v298 = vshrl.u32 %v221, 16
      %v300 = vrot.slane %v298, 6
      %v301 = vshll.u32 %v221, 16
      %v303 = vrot.slane %v301, 7
      %v304 = vor.u32 %v300, %v303
      %v305 = vsel %vm227, %v296, %v304
      %v306 = vrot.slane %v304, 4
      %v308 = vshrl.u32 %v222, 16
      %v310 = vrot.slane %v308, 6
      %v311 = vshll.u32 %v222, 16
      %v313 = vrot.slane %v311, 7
      %v314 = vor.u32 %v310, %v313
      %v315 = vsel %vm227, %v306, %v314
      %v316 = vrot.slane %v314, 4
      %v318 = vshrl.u32 %v223, 16
      %v320 = vrot.slane %v318, 6
      %v321 = vshll.u32 %v223, 16
      %v323 = vrot.slane %v321, 7
      %v324 = vor.u32 %v320, %v323
      %v325 = vsel %vm227, %v316, %v324
      %v326 = vrot.slane %v324, 4
      %v328 = vshrl.u32 %v224, 16
      %v330 = vrot.slane %v328, 6
      %v331 = vshll.u32 %v224, 16
      %v333 = vrot.slane %v331, 7
      %v334 = vor.u32 %v330, %v333
      %v335 = vsel %vm227, %v326, %v334
      %vm346 = vcmask 257024
      %347 = vst.msk [vmem:[#allocation2] sm:$0xf] %vm346, %v245
      %348 = vst.msk [vmem:[#allocation2 + $0xc] sm:$0xf] %vm346, %v255
      %349 = vst.msk [vmem:[#allocation2 + $0x18] sm:$0xf] %vm346, %v265
      %350 = vst.msk [vmem:[#allocation2 + $0x24] sm:$0xf] %vm346, %v275
      %351 = vst.msk [vmem:[#allocation2 + $0x30] sm:$0xf] %vm346, %v285
      %352 = vst.msk [vmem:[#allocation2 + $0x3c] sm:$0xf] %vm346, %v295
      %353 = vst.msk [vmem:[#allocation2 + $0x48] sm:$0xf] %vm346, %v305
      %354 = vst.msk [vmem:[#allocation2 + $0x54] sm:$0xf] %vm346, %v315
      %355 = vst.msk [vmem:[#allocation2 + $0x60] sm:$0xf] %vm346, %v325
      %356 = vst.msk [vmem:[#allocation2 + $0x6c] sm:$0xf] %vm346, %v335
      %v357 = vld [vmem:[%s165] sm:$0x8]
      %v358 = vld [vmem:[%s165 + $0x4] sm:$0xf]
      %v359 = vld [vmem:[%s165 + $0x8] sm:$0xf]
      %v360 = vld [vmem:[%s165 + $0xc] sm:$0xf]
      %v361 = vld [vmem:[%s165 + $0x10] sm:$0xf]
      %v362 = vld [vmem:[%s165 + $0x14] sm:$0xf]
      %v363 = vld [vmem:[%s165 + $0x18] sm:$0xf]
      %v364 = vld [vmem:[%s165 + $0x1c] sm:$0xf]
      %v365 = vld [vmem:[%s165 + $0x20] sm:$0xf]
      %v366 = vld [vmem:[%s165 + $0x24] sm:$0xf]
      %v367 = vld [vmem:[%s165 + $0x28] sm:$0x7]
      %vm379 = vcmask 1040384
      %vm380 = vcmask 1044484
      %vm381 = vmor %vm379, %vm380
      %v382 = vrot.slane %v357, 7
      %v383 = vrot.slane %v382, 4
      %v384 = vrot.slane %v358, 7
      %v385 = vsel %vm381, %v383, %v384
      %v386 = vrot.slane %v384, 4
      %v387 = vrot.slane %v359, 7
      %v388 = vsel %vm381, %v386, %v387
      %v389 = vrot.slane %v387, 4
      %v390 = vrot.slane %v360, 7
      %v391 = vsel %vm381, %v389, %v390
      %v392 = vrot.slane %v390, 4
      %v393 = vrot.slane %v361, 7
      %v394 = vsel %vm381, %v392, %v393
      %v395 = vrot.slane %v393, 4
      %v396 = vrot.slane %v362, 7
      %v397 = vsel %vm381, %v395, %v396
      %v398 = vrot.slane %v396, 4
      %v399 = vrot.slane %v363, 7
      %v400 = vsel %vm381, %v398, %v399
      %v401 = vrot.slane %v399, 4
      %v402 = vrot.slane %v364, 7
      %v403 = vsel %vm381, %v401, %v402
      %v404 = vrot.slane %v402, 4
      %v405 = vrot.slane %v365, 7
      %v406 = vsel %vm381, %v404, %v405
      %v407 = vrot.slane %v405, 4
      %v408 = vrot.slane %v366, 7
      %v409 = vsel %vm381, %v407, %v408
      %v410 = vrot.slane %v408, 4
      %v411 = vrot.slane %v367, 7
      %v412 = vsel %vm381, %v410, %v411
      %413 = vrot.lane.b32.xlu0 %v385, 32
      %v414 = vpop.permute.xlu0 %413
      %415 = vrot.lane.b32.xlu0 %v388, 32
      %v416 = vpop.permute.xlu0 %415
      %417 = vrot.lane.b32.xlu0 %v391, 32
      %v418 = vpop.permute.xlu0 %417
      %419 = vrot.lane.b32.xlu0 %v394, 32
      %v420 = vpop.permute.xlu0 %419
      %421 = vrot.lane.b32.xlu0 %v397, 32
      %v422 = vpop.permute.xlu0 %421
      %423 = vrot.lane.b32.xlu0 %v400, 32
      %v424 = vpop.permute.xlu0 %423
      %425 = vrot.lane.b32.xlu0 %v403, 32
      %v426 = vpop.permute.xlu0 %425
      %427 = vrot.lane.b32.xlu0 %v406, 32
      %v428 = vpop.permute.xlu0 %427
      %429 = vrot.lane.b32.xlu0 %v409, 32
      %v430 = vpop.permute.xlu0 %429
      %431 = vrot.lane.b32.xlu0 %v412, 32
      %v432 = vpop.permute.xlu0 %431
      %vm443 = vcmask 519424
      %444 = vst.msk [vmem:[#allocation2] sm:$0xf] %vm443, %v414
      %445 = vst.msk [vmem:[#allocation2 + $0xc] sm:$0xf] %vm443, %v416
      %446 = vst.msk [vmem:[#allocation2 + $0x18] sm:$0xf] %vm443, %v418
      %447 = vst.msk [vmem:[#allocation2 + $0x24] sm:$0xf] %vm443, %v420
      %448 = vst.msk [vmem:[#allocation2 + $0x30] sm:$0xf] %vm443, %v422
      %449 = vst.msk [vmem:[#allocation2 + $0x3c] sm:$0xf] %vm443, %v424
      %450 = vst.msk [vmem:[#allocation2 + $0x48] sm:$0xf] %vm443, %v426
      %451 = vst.msk [vmem:[#allocation2 + $0x54] sm:$0xf] %vm443, %v428
      %452 = vst.msk [vmem:[#allocation2 + $0x60] sm:$0xf] %vm443, %v430
      %453 = vst.msk [vmem:[#allocation2 + $0x6c] sm:$0xf] %vm443, %v432
      %v454 = vld [vmem:[%s165] sm:$0x8]
      %v455 = vld [vmem:[%s165 + $0x4] sm:$0xf]
      %v456 = vld [vmem:[%s165 + $0x8] sm:$0xf]
      %v457 = vld [vmem:[%s165 + $0xc] sm:$0xf]
      %v458 = vld [vmem:[%s165 + $0x10] sm:$0xf]
      %v459 = vld [vmem:[%s165 + $0x14] sm:$0xf]
      %v460 = vld [vmem:[%s165 + $0x18] sm:$0xf]
      %v461 = vld [vmem:[%s165 + $0x1c] sm:$0xf]
      %v462 = vld [vmem:[%s165 + $0x20] sm:$0xf]
      %v463 = vld [vmem:[%s165 + $0x24] sm:$0xf]
      %v464 = vld [vmem:[%s165 + $0x28] sm:$0xf]
      %vm465 = vsmask.f32 256
      %vm466 = vsmask.f32 4368
      %vm467 = vmor %vm465, %vm466
      %v469 = vshrl.u32 %v454, 16
      %v471 = vrot.slane %v469, 7
      %v472 = vrot.slane %v471, 4
      %v474 = vshrl.u32 %v455, 16
      %v476 = vrot.slane %v474, 7
      %v477 = vshll.u32 %v455, 16
      %v479 = vor.u32 %v476, %v477
      %v480 = vsel %vm467, %v472, %v479
      %v481 = vrot.slane %v476, 4
      %v483 = vshrl.u32 %v456, 16
      %v485 = vrot.slane %v483, 7
      %v486 = vshll.u32 %v456, 16
      %v488 = vor.u32 %v485, %v486
      %v489 = vsel %vm467, %v481, %v488
      %v490 = vrot.slane %v485, 4
      %v492 = vshrl.u32 %v457, 16
      %v494 = vrot.slane %v492, 7
      %v495 = vshll.u32 %v457, 16
      %v497 = vor.u32 %v494, %v495
      %v498 = vsel %vm467, %v490, %v497
      %v499 = vrot.slane %v494, 4
      %v501 = vshrl.u32 %v458, 16
      %v503 = vrot.slane %v501, 7
      %v504 = vshll.u32 %v458, 16
      %v506 = vor.u32 %v503, %v504
      %v507 = vsel %vm467, %v499, %v506
      %v508 = vrot.slane %v503, 4
      %v510 = vshrl.u32 %v459, 16
      %v512 = vrot.slane %v510, 7
      %v513 = vshll.u32 %v459, 16
      %v515 = vor.u32 %v512, %v513
      %v516 = vsel %vm467, %v508, %v515
      %v517 = vrot.slane %v512, 4
      %v519 = vshrl.u32 %v460, 16
      %v521 = vrot.slane %v519, 7
      %v522 = vshll.u32 %v460, 16
      %v524 = vor.u32 %v521, %v522
      %v525 = vsel %vm467, %v517, %v524
      %v526 = vrot.slane %v521, 4
      %v528 = vshrl.u32 %v461, 16
      %v530 = vrot.slane %v528, 7
      %v531 = vshll.u32 %v461, 16
      %v533 = vor.u32 %v530, %v531
      %v534 = vsel %vm467, %v526, %v533
      %v535 = vrot.slane %v530, 4
      %v537 = vshrl.u32 %v462, 16
      %v539 = vrot.slane %v537, 7
      %v540 = vshll.u32 %v462, 16
      %v542 = vor.u32 %v539, %v540
      %v543 = vsel %vm467, %v535, %v542
      %v544 = vrot.slane %v539, 4
      %v546 = vshrl.u32 %v463, 16
      %v548 = vrot.slane %v546, 7
      %v549 = vshll.u32 %v463, 16
      %v551 = vor.u32 %v548, %v549
      %v552 = vsel %vm467, %v544, %v551
      %v553 = vrot.slane %v548, 4
      %v555 = vshrl.u32 %v464, 16
      %v557 = vrot.slane %v555, 7
      %v558 = vshll.u32 %v464, 16
      %v560 = vor.u32 %v557, %v558
      %v561 = vsel %vm467, %v553, %v560
      %562 = vrot.lane.b32.xlu0 %v480, 64
      %v563 = vpop.permute.xlu0 %562
      %564 = vrot.lane.b32.xlu0 %v489, 64
      %v565 = vpop.permute.xlu0 %564
      %566 = vrot.lane.b32.xlu0 %v498, 64
      %v567 = vpop.permute.xlu0 %566
      %568 = vrot.lane.b32.xlu0 %v507, 64
      %v569 = vpop.permute.xlu0 %568
      %570 = vrot.lane.b32.xlu0 %v516, 64
      %v571 = vpop.permute.xlu0 %570
      %572 = vrot.lane.b32.xlu0 %v525, 64
      %v573 = vpop.permute.xlu0 %572
      %574 = vrot.lane.b32.xlu0 %v534, 64
      %v575 = vpop.permute.xlu0 %574
      %576 = vrot.lane.b32.xlu0 %v543, 64
      %v577 = vpop.permute.xlu0 %576
      %578 = vrot.lane.b32.xlu0 %v552, 64
      %v579 = vpop.permute.xlu0 %578
      %580 = vrot.lane.b32.xlu0 %v561, 64
      %v581 = vpop.permute.xlu0 %580
      %vm592 = vcmask 781824
      %593 = vst.msk [vmem:[#allocation2] sm:$0xf] %vm592, %v563
      %594 = vst.msk [vmem:[#allocation2 + $0xc] sm:$0xf] %vm592, %v565
      %595 = vst.msk [vmem:[#allocation2 + $0x18] sm:$0xf] %vm592, %v567
      %596 = vst.msk [vmem:[#allocation2 + $0x24] sm:$0xf] %vm592, %v569
      %597 = vst.msk [vmem:[#allocation2 + $0x30] sm:$0xf] %vm592, %v571
      %598 = vst.msk [vmem:[#allocation2 + $0x3c] sm:$0xf] %vm592, %v573
      %599 = vst.msk [vmem:[#allocation2 + $0x48] sm:$0xf] %vm592, %v575
      %600 = vst.msk [vmem:[#allocation2 + $0x54] sm:$0xf] %vm592, %v577
      %601 = vst.msk [vmem:[#allocation2 + $0x60] sm:$0xf] %vm592, %v579
      %602 = vst.msk [vmem:[#allocation2 + $0x6c] sm:$0xf] %vm592, %v581
      %v603 = vld [vmem:[%s165 + $0x4] sm:$0x8]
      %v604 = vld [vmem:[%s165 + $0x8] sm:$0xf]
      %v605 = vld [vmem:[%s165 + $0xc] sm:$0xf]
      %v606 = vld [vmem:[%s165 + $0x10] sm:$0xf]
      %v607 = vld [vmem:[%s165 + $0x14] sm:$0xf]
      %v608 = vld [vmem:[%s165 + $0x18] sm:$0xf]
      %v609 = vld [vmem:[%s165 + $0x1c] sm:$0xf]
      %v610 = vld [vmem:[%s165 + $0x20] sm:$0xf]
      %v611 = vld [vmem:[%s165 + $0x24] sm:$0xf]
      %v612 = vld [vmem:[%s165 + $0x28] sm:$0xf]
      %v613 = vld [vmem:[%s165 + $0x2c] sm:$0xf]
      %v615 = vshrl.u32 %v603, 16
      %v617 = vrot.slane %v615, 7
      %v618 = vrot.slane %v617, 4
      %v620 = vshrl.u32 %v604, 16
      %v622 = vrot.slane %v620, 7
      %v623 = vshll.u32 %v604, 16
      %v625 = vor.u32 %v622, %v623
      %v626 = vsel %vm467, %v618, %v625
      %v627 = vrot.slane %v622, 4
      %v629 = vshrl.u32 %v605, 16
      %v631 = vrot.slane %v629, 7
      %v632 = vshll.u32 %v605, 16
      %v634 = vor.u32 %v631, %v632
      %v635 = vsel %vm467, %v627, %v634
      %v636 = vrot.slane %v631, 4
      %v638 = vshrl.u32 %v606, 16
      %v640 = vrot.slane %v638, 7
      %v641 = vshll.u32 %v606, 16
      %v643 = vor.u32 %v640, %v641
      %v644 = vsel %vm467, %v636, %v643
      %v645 = vrot.slane %v640, 4
      %v647 = vshrl.u32 %v607, 16
      %v649 = vrot.slane %v647, 7
      %v650 = vshll.u32 %v607, 16
      %v652 = vor.u32 %v649, %v650
      %v653 = vsel %vm467, %v645, %v652
      %v654 = vrot.slane %v649, 4
      %v656 = vshrl.u32 %v608, 16
      %v658 = vrot.slane %v656, 7
      %v659 = vshll.u32 %v608, 16
      %v661 = vor.u32 %v658, %v659
      %v662 = vsel %vm467, %v654, %v661
      %v663 = vrot.slane %v658, 4
      %v665 = vshrl.u32 %v609, 16
      %v667 = vrot.slane %v665, 7
      %v668 = vshll.u32 %v609, 16
      %v670 = vor.u32 %v667, %v668
      %v671 = vsel %vm467, %v663, %v670
      %v672 = vrot.slane %v667, 4
      %v674 = vshrl.u32 %v610, 16
      %v676 = vrot.slane %v674, 7
      %v677 = vshll.u32 %v610, 16
      %v679 = vor.u32 %v676, %v677
      %v680 = vsel %vm467, %v672, %v679
      %v681 = vrot.slane %v676, 4
      %v683 = vshrl.u32 %v611, 16
      %v685 = vrot.slane %v683, 7
      %v686 = vshll.u32 %v611, 16
      %v688 = vor.u32 %v685, %v686
      %v689 = vsel %vm467, %v681, %v688
      %v690 = vrot.slane %v685, 4
      %v692 = vshrl.u32 %v612, 16
      %v694 = vrot.slane %v692, 7
      %v695 = vshll.u32 %v612, 16
      %v697 = vor.u32 %v694, %v695
      %v698 = vsel %vm467, %v690, %v697
      %v699 = vrot.slane %v694, 4
      %v701 = vshrl.u32 %v613, 16
      %v703 = vrot.slane %v701, 7
      %v704 = vshll.u32 %v613, 16
      %v706 = vor.u32 %v703, %v704
      %v707 = vsel %vm467, %v699, %v706
      %708 = vrot.lane.b32.xlu0 %v626, 96
      %v709 = vpop.permute.xlu0 %708
      %710 = vrot.lane.b32.xlu0 %v635, 96
      %v711 = vpop.permute.xlu0 %710
      %712 = vrot.lane.b32.xlu0 %v644, 96
      %v713 = vpop.permute.xlu0 %712
      %714 = vrot.lane.b32.xlu0 %v653, 96
      %v715 = vpop.permute.xlu0 %714
      %716 = vrot.lane.b32.xlu0 %v662, 96
      %v717 = vpop.permute.xlu0 %716
      %718 = vrot.lane.b32.xlu0 %v671, 96
      %v719 = vpop.permute.xlu0 %718
      %720 = vrot.lane.b32.xlu0 %v680, 96
      %v721 = vpop.permute.xlu0 %720
      %722 = vrot.lane.b32.xlu0 %v689, 96
      %v723 = vpop.permute.xlu0 %722
      %724 = vrot.lane.b32.xlu0 %v698, 96
      %v725 = vpop.permute.xlu0 %724
      %726 = vrot.lane.b32.xlu0 %v707, 96
      %v727 = vpop.permute.xlu0 %726
      %vm738 = vcmask 1044224
      %739 = vst.msk [vmem:[#allocation2] sm:$0xf] %vm738, %v709
      %740 = vst.msk [vmem:[#allocation2 + $0xc] sm:$0xf] %vm738, %v711
      %741 = vst.msk [vmem:[#allocation2 + $0x18] sm:$0xf] %vm738, %v713
      %742 = vst.msk [vmem:[#allocation2 + $0x24] sm:$0xf] %vm738, %v715
      %743 = vst.msk [vmem:[#allocation2 + $0x30] sm:$0xf] %vm738, %v717
      %744 = vst.msk [vmem:[#allocation2 + $0x3c] sm:$0xf] %vm738, %v719
      %745 = vst.msk [vmem:[#allocation2 + $0x48] sm:$0xf] %vm738, %v721
      %746 = vst.msk [vmem:[#allocation2 + $0x54] sm:$0xf] %vm738, %v723
      %747 = vst.msk [vmem:[#allocation2 + $0x60] sm:$0xf] %vm738, %v725
      %748 = vst.msk [vmem:[#allocation2 + $0x6c] sm:$0xf] %vm738, %v727
      %v749 = vld [vmem:[%s165 + $0x8] sm:$0xf]
      %v750 = vld [vmem:[%s165 + $0xc] sm:$0xf]
      %v751 = vld [vmem:[%s165 + $0x10] sm:$0xf]
      %v752 = vld [vmem:[%s165 + $0x14] sm:$0xf]
      %v753 = vld [vmem:[%s165 + $0x18] sm:$0xf]
      %v754 = vld [vmem:[%s165 + $0x1c] sm:$0xf]
      %v755 = vld [vmem:[%s165 + $0x20] sm:$0xf]
      %v756 = vld [vmem:[%s165 + $0x24] sm:$0xf]
      %v757 = vld [vmem:[%s165 + $0x28] sm:$0xf]
      %v758 = vld [vmem:[%s165 + $0x2c] sm:$0xf]
      %759 = vst.msk [vmem:[#allocation2 + $0x4] sm:$0xf] %vm346, %v749
      %760 = vst.msk [vmem:[#allocation2 + $0x10] sm:$0xf] %vm346, %v750
      %761 = vst.msk [vmem:[#allocation2 + $0x1c] sm:$0xf] %vm346, %v751
      %762 = vst.msk [vmem:[#allocation2 + $0x28] sm:$0xf] %vm346, %v752
      %763 = vst.msk [vmem:[#allocation2 + $0x34] sm:$0xf] %vm346, %v753
      %764 = vst.msk [vmem:[#allocation2 + $0x40] sm:$0xf] %vm346, %v754
      %765 = vst.msk [vmem:[#allocation2 + $0x4c] sm:$0xf] %vm346, %v755
      %766 = vst.msk [vmem:[#allocation2 + $0x58] sm:$0xf] %vm346, %v756
      %767 = vst.msk [vmem:[#allocation2 + $0x64] sm:$0xf] %vm346, %v757
      %768 = vst.msk [vmem:[#allocation2 + $0x70] sm:$0xf] %vm346, %v758
      %v769 = vld [vmem:[%s165 + $0x8] sm:$0xf]
      %v770 = vld [vmem:[%s165 + $0xc] sm:$0xf]
      %v771 = vld [vmem:[%s165 + $0x10] sm:$0xf]
      %v772 = vld [vmem:[%s165 + $0x14] sm:$0xf]
      %v773 = vld [vmem:[%s165 + $0x18] sm:$0xf]
      %v774 = vld [vmem:[%s165 + $0x1c] sm:$0xf]
      %v775 = vld [vmem:[%s165 + $0x20] sm:$0xf]
      %v776 = vld [vmem:[%s165 + $0x24] sm:$0xf]
      %v777 = vld [vmem:[%s165 + $0x28] sm:$0xf]
      %v778 = vld [vmem:[%s165 + $0x2c] sm:$0xf]
      %v779 = vld [vmem:[%s165 + $0x30] sm:$0x1]
      %vm780 = vsmask.f32 3328
      %vm781 = vsmask.f32 7440
      %vm782 = vmor %vm780, %vm781
      %v784 = vshrl.u32 %v769, 16
      %v786 = vrot.slane %v784, 4
      %v787 = vshll.u32 %v769, 16
      %v789 = vrot.slane %v787, 5
      %v790 = vor.u32 %v786, %v789
      %v791 = vrot.slane %v790, 4
      %v793 = vshll.u32 %v770, 16
      %v795 = vrot.slane %v793, 5
      %v796 = vsel %vm782, %v791, %v795
      %v797 = vshrl.u32 %v770, 16
      %v799 = vrot.slane %v797, 4
      %v800 = vor.u32 %v799, %v795
      %v801 = vrot.slane %v800, 4
      %v803 = vshll.u32 %v771, 16
      %v805 = vrot.slane %v803, 5
      %v806 = vsel %vm782, %v801, %v805
      %v807 = vshrl.u32 %v771, 16
      %v809 = vrot.slane %v807, 4
      %v810 = vor.u32 %v809, %v805
      %v811 = vrot.slane %v810, 4
      %v813 = vshll.u32 %v772, 16
      %v815 = vrot.slane %v813, 5
      %v816 = vsel %vm782, %v811, %v815
      %v817 = vshrl.u32 %v772, 16
      %v819 = vrot.slane %v817, 4
      %v820 = vor.u32 %v819, %v815
      %v821 = vrot.slane %v820, 4
      %v823 = vshll.u32 %v773, 16
      %v825 = vrot.slane %v823, 5
      %v826 = vsel %vm782, %v821, %v825
      %v827 = vshrl.u32 %v773, 16
      %v829 = vrot.slane %v827, 4
      %v830 = vor.u32 %v829, %v825
      %v831 = vrot.slane %v830, 4
      %v833 = vshll.u32 %v774, 16
      %v835 = vrot.slane %v833, 5
      %v836 = vsel %vm782, %v831, %v835
      %v837 = vshrl.u32 %v774, 16
      %v839 = vrot.slane %v837, 4
      %v840 = vor.u32 %v839, %v835
      %v841 = vrot.slane %v840, 4
      %v843 = vshll.u32 %v775, 16
      %v845 = vrot.slane %v843, 5
      %v846 = vsel %vm782, %v841, %v845
      %v847 = vshrl.u32 %v775, 16
      %v849 = vrot.slane %v847, 4
      %v850 = vor.u32 %v849, %v845
      %v851 = vrot.slane %v850, 4
      %v853 = vshll.u32 %v776, 16
      %v855 = vrot.slane %v853, 5
      %v856 = vsel %vm782, %v851, %v855
      %v857 = vshrl.u32 %v776, 16
      %v859 = vrot.slane %v857, 4
      %v860 = vor.u32 %v859, %v855
      %v861 = vrot.slane %v860, 4
      %v863 = vshll.u32 %v777, 16
      %v865 = vrot.slane %v863, 5
      %v866 = vsel %vm782, %v861, %v865
      %v867 = vshrl.u32 %v777, 16
      %v869 = vrot.slane %v867, 4
      %v870 = vor.u32 %v869, %v865
      %v871 = vrot.slane %v870, 4
      %v873 = vshll.u32 %v778, 16
      %v875 = vrot.slane %v873, 5
      %v876 = vsel %vm782, %v871, %v875
      %v877 = vshrl.u32 %v778, 16
      %v879 = vrot.slane %v877, 4
      %v880 = vor.u32 %v879, %v875
      %v881 = vrot.slane %v880, 4
      %v883 = vshll.u32 %v779, 16
      %v885 = vrot.slane %v883, 5
      %v886 = vsel %vm782, %v881, %v885
      %887 = vrot.lane.b32.xlu0 %v796, 32
      %v888 = vpop.permute.xlu0 %887
      %889 = vrot.lane.b32.xlu0 %v806, 32
      %v890 = vpop.permute.xlu0 %889
      %891 = vrot.lane.b32.xlu0 %v816, 32
      %v892 = vpop.permute.xlu0 %891
      %893 = vrot.lane.b32.xlu0 %v826, 32
      %v894 = vpop.permute.xlu0 %893
      %895 = vrot.lane.b32.xlu0 %v836, 32
      %v896 = vpop.permute.xlu0 %895
      %897 = vrot.lane.b32.xlu0 %v846, 32
      %v898 = vpop.permute.xlu0 %897
      %899 = vrot.lane.b32.xlu0 %v856, 32
      %v900 = vpop.permute.xlu0 %899
      %901 = vrot.lane.b32.xlu0 %v866, 32
      %v902 = vpop.permute.xlu0 %901
      %903 = vrot.lane.b32.xlu0 %v876, 32
      %v904 = vpop.permute.xlu0 %903
      %905 = vrot.lane.b32.xlu0 %v886, 32
      %v906 = vpop.permute.xlu0 %905
      %917 = vst.msk [vmem:[#allocation2 + $0x4] sm:$0xf] %vm443, %v888
      %918 = vst.msk [vmem:[#allocation2 + $0x10] sm:$0xf] %vm443, %v890
      %919 = vst.msk [vmem:[#allocation2 + $0x1c] sm:$0xf] %vm443, %v892
      %920 = vst.msk [vmem:[#allocation2 + $0x28] sm:$0xf] %vm443, %v894
      %921 = vst.msk [vmem:[#allocation2 + $0x34] sm:$0xf] %vm443, %v896
      %922 = vst.msk [vmem:[#allocation2 + $0x40] sm:$0xf] %vm443, %v898
      %923 = vst.msk [vmem:[#allocation2 + $0x4c] sm:$0xf] %vm443, %v900
      %924 = vst.msk [vmem:[#allocation2 + $0x58] sm:$0xf] %vm443, %v902
      %925 = vst.msk [vmem:[#allocation2 + $0x64] sm:$0xf] %vm443, %v904
      %926 = vst.msk [vmem:[#allocation2 + $0x70] sm:$0xf] %vm443, %v906
      %v927 = vld [vmem:[%s165 + $0xc] sm:$0xf]
      %v928 = vld [vmem:[%s165 + $0x10] sm:$0xf]
      %v929 = vld [vmem:[%s165 + $0x14] sm:$0xf]
      %v930 = vld [vmem:[%s165 + $0x18] sm:$0xf]
      %v931 = vld [vmem:[%s165 + $0x1c] sm:$0xf]
      %v932 = vld [vmem:[%s165 + $0x20] sm:$0xf]
      %v933 = vld [vmem:[%s165 + $0x24] sm:$0xf]
      %v934 = vld [vmem:[%s165 + $0x28] sm:$0xf]
      %v935 = vld [vmem:[%s165 + $0x2c] sm:$0xf]
      %v936 = vld [vmem:[%s165 + $0x30] sm:$0xf]
      %v937 = vld [vmem:[%s165 + $0x34] sm:$0x1]
      %v939 = vshrl.u32 %v927, 16
      %v941 = vrot.slane %v939, 4
      %v942 = vshll.u32 %v927, 16
      %v944 = vrot.slane %v942, 5
      %v945 = vor.u32 %v941, %v944
      %v946 = vrot.slane %v945, 4
      %v948 = vshll.u32 %v928, 16
      %v950 = vrot.slane %v948, 5
      %v951 = vsel %vm782, %v946, %v950
      %v952 = vshrl.u32 %v928, 16
      %v954 = vrot.slane %v952, 4
      %v955 = vor.u32 %v954, %v950
      %v956 = vrot.slane %v955, 4
      %v958 = vshll.u32 %v929, 16
      %v960 = vrot.slane %v958, 5
      %v961 = vsel %vm782, %v956, %v960
      %v962 = vshrl.u32 %v929, 16
      %v964 = vrot.slane %v962, 4
      %v965 = vor.u32 %v964, %v960
      %v966 = vrot.slane %v965, 4
      %v968 = vshll.u32 %v930, 16
      %v970 = vrot.slane %v968, 5
      %v971 = vsel %vm782, %v966, %v970
      %v972 = vshrl.u32 %v930, 16
      %v974 = vrot.slane %v972, 4
      %v975 = vor.u32 %v974, %v970
      %v976 = vrot.slane %v975, 4
      %v978 = vshll.u32 %v931, 16
      %v980 = vrot.slane %v978, 5
      %v981 = vsel %vm782, %v976, %v980
      %v982 = vshrl.u32 %v931, 16
      %v984 = vrot.slane %v982, 4
      %v985 = vor.u32 %v984, %v980
      %v986 = vrot.slane %v985, 4
      %v988 = vshll.u32 %v932, 16
      %v990 = vrot.slane %v988, 5
      %v991 = vsel %vm782, %v986, %v990
      %v992 = vshrl.u32 %v932, 16
      %v994 = vrot.slane %v992, 4
      %v995 = vor.u32 %v994, %v990
      %v996 = vrot.slane %v995, 4
      %v998 = vshll.u32 %v933, 16
      %v1000 = vrot.slane %v998, 5
      %v1001 = vsel %vm782, %v996, %v1000
      %v1002 = vshrl.u32 %v933, 16
      %v1004 = vrot.slane %v1002, 4
      %v1005 = vor.u32 %v1004, %v1000
      %v1006 = vrot.slane %v1005, 4
      %v1008 = vshll.u32 %v934, 16
      %v1010 = vrot.slane %v1008, 5
      %v1011 = vsel %vm782, %v1006, %v1010
      %v1012 = vshrl.u32 %v934, 16
      %v1014 = vrot.slane %v1012, 4
      %v1015 = vor.u32 %v1014, %v1010
      %v1016 = vrot.slane %v1015, 4
      %v1018 = vshll.u32 %v935, 16
      %v1020 = vrot.slane %v1018, 5
      %v1021 = vsel %vm782, %v1016, %v1020
      %v1022 = vshrl.u32 %v935, 16
      %v1024 = vrot.slane %v1022, 4
      %v1025 = vor.u32 %v1024, %v1020
      %v1026 = vrot.slane %v1025, 4
      %v1028 = vshll.u32 %v936, 16
      %v1030 = vrot.slane %v1028, 5
      %v1031 = vsel %vm782, %v1026, %v1030
      %v1032 = vshrl.u32 %v936, 16
      %v1034 = vrot.slane %v1032, 4
      %v1035 = vor.u32 %v1034, %v1030
      %v1036 = vrot.slane %v1035, 4
      %v1038 = vshll.u32 %v937, 16
      %v1040 = vrot.slane %v1038, 5
      %v1041 = vsel %vm782, %v1036, %v1040
      %1042 = vrot.lane.b32.xlu0 %v951, 64
      %v1043 = vpop.permute.xlu0 %1042
      %1044 = vrot.lane.b32.xlu0 %v961, 64
      %v1045 = vpop.permute.xlu0 %1044
      %1046 = vrot.lane.b32.xlu0 %v971, 64
      %v1047 = vpop.permute.xlu0 %1046
      %1048 = vrot.lane.b32.xlu0 %v981, 64
      %v1049 = vpop.permute.xlu0 %1048
      %1050 = vrot.lane.b32.xlu0 %v991, 64
      %v1051 = vpop.permute.xlu0 %1050
      %1052 = vrot.lane.b32.xlu0 %v1001, 64
      %v1053 = vpop.permute.xlu0 %1052
      %1054 = vrot.lane.b32.xlu0 %v1011, 64
      %v1055 = vpop.permute.xlu0 %1054
      %1056 = vrot.lane.b32.xlu0 %v1021, 64
      %v1057 = vpop.permute.xlu0 %1056
      %1058 = vrot.lane.b32.xlu0 %v1031, 64
      %v1059 = vpop.permute.xlu0 %1058
      %1060 = vrot.lane.b32.xlu0 %v1041, 64
      %v1061 = vpop.permute.xlu0 %1060
      %1072 = vst.msk [vmem:[#allocation2 + $0x4] sm:$0xf] %vm592, %v1043
      %1073 = vst.msk [vmem:[#allocation2 + $0x10] sm:$0xf] %vm592, %v1045
      %1074 = vst.msk [vmem:[#allocation2 + $0x1c] sm:$0xf] %vm592, %v1047
      %1075 = vst.msk [vmem:[#allocation2 + $0x28] sm:$0xf] %vm592, %v1049
      %1076 = vst.msk [vmem:[#allocation2 + $0x34] sm:$0xf] %vm592, %v1051
      %1077 = vst.msk [vmem:[#allocation2 + $0x40] sm:$0xf] %vm592, %v1053
      %1078 = vst.msk [vmem:[#allocation2 + $0x4c] sm:$0xf] %vm592, %v1055
      %1079 = vst.msk [vmem:[#allocation2 + $0x58] sm:$0xf] %vm592, %v1057
      %1080 = vst.msk [vmem:[#allocation2 + $0x64] sm:$0xf] %vm592, %v1059
      %1081 = vst.msk [vmem:[#allocation2 + $0x70] sm:$0xf] %vm592, %v1061
      %v1082 = vld [vmem:[%s165 + $0xc] sm:$0xe]
      %v1083 = vld [vmem:[%s165 + $0x10] sm:$0xf]
      %v1084 = vld [vmem:[%s165 + $0x14] sm:$0xf]
      %v1085 = vld [vmem:[%s165 + $0x18] sm:$0xf]
      %v1086 = vld [vmem:[%s165 + $0x1c] sm:$0xf]
      %v1087 = vld [vmem:[%s165 + $0x20] sm:$0xf]
      %v1088 = vld [vmem:[%s165 + $0x24] sm:$0xf]
      %v1089 = vld [vmem:[%s165 + $0x28] sm:$0xf]
      %v1090 = vld [vmem:[%s165 + $0x2c] sm:$0xf]
      %v1091 = vld [vmem:[%s165 + $0x30] sm:$0xf]
      %v1092 = vld [vmem:[%s165 + $0x34] sm:$0x1]
      %vm1104 = vcmask 1042432
      %vm1105 = vcmask 1046532
      %vm1106 = vmor %vm1104, %vm1105
      %v1107 = vrot.slane %v1082, 5
      %v1108 = vrot.slane %v1107, 4
      %v1109 = vrot.slane %v1083, 5
      %v1110 = vsel %vm1106, %v1108, %v1109
      %v1111 = vrot.slane %v1109, 4
      %v1112 = vrot.slane %v1084, 5
      %v1113 = vsel %vm1106, %v1111, %v1112
      %v1114 = vrot.slane %v1112, 4
      %v1115 = vrot.slane %v1085, 5
      %v1116 = vsel %vm1106, %v1114, %v1115
      %v1117 = vrot.slane %v1115, 4
      %v1118 = vrot.slane %v1086, 5
      %v1119 = vsel %vm1106, %v1117, %v1118
      %v1120 = vrot.slane %v1118, 4
      %v1121 = vrot.slane %v1087, 5
      %v1122 = vsel %vm1106, %v1120, %v1121
      %v1123 = vrot.slane %v1121, 4
      %v1124 = vrot.slane %v1088, 5
      %v1125 = vsel %vm1106, %v1123, %v1124
      %v1126 = vrot.slane %v1124, 4
      %v1127 = vrot.slane %v1089, 5
      %v1128 = vsel %vm1106, %v1126, %v1127
      %v1129 = vrot.slane %v1127, 4
      %v1130 = vrot.slane %v1090, 5
      %v1131 = vsel %vm1106, %v1129, %v1130
      %v1132 = vrot.slane %v1130, 4
      %v1133 = vrot.slane %v1091, 5
      %v1134 = vsel %vm1106, %v1132, %v1133
      %v1135 = vrot.slane %v1133, 4
      %v1136 = vrot.slane %v1092, 5
      %v1137 = vsel %vm1106, %v1135, %v1136
      %1138 = vrot.lane.b32.xlu0 %v1110, 96
      %v1139 = vpop.permute.xlu0 %1138
      %1140 = vrot.lane.b32.xlu0 %v1113, 96
      %v1141 = vpop.permute.xlu0 %1140
      %1142 = vrot.lane.b32.xlu0 %v1116, 96
      %v1143 = vpop.permute.xlu0 %1142
      %1144 = vrot.lane.b32.xlu0 %v1119, 96
      %v1145 = vpop.permute.xlu0 %1144
      %1146 = vrot.lane.b32.xlu0 %v1122, 96
      %v1147 = vpop.permute.xlu0 %1146
      %1148 = vrot.lane.b32.xlu0 %v1125, 96
      %v1149 = vpop.permute.xlu0 %1148
      %1150 = vrot.lane.b32.xlu0 %v1128, 96
      %v1151 = vpop.permute.xlu0 %1150
      %1152 = vrot.lane.b32.xlu0 %v1131, 96
      %v1153 = vpop.permute.xlu0 %1152
      %1154 = vrot.lane.b32.xlu0 %v1134, 96
      %v1155 = vpop.permute.xlu0 %1154
      %1156 = vrot.lane.b32.xlu0 %v1137, 96
      %v1157 = vpop.permute.xlu0 %1156
      %1168 = vst.msk [vmem:[#allocation2 + $0x4] sm:$0xf] %vm738, %v1139
      %1169 = vst.msk [vmem:[#allocation2 + $0x10] sm:$0xf] %vm738, %v1141
      %1170 = vst.msk [vmem:[#allocation2 + $0x1c] sm:$0xf] %vm738, %v1143
      %1171 = vst.msk [vmem:[#allocation2 + $0x28] sm:$0xf] %vm738, %v1145
      %1172 = vst.msk [vmem:[#allocation2 + $0x34] sm:$0xf] %vm738, %v1147
      %1173 = vst.msk [vmem:[#allocation2 + $0x40] sm:$0xf] %vm738, %v1149
      %1174 = vst.msk [vmem:[#allocation2 + $0x4c] sm:$0xf] %vm738, %v1151
      %1175 = vst.msk [vmem:[#allocation2 + $0x58] sm:$0xf] %vm738, %v1153
      %1176 = vst.msk [vmem:[#allocation2 + $0x64] sm:$0xf] %vm738, %v1155
      %1177 = vst.msk [vmem:[#allocation2 + $0x70] sm:$0xf] %vm738, %v1157
      %v1178 = vld [vmem:[%s165 + $0xc] sm:$0xe]
      %v1179 = vld [vmem:[%s165 + $0x10] sm:$0xf]
      %v1180 = vld [vmem:[%s165 + $0x14] sm:$0xf]
      %v1181 = vld [vmem:[%s165 + $0x18] sm:$0xf]
      %v1182 = vld [vmem:[%s165 + $0x1c] sm:$0xf]
      %v1183 = vld [vmem:[%s165 + $0x20] sm:$0xf]
      %v1184 = vld [vmem:[%s165 + $0x24] sm:$0xf]
      %v1185 = vld [vmem:[%s165 + $0x28] sm:$0xf]
      %v1186 = vld [vmem:[%s165 + $0x2c] sm:$0xf]
      %v1187 = vld [vmem:[%s165 + $0x30] sm:$0xf]
      %v1188 = vld [vmem:[%s165 + $0x34] sm:$0x3]
      %vm1189 = vsmask.f32 2304
      %vm1190 = vsmask.f32 6416
      %vm1191 = vmor %vm1189, %vm1190
      %v1193 = vshrl.u32 %v1178, 16
      %v1195 = vrot.slane %v1193, 5
      %v1196 = vshll.u32 %v1178, 16
      %v1198 = vrot.slane %v1196, 6
      %v1199 = vor.u32 %v1195, %v1198
      %v1200 = vrot.slane %v1199, 4
      %v1202 = vshrl.u32 %v1179, 16
      %v1204 = vrot.slane %v1202, 5
      %v1205 = vshll.u32 %v1179, 16
      %v1207 = vrot.slane %v1205, 6
      %v1208 = vor.u32 %v1204, %v1207
      %v1209 = vsel %vm1191, %v1200, %v1208
      %v1210 = vrot.slane %v1208, 4
      %v1212 = vshrl.u32 %v1180, 16
      %v1214 = vrot.slane %v1212, 5
      %v1215 = vshll.u32 %v1180, 16
      %v1217 = vrot.slane %v1215, 6
      %v1218 = vor.u32 %v1214, %v1217
      %v1219 = vsel %vm1191, %v1210, %v1218
      %v1220 = vrot.slane %v1218, 4
      %v1222 = vshrl.u32 %v1181, 16
      %v1224 = vrot.slane %v1222, 5
      %v1225 = vshll.u32 %v1181, 16
      %v1227 = vrot.slane %v1225, 6
      %v1228 = vor.u32 %v1224, %v1227
      %v1229 = vsel %vm1191, %v1220, %v1228
      %v1230 = vrot.slane %v1228, 4
      %v1232 = vshrl.u32 %v1182, 16
      %v1234 = vrot.slane %v1232, 5
      %v1235 = vshll.u32 %v1182, 16
      %v1237 = vrot.slane %v1235, 6
      %v1238 = vor.u32 %v1234, %v1237
      %v1239 = vsel %vm1191, %v1230, %v1238
      %v1240 = vrot.slane %v1238, 4
      %v1242 = vshrl.u32 %v1183, 16
      %v1244 = vrot.slane %v1242, 5
      %v1245 = vshll.u32 %v1183, 16
      %v1247 = vrot.slane %v1245, 6
      %v1248 = vor.u32 %v1244, %v1247
      %v1249 = vsel %vm1191, %v1240, %v1248
      %v1250 = vrot.slane %v1248, 4
      %v1252 = vshrl.u32 %v1184, 16
      %v1254 = vrot.slane %v1252, 5
      %v1255 = vshll.u32 %v1184, 16
      %v1257 = vrot.slane %v1255, 6
      %v1258 = vor.u32 %v1254, %v1257
      %v1259 = vsel %vm1191, %v1250, %v1258
      %v1260 = vrot.slane %v1258, 4
      %v1262 = vshrl.u32 %v1185, 16
      %v1264 = vrot.slane %v1262, 5
      %v1265 = vshll.u32 %v1185, 16
      %v1267 = vrot.slane %v1265, 6
      %v1268 = vor.u32 %v1264, %v1267
      %v1269 = vsel %vm1191, %v1260, %v1268
      %v1270 = vrot.slane %v1268, 4
      %v1272 = vshrl.u32 %v1186, 16
      %v1274 = vrot.slane %v1272, 5
      %v1275 = vshll.u32 %v1186, 16
      %v1277 = vrot.slane %v1275, 6
      %v1278 = vor.u32 %v1274, %v1277
      %v1279 = vsel %vm1191, %v1270, %v1278
      %v1280 = vrot.slane %v1278, 4
      %v1282 = vshrl.u32 %v1187, 16
      %v1284 = vrot.slane %v1282, 5
      %v1285 = vshll.u32 %v1187, 16
      %v1287 = vrot.slane %v1285, 6
      %v1288 = vor.u32 %v1284, %v1287
      %v1289 = vsel %vm1191, %v1280, %v1288
      %v1290 = vrot.slane %v1288, 4
      %v1292 = vshrl.u32 %v1188, 16
      %v1294 = vrot.slane %v1292, 5
      %v1295 = vshll.u32 %v1188, 16
      %v1297 = vrot.slane %v1295, 6
      %v1298 = vor.u32 %v1294, %v1297
      %v1299 = vsel %vm1191, %v1290, %v1298
      %1310 = vst.msk [vmem:[#allocation2 + $0x8] sm:$0xf] %vm346, %v1209
      %1311 = vst.msk [vmem:[#allocation2 + $0x14] sm:$0xf] %vm346, %v1219
      %1312 = vst.msk [vmem:[#allocation2 + $0x20] sm:$0xf] %vm346, %v1229
      %1313 = vst.msk [vmem:[#allocation2 + $0x2c] sm:$0xf] %vm346, %v1239
      %1314 = vst.msk [vmem:[#allocation2 + $0x38] sm:$0xf] %vm346, %v1249
      %1315 = vst.msk [vmem:[#allocation2 + $0x44] sm:$0xf] %vm346, %v1259
      %1316 = vst.msk [vmem:[#allocation2 + $0x50] sm:$0xf] %vm346, %v1269
      %1317 = vst.msk [vmem:[#allocation2 + $0x5c] sm:$0xf] %vm346, %v1279
      %1318 = vst.msk [vmem:[#allocation2 + $0x68] sm:$0xf] %vm346, %v1289
      %1319 = vst.msk [vmem:[#allocation2 + $0x74] sm:$0xf] %vm346, %v1299
      %v1320 = vld [vmem:[#allocation2] sm:$0xff]
      %v1321 = vld [vmem:[#allocation2 + $0x8] sm:$0xf]
      %v1322 = vld [vmem:[#allocation2 + $0xc] sm:$0xff]
      %v1323 = vld [vmem:[#allocation2 + $0x14] sm:$0xf]
      %v1324 = vld [vmem:[#allocation2 + $0x18] sm:$0xff]
      %v1325 = vld [vmem:[#allocation2 + $0x20] sm:$0xf]
      %v1326 = vld [vmem:[#allocation2 + $0x24] sm:$0xff]
      %v1327 = vld [vmem:[#allocation2 + $0x2c] sm:$0xf]
      %v1328 = vld [vmem:[#allocation2 + $0x30] sm:$0xff]
      %v1329 = vld [vmem:[#allocation2 + $0x38] sm:$0xf]
      %v1330 = vld [vmem:[#allocation2 + $0x3c] sm:$0xff]
      %v1331 = vld [vmem:[#allocation2 + $0x44] sm:$0xf]
      %v1332 = vld [vmem:[#allocation2 + $0x48] sm:$0xff]
      %v1333 = vld [vmem:[#allocation2 + $0x50] sm:$0xf]
      %v1334 = vld [vmem:[#allocation2 + $0x54] sm:$0xff]
      %v1335 = vld [vmem:[#allocation2 + $0x5c] sm:$0xf]
      %v1336 = vld [vmem:[#allocation2 + $0x60] sm:$0xff]
      %v1337 = vld [vmem:[#allocation2 + $0x68] sm:$0xf]
      %v1338 = vld [vmem:[#allocation2 + $0x6c] sm:$0xff]
      %v1339 = vld [vmem:[#allocation2 + $0x74] sm:$0xf]
      %v1341 = vperm.slane %v208, 0
      %v1363 = vunpack.c.l.b16 %v1320
      %v1364 = vunpack.c.h.b16 %v1320
      %v1365 = vunpack.c.l.b16 %v1321
      %v1366 = vunpack.c.l.b16 %v1322
      %v1367 = vunpack.c.h.b16 %v1322
      %v1368 = vunpack.c.l.b16 %v1323
      %v1369 = vunpack.c.l.b16 %v1324
      %v1370 = vunpack.c.h.b16 %v1324
      %v1371 = vunpack.c.l.b16 %v1325
      %v1372 = vunpack.c.l.b16 %v1326
      %v1373 = vunpack.c.h.b16 %v1326
      %v1374 = vunpack.c.l.b16 %v1327
      %v1375 = vunpack.c.l.b16 %v1328
      %v1376 = vunpack.c.h.b16 %v1328
      %v1377 = vunpack.c.l.b16 %v1329
      %v1378 = vunpack.c.l.b16 %v1330
      %v1379 = vunpack.c.h.b16 %v1330
      %v1380 = vunpack.c.l.b16 %v1331
      %v1381 = vunpack.c.l.b16 %v1332
      %v1382 = vunpack.c.h.b16 %v1332
      %v1383 = vunpack.c.l.b16 %v1333
      %v1384 = vunpack.c.l.b16 %v1334
      %v1385 = vunpack.c.h.b16 %v1334
      %v1386 = vunpack.c.l.b16 %v1335
      %v1387 = vunpack.c.l.b16 %v1336
      %v1388 = vunpack.c.h.b16 %v1336
      %v1389 = vunpack.c.l.b16 %v1337
      %v1390 = vunpack.c.l.b16 %v1338
      %v1391 = vunpack.c.h.b16 %v1338
      %v1392 = vunpack.c.l.b16 %v1339
      %v1393 = vpack.c.b16 %v1366, %v1363
      %v1394 = vpack.c.b16 %v1367, %v1364
      %v1395 = vpack.c.b16 %v1368, %v1365
      %v1396 = vpack.c.b16 %v1372, %v1369
      %v1397 = vpack.c.b16 %v1373, %v1370
      %v1398 = vpack.c.b16 %v1374, %v1371
      %v1399 = vpack.c.b16 %v1378, %v1375
      %v1400 = vpack.c.b16 %v1379, %v1376
      %v1401 = vpack.c.b16 %v1380, %v1377
      %v1402 = vpack.c.b16 %v1384, %v1381
      %v1403 = vpack.c.b16 %v1385, %v1382
      %v1404 = vpack.c.b16 %v1386, %v1383
      %v1405 = vpack.c.b16 %v1390, %v1387
      %v1406 = vpack.c.b16 %v1391, %v1388
      %v1407 = vpack.c.b16 %v1392, %v1389
      %v1454 = vunpack.c.l.b16 %v172
      %v1455 = vunpack.c.l.b16 %v173
      %v1456 = vunpack.c.l.b16 %v174
      %v1457 = vunpack.c.l.b16 %v175
      %v1458 = vunpack.c.l.b16 %v176
      %v1459 = vunpack.c.l.b16 %v177
      %v1460 = vunpack.c.l.b16 %v178
      %v1461 = vunpack.c.l.b16 %v179
      %v1462 = vunpack.c.l.b16 %v180
      %v1463 = vunpack.c.l.b16 %v181
      %v1464 = vunpack.c.l.b16 %v182
      %v1465 = vunpack.c.l.b16 %v183
      %v1466 = vunpack.c.l.b16 %v184
      %v1467 = vunpack.c.l.b16 %v185
      %v1468 = vunpack.c.l.b16 %v186
      %v1469 = vunpack.c.l.b16 %v187
      %v1470 = vunpack.c.l.b16 %v188
      %v1471 = vunpack.c.l.b16 %v189
      %v1472 = vunpack.c.l.b16 %v190
      %v1473 = vunpack.c.l.b16 %v191
      %v1474 = vunpack.c.l.b16 %v192
      %v1475 = vunpack.c.l.b16 %v193
      %v1476 = vunpack.c.l.b16 %v194
      %v1477 = vunpack.c.l.b16 %v195
      %v1478 = vunpack.c.l.b16 %v196
      %v1479 = vunpack.c.l.b16 %v197
      %v1480 = vunpack.c.l.b16 %v198
      %v1481 = vunpack.c.l.b16 %v199
      %v1482 = vunpack.c.l.b16 %v200
      %v1483 = vunpack.c.l.b16 %v201
      %v1484 = vunpack.c.l.b16 %v202
      %v1485 = vunpack.c.l.b16 %v203
      %v1486 = vunpack.c.l.b16 %v204
      %v1487 = vunpack.c.l.b16 %v205
      %v1488 = vunpack.c.l.b16 %v206
      %v1489 = vunpack.c.l.b16 %v207
      %v1490 = vpack.c.b16 %v1455, %v1454
      %v1491 = vpack.c.b16 %v1457, %v1456
      %v1492 = vpack.c.b16 %v1459, %v1458
      %v1493 = vpack.c.b16 %v1461, %v1460
      %v1494 = vpack.c.b16 %v1463, %v1462
      %v1495 = vpack.c.b16 %v1465, %v1464
      %v1496 = vpack.c.b16 %v1467, %v1466
      %v1497 = vpack.c.b16 %v1469, %v1468
      %v1498 = vpack.c.b16 %v1471, %v1470
      %v1499 = vpack.c.b16 %v1473, %v1472
      %v1500 = vpack.c.b16 %v1475, %v1474
      %v1501 = vpack.c.b16 %v1477, %v1476
      %v1502 = vpack.c.b16 %v1479, %v1478
      %v1503 = vpack.c.b16 %v1481, %v1480
      %v1504 = vpack.c.b16 %v1483, %v1482
      %v1505 = vpack.c.b16 %v1485, %v1484
      %v1506 = vpack.c.b16 %v1487, %v1486
      %v1507 = vpack.c.b16 %v1489, %v1488
      %vm1526 = vcmask 261120
      %v1528 = vsel %vm1526, %v1395, 0
      %v1531 = vsel %vm1526, %v1398, 0
      %v1534 = vsel %vm1526, %v1401, 0
      %v1537 = vsel %vm1526, %v1404, 0
      %v1540 = vsel %vm1526, %v1407, 0
      %1542 = vmatpush.bf16.msra.mxu0 %v1497
      %1543 = vmatpush.bf16.msra.mxu0 %v1496
      %1544 = vmatpush.bf16.msra.mxu0 %v1495
      %1545 = vmatpush.bf16.msra.mxu0 %v1494
      %1546 = vmatpush.bf16.msra.mxu0 %v1493
      %1547 = vmatpush.bf16.msra.mxu0 %v1492
      %1548 = vmatpush.bf16.msra.mxu0 %v1491
      %1549 = vmatpush.bf16.msra.mxu0 %v1490
      %1550 = vmatmul.bf16.gmra.mxu0 %v1393
      %v1551 = vpop.f32.mrf.mxu0
      %v1552 = vadd.f32 %v1341, %v1551
      %v1553 = vpop.f32.mrf.mxu0
      %v1554 = vadd.f32 %v1341, %v1553
      %1555 = vmatmul.bf16.gmra.mxu0 %v1396
      %v1556 = vpop.f32.mrf.mxu0
      %v1557 = vadd.f32 %v1341, %v1556
      %v1558 = vpop.f32.mrf.mxu0
      %v1559 = vadd.f32 %v1341, %v1558
      %1560 = vmatmul.bf16.gmra.mxu0 %v1399
      %v1561 = vpop.f32.mrf.mxu0
      %v1562 = vadd.f32 %v1341, %v1561
      %v1563 = vpop.f32.mrf.mxu0
      %v1564 = vadd.f32 %v1341, %v1563
      %1565 = vmatmul.bf16.gmra.mxu0 %v1402
      %v1566 = vpop.f32.mrf.mxu0
      %v1567 = vadd.f32 %v1341, %v1566
      %v1568 = vpop.f32.mrf.mxu0
      %v1569 = vadd.f32 %v1341, %v1568
      %1570 = vmatmul.bf16.gmra.mxu0 %v1405
      %v1571 = vpop.f32.mrf.mxu0
      %v1572 = vadd.f32 %v1341, %v1571
      %v1573 = vpop.f32.mrf.mxu0
      %v1574 = vadd.f32 %v1341, %v1573
      %1575 = vdwg.mxu0
      %1576 = vmatpush.bf16.msra.mxu0 %v1505
      %1577 = vmatpush.bf16.msra.mxu0 %v1504
      %1578 = vmatpush.bf16.msra.mxu0 %v1503
      %1579 = vmatpush.bf16.msra.mxu0 %v1502
      %1580 = vmatpush.bf16.msra.mxu0 %v1501
      %1581 = vmatpush.bf16.msra.mxu0 %v1500
      %1582 = vmatpush.bf16.msra.mxu0 %v1499
      %1583 = vmatpush.bf16.msra.mxu0 %v1498
      %1584 = vmatmul.bf16.gmra.mxu0 %v1394
      %v1585 = vpop.f32.mrf.mxu0
      %v1586 = vadd.f32 %v1552, %v1585
      %v1587 = vpop.f32.mrf.mxu0
      %v1588 = vadd.f32 %v1554, %v1587
      %1589 = vmatmul.bf16.gmra.mxu0 %v1397
      %v1590 = vpop.f32.mrf.mxu0
      %v1591 = vadd.f32 %v1557, %v1590
      %v1592 = vpop.f32.mrf.mxu0
      %v1593 = vadd.f32 %v1559, %v1592
      %1594 = vmatmul.bf16.gmra.mxu0 %v1400
      %v1595 = vpop.f32.mrf.mxu0
      %v1596 = vadd.f32 %v1562, %v1595
      %v1597 = vpop.f32.mrf.mxu0
      %v1598 = vadd.f32 %v1564, %v1597
      %1599 = vmatmul.bf16.gmra.mxu0 %v1403
      %v1600 = vpop.f32.mrf.mxu0
      %v1601 = vadd.f32 %v1567, %v1600
      %v1602 = vpop.f32.mrf.mxu0
      %v1603 = vadd.f32 %v1569, %v1602
      %1604 = vmatmul.bf16.gmra.mxu0 %v1406
      %v1605 = vpop.f32.mrf.mxu0
      %v1606 = vadd.f32 %v1572, %v1605
      %v1607 = vpop.f32.mrf.mxu0
      %v1608 = vadd.f32 %v1574, %v1607
      %1609 = vdwg.mxu0
      %1610 = vmatpush.bf16.msra.mxu0 0
      %1611 = vmatpush.bf16.msra.mxu0 0
      %1612 = vmatpush.bf16.msra.mxu0 0
      %1613 = vmatpush.bf16.msra.mxu0 0
      %1614 = vmatpush.bf16.msra.mxu0 0
      %1615 = vmatpush.bf16.msra.mxu0 0
      %1616 = vmatpush.bf16.msra.mxu0 %v1507
      %1617 = vmatpush.bf16.msra.mxu0 %v1506
      %1618 = vmatmul.bf16.gmra.mxu0 %v1528
      %v1619 = vpop.f32.mrf.mxu0
      %v1620 = vadd.f32 %v1586, %v1619
      %v1621 = vpop.f32.mrf.mxu0
      %v1622 = vadd.f32 %v1588, %v1621
      %1623 = vmatmul.bf16.gmra.mxu0 %v1531
      %v1624 = vpop.f32.mrf.mxu0
      %v1625 = vadd.f32 %v1591, %v1624
      %v1626 = vpop.f32.mrf.mxu0
      %v1627 = vadd.f32 %v1593, %v1626
      %1628 = vmatmul.bf16.gmra.mxu0 %v1534
      %v1629 = vpop.f32.mrf.mxu0
      %v1630 = vadd.f32 %v1596, %v1629
      %v1631 = vpop.f32.mrf.mxu0
      %v1632 = vadd.f32 %v1598, %v1631
      %1633 = vmatmul.bf16.gmra.mxu0 %v1537
      %v1634 = vpop.f32.mrf.mxu0
      %v1635 = vadd.f32 %v1601, %v1634
      %v1636 = vpop.f32.mrf.mxu0
      %v1637 = vadd.f32 %v1603, %v1636
      %1638 = vmatmul.bf16.gmra.mxu0 %v1540
      %v1639 = vpop.f32.mrf.mxu0
      %v1640 = vadd.f32 %v1606, %v1639
      %v1641 = vpop.f32.mrf.mxu0
      %v1642 = vadd.f32 %v1608, %v1641
      %1643 = vdwg.mxu0
      %v1644 = vmax.f32 %v1620, 0.0
      %v1645 = vmax.f32 %v1622, 0.0
      %v1646 = vmax.f32 %v1625, 0.0
      %v1647 = vmax.f32 %v1627, 0.0
      %v1648 = vmax.f32 %v1630, 0.0
      %v1649 = vmax.f32 %v1632, 0.0
      %v1650 = vmax.f32 %v1635, 0.0
      %v1651 = vmax.f32 %v1637, 0.0
      %v1652 = vmax.f32 %v1640, 0.0
      %v1653 = vmax.f32 %v1642, 0.0
      %v1654 = vlaneseq
      %v1655 = vshrl.u32 %v1654, 7
      %v1656 = vadd.s32 %v1655, 8
      %v1657 = vadd.s32 %v1655, 16
      %v1658 = vadd.s32 %v1655, 24
      %v1659 = vadd.s32 %v1655, 32
      %v1660 = vadd.s32 %v1655, 40
      %v1661 = vadd.s32 %v1655, 48
      %v1662 = vadd.s32 %v1655, 56
      %v1663 = vadd.s32 %v1655, 64
      %v1664 = vadd.s32 %v1655, 72
      %vm1665 = vcmp.lt.s32.totalorder %v1655, 0
      %v1666 = vsub.s32 0, %v1655
      %v1667 = vsel %vm1665, %v1666, %v1655
      %v1668 = vand.u32 %v1667, 65535
      %v1669 = vshrl.u32 %v1667, 16
      %v1671 = vmul.u32 %v1668, 52429
      %v1672 = vmul.u32 %v1668, 52428
      %v1673 = vmul.u32 %v1669, 52429
      %v1674 = vmul.u32 %v1669, 52428
      %v1675 = vshll.u32 %v1672, 16
      %v1676 = vshrl.u32 %v1672, 16
      %v1677 = vshll.u32 %v1673, 16
      %v1678 = vshrl.u32 %v1673, 16
      %vm1679 = vc.u32 %v1671, %v1675
      %v1680 = vsel %vm1679, 1, 0
      %v1681 = vadd.s32 %v1671, %v1675
      %v1682 = vadd.s32 %v1674, %v1680
      %vm1683 = vc.u32 %v1681, %v1677
      %v1684 = vsel %vm1683, 1, 0
      %v1685 = vadd.s32 %v1681, %v1677
      %v1686 = vadd.s32 %v1682, %v1684
      %v1687 = vadd.s32 %v1686, %v1676
      %v1688 = vadd.s32 %v1687, %v1678
      %v1689 = vshrl.u32 %v1688, 3
      %v1690 = vmul.u32 %v1689, 10
      %v1691 = vsub.s32 %v1667, %v1690
      %v1692 = vsub.s32 0, %v1691
      %v1693 = vsel %vm1665, %v1692, %v1691
      %vm1694 = vcmp.lt.s32.totalorder %v1656, 0
      %v1695 = vsub.s32 0, %v1656
      %v1696 = vsel %vm1694, %v1695, %v1656
      %v1697 = vand.u32 %v1696, 65535
      %v1698 = vshrl.u32 %v1696, 16
      %v1700 = vmul.u32 %v1697, 52429
      %v1701 = vmul.u32 %v1697, 52428
      %v1702 = vmul.u32 %v1698, 52429
      %v1703 = vmul.u32 %v1698, 52428
      %v1704 = vshll.u32 %v1701, 16
      %v1705 = vshrl.u32 %v1701, 16
      %v1706 = vshll.u32 %v1702, 16
      %v1707 = vshrl.u32 %v1702, 16
      %vm1708 = vc.u32 %v1700, %v1704
      %v1709 = vsel %vm1708, 1, 0
      %v1710 = vadd.s32 %v1700, %v1704
      %v1711 = vadd.s32 %v1703, %v1709
      %vm1712 = vc.u32 %v1710, %v1706
      %v1713 = vsel %vm1712, 1, 0
      %v1714 = vadd.s32 %v1710, %v1706
      %v1715 = vadd.s32 %v1711, %v1713
      %v1716 = vadd.s32 %v1715, %v1705
      %v1717 = vadd.s32 %v1716, %v1707
      %v1718 = vshrl.u32 %v1717, 3
      %v1719 = vmul.u32 %v1718, 10
      %v1720 = vsub.s32 %v1696, %v1719
      %v1721 = vsub.s32 0, %v1720
      %v1722 = vsel %vm1694, %v1721, %v1720
      %vm1723 = vcmp.lt.s32.totalorder %v1657, 0
      %v1724 = vsub.s32 0, %v1657
      %v1725 = vsel %vm1723, %v1724, %v1657
      %v1726 = vand.u32 %v1725, 65535
      %v1727 = vshrl.u32 %v1725, 16
      %v1729 = vmul.u32 %v1726, 52429
      %v1730 = vmul.u32 %v1726, 52428
      %v1731 = vmul.u32 %v1727, 52429
      %v1732 = vmul.u32 %v1727, 52428
      %v1733 = vshll.u32 %v1730, 16
      %v1734 = vshrl.u32 %v1730, 16
      %v1735 = vshll.u32 %v1731, 16
      %v1736 = vshrl.u32 %v1731, 16
      %vm1737 = vc.u32 %v1729, %v1733
      %v1738 = vsel %vm1737, 1, 0
      %v1739 = vadd.s32 %v1729, %v1733
      %v1740 = vadd.s32 %v1732, %v1738
      %vm1741 = vc.u32 %v1739, %v1735
      %v1742 = vsel %vm1741, 1, 0
      %v1743 = vadd.s32 %v1739, %v1735
      %v1744 = vadd.s32 %v1740, %v1742
      %v1745 = vadd.s32 %v1744, %v1734
      %v1746 = vadd.s32 %v1745, %v1736
      %v1747 = vshrl.u32 %v1746, 3
      %v1748 = vmul.u32 %v1747, 10
      %v1749 = vsub.s32 %v1725, %v1748
      %v1750 = vsub.s32 0, %v1749
      %v1751 = vsel %vm1723, %v1750, %v1749
      %vm1752 = vcmp.lt.s32.totalorder %v1658, 0
      %v1753 = vsub.s32 0, %v1658
      %v1754 = vsel %vm1752, %v1753, %v1658
      %v1755 = vand.u32 %v1754, 65535
      %v1756 = vshrl.u32 %v1754, 16
      %v1758 = vmul.u32 %v1755, 52429
      %v1759 = vmul.u32 %v1755, 52428
      %v1760 = vmul.u32 %v1756, 52429
      %v1761 = vmul.u32 %v1756, 52428
      %v1762 = vshll.u32 %v1759, 16
      %v1763 = vshrl.u32 %v1759, 16
      %v1764 = vshll.u32 %v1760, 16
      %v1765 = vshrl.u32 %v1760, 16
      %vm1766 = vc.u32 %v1758, %v1762
      %v1767 = vsel %vm1766, 1, 0
      %v1768 = vadd.s32 %v1758, %v1762
      %v1769 = vadd.s32 %v1761, %v1767
      %vm1770 = vc.u32 %v1768, %v1764
      %v1771 = vsel %vm1770, 1, 0
      %v1772 = vadd.s32 %v1768, %v1764
      %v1773 = vadd.s32 %v1769, %v1771
      %v1774 = vadd.s32 %v1773, %v1763
      %v1775 = vadd.s32 %v1774, %v1765
      %v1776 = vshrl.u32 %v1775, 3
      %v1777 = vmul.u32 %v1776, 10
      %v1778 = vsub.s32 %v1754, %v1777
      %v1779 = vsub.s32 0, %v1778
      %v1780 = vsel %vm1752, %v1779, %v1778
      %vm1781 = vcmp.lt.s32.totalorder %v1659, 0
      %v1782 = vsub.s32 0, %v1659
      %v1783 = vsel %vm1781, %v1782, %v1659
      %v1784 = vand.u32 %v1783, 65535
      %v1785 = vshrl.u32 %v1783, 16
      %v1787 = vmul.u32 %v1784, 52429
      %v1788 = vmul.u32 %v1784, 52428
      %v1789 = vmul.u32 %v1785, 52429
      %v1790 = vmul.u32 %v1785, 52428
      %v1791 = vshll.u32 %v1788, 16
      %v1792 = vshrl.u32 %v1788, 16
      %v1793 = vshll.u32 %v1789, 16
      %v1794 = vshrl.u32 %v1789, 16
      %vm1795 = vc.u32 %v1787, %v1791
      %v1796 = vsel %vm1795, 1, 0
      %v1797 = vadd.s32 %v1787, %v1791
      %v1798 = vadd.s32 %v1790, %v1796
      %vm1799 = vc.u32 %v1797, %v1793
      %v1800 = vsel %vm1799, 1, 0
      %v1801 = vadd.s32 %v1797, %v1793
      %v1802 = vadd.s32 %v1798, %v1800
      %v1803 = vadd.s32 %v1802, %v1792
      %v1804 = vadd.s32 %v1803, %v1794
      %v1805 = vshrl.u32 %v1804, 3
      %v1806 = vmul.u32 %v1805, 10
      %v1807 = vsub.s32 %v1783, %v1806
      %v1808 = vsub.s32 0, %v1807
      %v1809 = vsel %vm1781, %v1808, %v1807
      %vm1810 = vcmp.lt.s32.totalorder %v1660, 0
      %v1811 = vsub.s32 0, %v1660
      %v1812 = vsel %vm1810, %v1811, %v1660
      %v1813 = vand.u32 %v1812, 65535
      %v1814 = vshrl.u32 %v1812, 16
      %v1816 = vmul.u32 %v1813, 52429
      %v1817 = vmul.u32 %v1813, 52428
      %v1818 = vmul.u32 %v1814, 52429
      %v1819 = vmul.u32 %v1814, 52428
      %v1820 = vshll.u32 %v1817, 16
      %v1821 = vshrl.u32 %v1817, 16
      %v1822 = vshll.u32 %v1818, 16
      %v1823 = vshrl.u32 %v1818, 16
      %vm1824 = vc.u32 %v1816, %v1820
      %v1825 = vsel %vm1824, 1, 0
      %v1826 = vadd.s32 %v1816, %v1820
      %v1827 = vadd.s32 %v1819, %v1825
      %vm1828 = vc.u32 %v1826, %v1822
      %v1829 = vsel %vm1828, 1, 0
      %v1830 = vadd.s32 %v1826, %v1822
      %v1831 = vadd.s32 %v1827, %v1829
      %v1832 = vadd.s32 %v1831, %v1821
      %v1833 = vadd.s32 %v1832, %v1823
      %v1834 = vshrl.u32 %v1833, 3
      %v1835 = vmul.u32 %v1834, 10
      %v1836 = vsub.s32 %v1812, %v1835
      %v1837 = vsub.s32 0, %v1836
      %v1838 = vsel %vm1810, %v1837, %v1836
      %vm1839 = vcmp.lt.s32.totalorder %v1661, 0
      %v1840 = vsub.s32 0, %v1661
      %v1841 = vsel %vm1839, %v1840, %v1661
      %v1842 = vand.u32 %v1841, 65535
      %v1843 = vshrl.u32 %v1841, 16
      %v1845 = vmul.u32 %v1842, 52429
      %v1846 = vmul.u32 %v1842, 52428
      %v1847 = vmul.u32 %v1843, 52429
      %v1848 = vmul.u32 %v1843, 52428
      %v1849 = vshll.u32 %v1846, 16
      %v1850 = vshrl.u32 %v1846, 16
      %v1851 = vshll.u32 %v1847, 16
      %v1852 = vshrl.u32 %v1847, 16
      %vm1853 = vc.u32 %v1845, %v1849
      %v1854 = vsel %vm1853, 1, 0
      %v1855 = vadd.s32 %v1845, %v1849
      %v1856 = vadd.s32 %v1848, %v1854
      %vm1857 = vc.u32 %v1855, %v1851
      %v1858 = vsel %vm1857, 1, 0
      %v1859 = vadd.s32 %v1855, %v1851
      %v1860 = vadd.s32 %v1856, %v1858
      %v1861 = vadd.s32 %v1860, %v1850
      %v1862 = vadd.s32 %v1861, %v1852
      %v1863 = vshrl.u32 %v1862, 3
      %v1864 = vmul.u32 %v1863, 10
      %v1865 = vsub.s32 %v1841, %v1864
      %v1866 = vsub.s32 0, %v1865
      %v1867 = vsel %vm1839, %v1866, %v1865
      %vm1868 = vcmp.lt.s32.totalorder %v1662, 0
      %v1869 = vsub.s32 0, %v1662
      %v1870 = vsel %vm1868, %v1869, %v1662
      %v1871 = vand.u32 %v1870, 65535
      %v1872 = vshrl.u32 %v1870, 16
      %v1874 = vmul.u32 %v1871, 52429
      %v1875 = vmul.u32 %v1871, 52428
      %v1876 = vmul.u32 %v1872, 52429
      %v1877 = vmul.u32 %v1872, 52428
      %v1878 = vshll.u32 %v1875, 16
      %v1879 = vshrl.u32 %v1875, 16
      %v1880 = vshll.u32 %v1876, 16
      %v1881 = vshrl.u32 %v1876, 16
      %vm1882 = vc.u32 %v1874, %v1878
      %v1883 = vsel %vm1882, 1, 0
      %v1884 = vadd.s32 %v1874, %v1878
      %v1885 = vadd.s32 %v1877, %v1883
      %vm1886 = vc.u32 %v1884, %v1880
      %v1887 = vsel %vm1886, 1, 0
      %v1888 = vadd.s32 %v1884, %v1880
      %v1889 = vadd.s32 %v1885, %v1887
      %v1890 = vadd.s32 %v1889, %v1879
      %v1891 = vadd.s32 %v1890, %v1881
      %v1892 = vshrl.u32 %v1891, 3
      %v1893 = vmul.u32 %v1892, 10
      %v1894 = vsub.s32 %v1870, %v1893
      %v1895 = vsub.s32 0, %v1894
      %v1896 = vsel %vm1868, %v1895, %v1894
      %vm1897 = vcmp.lt.s32.totalorder %v1663, 0
      %v1898 = vsub.s32 0, %v1663
      %v1899 = vsel %vm1897, %v1898, %v1663
      %v1900 = vand.u32 %v1899, 65535
      %v1901 = vshrl.u32 %v1899, 16
      %v1903 = vmul.u32 %v1900, 52429
      %v1904 = vmul.u32 %v1900, 52428
      %v1905 = vmul.u32 %v1901, 52429
      %v1906 = vmul.u32 %v1901, 52428
      %v1907 = vshll.u32 %v1904, 16
      %v1908 = vshrl.u32 %v1904, 16
      %v1909 = vshll.u32 %v1905, 16
      %v1910 = vshrl.u32 %v1905, 16
      %vm1911 = vc.u32 %v1903, %v1907
      %v1912 = vsel %vm1911, 1, 0
      %v1913 = vadd.s32 %v1903, %v1907
      %v1914 = vadd.s32 %v1906, %v1912
      %vm1915 = vc.u32 %v1913, %v1909
      %v1916 = vsel %vm1915, 1, 0
      %v1917 = vadd.s32 %v1913, %v1909
      %v1918 = vadd.s32 %v1914, %v1916
      %v1919 = vadd.s32 %v1918, %v1908
      %v1920 = vadd.s32 %v1919, %v1910
      %v1921 = vshrl.u32 %v1920, 3
      %v1922 = vmul.u32 %v1921, 10
      %v1923 = vsub.s32 %v1899, %v1922
      %v1924 = vsub.s32 0, %v1923
      %v1925 = vsel %vm1897, %v1924, %v1923
      %vm1926 = vcmp.lt.s32.totalorder %v1664, 0
      %v1927 = vsub.s32 0, %v1664
      %v1928 = vsel %vm1926, %v1927, %v1664
      %v1929 = vand.u32 %v1928, 65535
      %v1930 = vshrl.u32 %v1928, 16
      %v1932 = vmul.u32 %v1929, 52429
      %v1933 = vmul.u32 %v1929, 52428
      %v1934 = vmul.u32 %v1930, 52429
      %v1935 = vmul.u32 %v1930, 52428
      %v1936 = vshll.u32 %v1933, 16
      %v1937 = vshrl.u32 %v1933, 16
      %v1938 = vshll.u32 %v1934, 16
      %v1939 = vshrl.u32 %v1934, 16
      %vm1940 = vc.u32 %v1932, %v1936
      %v1941 = vsel %vm1940, 1, 0
      %v1942 = vadd.s32 %v1932, %v1936
      %v1943 = vadd.s32 %v1935, %v1941
      %vm1944 = vc.u32 %v1942, %v1938
      %v1945 = vsel %vm1944, 1, 0
      %v1946 = vadd.s32 %v1942, %v1938
      %v1947 = vadd.s32 %v1943, %v1945
      %v1948 = vadd.s32 %v1947, %v1937
      %v1949 = vadd.s32 %v1948, %v1939
      %v1950 = vshrl.u32 %v1949, 3
      %v1951 = vmul.u32 %v1950, 10
      %v1952 = vsub.s32 %v1928, %v1951
      %v1953 = vsub.s32 0, %v1952
      %v1954 = vsel %vm1926, %v1953, %v1952
      %vm1955 = vcmp.ne.s32.totalorder %v1693, 0
      %vm1956 = vcmp.ne.s32.totalorder %v1722, 0
      %vm1957 = vcmp.ne.s32.totalorder %v1751, 0
      %vm1958 = vcmp.ne.s32.totalorder %v1780, 0
      %vm1959 = vcmp.ne.s32.totalorder %v1809, 0
      %vm1960 = vcmp.ne.s32.totalorder %v1838, 0
      %vm1961 = vcmp.ne.s32.totalorder %v1867, 0
      %vm1962 = vcmp.ne.s32.totalorder %v1896, 0
      %vm1963 = vcmp.ne.s32.totalorder %v1925, 0
      %vm1964 = vcmp.ne.s32.totalorder %v1954, 0
      %vm1965 = vcmp.lt.s32.totalorder %v1693, 0
      %vm1966 = vcmp.lt.s32.totalorder %v1722, 0
      %vm1967 = vcmp.lt.s32.totalorder %v1751, 0
      %vm1968 = vcmp.lt.s32.totalorder %v1780, 0
      %vm1969 = vcmp.lt.s32.totalorder %v1809, 0
      %vm1970 = vcmp.lt.s32.totalorder %v1838, 0
      %vm1971 = vcmp.lt.s32.totalorder %v1867, 0
      %vm1972 = vcmp.lt.s32.totalorder %v1896, 0
      %vm1973 = vcmp.lt.s32.totalorder %v1925, 0
      %vm1974 = vcmp.lt.s32.totalorder %v1954, 0
      %vm1975 = vmand %vm1965, %vm1955
      %vm1976 = vmand %vm1966, %vm1956
      %vm1977 = vmand %vm1967, %vm1957
      %vm1978 = vmand %vm1968, %vm1958
      %vm1979 = vmand %vm1969, %vm1959
      %vm1980 = vmand %vm1970, %vm1960
      %vm1981 = vmand %vm1971, %vm1961
      %vm1982 = vmand %vm1972, %vm1962
      %vm1983 = vmand %vm1973, %vm1963
      %vm1984 = vmand %vm1974, %vm1964
      %v1985 = vadd.s32 %v1693, 10
      %v1986 = vadd.s32 %v1722, 10
      %v1987 = vadd.s32 %v1751, 10
      %v1988 = vadd.s32 %v1780, 10
      %v1989 = vadd.s32 %v1809, 10
      %v1990 = vadd.s32 %v1838, 10
      %v1991 = vadd.s32 %v1867, 10
      %v1992 = vadd.s32 %v1896, 10
      %v1993 = vadd.s32 %v1925, 10
      %v1994 = vadd.s32 %v1954, 10
      %v1995 = vsel %vm1975, %v1985, %v1693
      %v1996 = vsel %vm1976, %v1986, %v1722
      %v1997 = vsel %vm1977, %v1987, %v1751
      %v1998 = vsel %vm1978, %v1988, %v1780
      %v1999 = vsel %vm1979, %v1989, %v1809
      %v2000 = vsel %vm1980, %v1990, %v1838
      %v2001 = vsel %vm1981, %v1991, %v1867
      %v2002 = vsel %vm1982, %v1992, %v1896
      %v2003 = vsel %vm1983, %v1993, %v1925
      %v2004 = vsel %vm1984, %v1994, %v1954
      %vm2005 = vcmp.lt.s32.totalorder %v1995, 8
      %vm2006 = vcmp.lt.s32.totalorder %v1996, 8
      %vm2007 = vcmp.lt.s32.totalorder %v1997, 8
      %vm2008 = vcmp.lt.s32.totalorder %v1998, 8
      %vm2009 = vcmp.lt.s32.totalorder %v1999, 8
      %vm2010 = vcmp.lt.s32.totalorder %v2000, 8
      %vm2011 = vcmp.lt.s32.totalorder %v2001, 8
      %vm2012 = vcmp.lt.s32.totalorder %v2002, 8
      %vm2013 = vcmp.lt.s32.totalorder %v2003, 8
      %vm2014 = vcmp.lt.s32.totalorder %v2004, 8
      %v2015 = vsel %vm2005, %v1644, 0.0
      %v2016 = vsel %vm2006, %v1645, 0.0
      %v2017 = vsel %vm2007, %v1646, 0.0
      %v2018 = vsel %vm2008, %v1647, 0.0
      %v2019 = vsel %vm2009, %v1648, 0.0
      %v2020 = vsel %vm2010, %v1649, 0.0
      %v2021 = vsel %vm2011, %v1650, 0.0
      %v2022 = vsel %vm2012, %v1651, 0.0
      %v2023 = vsel %vm2013, %v1652, 0.0
      %v2024 = vsel %vm2014, %v1653, 0.0
      %v2025 = vpack.c.bf16 %v2015, %v2015
      %v2026 = vpack.c.bf16 %v2016, %v2016
      %v2027 = vpack.c.bf16 %v2017, %v2017
      %v2028 = vpack.c.bf16 %v2018, %v2018
      %v2029 = vpack.c.bf16 %v2019, %v2019
      %v2030 = vpack.c.bf16 %v2020, %v2020
      %v2031 = vpack.c.bf16 %v2021, %v2021
      %v2032 = vpack.c.bf16 %v2022, %v2022
      %v2033 = vpack.c.bf16 %v2023, %v2023
      %v2034 = vpack.c.bf16 %v2024, %v2024
      %2035 = vst.msk [vmem:[%s170 + $0x8] sm:$0xf] %vm209, %v2025
      %2036 = vst.msk [vmem:[%s170 + $0xc] sm:$0xf] %vm209, %v2026
      %2037 = vst.msk [vmem:[%s170 + $0x10] sm:$0xf] %vm209, %v2027
      %2038 = vst.msk [vmem:[%s170 + $0x14] sm:$0xf] %vm209, %v2028
      %2039 = vst.msk [vmem:[%s170 + $0x18] sm:$0xf] %vm209, %v2029
      %2040 = vst.msk [vmem:[%s170 + $0x1c] sm:$0xf] %vm209, %v2030
      %2041 = vst.msk [vmem:[%s170 + $0x20] sm:$0xf] %vm209, %v2031
      %2042 = vst.msk [vmem:[%s170 + $0x24] sm:$0xf] %vm209, %v2032
      %2043 = vst.msk [vmem:[%s170 + $0x28] sm:$0xf] %vm209, %v2033
      %2044 = vst.msk [vmem:[%s170 + $0x2c] sm:$0xf] %vm209, %v2034
      %p2045 = scmp.lt.s32.totalorder %s14, 1
      %s2046 = scalar_select %p2045, %s14, 1
      %s2047 = smul.addr %s2046, 14
      %s2048 = smul.addr %s2047, 4
      %s2049 = scalar_lea.vmem %s3, %s2048
      // Predicated region
      $region33: #{block35_forward.7} parent=31 // pred_check
        %p2050 = pneg %p100
      $region34: #{block35_forward.7} parent=31 // pred_check_branch
        %2052 = sbr.rel (%p2050) target = $region36
      $region35: #{block35_forward.7} parent=31 // pred_region
        _
      $region36: #{block35_forward.7} parent=31 // pred_fallthru
        _
    $region32: #{block35_forward.7} parent=5 // pred_fallthru
      _
    %p2053 = scmp.le.s32.totalorder 2, %s9
    // Predicated region
    $region37: #{block35_forward.7} parent=5 // pred_check
      %p2054 = pneg %p2053
    $region38: #{block35_forward.7} parent=5 // pred_check_branch
      %2056 = sbr.rel (%p2054) target = $region40
    $region39: #{block35_forward.7} parent=5 // pred_region
      %s2057 = ssub.s32 %s9, 2
      // Predicated region
      $region41: #{block35_forward.7} parent=39 // pred_check
        %p2058 = pneg %p106
      $region42: #{block35_forward.7} parent=39 // pred_check_branch
        %2060 = sbr.rel (%p2058) target = $region44
      $region43: #{block35_forward.7} parent=39 // pred_region
        %p2061 = scmp.lt.s32.totalorder %s15, 1
        %s2062 = scalar_select %p2061, %s15, 1
        %s2063 = smul.addr %s2062, 14
        %s2064 = smul.addr %s2063, 4
        %s2065 = scalar_lea.vmem %s3, %s2064
      $region44: #{block35_forward.7} parent=39 // pred_fallthru
        _
    $region40: #{block35_forward.7} parent=5 // pred_fallthru
      _
  $region6: #{block35_forward.7} parent=0 // loop_footer
    %s13 = sadd.s32 1, %s9
  $region7: #{block35_forward.7} parent=0 // loop_footer_branch
    %8 = sbr.rel target = $region3
  $region8: #{block35_forward.7} parent=0 // loop_exit
    _

// kernel: block35_forward.8
$region0: #{block35_forward.8}
  #allocation0 [shape = 'u32[]', space=smem, size = 0x4, offset = 0x4, fixed_abs, tag = 'smem constant byte address 0x4 - core index']
  #allocation1 [shape = 'u32[72,128]{1,0:T(1,128)}', space=vmem, size = 0x9000, scoped, tag = 'internal scratch']
  #allocation2 [shape = 'bf16[80,432]{1,0:T(8,128)(2,1)}', space=vmem, size = 0x14000, scoped, tag = 'scratch operand']
  %s0 = inlined_call_operand.vmem [shape: bf16[2,112,48], index: 0, kind: input, shape index: {}]
  %s1 = inlined_call_operand.vmem [shape: bf16[432,64], index: 1, kind: input, shape index: {}]
  %s2 = inlined_call_operand.vmem [shape: f32[1,64], index: 2, kind: input, shape index: {}]
  %s3 = inlined_call_operand.vmem [shape: bf16[2,80,64], index: 3, kind: output, shape index: {}]
  %s4 = sld [smem:[#allocation0]]
  $region45: #{block35_forward.8} parent=0
    _
  %s6 = ssub.s32 1, %s4
  %s7 = scalar_select 0, %s6, %s4
  loop: start=0, step=1, limit=4
  $region2: #{block35_forward.8} parent=0 // loop_pre_header
    _
  $region3: #{block35_forward.8} parent=0 // loop_header
    %s9 = sphi 0, %s13
    %p10 = scmp.ge.s32.totalorder %s9, 4
    %s19 = sphi 0, %s21
    %s22 = sphi 0, %s19
    %s23 = sphi 0, %s22
    %s39 = sphi 0, %s23
    %s43 = sphi 0, %s43
    %s45 = sphi 0, %s43
    %s46 = sphi 0, %s45
    %s60 = sphi 0, %s46
    %s64 = sphi 0, %s64
    %s66 = sphi 0, %s64
    %s67 = sphi 0, %s66
    %s81 = sphi 0, %s67
    %s87 = sphi 0, %s89
    %s90 = sphi 0, %s87
    %s91 = sphi 0, %s90
    %s107 = sphi 0, %s91
  $region4: #{block35_forward.8} parent=0 // loop_header_branch
    %12 = sbr.rel (%p10) target = $region8
  $region5: #{block35_forward.8} parent=0 // loop_body
    %s14 = ssub.s32 %s9, 1
    %s15 = ssub.s32 %s9, 2
    %s16 = sadd.s32 %s9, 1
    %s17 = ssub.s32 %s9, %s16
    %p18 = scmp.eq.s32.totalorder %s17, 0
    %s20 = sadd.s32 %s19, 1
    %s21 = scalar_select %p18, %s19, %s20
    %p24 = pneg %p18
    %p25 = scmp.eq.s32.totalorder %s9, 1
    %p26 = por %p24, %p25
    %p27 = scmp.ne.s32.totalorder %s19, %s22
    %p28 = scmp.eq.s32.totalorder %s9, 0
    %p29 = por %p27, %p28
    %p30 = scmp.ne.s32.totalorder %s19, %s22
    %p31 = scmp.eq.s32.totalorder %s14, 1
    %p32 = por %p30, %p31
    %p33 = scmp.ne.s32.totalorder %s22, %s23
    %p34 = scmp.eq.s32.totalorder %s14, 0
    %p35 = por %p33, %p34
    %p36 = scmp.ne.s32.totalorder %s22, %s23
    %p37 = scmp.eq.s32.totalorder %s15, 1
    %p38 = por %p36, %p37
    %p40 = scmp.ne.s32.totalorder %s23, %s39
    %p41 = scmp.eq.s32.totalorder %s15, 0
    %p42 = por %p40, %p41
    %s44 = sadd.s32 %s43, 1
    %p47 = scmp.eq.s32.totalorder %s9, 1
    %p48 = scmp.ne.s32.totalorder %s43, %s45
    %p49 = scmp.eq.s32.totalorder %s9, 0
    %p50 = por %p48, %p49
    %p51 = scmp.ne.s32.totalorder %s43, %s45
    %p52 = scmp.eq.s32.totalorder %s14, 1
    %p53 = por %p51, %p52
    %p54 = scmp.ne.s32.totalorder %s45, %s46
    %p55 = scmp.eq.s32.totalorder %s14, 0
    %p56 = por %p54, %p55
    %p57 = scmp.ne.s32.totalorder %s45, %s46
    %p58 = scmp.eq.s32.totalorder %s15, 1
    %p59 = por %p57, %p58
    %p61 = scmp.ne.s32.totalorder %s46, %s60
    %p62 = scmp.eq.s32.totalorder %s15, 0
    %p63 = por %p61, %p62
    %s65 = sadd.s32 %s64, 1
    %p68 = scmp.eq.s32.totalorder %s9, 1
    %p69 = scmp.ne.s32.totalorder %s64, %s66
    %p70 = scmp.eq.s32.totalorder %s9, 0
    %p71 = por %p69, %p70
    %p72 = scmp.ne.s32.totalorder %s64, %s66
    %p73 = scmp.eq.s32.totalorder %s14, 1
    %p74 = por %p72, %p73
    %p75 = scmp.ne.s32.totalorder %s66, %s67
    %p76 = scmp.eq.s32.totalorder %s14, 0
    %p77 = por %p75, %p76
    %p78 = scmp.ne.s32.totalorder %s66, %s67
    %p79 = scmp.eq.s32.totalorder %s15, 1
    %p80 = por %p78, %p79
    %p82 = scmp.ne.s32.totalorder %s67, %s81
    %p83 = scmp.eq.s32.totalorder %s15, 0
    %p84 = por %p82, %p83
    %s85 = ssub.s32 %s9, %s16
    %p86 = scmp.eq.s32.totalorder %s85, 0
    %s88 = sadd.s32 %s87, 1
    %s89 = scalar_select %p86, %s87, %s88
    %p92 = pneg %p86
    %p93 = scmp.eq.s32.totalorder %s9, 1
    %p94 = por %p92, %p93
    %p95 = scmp.ne.s32.totalorder %s87, %s90
    %p96 = scmp.eq.s32.totalorder %s9, 0
    %p97 = por %p95, %p96
    %p98 = scmp.ne.s32.totalorder %s87, %s90
    %p99 = scmp.eq.s32.totalorder %s14, 1
    %p100 = por %p98, %p99
    %p101 = scmp.ne.s32.totalorder %s90, %s91
    %p102 = scmp.eq.s32.totalorder %s14, 0
    %p103 = por %p101, %p102
    %p104 = scmp.ne.s32.totalorder %s90, %s91
    %p105 = scmp.eq.s32.totalorder %s15, 1
    %p106 = por %p104, %p105
    %p108 = scmp.ne.s32.totalorder %s91, %s107
    %p109 = scmp.eq.s32.totalorder %s15, 0
    %p110 = por %p108, %p109
    %p111 = scmp.le.s32.totalorder 1, %s9
    %p112 = scmp.lt.s32.totalorder %s9, 3
    %p113 = pnand %p111, %p112
    %p114 = pneg %p113
    // Predicated region
    $region9: #{block35_forward.8} parent=5 // pred_check
      _
    $region10: #{block35_forward.8} parent=5 // pred_check_branch
      %116 = sbr.rel (%p113) target = $region12
    $region11: #{block35_forward.8} parent=5 // pred_region
      %s117 = ssub.s32 %s9, 1
      // Predicated region
      $region13: #{block35_forward.8} parent=11 // pred_check
        %p118 = pneg %p56
      $region14: #{block35_forward.8} parent=11 // pred_check_branch
        %120 = sbr.rel (%p118) target = $region16
      $region15: #{block35_forward.8} parent=11 // pred_region
        _
      $region16: #{block35_forward.8} parent=11 // pred_fallthru
        _
      // Predicated region
      $region17: #{block35_forward.8} parent=11 // pred_check
        %p121 = pneg %p77
      $region18: #{block35_forward.8} parent=11 // pred_check_branch
        %123 = sbr.rel (%p121) target = $region20
      $region19: #{block35_forward.8} parent=11 // pred_region
        _
      $region20: #{block35_forward.8} parent=11 // pred_fallthru
        _
    $region12: #{block35_forward.8} parent=5 // pred_fallthru
      _
    %p124 = scmp.lt.s32.totalorder %s9, 2
    // Predicated region
    $region21: #{block35_forward.8} parent=5 // pred_check
      %p125 = pneg %p124
    $region22: #{block35_forward.8} parent=5 // pred_check_branch
      %127 = sbr.rel (%p125) target = $region24
    $region23: #{block35_forward.8} parent=5 // pred_region
      // Predicated region
      $region25: #{block35_forward.8} parent=23 // pred_check
        %p128 = pneg %p29
      $region26: #{block35_forward.8} parent=23 // pred_check_branch
        %130 = sbr.rel (%p128) target = $region28
      $region27: #{block35_forward.8} parent=23 // pred_region
        %p131 = scmp.lt.s32.totalorder %s9, 1
        %s132 = scalar_select %p131, %s9, 1
        %s133 = smul.addr %s132, 14
        %s134 = smul.addr %s133, 4
        %s135 = scalar_lea.vmem %s0, %s134
      $region28: #{block35_forward.8} parent=23 // pred_fallthru
        _
    $region24: #{block35_forward.8} parent=5 // pred_fallthru
      _
    %p136 = scmp.le.s32.totalorder 1, %s9
    %p137 = scmp.lt.s32.totalorder %s9, 3
    %p138 = pnand %p136, %p137
    %p139 = pneg %p138
    // Predicated region
    $region29: #{block35_forward.8} parent=5 // pred_check
      _
    $region30: #{block35_forward.8} parent=5 // pred_check_branch
      %141 = sbr.rel (%p138) target = $region32
    $region31: #{block35_forward.8} parent=5 // pred_region
      %s142 = ssub.s32 %s9, 1
      %p143 = scmp.lt.s32.totalorder %s14, 1
      %s144 = scalar_select %p143, %s14, 1
      %s145 = smul.addr %s144, 14
      %s146 = smul.addr %s145, 4
      %s147 = scalar_lea.vmem %s0, %s146
      %p148 = pneg %p35
      %p149 = pneg %p32
      %p150 = pneg %p56
      %p151 = pneg %p53
      %p152 = pneg %p77
      %p153 = pneg %p74
      %p154 = pneg %p103
      %p155 = pneg %p100
      %p156 = scmp.lt.s32.totalorder %s14, 1
      %s157 = scalar_select %p156, %s14, 1
      %s158 = smul.addr %s157, 10
      %s159 = smul.addr %s158, 4
      %s160 = scalar_lea.vmem %s3, %s159
      %p161 = scmp.lt.s32.totalorder %s14, 1
      %s162 = scalar_select %p161, %s14, 1
      %s163 = smul.addr %s162, 14
      %s164 = smul.addr %s163, 4
      %s165 = scalar_lea.vmem %s0, %s164
      %p166 = scmp.lt.s32.totalorder %s14, 1
      %s167 = scalar_select %p166, %s14, 1
      %s168 = smul.addr %s167, 10
      %s169 = smul.addr %s168, 4
      %s170 = scalar_lea.vmem %s3, %s169
      %v172 = vld [vmem:[%s1] sm:$0xf]
      %v173 = vld [vmem:[%s1 + $0x4] sm:$0xf]
      %v174 = vld [vmem:[%s1 + $0x8] sm:$0xf]
      %v175 = vld [vmem:[%s1 + $0xc] sm:$0xf]
      %v176 = vld [vmem:[%s1 + $0x10] sm:$0xf]
      %v177 = vld [vmem:[%s1 + $0x14] sm:$0xf]
      %v178 = vld [vmem:[%s1 + $0x18] sm:$0xf]
      %v179 = vld [vmem:[%s1 + $0x1c] sm:$0xf]
      %v180 = vld [vmem:[%s1 + $0x20] sm:$0xf]
      %v181 = vld [vmem:[%s1 + $0x24] sm:$0xf]
      %v182 = vld [vmem:[%s1 + $0x28] sm:$0xf]
      %v183 = vld [vmem:[%s1 + $0x2c] sm:$0xf]
      %v184 = vld [vmem:[%s1 + $0x30] sm:$0xf]
      %v185 = vld [vmem:[%s1 + $0x34] sm:$0xf]
      %v186 = vld [vmem:[%s1 + $0x38] sm:$0xf]
      %v187 = vld [vmem:[%s1 + $0x3c] sm:$0xf]
      %v188 = vld [vmem:[%s1 + $0x40] sm:$0xf]
      %v189 = vld [vmem:[%s1 + $0x44] sm:$0xf]
      %v190 = vld [vmem:[%s1 + $0x48] sm:$0xf]
      %v191 = vld [vmem:[%s1 + $0x4c] sm:$0xf]
      %v192 = vld [vmem:[%s1 + $0x50] sm:$0xf]
      %v193 = vld [vmem:[%s1 + $0x54] sm:$0xf]
      %v194 = vld [vmem:[%s1 + $0x58] sm:$0xf]
      %v195 = vld [vmem:[%s1 + $0x5c] sm:$0xf]
      %v196 = vld [vmem:[%s1 + $0x60] sm:$0xf]
      %v197 = vld [vmem:[%s1 + $0x64] sm:$0xf]
      %v198 = vld [vmem:[%s1 + $0x68] sm:$0xf]
      %v199 = vld [vmem:[%s1 + $0x6c] sm:$0xf]
      %v200 = vld [vmem:[%s1 + $0x70] sm:$0xf]
      %v201 = vld [vmem:[%s1 + $0x74] sm:$0xf]
      %v202 = vld [vmem:[%s1 + $0x78] sm:$0xf]
      %v203 = vld [vmem:[%s1 + $0x7c] sm:$0xf]
      %v204 = vld [vmem:[%s1 + $0x80] sm:$0xf]
      %v205 = vld [vmem:[%s1 + $0x84] sm:$0xf]
      %v206 = vld [vmem:[%s1 + $0x88] sm:$0xf]
      %v207 = vld [vmem:[%s1 + $0x8c] sm:$0xf]
      %v208 = vld [vmem:[%s1 + $0x90] sm:$0xf]
      %v209 = vld [vmem:[%s1 + $0x94] sm:$0xf]
      %v210 = vld [vmem:[%s1 + $0x98] sm:$0xf]
      %v211 = vld [vmem:[%s1 + $0x9c] sm:$0xf]
      %v212 = vld [vmem:[%s1 + $0xa0] sm:$0xf]
      %v213 = vld [vmem:[%s1 + $0xa4] sm:$0xf]
      %v214 = vld [vmem:[%s1 + $0xa8] sm:$0xf]
      %v215 = vld [vmem:[%s1 + $0xac] sm:$0xf]
      %v216 = vld [vmem:[%s1 + $0xb0] sm:$0xf]
      %v217 = vld [vmem:[%s1 + $0xb4] sm:$0xf]
      %v218 = vld [vmem:[%s1 + $0xb8] sm:$0xf]
      %v219 = vld [vmem:[%s1 + $0xbc] sm:$0xf]
      %v220 = vld [vmem:[%s1 + $0xc0] sm:$0xf]
      %v221 = vld [vmem:[%s1 + $0xc4] sm:$0xf]
      %v222 = vld [vmem:[%s1 + $0xc8] sm:$0xf]
      %v223 = vld [vmem:[%s1 + $0xcc] sm:$0xf]
      %v224 = vld [vmem:[%s1 + $0xd0] sm:$0xf]
      %v225 = vld [vmem:[%s1 + $0xd4] sm:$0xf]
      %v226 = vld [vmem:[%s2] sm:$0x1]
      %v227 = vld [vmem:[%s165] sm:$0xc]
      %v228 = vld [vmem:[%s165 + $0x4] sm:$0xf]
      %v229 = vld [vmem:[%s165 + $0x8] sm:$0xf]
      %v230 = vld [vmem:[%s165 + $0xc] sm:$0xf]
      %v231 = vld [vmem:[%s165 + $0x10] sm:$0xf]
      %v232 = vld [vmem:[%s165 + $0x14] sm:$0xf]
      %v233 = vld [vmem:[%s165 + $0x18] sm:$0xf]
      %v234 = vld [vmem:[%s165 + $0x1c] sm:$0xf]
      %v235 = vld [vmem:[%s165 + $0x20] sm:$0xf]
      %v236 = vld [vmem:[%s165 + $0x24] sm:$0xf]
      %v237 = vld [vmem:[%s165 + $0x28] sm:$0x7]
      %vm238 = vsmask.f32 1280
      %vm239 = vsmask.f32 5392
      %vm240 = vmor %vm238, %vm239
      %v242 = vshrl.u32 %v227, 16
      %v244 = vrot.slane %v242, 6
      %v245 = vshll.u32 %v227, 16
      %v247 = vrot.slane %v245, 7
      %v248 = vor.u32 %v244, %v247
      %v249 = vrot.slane %v248, 4
      %v251 = vshrl.u32 %v228, 16
      %v253 = vrot.slane %v251, 6
      %v254 = vshll.u32 %v228, 16
      %v256 = vrot.slane %v254, 7
      %v257 = vor.u32 %v253, %v256
      %v258 = vsel %vm240, %v249, %v257
      %v259 = vrot.slane %v257, 4
      %v261 = vshrl.u32 %v229, 16
      %v263 = vrot.slane %v261, 6
      %v264 = vshll.u32 %v229, 16
      %v266 = vrot.slane %v264, 7
      %v267 = vor.u32 %v263, %v266
      %v268 = vsel %vm240, %v259, %v267
      %v269 = vrot.slane %v267, 4
      %v271 = vshrl.u32 %v230, 16
      %v273 = vrot.slane %v271, 6
      %v274 = vshll.u32 %v230, 16
      %v276 = vrot.slane %v274, 7
      %v277 = vor.u32 %v273, %v276
      %v278 = vsel %vm240, %v269, %v277
      %v279 = vrot.slane %v277, 4
      %v281 = vshrl.u32 %v231, 16
      %v283 = vrot.slane %v281, 6
      %v284 = vshll.u32 %v231, 16
      %v286 = vrot.slane %v284, 7
      %v287 = vor.u32 %v283, %v286
      %v288 = vsel %vm240, %v279, %v287
      %v289 = vrot.slane %v287, 4
      %v291 = vshrl.u32 %v232, 16
      %v293 = vrot.slane %v291, 6
      %v294 = vshll.u32 %v232, 16
      %v296 = vrot.slane %v294, 7
      %v297 = vor.u32 %v293, %v296
      %v298 = vsel %vm240, %v289, %v297
      %v299 = vrot.slane %v297, 4
      %v301 = vshrl.u32 %v233, 16
      %v303 = vrot.slane %v301, 6
      %v304 = vshll.u32 %v233, 16
      %v306 = vrot.slane %v304, 7
      %v307 = vor.u32 %v303, %v306
      %v308 = vsel %vm240, %v299, %v307
      %v309 = vrot.slane %v307, 4
      %v311 = vshrl.u32 %v234, 16
      %v313 = vrot.slane %v311, 6
      %v314 = vshll.u32 %v234, 16
      %v316 = vrot.slane %v314, 7
      %v317 = vor.u32 %v313, %v316
      %v318 = vsel %vm240, %v309, %v317
      %v319 = vrot.slane %v317, 4
      %v321 = vshrl.u32 %v235, 16
      %v323 = vrot.slane %v321, 6
      %v324 = vshll.u32 %v235, 16
      %v326 = vrot.slane %v324, 7
      %v327 = vor.u32 %v323, %v326
      %v328 = vsel %vm240, %v319, %v327
      %v329 = vrot.slane %v327, 4
      %v331 = vshrl.u32 %v236, 16
      %v333 = vrot.slane %v331, 6
      %v334 = vshll.u32 %v236, 16
      %v336 = vrot.slane %v334, 7
      %v337 = vor.u32 %v333, %v336
      %v338 = vsel %vm240, %v329, %v337
      %v339 = vrot.slane %v337, 4
      %v341 = vshrl.u32 %v237, 16
      %v343 = vrot.slane %v341, 6
      %v344 = vshll.u32 %v237, 16
      %v346 = vrot.slane %v344, 7
      %v347 = vor.u32 %v343, %v346
      %v348 = vsel %vm240, %v339, %v347
      %vm359 = vcmask 388096
      %360 = vst.msk [vmem:[#allocation2] sm:$0xf] %vm359, %v258
      %361 = vst.msk [vmem:[#allocation2 + $0x10] sm:$0xf] %vm359, %v268
      %362 = vst.msk [vmem:[#allocation2 + $0x20] sm:$0xf] %vm359, %v278
      %363 = vst.msk [vmem:[#allocation2 + $0x30] sm:$0xf] %vm359, %v288
      %364 = vst.msk [vmem:[#allocation2 + $0x40] sm:$0xf] %vm359, %v298
      %365 = vst.msk [vmem:[#allocation2 + $0x50] sm:$0xf] %vm359, %v308
      %366 = vst.msk [vmem:[#allocation2 + $0x60] sm:$0xf] %vm359, %v318
      %367 = vst.msk [vmem:[#allocation2 + $0x70] sm:$0xf] %vm359, %v328
      %368 = vst.msk [vmem:[#allocation2 + $0x80] sm:$0xf] %vm359, %v338
      %369 = vst.msk [vmem:[#allocation2 + $0x90] sm:$0xf] %vm359, %v348
      %v370 = vld [vmem:[%s165] sm:$0x8]
      %v371 = vld [vmem:[%s165 + $0x4] sm:$0xf]
      %v372 = vld [vmem:[%s165 + $0x8] sm:$0xf]
      %v373 = vld [vmem:[%s165 + $0xc] sm:$0xf]
      %v374 = vld [vmem:[%s165 + $0x10] sm:$0xf]
      %v375 = vld [vmem:[%s165 + $0x14] sm:$0xf]
      %v376 = vld [vmem:[%s165 + $0x18] sm:$0xf]
      %v377 = vld [vmem:[%s165 + $0x1c] sm:$0xf]
      %v378 = vld [vmem:[%s165 + $0x20] sm:$0xf]
      %v379 = vld [vmem:[%s165 + $0x24] sm:$0xf]
      %v380 = vld [vmem:[%s165 + $0x28] sm:$0x7]
      %vm392 = vcmask 1040384
      %vm393 = vcmask 1044484
      %vm394 = vmor %vm392, %vm393
      %v395 = vrot.slane %v370, 7
      %v396 = vrot.slane %v395, 4
      %v397 = vrot.slane %v371, 7
      %v398 = vsel %vm394, %v396, %v397
      %v399 = vrot.slane %v397, 4
      %v400 = vrot.slane %v372, 7
      %v401 = vsel %vm394, %v399, %v400
      %v402 = vrot.slane %v400, 4
      %v403 = vrot.slane %v373, 7
      %v404 = vsel %vm394, %v402, %v403
      %v405 = vrot.slane %v403, 4
      %v406 = vrot.slane %v374, 7
      %v407 = vsel %vm394, %v405, %v406
      %v408 = vrot.slane %v406, 4
      %v409 = vrot.slane %v375, 7
      %v410 = vsel %vm394, %v408, %v409
      %v411 = vrot.slane %v409, 4
      %v412 = vrot.slane %v376, 7
      %v413 = vsel %vm394, %v411, %v412
      %v414 = vrot.slane %v412, 4
      %v415 = vrot.slane %v377, 7
      %v416 = vsel %vm394, %v414, %v415
      %v417 = vrot.slane %v415, 4
      %v418 = vrot.slane %v378, 7
      %v419 = vsel %vm394, %v417, %v418
      %v420 = vrot.slane %v418, 4
      %v421 = vrot.slane %v379, 7
      %v422 = vsel %vm394, %v420, %v421
      %v423 = vrot.slane %v421, 4
      %v424 = vrot.slane %v380, 7
      %v425 = vsel %vm394, %v423, %v424
      %426 = vrot.lane.b32.xlu0 %v398, 48
      %v427 = vpop.permute.xlu0 %426
      %428 = vrot.lane.b32.xlu0 %v401, 48
      %v429 = vpop.permute.xlu0 %428
      %430 = vrot.lane.b32.xlu0 %v404, 48
      %v431 = vpop.permute.xlu0 %430
      %432 = vrot.lane.b32.xlu0 %v407, 48
      %v433 = vpop.permute.xlu0 %432
      %434 = vrot.lane.b32.xlu0 %v410, 48
      %v435 = vpop.permute.xlu0 %434
      %436 = vrot.lane.b32.xlu0 %v413, 48
      %v437 = vpop.permute.xlu0 %436
      %438 = vrot.lane.b32.xlu0 %v416, 48
      %v439 = vpop.permute.xlu0 %438
      %440 = vrot.lane.b32.xlu0 %v419, 48
      %v441 = vpop.permute.xlu0 %440
      %442 = vrot.lane.b32.xlu0 %v422, 48
      %v443 = vpop.permute.xlu0 %442
      %444 = vrot.lane.b32.xlu0 %v425, 48
      %v445 = vpop.permute.xlu0 %444
      %vm456 = vcmask 781696
      %457 = vst.msk [vmem:[#allocation2] sm:$0xf] %vm456, %v427
      %458 = vst.msk [vmem:[#allocation2 + $0x10] sm:$0xf] %vm456, %v429
      %459 = vst.msk [vmem:[#allocation2 + $0x20] sm:$0xf] %vm456, %v431
      %460 = vst.msk [vmem:[#allocation2 + $0x30] sm:$0xf] %vm456, %v433
      %461 = vst.msk [vmem:[#allocation2 + $0x40] sm:$0xf] %vm456, %v435
      %462 = vst.msk [vmem:[#allocation2 + $0x50] sm:$0xf] %vm456, %v437
      %463 = vst.msk [vmem:[#allocation2 + $0x60] sm:$0xf] %vm456, %v439
      %464 = vst.msk [vmem:[#allocation2 + $0x70] sm:$0xf] %vm456, %v441
      %465 = vst.msk [vmem:[#allocation2 + $0x80] sm:$0xf] %vm456, %v443
      %466 = vst.msk [vmem:[#allocation2 + $0x90] sm:$0xf] %vm456, %v445
      %v467 = vld [vmem:[%s165] sm:$0x8]
      %v468 = vld [vmem:[%s165 + $0x4] sm:$0xf]
      %v469 = vld [vmem:[%s165 + $0x8] sm:$0xf]
      %v470 = vld [vmem:[%s165 + $0xc] sm:$0xf]
      %v471 = vld [vmem:[%s165 + $0x10] sm:$0xf]
      %v472 = vld [vmem:[%s165 + $0x14] sm:$0xf]
      %v473 = vld [vmem:[%s165 + $0x18] sm:$0xf]
      %v474 = vld [vmem:[%s165 + $0x1c] sm:$0xf]
      %v475 = vld [vmem:[%s165 + $0x20] sm:$0xf]
      %v476 = vld [vmem:[%s165 + $0x24] sm:$0xf]
      %v477 = vld [vmem:[%s165 + $0x28] sm:$0xf]
      %vm478 = vsmask.f32 256
      %vm479 = vsmask.f32 4368
      %vm480 = vmor %vm478, %vm479
      %v482 = vshrl.u32 %v467, 16
      %v484 = vrot.slane %v482, 7
      %v485 = vrot.slane %v484, 4
      %v487 = vshrl.u32 %v468, 16
      %v489 = vrot.slane %v487, 7
      %v490 = vshll.u32 %v468, 16
      %v492 = vor.u32 %v489, %v490
      %v493 = vsel %vm480, %v485, %v492
      %v494 = vrot.slane %v489, 4
      %v496 = vshrl.u32 %v469, 16
      %v498 = vrot.slane %v496, 7
      %v499 = vshll.u32 %v469, 16
      %v501 = vor.u32 %v498, %v499
      %v502 = vsel %vm480, %v494, %v501
      %v503 = vrot.slane %v498, 4
      %v505 = vshrl.u32 %v470, 16
      %v507 = vrot.slane %v505, 7
      %v508 = vshll.u32 %v470, 16
      %v510 = vor.u32 %v507, %v508
      %v511 = vsel %vm480, %v503, %v510
      %v512 = vrot.slane %v507, 4
      %v514 = vshrl.u32 %v471, 16
      %v516 = vrot.slane %v514, 7
      %v517 = vshll.u32 %v471, 16
      %v519 = vor.u32 %v516, %v517
      %v520 = vsel %vm480, %v512, %v519
      %v521 = vrot.slane %v516, 4
      %v523 = vshrl.u32 %v472, 16
      %v525 = vrot.slane %v523, 7
      %v526 = vshll.u32 %v472, 16
      %v528 = vor.u32 %v525, %v526
      %v529 = vsel %vm480, %v521, %v528
      %v530 = vrot.slane %v525, 4
      %v532 = vshrl.u32 %v473, 16
      %v534 = vrot.slane %v532, 7
      %v535 = vshll.u32 %v473, 16
      %v537 = vor.u32 %v534, %v535
      %v538 = vsel %vm480, %v530, %v537
      %v539 = vrot.slane %v534, 4
      %v541 = vshrl.u32 %v474, 16
      %v543 = vrot.slane %v541, 7
      %v544 = vshll.u32 %v474, 16
      %v546 = vor.u32 %v543, %v544
      %v547 = vsel %vm480, %v539, %v546
      %v548 = vrot.slane %v543, 4
      %v550 = vshrl.u32 %v475, 16
      %v552 = vrot.slane %v550, 7
      %v553 = vshll.u32 %v475, 16
      %v555 = vor.u32 %v552, %v553
      %v556 = vsel %vm480, %v548, %v555
      %v557 = vrot.slane %v552, 4
      %v559 = vshrl.u32 %v476, 16
      %v561 = vrot.slane %v559, 7
      %v562 = vshll.u32 %v476, 16
      %v564 = vor.u32 %v561, %v562
      %v565 = vsel %vm480, %v557, %v564
      %v566 = vrot.slane %v561, 4
      %v568 = vshrl.u32 %v477, 16
      %v570 = vrot.slane %v568, 7
      %v571 = vshll.u32 %v477, 16
      %v573 = vor.u32 %v570, %v571
      %v574 = vsel %vm480, %v566, %v573
      %575 = vrot.lane.b32.xlu0 %v493, 96
      %v576 = vpop.permute.xlu0 %575
      %577 = vrot.lane.b32.xlu0 %v502, 96
      %v578 = vpop.permute.xlu0 %577
      %579 = vrot.lane.b32.xlu0 %v511, 96
      %v580 = vpop.permute.xlu0 %579
      %581 = vrot.lane.b32.xlu0 %v520, 96
      %v582 = vpop.permute.xlu0 %581
      %583 = vrot.lane.b32.xlu0 %v529, 96
      %v584 = vpop.permute.xlu0 %583
      %585 = vrot.lane.b32.xlu0 %v538, 96
      %v586 = vpop.permute.xlu0 %585
      %587 = vrot.lane.b32.xlu0 %v547, 96
      %v588 = vpop.permute.xlu0 %587
      %589 = vrot.lane.b32.xlu0 %v556, 96
      %v590 = vpop.permute.xlu0 %589
      %591 = vrot.lane.b32.xlu0 %v565, 96
      %v592 = vpop.permute.xlu0 %591
      %593 = vrot.lane.b32.xlu0 %v574, 96
      %v594 = vpop.permute.xlu0 %593
      %v595 = vrot.slane %v576, 4
      %v596 = vrot.slane %v578, 4
      %v597 = vrot.slane %v580, 4
      %v598 = vrot.slane %v582, 4
      %v599 = vrot.slane %v584, 4
      %v600 = vrot.slane %v586, 4
      %v601 = vrot.slane %v588, 4
      %v602 = vrot.slane %v590, 4
      %v603 = vrot.slane %v592, 4
      %v604 = vrot.slane %v594, 4
      %vm605 = vcmask 785408
      %v606 = vsel %vm605, %v595, %v576
      %v607 = vsel %vm605, %v596, %v578
      %v608 = vsel %vm605, %v597, %v580
      %v609 = vsel %vm605, %v598, %v582
      %v610 = vsel %vm605, %v599, %v584
      %v611 = vsel %vm605, %v600, %v586
      %v612 = vsel %vm605, %v601, %v588
      %v613 = vsel %vm605, %v602, %v590
      %v614 = vsel %vm605, %v603, %v592
      %v615 = vsel %vm605, %v604, %v594
      %vm626 = vcmask 1044224
      %vm627 = vcmask 130052
      %vm628 = vmor %vm627, %vm626
      %629 = vst.msk [vmem:[#allocation2] sm:$0xff] %vm628, %v606
      %630 = vst.msk [vmem:[#allocation2 + $0x10] sm:$0xff] %vm628, %v607
      %631 = vst.msk [vmem:[#allocation2 + $0x20] sm:$0xff] %vm628, %v608
      %632 = vst.msk [vmem:[#allocation2 + $0x30] sm:$0xff] %vm628, %v609
      %633 = vst.msk [vmem:[#allocation2 + $0x40] sm:$0xff] %vm628, %v610
      %634 = vst.msk [vmem:[#allocation2 + $0x50] sm:$0xff] %vm628, %v611
      %635 = vst.msk [vmem:[#allocation2 + $0x60] sm:$0xff] %vm628, %v612
      %636 = vst.msk [vmem:[#allocation2 + $0x70] sm:$0xff] %vm628, %v613
      %637 = vst.msk [vmem:[#allocation2 + $0x80] sm:$0xff] %vm628, %v614
      %638 = vst.msk [vmem:[#allocation2 + $0x90] sm:$0xff] %vm628, %v615
      %v639 = vld [vmem:[%s165 + $0x4] sm:$0x8]
      %v640 = vld [vmem:[%s165 + $0x8] sm:$0xf]
      %v641 = vld [vmem:[%s165 + $0xc] sm:$0xf]
      %v642 = vld [vmem:[%s165 + $0x10] sm:$0xf]
      %v643 = vld [vmem:[%s165 + $0x14] sm:$0xf]
      %v644 = vld [vmem:[%s165 + $0x18] sm:$0xf]
      %v645 = vld [vmem:[%s165 + $0x1c] sm:$0xf]
      %v646 = vld [vmem:[%s165 + $0x20] sm:$0xf]
      %v647 = vld [vmem:[%s165 + $0x24] sm:$0xf]
      %v648 = vld [vmem:[%s165 + $0x28] sm:$0xf]
      %v649 = vld [vmem:[%s165 + $0x2c] sm:$0xf]
      %v651 = vshrl.u32 %v639, 16
      %v653 = vrot.slane %v651, 7
      %v654 = vrot.slane %v653, 4
      %v656 = vshrl.u32 %v640, 16
      %v658 = vrot.slane %v656, 7
      %v659 = vshll.u32 %v640, 16
      %v661 = vor.u32 %v658, %v659
      %v662 = vsel %vm480, %v654, %v661
      %v663 = vrot.slane %v658, 4
      %v665 = vshrl.u32 %v641, 16
      %v667 = vrot.slane %v665, 7
      %v668 = vshll.u32 %v641, 16
      %v670 = vor.u32 %v667, %v668
      %v671 = vsel %vm480, %v663, %v670
      %v672 = vrot.slane %v667, 4
      %v674 = vshrl.u32 %v642, 16
      %v676 = vrot.slane %v674, 7
      %v677 = vshll.u32 %v642, 16
      %v679 = vor.u32 %v676, %v677
      %v680 = vsel %vm480, %v672, %v679
      %v681 = vrot.slane %v676, 4
      %v683 = vshrl.u32 %v643, 16
      %v685 = vrot.slane %v683, 7
      %v686 = vshll.u32 %v643, 16
      %v688 = vor.u32 %v685, %v686
      %v689 = vsel %vm480, %v681, %v688
      %v690 = vrot.slane %v685, 4
      %v692 = vshrl.u32 %v644, 16
      %v694 = vrot.slane %v692, 7
      %v695 = vshll.u32 %v644, 16
      %v697 = vor.u32 %v694, %v695
      %v698 = vsel %vm480, %v690, %v697
      %v699 = vrot.slane %v694, 4
      %v701 = vshrl.u32 %v645, 16
      %v703 = vrot.slane %v701, 7
      %v704 = vshll.u32 %v645, 16
      %v706 = vor.u32 %v703, %v704
      %v707 = vsel %vm480, %v699, %v706
      %v708 = vrot.slane %v703, 4
      %v710 = vshrl.u32 %v646, 16
      %v712 = vrot.slane %v710, 7
      %v713 = vshll.u32 %v646, 16
      %v715 = vor.u32 %v712, %v713
      %v716 = vsel %vm480, %v708, %v715
      %v717 = vrot.slane %v712, 4
      %v719 = vshrl.u32 %v647, 16
      %v721 = vrot.slane %v719, 7
      %v722 = vshll.u32 %v647, 16
      %v724 = vor.u32 %v721, %v722
      %v725 = vsel %vm480, %v717, %v724
      %v726 = vrot.slane %v721, 4
      %v728 = vshrl.u32 %v648, 16
      %v730 = vrot.slane %v728, 7
      %v731 = vshll.u32 %v648, 16
      %v733 = vor.u32 %v730, %v731
      %v734 = vsel %vm480, %v726, %v733
      %v735 = vrot.slane %v730, 4
      %v737 = vshrl.u32 %v649, 16
      %v739 = vrot.slane %v737, 7
      %v740 = vshll.u32 %v649, 16
      %v742 = vor.u32 %v739, %v740
      %v743 = vsel %vm480, %v735, %v742
      %744 = vrot.lane.b32.xlu0 %v662, 16
      %v745 = vpop.permute.xlu0 %744
      %746 = vrot.lane.b32.xlu0 %v671, 16
      %v747 = vpop.permute.xlu0 %746
      %748 = vrot.lane.b32.xlu0 %v680, 16
      %v749 = vpop.permute.xlu0 %748
      %750 = vrot.lane.b32.xlu0 %v689, 16
      %v751 = vpop.permute.xlu0 %750
      %752 = vrot.lane.b32.xlu0 %v698, 16
      %v753 = vpop.permute.xlu0 %752
      %754 = vrot.lane.b32.xlu0 %v707, 16
      %v755 = vpop.permute.xlu0 %754
      %756 = vrot.lane.b32.xlu0 %v716, 16
      %v757 = vpop.permute.xlu0 %756
      %758 = vrot.lane.b32.xlu0 %v725, 16
      %v759 = vpop.permute.xlu0 %758
      %760 = vrot.lane.b32.xlu0 %v734, 16
      %v761 = vpop.permute.xlu0 %760
      %762 = vrot.lane.b32.xlu0 %v743, 16
      %v763 = vpop.permute.xlu0 %762
      %vm774 = vcmask 519296
      %775 = vst.msk [vmem:[#allocation2 + $0x4] sm:$0xf] %vm774, %v745
      %776 = vst.msk [vmem:[#allocation2 + $0x14] sm:$0xf] %vm774, %v747
      %777 = vst.msk [vmem:[#allocation2 + $0x24] sm:$0xf] %vm774, %v749
      %778 = vst.msk [vmem:[#allocation2 + $0x34] sm:$0xf] %vm774, %v751
      %779 = vst.msk [vmem:[#allocation2 + $0x44] sm:$0xf] %vm774, %v753
      %780 = vst.msk [vmem:[#allocation2 + $0x54] sm:$0xf] %vm774, %v755
      %781 = vst.msk [vmem:[#allocation2 + $0x64] sm:$0xf] %vm774, %v757
      %782 = vst.msk [vmem:[#allocation2 + $0x74] sm:$0xf] %vm774, %v759
      %783 = vst.msk [vmem:[#allocation2 + $0x84] sm:$0xf] %vm774, %v761
      %784 = vst.msk [vmem:[#allocation2 + $0x94] sm:$0xf] %vm774, %v763
      %v785 = vld [vmem:[%s165 + $0x8] sm:$0xf]
      %v786 = vld [vmem:[%s165 + $0xc] sm:$0xf]
      %v787 = vld [vmem:[%s165 + $0x10] sm:$0xf]
      %v788 = vld [vmem:[%s165 + $0x14] sm:$0xf]
      %v789 = vld [vmem:[%s165 + $0x18] sm:$0xf]
      %v790 = vld [vmem:[%s165 + $0x1c] sm:$0xf]
      %v791 = vld [vmem:[%s165 + $0x20] sm:$0xf]
      %v792 = vld [vmem:[%s165 + $0x24] sm:$0xf]
      %v793 = vld [vmem:[%s165 + $0x28] sm:$0xf]
      %v794 = vld [vmem:[%s165 + $0x2c] sm:$0xf]
      %805 = vrot.lane.b32.xlu0 %v785, 64
      %v806 = vpop.permute.xlu0 %805
      %807 = vrot.lane.b32.xlu0 %v786, 64
      %v808 = vpop.permute.xlu0 %807
      %809 = vrot.lane.b32.xlu0 %v787, 64
      %v810 = vpop.permute.xlu0 %809
      %811 = vrot.lane.b32.xlu0 %v788, 64
      %v812 = vpop.permute.xlu0 %811
      %813 = vrot.lane.b32.xlu0 %v789, 64
      %v814 = vpop.permute.xlu0 %813
      %815 = vrot.lane.b32.xlu0 %v790, 64
      %v816 = vpop.permute.xlu0 %815
      %817 = vrot.lane.b32.xlu0 %v791, 64
      %v818 = vpop.permute.xlu0 %817
      %819 = vrot.lane.b32.xlu0 %v792, 64
      %v820 = vpop.permute.xlu0 %819
      %821 = vrot.lane.b32.xlu0 %v793, 64
      %v822 = vpop.permute.xlu0 %821
      %823 = vrot.lane.b32.xlu0 %v794, 64
      %v824 = vpop.permute.xlu0 %823
      %vm835 = vcmask 912896
      %836 = vst.msk [vmem:[#allocation2 + $0x4] sm:$0xf] %vm835, %v806
      %837 = vst.msk [vmem:[#allocation2 + $0x14] sm:$0xf] %vm835, %v808
      %838 = vst.msk [vmem:[#allocation2 + $0x24] sm:$0xf] %vm835, %v810
      %839 = vst.msk [vmem:[#allocation2 + $0x34] sm:$0xf] %vm835, %v812
      %840 = vst.msk [vmem:[#allocation2 + $0x44] sm:$0xf] %vm835, %v814
      %841 = vst.msk [vmem:[#allocation2 + $0x54] sm:$0xf] %vm835, %v816
      %842 = vst.msk [vmem:[#allocation2 + $0x64] sm:$0xf] %vm835, %v818
      %843 = vst.msk [vmem:[#allocation2 + $0x74] sm:$0xf] %vm835, %v820
      %844 = vst.msk [vmem:[#allocation2 + $0x84] sm:$0xf] %vm835, %v822
      %845 = vst.msk [vmem:[#allocation2 + $0x94] sm:$0xf] %vm835, %v824
      %v846 = vld [vmem:[%s165 + $0x8] sm:$0xf]
      %v847 = vld [vmem:[%s165 + $0xc] sm:$0xf]
      %v848 = vld [vmem:[%s165 + $0x10] sm:$0xf]
      %v849 = vld [vmem:[%s165 + $0x14] sm:$0xf]
      %v850 = vld [vmem:[%s165 + $0x18] sm:$0xf]
      %v851 = vld [vmem:[%s165 + $0x1c] sm:$0xf]
      %v852 = vld [vmem:[%s165 + $0x20] sm:$0xf]
      %v853 = vld [vmem:[%s165 + $0x24] sm:$0xf]
      %v854 = vld [vmem:[%s165 + $0x28] sm:$0xf]
      %v855 = vld [vmem:[%s165 + $0x2c] sm:$0xf]
      %v856 = vld [vmem:[%s165 + $0x30] sm:$0x1]
      %vm857 = vsmask.f32 3328
      %vm858 = vsmask.f32 7440
      %vm859 = vmor %vm857, %vm858
      %v861 = vshrl.u32 %v846, 16
      %v863 = vrot.slane %v861, 4
      %v864 = vshll.u32 %v846, 16
      %v866 = vrot.slane %v864, 5
      %v867 = vor.u32 %v863, %v866
      %v868 = vrot.slane %v867, 4
      %v870 = vshll.u32 %v847, 16
      %v872 = vrot.slane %v870, 5
      %v873 = vsel %vm859, %v868, %v872
      %v874 = vshrl.u32 %v847, 16
      %v876 = vrot.slane %v874, 4
      %v877 = vor.u32 %v876, %v872
      %v878 = vrot.slane %v877, 4
      %v880 = vshll.u32 %v848, 16
      %v882 = vrot.slane %v880, 5
      %v883 = vsel %vm859, %v878, %v882
      %v884 = vshrl.u32 %v848, 16
      %v886 = vrot.slane %v884, 4
      %v887 = vor.u32 %v886, %v882
      %v888 = vrot.slane %v887, 4
      %v890 = vshll.u32 %v849, 16
      %v892 = vrot.slane %v890, 5
      %v893 = vsel %vm859, %v888, %v892
      %v894 = vshrl.u32 %v849, 16
      %v896 = vrot.slane %v894, 4
      %v897 = vor.u32 %v896, %v892
      %v898 = vrot.slane %v897, 4
      %v900 = vshll.u32 %v850, 16
      %v902 = vrot.slane %v900, 5
      %v903 = vsel %vm859, %v898, %v902
      %v904 = vshrl.u32 %v850, 16
      %v906 = vrot.slane %v904, 4
      %v907 = vor.u32 %v906, %v902
      %v908 = vrot.slane %v907, 4
      %v910 = vshll.u32 %v851, 16
      %v912 = vrot.slane %v910, 5
      %v913 = vsel %vm859, %v908, %v912
      %v914 = vshrl.u32 %v851, 16
      %v916 = vrot.slane %v914, 4
      %v917 = vor.u32 %v916, %v912
      %v918 = vrot.slane %v917, 4
      %v920 = vshll.u32 %v852, 16
      %v922 = vrot.slane %v920, 5
      %v923 = vsel %vm859, %v918, %v922
      %v924 = vshrl.u32 %v852, 16
      %v926 = vrot.slane %v924, 4
      %v927 = vor.u32 %v926, %v922
      %v928 = vrot.slane %v927, 4
      %v930 = vshll.u32 %v853, 16
      %v932 = vrot.slane %v930, 5
      %v933 = vsel %vm859, %v928, %v932
      %v934 = vshrl.u32 %v853, 16
      %v936 = vrot.slane %v934, 4
      %v937 = vor.u32 %v936, %v932
      %v938 = vrot.slane %v937, 4
      %v940 = vshll.u32 %v854, 16
      %v942 = vrot.slane %v940, 5
      %v943 = vsel %vm859, %v938, %v942
      %v944 = vshrl.u32 %v854, 16
      %v946 = vrot.slane %v944, 4
      %v947 = vor.u32 %v946, %v942
      %v948 = vrot.slane %v947, 4
      %v950 = vshll.u32 %v855, 16
      %v952 = vrot.slane %v950, 5
      %v953 = vsel %vm859, %v948, %v952
      %v954 = vshrl.u32 %v855, 16
      %v956 = vrot.slane %v954, 4
      %v957 = vor.u32 %v956, %v952
      %v958 = vrot.slane %v957, 4
      %v960 = vshll.u32 %v856, 16
      %v962 = vrot.slane %v960, 5
      %v963 = vsel %vm859, %v958, %v962
      %964 = vrot.lane.b32.xlu0 %v873, 112
      %v965 = vpop.permute.xlu0 %964
      %966 = vrot.lane.b32.xlu0 %v883, 112
      %v967 = vpop.permute.xlu0 %966
      %968 = vrot.lane.b32.xlu0 %v893, 112
      %v969 = vpop.permute.xlu0 %968
      %970 = vrot.lane.b32.xlu0 %v903, 112
      %v971 = vpop.permute.xlu0 %970
      %972 = vrot.lane.b32.xlu0 %v913, 112
      %v973 = vpop.permute.xlu0 %972
      %974 = vrot.lane.b32.xlu0 %v923, 112
      %v975 = vpop.permute.xlu0 %974
      %976 = vrot.lane.b32.xlu0 %v933, 112
      %v977 = vpop.permute.xlu0 %976
      %978 = vrot.lane.b32.xlu0 %v943, 112
      %v979 = vpop.permute.xlu0 %978
      %980 = vrot.lane.b32.xlu0 %v953, 112
      %v981 = vpop.permute.xlu0 %980
      %982 = vrot.lane.b32.xlu0 %v963, 112
      %v983 = vpop.permute.xlu0 %982
      %v984 = vrot.slane %v965, 4
      %v985 = vrot.slane %v967, 4
      %v986 = vrot.slane %v969, 4
      %v987 = vrot.slane %v971, 4
      %v988 = vrot.slane %v973, 4
      %v989 = vrot.slane %v975, 4
      %v990 = vrot.slane %v977, 4
      %v991 = vrot.slane %v979, 4
      %v992 = vrot.slane %v981, 4
      %v993 = vrot.slane %v983, 4
      %vm994 = vcmask 916480
      %v995 = vsel %vm994, %v984, %v965
      %v996 = vsel %vm994, %v985, %v967
      %v997 = vsel %vm994, %v986, %v969
      %v998 = vsel %vm994, %v987, %v971
      %v999 = vsel %vm994, %v988, %v973
      %v1000 = vsel %vm994, %v989, %v975
      %v1001 = vsel %vm994, %v990, %v977
      %v1002 = vsel %vm994, %v991, %v979
      %v1003 = vsel %vm994, %v992, %v981
      %v1004 = vsel %vm994, %v993, %v983
      %vm1015 = vcmask 1044352
      %vm1016 = vcmask 261124
      %vm1017 = vmor %vm1016, %vm1015
      %1018 = vst.msk [vmem:[#allocation2 + $0x4] sm:$0xff] %vm1017, %v995
      %1019 = vst.msk [vmem:[#allocation2 + $0x14] sm:$0xff] %vm1017, %v996
      %1020 = vst.msk [vmem:[#allocation2 + $0x24] sm:$0xff] %vm1017, %v997
      %1021 = vst.msk [vmem:[#allocation2 + $0x34] sm:$0xff] %vm1017, %v998
      %1022 = vst.msk [vmem:[#allocation2 + $0x44] sm:$0xff] %vm1017, %v999
      %1023 = vst.msk [vmem:[#allocation2 + $0x54] sm:$0xff] %vm1017, %v1000
      %1024 = vst.msk [vmem:[#allocation2 + $0x64] sm:$0xff] %vm1017, %v1001
      %1025 = vst.msk [vmem:[#allocation2 + $0x74] sm:$0xff] %vm1017, %v1002
      %1026 = vst.msk [vmem:[#allocation2 + $0x84] sm:$0xff] %vm1017, %v1003
      %1027 = vst.msk [vmem:[#allocation2 + $0x94] sm:$0xff] %vm1017, %v1004
      %v1028 = vld [vmem:[%s165 + $0xc] sm:$0xf]
      %v1029 = vld [vmem:[%s165 + $0x10] sm:$0xf]
      %v1030 = vld [vmem:[%s165 + $0x14] sm:$0xf]
      %v1031 = vld [vmem:[%s165 + $0x18] sm:$0xf]
      %v1032 = vld [vmem:[%s165 + $0x1c] sm:$0xf]
      %v1033 = vld [vmem:[%s165 + $0x20] sm:$0xf]
      %v1034 = vld [vmem:[%s165 + $0x24] sm:$0xf]
      %v1035 = vld [vmem:[%s165 + $0x28] sm:$0xf]
      %v1036 = vld [vmem:[%s165 + $0x2c] sm:$0xf]
      %v1037 = vld [vmem:[%s165 + $0x30] sm:$0xf]
      %v1038 = vld [vmem:[%s165 + $0x34] sm:$0x1]
      %v1040 = vshrl.u32 %v1028, 16
      %v1042 = vrot.slane %v1040, 4
      %v1043 = vshll.u32 %v1028, 16
      %v1045 = vrot.slane %v1043, 5
      %v1046 = vor.u32 %v1042, %v1045
      %v1047 = vrot.slane %v1046, 4
      %v1049 = vshll.u32 %v1029, 16
      %v1051 = vrot.slane %v1049, 5
      %v1052 = vsel %vm859, %v1047, %v1051
      %v1053 = vshrl.u32 %v1029, 16
      %v1055 = vrot.slane %v1053, 4
      %v1056 = vor.u32 %v1055, %v1051
      %v1057 = vrot.slane %v1056, 4
      %v1059 = vshll.u32 %v1030, 16
      %v1061 = vrot.slane %v1059, 5
      %v1062 = vsel %vm859, %v1057, %v1061
      %v1063 = vshrl.u32 %v1030, 16
      %v1065 = vrot.slane %v1063, 4
      %v1066 = vor.u32 %v1065, %v1061
      %v1067 = vrot.slane %v1066, 4
      %v1069 = vshll.u32 %v1031, 16
      %v1071 = vrot.slane %v1069, 5
      %v1072 = vsel %vm859, %v1067, %v1071
      %v1073 = vshrl.u32 %v1031, 16
      %v1075 = vrot.slane %v1073, 4
      %v1076 = vor.u32 %v1075, %v1071
      %v1077 = vrot.slane %v1076, 4
      %v1079 = vshll.u32 %v1032, 16
      %v1081 = vrot.slane %v1079, 5
      %v1082 = vsel %vm859, %v1077, %v1081
      %v1083 = vshrl.u32 %v1032, 16
      %v1085 = vrot.slane %v1083, 4
      %v1086 = vor.u32 %v1085, %v1081
      %v1087 = vrot.slane %v1086, 4
      %v1089 = vshll.u32 %v1033, 16
      %v1091 = vrot.slane %v1089, 5
      %v1092 = vsel %vm859, %v1087, %v1091
      %v1093 = vshrl.u32 %v1033, 16
      %v1095 = vrot.slane %v1093, 4
      %v1096 = vor.u32 %v1095, %v1091
      %v1097 = vrot.slane %v1096, 4
      %v1099 = vshll.u32 %v1034, 16
      %v1101 = vrot.slane %v1099, 5
      %v1102 = vsel %vm859, %v1097, %v1101
      %v1103 = vshrl.u32 %v1034, 16
      %v1105 = vrot.slane %v1103, 4
      %v1106 = vor.u32 %v1105, %v1101
      %v1107 = vrot.slane %v1106, 4
      %v1109 = vshll.u32 %v1035, 16
      %v1111 = vrot.slane %v1109, 5
      %v1112 = vsel %vm859, %v1107, %v1111
      %v1113 = vshrl.u32 %v1035, 16
      %v1115 = vrot.slane %v1113, 4
      %v1116 = vor.u32 %v1115, %v1111
      %v1117 = vrot.slane %v1116, 4
      %v1119 = vshll.u32 %v1036, 16
      %v1121 = vrot.slane %v1119, 5
      %v1122 = vsel %vm859, %v1117, %v1121
      %v1123 = vshrl.u32 %v1036, 16
      %v1125 = vrot.slane %v1123, 4
      %v1126 = vor.u32 %v1125, %v1121
      %v1127 = vrot.slane %v1126, 4
      %v1129 = vshll.u32 %v1037, 16
      %v1131 = vrot.slane %v1129, 5
      %v1132 = vsel %vm859, %v1127, %v1131
      %v1133 = vshrl.u32 %v1037, 16
      %v1135 = vrot.slane %v1133, 4
      %v1136 = vor.u32 %v1135, %v1131
      %v1137 = vrot.slane %v1136, 4
      %v1139 = vshll.u32 %v1038, 16
      %v1141 = vrot.slane %v1139, 5
      %v1142 = vsel %vm859, %v1137, %v1141
      %1143 = vrot.lane.b32.xlu0 %v1052, 32
      %v1144 = vpop.permute.xlu0 %1143
      %1145 = vrot.lane.b32.xlu0 %v1062, 32
      %v1146 = vpop.permute.xlu0 %1145
      %1147 = vrot.lane.b32.xlu0 %v1072, 32
      %v1148 = vpop.permute.xlu0 %1147
      %1149 = vrot.lane.b32.xlu0 %v1082, 32
      %v1150 = vpop.permute.xlu0 %1149
      %1151 = vrot.lane.b32.xlu0 %v1092, 32
      %v1152 = vpop.permute.xlu0 %1151
      %1153 = vrot.lane.b32.xlu0 %v1102, 32
      %v1154 = vpop.permute.xlu0 %1153
      %1155 = vrot.lane.b32.xlu0 %v1112, 32
      %v1156 = vpop.permute.xlu0 %1155
      %1157 = vrot.lane.b32.xlu0 %v1122, 32
      %v1158 = vpop.permute.xlu0 %1157
      %1159 = vrot.lane.b32.xlu0 %v1132, 32
      %v1160 = vpop.permute.xlu0 %1159
      %1161 = vrot.lane.b32.xlu0 %v1142, 32
      %v1162 = vpop.permute.xlu0 %1161
      %vm1173 = vcmask 650496
      %1174 = vst.msk [vmem:[#allocation2 + $0x8] sm:$0xf] %vm1173, %v1144
      %1175 = vst.msk [vmem:[#allocation2 + $0x18] sm:$0xf] %vm1173, %v1146
      %1176 = vst.msk [vmem:[#allocation2 + $0x28] sm:$0xf] %vm1173, %v1148
      %1177 = vst.msk [vmem:[#allocation2 + $0x38] sm:$0xf] %vm1173, %v1150
      %1178 = vst.msk [vmem:[#allocation2 + $0x48] sm:$0xf] %vm1173, %v1152
      %1179 = vst.msk [vmem:[#allocation2 + $0x58] sm:$0xf] %vm1173, %v1154
      %1180 = vst.msk [vmem:[#allocation2 + $0x68] sm:$0xf] %vm1173, %v1156
      %1181 = vst.msk [vmem:[#allocation2 + $0x78] sm:$0xf] %vm1173, %v1158
      %1182 = vst.msk [vmem:[#allocation2 + $0x88] sm:$0xf] %vm1173, %v1160
      %1183 = vst.msk [vmem:[#allocation2 + $0x98] sm:$0xf] %vm1173, %v1162
      %v1184 = vld [vmem:[%s165 + $0xc] sm:$0xe]
      %v1185 = vld [vmem:[%s165 + $0x10] sm:$0xf]
      %v1186 = vld [vmem:[%s165 + $0x14] sm:$0xf]
      %v1187 = vld [vmem:[%s165 + $0x18] sm:$0xf]
      %v1188 = vld [vmem:[%s165 + $0x1c] sm:$0xf]
      %v1189 = vld [vmem:[%s165 + $0x20] sm:$0xf]
      %v1190 = vld [vmem:[%s165 + $0x24] sm:$0xf]
      %v1191 = vld [vmem:[%s165 + $0x28] sm:$0xf]
      %v1192 = vld [vmem:[%s165 + $0x2c] sm:$0xf]
      %v1193 = vld [vmem:[%s165 + $0x30] sm:$0xf]
      %v1194 = vld [vmem:[%s165 + $0x34] sm:$0x1]
      %vm1206 = vcmask 1042432
      %vm1207 = vcmask 1046532
      %vm1208 = vmor %vm1206, %vm1207
      %v1209 = vrot.slane %v1184, 5
      %v1210 = vrot.slane %v1209, 4
      %v1211 = vrot.slane %v1185, 5
      %v1212 = vsel %vm1208, %v1210, %v1211
      %v1213 = vrot.slane %v1211, 4
      %v1214 = vrot.slane %v1186, 5
      %v1215 = vsel %vm1208, %v1213, %v1214
      %v1216 = vrot.slane %v1214, 4
      %v1217 = vrot.slane %v1187, 5
      %v1218 = vsel %vm1208, %v1216, %v1217
      %v1219 = vrot.slane %v1217, 4
      %v1220 = vrot.slane %v1188, 5
      %v1221 = vsel %vm1208, %v1219, %v1220
      %v1222 = vrot.slane %v1220, 4
      %v1223 = vrot.slane %v1189, 5
      %v1224 = vsel %vm1208, %v1222, %v1223
      %v1225 = vrot.slane %v1223, 4
      %v1226 = vrot.slane %v1190, 5
      %v1227 = vsel %vm1208, %v1225, %v1226
      %v1228 = vrot.slane %v1226, 4
      %v1229 = vrot.slane %v1191, 5
      %v1230 = vsel %vm1208, %v1228, %v1229
      %v1231 = vrot.slane %v1229, 4
      %v1232 = vrot.slane %v1192, 5
      %v1233 = vsel %vm1208, %v1231, %v1232
      %v1234 = vrot.slane %v1232, 4
      %v1235 = vrot.slane %v1193, 5
      %v1236 = vsel %vm1208, %v1234, %v1235
      %v1237 = vrot.slane %v1235, 4
      %v1238 = vrot.slane %v1194, 5
      %v1239 = vsel %vm1208, %v1237, %v1238
      %1240 = vrot.lane.b32.xlu0 %v1212, 80
      %v1241 = vpop.permute.xlu0 %1240
      %1242 = vrot.lane.b32.xlu0 %v1215, 80
      %v1243 = vpop.permute.xlu0 %1242
      %1244 = vrot.lane.b32.xlu0 %v1218, 80
      %v1245 = vpop.permute.xlu0 %1244
      %1246 = vrot.lane.b32.xlu0 %v1221, 80
      %v1247 = vpop.permute.xlu0 %1246
      %1248 = vrot.lane.b32.xlu0 %v1224, 80
      %v1249 = vpop.permute.xlu0 %1248
      %1250 = vrot.lane.b32.xlu0 %v1227, 80
      %v1251 = vpop.permute.xlu0 %1250
      %1252 = vrot.lane.b32.xlu0 %v1230, 80
      %v1253 = vpop.permute.xlu0 %1252
      %1254 = vrot.lane.b32.xlu0 %v1233, 80
      %v1255 = vpop.permute.xlu0 %1254
      %1256 = vrot.lane.b32.xlu0 %v1236, 80
      %v1257 = vpop.permute.xlu0 %1256
      %1258 = vrot.lane.b32.xlu0 %v1239, 80
      %v1259 = vpop.permute.xlu0 %1258
      %vm1270 = vcmask 1044096
      %1271 = vst.msk [vmem:[#allocation2 + $0x8] sm:$0xf] %vm1270, %v1241
      %1272 = vst.msk [vmem:[#allocation2 + $0x18] sm:$0xf] %vm1270, %v1243
      %1273 = vst.msk [vmem:[#allocation2 + $0x28] sm:$0xf] %vm1270, %v1245
      %1274 = vst.msk [vmem:[#allocation2 + $0x38] sm:$0xf] %vm1270, %v1247
      %1275 = vst.msk [vmem:[#allocation2 + $0x48] sm:$0xf] %vm1270, %v1249
      %1276 = vst.msk [vmem:[#allocation2 + $0x58] sm:$0xf] %vm1270, %v1251
      %1277 = vst.msk [vmem:[#allocation2 + $0x68] sm:$0xf] %vm1270, %v1253
      %1278 = vst.msk [vmem:[#allocation2 + $0x78] sm:$0xf] %vm1270, %v1255
      %1279 = vst.msk [vmem:[#allocation2 + $0x88] sm:$0xf] %vm1270, %v1257
      %1280 = vst.msk [vmem:[#allocation2 + $0x98] sm:$0xf] %vm1270, %v1259
      %v1281 = vld [vmem:[%s165 + $0xc] sm:$0xe]
      %v1282 = vld [vmem:[%s165 + $0x10] sm:$0xf]
      %v1283 = vld [vmem:[%s165 + $0x14] sm:$0xf]
      %v1284 = vld [vmem:[%s165 + $0x18] sm:$0xf]
      %v1285 = vld [vmem:[%s165 + $0x1c] sm:$0xf]
      %v1286 = vld [vmem:[%s165 + $0x20] sm:$0xf]
      %v1287 = vld [vmem:[%s165 + $0x24] sm:$0xf]
      %v1288 = vld [vmem:[%s165 + $0x28] sm:$0xf]
      %v1289 = vld [vmem:[%s165 + $0x2c] sm:$0xf]
      %v1290 = vld [vmem:[%s165 + $0x30] sm:$0xf]
      %v1291 = vld [vmem:[%s165 + $0x34] sm:$0x3]
      %vm1292 = vsmask.f32 2304
      %vm1293 = vsmask.f32 6416
      %vm1294 = vmor %vm1292, %vm1293
      %v1296 = vshrl.u32 %v1281, 16
      %v1298 = vrot.slane %v1296, 5
      %v1299 = vshll.u32 %v1281, 16
      %v1301 = vrot.slane %v1299, 6
      %v1302 = vor.u32 %v1298, %v1301
      %v1303 = vrot.slane %v1302, 4
      %v1305 = vshrl.u32 %v1282, 16
      %v1307 = vrot.slane %v1305, 5
      %v1308 = vshll.u32 %v1282, 16
      %v1310 = vrot.slane %v1308, 6
      %v1311 = vor.u32 %v1307, %v1310
      %v1312 = vsel %vm1294, %v1303, %v1311
      %v1313 = vrot.slane %v1311, 4
      %v1315 = vshrl.u32 %v1283, 16
      %v1317 = vrot.slane %v1315, 5
      %v1318 = vshll.u32 %v1283, 16
      %v1320 = vrot.slane %v1318, 6
      %v1321 = vor.u32 %v1317, %v1320
      %v1322 = vsel %vm1294, %v1313, %v1321
      %v1323 = vrot.slane %v1321, 4
      %v1325 = vshrl.u32 %v1284, 16
      %v1327 = vrot.slane %v1325, 5
      %v1328 = vshll.u32 %v1284, 16
      %v1330 = vrot.slane %v1328, 6
      %v1331 = vor.u32 %v1327, %v1330
      %v1332 = vsel %vm1294, %v1323, %v1331
      %v1333 = vrot.slane %v1331, 4
      %v1335 = vshrl.u32 %v1285, 16
      %v1337 = vrot.slane %v1335, 5
      %v1338 = vshll.u32 %v1285, 16
      %v1340 = vrot.slane %v1338, 6
      %v1341 = vor.u32 %v1337, %v1340
      %v1342 = vsel %vm1294, %v1333, %v1341
      %v1343 = vrot.slane %v1341, 4
      %v1345 = vshrl.u32 %v1286, 16
      %v1347 = vrot.slane %v1345, 5
      %v1348 = vshll.u32 %v1286, 16
      %v1350 = vrot.slane %v1348, 6
      %v1351 = vor.u32 %v1347, %v1350
      %v1352 = vsel %vm1294, %v1343, %v1351
      %v1353 = vrot.slane %v1351, 4
      %v1355 = vshrl.u32 %v1287, 16
      %v1357 = vrot.slane %v1355, 5
      %v1358 = vshll.u32 %v1287, 16
      %v1360 = vrot.slane %v1358, 6
      %v1361 = vor.u32 %v1357, %v1360
      %v1362 = vsel %vm1294, %v1353, %v1361
      %v1363 = vrot.slane %v1361, 4
      %v1365 = vshrl.u32 %v1288, 16
      %v1367 = vrot.slane %v1365, 5
      %v1368 = vshll.u32 %v1288, 16
      %v1370 = vrot.slane %v1368, 6
      %v1371 = vor.u32 %v1367, %v1370
      %v1372 = vsel %vm1294, %v1363, %v1371
      %v1373 = vrot.slane %v1371, 4
      %v1375 = vshrl.u32 %v1289, 16
      %v1377 = vrot.slane %v1375, 5
      %v1378 = vshll.u32 %v1289, 16
      %v1380 = vrot.slane %v1378, 6
      %v1381 = vor.u32 %v1377, %v1380
      %v1382 = vsel %vm1294, %v1373, %v1381
      %v1383 = vrot.slane %v1381, 4
      %v1385 = vshrl.u32 %v1290, 16
      %v1387 = vrot.slane %v1385, 5
      %v1388 = vshll.u32 %v1290, 16
      %v1390 = vrot.slane %v1388, 6
      %v1391 = vor.u32 %v1387, %v1390
      %v1392 = vsel %vm1294, %v1383, %v1391
      %v1393 = vrot.slane %v1391, 4
      %v1395 = vshrl.u32 %v1291, 16
      %v1397 = vrot.slane %v1395, 5
      %v1398 = vshll.u32 %v1291, 16
      %v1400 = vrot.slane %v1398, 6
      %v1401 = vor.u32 %v1397, %v1400
      %v1402 = vsel %vm1294, %v1393, %v1401
      %1413 = vst.msk [vmem:[#allocation2 + $0xc] sm:$0xf] %vm359, %v1312
      %1414 = vst.msk [vmem:[#allocation2 + $0x1c] sm:$0xf] %vm359, %v1322
      %1415 = vst.msk [vmem:[#allocation2 + $0x2c] sm:$0xf] %vm359, %v1332
      %1416 = vst.msk [vmem:[#allocation2 + $0x3c] sm:$0xf] %vm359, %v1342
      %1417 = vst.msk [vmem:[#allocation2 + $0x4c] sm:$0xf] %vm359, %v1352
      %1418 = vst.msk [vmem:[#allocation2 + $0x5c] sm:$0xf] %vm359, %v1362
      %1419 = vst.msk [vmem:[#allocation2 + $0x6c] sm:$0xf] %vm359, %v1372
      %1420 = vst.msk [vmem:[#allocation2 + $0x7c] sm:$0xf] %vm359, %v1382
      %1421 = vst.msk [vmem:[#allocation2 + $0x8c] sm:$0xf] %vm359, %v1392
      %1422 = vst.msk [vmem:[#allocation2 + $0x9c] sm:$0xf] %vm359, %v1402
      %v1423 = vld [vmem:[#allocation2] sm:$0xff]
      %v1424 = vld [vmem:[#allocation2 + $0x8] sm:$0xff]
      %v1425 = vld [vmem:[#allocation2 + $0x10] sm:$0xff]
      %v1426 = vld [vmem:[#allocation2 + $0x18] sm:$0xff]
      %v1427 = vld [vmem:[#allocation2 + $0x20] sm:$0xff]
      %v1428 = vld [vmem:[#allocation2 + $0x28] sm:$0xff]
      %v1429 = vld [vmem:[#allocation2 + $0x30] sm:$0xff]
      %v1430 = vld [vmem:[#allocation2 + $0x38] sm:$0xff]
      %v1431 = vld [vmem:[#allocation2 + $0x40] sm:$0xff]
      %v1432 = vld [vmem:[#allocation2 + $0x48] sm:$0xff]
      %v1433 = vld [vmem:[#allocation2 + $0x50] sm:$0xff]
      %v1434 = vld [vmem:[#allocation2 + $0x58] sm:$0xff]
      %v1435 = vld [vmem:[#allocation2 + $0x60] sm:$0xff]
      %v1436 = vld [vmem:[#allocation2 + $0x68] sm:$0xff]
      %v1437 = vld [vmem:[#allocation2 + $0x70] sm:$0xff]
      %v1438 = vld [vmem:[#allocation2 + $0x78] sm:$0xff]
      %v1439 = vld [vmem:[#allocation2 + $0x80] sm:$0xff]
      %v1440 = vld [vmem:[#allocation2 + $0x88] sm:$0xff]
      %v1441 = vld [vmem:[#allocation2 + $0x90] sm:$0xff]
      %v1442 = vld [vmem:[#allocation2 + $0x98] sm:$0xff]
      %v1444 = vperm.slane %v226, 0
      %v1466 = vunpack.c.l.b16 %v1423
      %v1467 = vunpack.c.h.b16 %v1423
      %v1468 = vunpack.c.l.b16 %v1424
      %v1469 = vunpack.c.h.b16 %v1424
      %v1470 = vunpack.c.l.b16 %v1425
      %v1471 = vunpack.c.h.b16 %v1425
      %v1472 = vunpack.c.l.b16 %v1426
      %v1473 = vunpack.c.h.b16 %v1426
      %v1474 = vunpack.c.l.b16 %v1427
      %v1475 = vunpack.c.h.b16 %v1427
      %v1476 = vunpack.c.l.b16 %v1428
      %v1477 = vunpack.c.h.b16 %v1428
      %v1478 = vunpack.c.l.b16 %v1429
      %v1479 = vunpack.c.h.b16 %v1429
      %v1480 = vunpack.c.l.b16 %v1430
      %v1481 = vunpack.c.h.b16 %v1430
      %v1482 = vunpack.c.l.b16 %v1431
      %v1483 = vunpack.c.h.b16 %v1431
      %v1484 = vunpack.c.l.b16 %v1432
      %v1485 = vunpack.c.h.b16 %v1432
      %v1486 = vunpack.c.l.b16 %v1433
      %v1487 = vunpack.c.h.b16 %v1433
      %v1488 = vunpack.c.l.b16 %v1434
      %v1489 = vunpack.c.h.b16 %v1434
      %v1490 = vunpack.c.l.b16 %v1435
      %v1491 = vunpack.c.h.b16 %v1435
      %v1492 = vunpack.c.l.b16 %v1436
      %v1493 = vunpack.c.h.b16 %v1436
      %v1494 = vunpack.c.l.b16 %v1437
      %v1495 = vunpack.c.h.b16 %v1437
      %v1496 = vunpack.c.l.b16 %v1438
      %v1497 = vunpack.c.h.b16 %v1438
      %v1498 = vunpack.c.l.b16 %v1439
      %v1499 = vunpack.c.h.b16 %v1439
      %v1500 = vunpack.c.l.b16 %v1440
      %v1501 = vunpack.c.h.b16 %v1440
      %v1502 = vunpack.c.l.b16 %v1441
      %v1503 = vunpack.c.h.b16 %v1441
      %v1504 = vunpack.c.l.b16 %v1442
      %v1505 = vunpack.c.h.b16 %v1442
      %v1506 = vpack.c.b16 %v1470, %v1466
      %v1507 = vpack.c.b16 %v1471, %v1467
      %v1508 = vpack.c.b16 %v1472, %v1468
      %v1509 = vpack.c.b16 %v1473, %v1469
      %v1510 = vpack.c.b16 %v1478, %v1474
      %v1511 = vpack.c.b16 %v1479, %v1475
      %v1512 = vpack.c.b16 %v1480, %v1476
      %v1513 = vpack.c.b16 %v1481, %v1477
      %v1514 = vpack.c.b16 %v1486, %v1482
      %v1515 = vpack.c.b16 %v1487, %v1483
      %v1516 = vpack.c.b16 %v1488, %v1484
      %v1517 = vpack.c.b16 %v1489, %v1485
      %v1518 = vpack.c.b16 %v1494, %v1490
      %v1519 = vpack.c.b16 %v1495, %v1491
      %v1520 = vpack.c.b16 %v1496, %v1492
      %v1521 = vpack.c.b16 %v1497, %v1493
      %v1522 = vpack.c.b16 %v1502, %v1498
      %v1523 = vpack.c.b16 %v1503, %v1499
      %v1524 = vpack.c.b16 %v1504, %v1500
      %v1525 = vpack.c.b16 %v1505, %v1501
      %v1595 = vunpack.c.l.b16 %v172
      %v1596 = vunpack.c.l.b16 %v173
      %v1597 = vunpack.c.l.b16 %v174
      %v1598 = vunpack.c.l.b16 %v175
      %v1599 = vunpack.c.l.b16 %v176
      %v1600 = vunpack.c.l.b16 %v177
      %v1601 = vunpack.c.l.b16 %v178
      %v1602 = vunpack.c.l.b16 %v179
      %v1603 = vunpack.c.l.b16 %v180
      %v1604 = vunpack.c.l.b16 %v181
      %v1605 = vunpack.c.l.b16 %v182
      %v1606 = vunpack.c.l.b16 %v183
      %v1607 = vunpack.c.l.b16 %v184
      %v1608 = vunpack.c.l.b16 %v185
      %v1609 = vunpack.c.l.b16 %v186
      %v1610 = vunpack.c.l.b16 %v187
      %v1611 = vunpack.c.l.b16 %v188
      %v1612 = vunpack.c.l.b16 %v189
      %v1613 = vunpack.c.l.b16 %v190
      %v1614 = vunpack.c.l.b16 %v191
      %v1615 = vunpack.c.l.b16 %v192
      %v1616 = vunpack.c.l.b16 %v193
      %v1617 = vunpack.c.l.b16 %v194
      %v1618 = vunpack.c.l.b16 %v195
      %v1619 = vunpack.c.l.b16 %v196
      %v1620 = vunpack.c.l.b16 %v197
      %v1621 = vunpack.c.l.b16 %v198
      %v1622 = vunpack.c.l.b16 %v199
      %v1623 = vunpack.c.l.b16 %v200
      %v1624 = vunpack.c.l.b16 %v201
      %v1625 = vunpack.c.l.b16 %v202
      %v1626 = vunpack.c.l.b16 %v203
      %v1627 = vunpack.c.l.b16 %v204
      %v1628 = vunpack.c.l.b16 %v205
      %v1629 = vunpack.c.l.b16 %v206
      %v1630 = vunpack.c.l.b16 %v207
      %v1631 = vunpack.c.l.b16 %v208
      %v1632 = vunpack.c.l.b16 %v209
      %v1633 = vunpack.c.l.b16 %v210
      %v1634 = vunpack.c.l.b16 %v211
      %v1635 = vunpack.c.l.b16 %v212
      %v1636 = vunpack.c.l.b16 %v213
      %v1637 = vunpack.c.l.b16 %v214
      %v1638 = vunpack.c.l.b16 %v215
      %v1639 = vunpack.c.l.b16 %v216
      %v1640 = vunpack.c.l.b16 %v217
      %v1641 = vunpack.c.l.b16 %v218
      %v1642 = vunpack.c.l.b16 %v219
      %v1643 = vunpack.c.l.b16 %v220
      %v1644 = vunpack.c.l.b16 %v221
      %v1645 = vunpack.c.l.b16 %v222
      %v1646 = vunpack.c.l.b16 %v223
      %v1647 = vunpack.c.l.b16 %v224
      %v1648 = vunpack.c.l.b16 %v225
      %v1649 = vpack.c.b16 %v1596, %v1595
      %v1650 = vpack.c.b16 %v1598, %v1597
      %v1651 = vpack.c.b16 %v1600, %v1599
      %v1652 = vpack.c.b16 %v1602, %v1601
      %v1653 = vpack.c.b16 %v1604, %v1603
      %v1654 = vpack.c.b16 %v1606, %v1605
      %v1655 = vpack.c.b16 %v1608, %v1607
      %v1656 = vpack.c.b16 %v1610, %v1609
      %v1657 = vpack.c.b16 %v1612, %v1611
      %v1658 = vpack.c.b16 %v1614, %v1613
      %v1659 = vpack.c.b16 %v1616, %v1615
      %v1660 = vpack.c.b16 %v1618, %v1617
      %v1661 = vpack.c.b16 %v1620, %v1619
      %v1662 = vpack.c.b16 %v1622, %v1621
      %v1663 = vpack.c.b16 %v1624, %v1623
      %v1664 = vpack.c.b16 %v1626, %v1625
      %v1665 = vpack.c.b16 %v1628, %v1627
      %v1666 = vpack.c.b16 %v1630, %v1629
      %v1667 = vpack.c.b16 %v1632, %v1631
      %v1668 = vpack.c.b16 %v1634, %v1633
      %v1669 = vpack.c.b16 %v1636, %v1635
      %v1670 = vpack.c.b16 %v1638, %v1637
      %v1671 = vpack.c.b16 %v1640, %v1639
      %v1672 = vpack.c.b16 %v1642, %v1641
      %v1673 = vpack.c.b16 %v1644, %v1643
      %v1674 = vpack.c.b16 %v1646, %v1645
      %v1675 = vpack.c.b16 %v1648, %v1647
      %vm1703 = vcmask 392192
      %v1705 = vsel %vm1703, %v1509, 0
      %v1708 = vsel %vm1703, %v1513, 0
      %v1711 = vsel %vm1703, %v1517, 0
      %v1714 = vsel %vm1703, %v1521, 0
      %v1717 = vsel %vm1703, %v1525, 0
      %1719 = vmatpush.bf16.msra.mxu0 %v1656
      %1720 = vmatpush.bf16.msra.mxu0 %v1655
      %1721 = vmatpush.bf16.msra.mxu0 %v1654
      %1722 = vmatpush.bf16.msra.mxu0 %v1653
      %1723 = vmatpush.bf16.msra.mxu0 %v1652
      %1724 = vmatpush.bf16.msra.mxu0 %v1651
      %1725 = vmatpush.bf16.msra.mxu0 %v1650
      %1726 = vmatpush.bf16.msra.mxu0 %v1649
      %1727 = vmatmul.bf16.gmra.mxu0 %v1506
      %v1728 = vpop.f32.mrf.mxu0
      %v1729 = vadd.f32 %v1444, %v1728
      %v1730 = vpop.f32.mrf.mxu0
      %v1731 = vadd.f32 %v1444, %v1730
      %1732 = vmatmul.bf16.gmra.mxu0 %v1510
      %v1733 = vpop.f32.mrf.mxu0
      %v1734 = vadd.f32 %v1444, %v1733
      %v1735 = vpop.f32.mrf.mxu0
      %v1736 = vadd.f32 %v1444, %v1735
      %1737 = vmatmul.bf16.gmra.mxu0 %v1514
      %v1738 = vpop.f32.mrf.mxu0
      %v1739 = vadd.f32 %v1444, %v1738
      %v1740 = vpop.f32.mrf.mxu0
      %v1741 = vadd.f32 %v1444, %v1740
      %1742 = vmatmul.bf16.gmra.mxu0 %v1518
      %v1743 = vpop.f32.mrf.mxu0
      %v1744 = vadd.f32 %v1444, %v1743
      %v1745 = vpop.f32.mrf.mxu0
      %v1746 = vadd.f32 %v1444, %v1745
      %1747 = vmatmul.bf16.gmra.mxu0 %v1522
      %v1748 = vpop.f32.mrf.mxu0
      %v1749 = vadd.f32 %v1444, %v1748
      %v1750 = vpop.f32.mrf.mxu0
      %v1751 = vadd.f32 %v1444, %v1750
      %1752 = vdwg.mxu0
      %1753 = vmatpush.bf16.msra.mxu0 %v1664
      %1754 = vmatpush.bf16.msra.mxu0 %v1663
      %1755 = vmatpush.bf16.msra.mxu0 %v1662
      %1756 = vmatpush.bf16.msra.mxu0 %v1661
      %1757 = vmatpush.bf16.msra.mxu0 %v1660
      %1758 = vmatpush.bf16.msra.mxu0 %v1659
      %1759 = vmatpush.bf16.msra.mxu0 %v1658
      %1760 = vmatpush.bf16.msra.mxu0 %v1657
      %1761 = vmatmul.bf16.gmra.mxu0 %v1507
      %v1762 = vpop.f32.mrf.mxu0
      %v1763 = vadd.f32 %v1729, %v1762
      %v1764 = vpop.f32.mrf.mxu0
      %v1765 = vadd.f32 %v1731, %v1764
      %1766 = vmatmul.bf16.gmra.mxu0 %v1511
      %v1767 = vpop.f32.mrf.mxu0
      %v1768 = vadd.f32 %v1734, %v1767
      %v1769 = vpop.f32.mrf.mxu0
      %v1770 = vadd.f32 %v1736, %v1769
      %1771 = vmatmul.bf16.gmra.mxu0 %v1515
      %v1772 = vpop.f32.mrf.mxu0
      %v1773 = vadd.f32 %v1739, %v1772
      %v1774 = vpop.f32.mrf.mxu0
      %v1775 = vadd.f32 %v1741, %v1774
      %1776 = vmatmul.bf16.gmra.mxu0 %v1519
      %v1777 = vpop.f32.mrf.mxu0
      %v1778 = vadd.f32 %v1744, %v1777
      %v1779 = vpop.f32.mrf.mxu0
      %v1780 = vadd.f32 %v1746, %v1779
      %1781 = vmatmul.bf16.gmra.mxu0 %v1523
      %v1782 = vpop.f32.mrf.mxu0
      %v1783 = vadd.f32 %v1749, %v1782
      %v1784 = vpop.f32.mrf.mxu0
      %v1785 = vadd.f32 %v1751, %v1784
      %1786 = vdwg.mxu0
      %1787 = vmatpush.bf16.msra.mxu0 %v1672
      %1788 = vmatpush.bf16.msra.mxu0 %v1671
      %1789 = vmatpush.bf16.msra.mxu0 %v1670
      %1790 = vmatpush.bf16.msra.mxu0 %v1669
      %1791 = vmatpush.bf16.msra.mxu0 %v1668
      %1792 = vmatpush.bf16.msra.mxu0 %v1667
      %1793 = vmatpush.bf16.msra.mxu0 %v1666
      %1794 = vmatpush.bf16.msra.mxu0 %v1665
      %1795 = vmatmul.bf16.gmra.mxu0 %v1508
      %v1796 = vpop.f32.mrf.mxu0
      %v1797 = vadd.f32 %v1763, %v1796
      %v1798 = vpop.f32.mrf.mxu0
      %v1799 = vadd.f32 %v1765, %v1798
      %1800 = vmatmul.bf16.gmra.mxu0 %v1512
      %v1801 = vpop.f32.mrf.mxu0
      %v1802 = vadd.f32 %v1768, %v1801
      %v1803 = vpop.f32.mrf.mxu0
      %v1804 = vadd.f32 %v1770, %v1803
      %1805 = vmatmul.bf16.gmra.mxu0 %v1516
      %v1806 = vpop.f32.mrf.mxu0
      %v1807 = vadd.f32 %v1773, %v1806
      %v1808 = vpop.f32.mrf.mxu0
      %v1809 = vadd.f32 %v1775, %v1808
      %1810 = vmatmul.bf16.gmra.mxu0 %v1520
      %v1811 = vpop.f32.mrf.mxu0
      %v1812 = vadd.f32 %v1778, %v1811
      %v1813 = vpop.f32.mrf.mxu0
      %v1814 = vadd.f32 %v1780, %v1813
      %1815 = vmatmul.bf16.gmra.mxu0 %v1524
      %v1816 = vpop.f32.mrf.mxu0
      %v1817 = vadd.f32 %v1783, %v1816
      %v1818 = vpop.f32.mrf.mxu0
      %v1819 = vadd.f32 %v1785, %v1818
      %1820 = vdwg.mxu0
      %1821 = vmatpush.bf16.msra.mxu0 0
      %1822 = vmatpush.bf16.msra.mxu0 0
      %1823 = vmatpush.bf16.msra.mxu0 0
      %1824 = vmatpush.bf16.msra.mxu0 0
      %1825 = vmatpush.bf16.msra.mxu0 0
      %1826 = vmatpush.bf16.msra.mxu0 %v1675
      %1827 = vmatpush.bf16.msra.mxu0 %v1674
      %1828 = vmatpush.bf16.msra.mxu0 %v1673
      %1829 = vmatmul.bf16.gmra.mxu0 %v1705
      %v1830 = vpop.f32.mrf.mxu0
      %v1831 = vadd.f32 %v1797, %v1830
      %v1832 = vpop.f32.mrf.mxu0
      %v1833 = vadd.f32 %v1799, %v1832
      %1834 = vmatmul.bf16.gmra.mxu0 %v1708
      %v1835 = vpop.f32.mrf.mxu0
      %v1836 = vadd.f32 %v1802, %v1835
      %v1837 = vpop.f32.mrf.mxu0
      %v1838 = vadd.f32 %v1804, %v1837
      %1839 = vmatmul.bf16.gmra.mxu0 %v1711
      %v1840 = vpop.f32.mrf.mxu0
      %v1841 = vadd.f32 %v1807, %v1840
      %v1842 = vpop.f32.mrf.mxu0
      %v1843 = vadd.f32 %v1809, %v1842
      %1844 = vmatmul.bf16.gmra.mxu0 %v1714
      %v1845 = vpop.f32.mrf.mxu0
      %v1846 = vadd.f32 %v1812, %v1845
      %v1847 = vpop.f32.mrf.mxu0
      %v1848 = vadd.f32 %v1814, %v1847
      %1849 = vmatmul.bf16.gmra.mxu0 %v1717
      %v1850 = vpop.f32.mrf.mxu0
      %v1851 = vadd.f32 %v1817, %v1850
      %v1852 = vpop.f32.mrf.mxu0
      %v1853 = vadd.f32 %v1819, %v1852
      %1854 = vdwg.mxu0
      %v1855 = vmax.f32 %v1831, 0.0
      %v1856 = vmax.f32 %v1833, 0.0
      %v1857 = vmax.f32 %v1836, 0.0
      %v1858 = vmax.f32 %v1838, 0.0
      %v1859 = vmax.f32 %v1841, 0.0
      %v1860 = vmax.f32 %v1843, 0.0
      %v1861 = vmax.f32 %v1846, 0.0
      %v1862 = vmax.f32 %v1848, 0.0
      %v1863 = vmax.f32 %v1851, 0.0
      %v1864 = vmax.f32 %v1853, 0.0
      %v1865 = vlaneseq
      %v1866 = vshrl.u32 %v1865, 7
      %v1867 = vadd.s32 %v1866, 8
      %v1868 = vadd.s32 %v1866, 16
      %v1869 = vadd.s32 %v1866, 24
      %v1870 = vadd.s32 %v1866, 32
      %v1871 = vadd.s32 %v1866, 40
      %v1872 = vadd.s32 %v1866, 48
      %v1873 = vadd.s32 %v1866, 56
      %v1874 = vadd.s32 %v1866, 64
      %v1875 = vadd.s32 %v1866, 72
      %vm1876 = vcmp.lt.s32.totalorder %v1866, 0
      %v1877 = vsub.s32 0, %v1866
      %v1878 = vsel %vm1876, %v1877, %v1866
      %v1879 = vand.u32 %v1878, 65535
      %v1880 = vshrl.u32 %v1878, 16
      %v1882 = vmul.u32 %v1879, 52429
      %v1883 = vmul.u32 %v1879, 52428
      %v1884 = vmul.u32 %v1880, 52429
      %v1885 = vmul.u32 %v1880, 52428
      %v1886 = vshll.u32 %v1883, 16
      %v1887 = vshrl.u32 %v1883, 16
      %v1888 = vshll.u32 %v1884, 16
      %v1889 = vshrl.u32 %v1884, 16
      %vm1890 = vc.u32 %v1882, %v1886
      %v1891 = vsel %vm1890, 1, 0
      %v1892 = vadd.s32 %v1882, %v1886
      %v1893 = vadd.s32 %v1885, %v1891
      %vm1894 = vc.u32 %v1892, %v1888
      %v1895 = vsel %vm1894, 1, 0
      %v1896 = vadd.s32 %v1892, %v1888
      %v1897 = vadd.s32 %v1893, %v1895
      %v1898 = vadd.s32 %v1897, %v1887
      %v1899 = vadd.s32 %v1898, %v1889
      %v1900 = vshrl.u32 %v1899, 3
      %v1901 = vmul.u32 %v1900, 10
      %v1902 = vsub.s32 %v1878, %v1901
      %v1903 = vsub.s32 0, %v1902
      %v1904 = vsel %vm1876, %v1903, %v1902
      %vm1905 = vcmp.lt.s32.totalorder %v1867, 0
      %v1906 = vsub.s32 0, %v1867
      %v1907 = vsel %vm1905, %v1906, %v1867
      %v1908 = vand.u32 %v1907, 65535
      %v1909 = vshrl.u32 %v1907, 16
      %v1911 = vmul.u32 %v1908, 52429
      %v1912 = vmul.u32 %v1908, 52428
      %v1913 = vmul.u32 %v1909, 52429
      %v1914 = vmul.u32 %v1909, 52428
      %v1915 = vshll.u32 %v1912, 16
      %v1916 = vshrl.u32 %v1912, 16
      %v1917 = vshll.u32 %v1913, 16
      %v1918 = vshrl.u32 %v1913, 16
      %vm1919 = vc.u32 %v1911, %v1915
      %v1920 = vsel %vm1919, 1, 0
      %v1921 = vadd.s32 %v1911, %v1915
      %v1922 = vadd.s32 %v1914, %v1920
      %vm1923 = vc.u32 %v1921, %v1917
      %v1924 = vsel %vm1923, 1, 0
      %v1925 = vadd.s32 %v1921, %v1917
      %v1926 = vadd.s32 %v1922, %v1924
      %v1927 = vadd.s32 %v1926, %v1916
      %v1928 = vadd.s32 %v1927, %v1918
      %v1929 = vshrl.u32 %v1928, 3
      %v1930 = vmul.u32 %v1929, 10
      %v1931 = vsub.s32 %v1907, %v1930
      %v1932 = vsub.s32 0, %v1931
      %v1933 = vsel %vm1905, %v1932, %v1931
      %vm1934 = vcmp.lt.s32.totalorder %v1868, 0
      %v1935 = vsub.s32 0, %v1868
      %v1936 = vsel %vm1934, %v1935, %v1868
      %v1937 = vand.u32 %v1936, 65535
      %v1938 = vshrl.u32 %v1936, 16
      %v1940 = vmul.u32 %v1937, 52429
      %v1941 = vmul.u32 %v1937, 52428
      %v1942 = vmul.u32 %v1938, 52429
      %v1943 = vmul.u32 %v1938, 52428
      %v1944 = vshll.u32 %v1941, 16
      %v1945 = vshrl.u32 %v1941, 16
      %v1946 = vshll.u32 %v1942, 16
      %v1947 = vshrl.u32 %v1942, 16
      %vm1948 = vc.u32 %v1940, %v1944
      %v1949 = vsel %vm1948, 1, 0
      %v1950 = vadd.s32 %v1940, %v1944
      %v1951 = vadd.s32 %v1943, %v1949
      %vm1952 = vc.u32 %v1950, %v1946
      %v1953 = vsel %vm1952, 1, 0
      %v1954 = vadd.s32 %v1950, %v1946
      %v1955 = vadd.s32 %v1951, %v1953
      %v1956 = vadd.s32 %v1955, %v1945
      %v1957 = vadd.s32 %v1956, %v1947
      %v1958 = vshrl.u32 %v1957, 3
      %v1959 = vmul.u32 %v1958, 10
      %v1960 = vsub.s32 %v1936, %v1959
      %v1961 = vsub.s32 0, %v1960
      %v1962 = vsel %vm1934, %v1961, %v1960
      %vm1963 = vcmp.lt.s32.totalorder %v1869, 0
      %v1964 = vsub.s32 0, %v1869
      %v1965 = vsel %vm1963, %v1964, %v1869
      %v1966 = vand.u32 %v1965, 65535
      %v1967 = vshrl.u32 %v1965, 16
      %v1969 = vmul.u32 %v1966, 52429
      %v1970 = vmul.u32 %v1966, 52428
      %v1971 = vmul.u32 %v1967, 52429
      %v1972 = vmul.u32 %v1967, 52428
      %v1973 = vshll.u32 %v1970, 16
      %v1974 = vshrl.u32 %v1970, 16
      %v1975 = vshll.u32 %v1971, 16
      %v1976 = vshrl.u32 %v1971, 16
      %vm1977 = vc.u32 %v1969, %v1973
      %v1978 = vsel %vm1977, 1, 0
      %v1979 = vadd.s32 %v1969, %v1973
      %v1980 = vadd.s32 %v1972, %v1978
      %vm1981 = vc.u32 %v1979, %v1975
      %v1982 = vsel %vm1981, 1, 0
      %v1983 = vadd.s32 %v1979, %v1975
      %v1984 = vadd.s32 %v1980, %v1982
      %v1985 = vadd.s32 %v1984, %v1974
      %v1986 = vadd.s32 %v1985, %v1976
      %v1987 = vshrl.u32 %v1986, 3
      %v1988 = vmul.u32 %v1987, 10
      %v1989 = vsub.s32 %v1965, %v1988
      %v1990 = vsub.s32 0, %v1989
      %v1991 = vsel %vm1963, %v1990, %v1989
      %vm1992 = vcmp.lt.s32.totalorder %v1870, 0
      %v1993 = vsub.s32 0, %v1870
      %v1994 = vsel %vm1992, %v1993, %v1870
      %v1995 = vand.u32 %v1994, 65535
      %v1996 = vshrl.u32 %v1994, 16
      %v1998 = vmul.u32 %v1995, 52429
      %v1999 = vmul.u32 %v1995, 52428
      %v2000 = vmul.u32 %v1996, 52429
      %v2001 = vmul.u32 %v1996, 52428
      %v2002 = vshll.u32 %v1999, 16
      %v2003 = vshrl.u32 %v1999, 16
      %v2004 = vshll.u32 %v2000, 16
      %v2005 = vshrl.u32 %v2000, 16
      %vm2006 = vc.u32 %v1998, %v2002
      %v2007 = vsel %vm2006, 1, 0
      %v2008 = vadd.s32 %v1998, %v2002
      %v2009 = vadd.s32 %v2001, %v2007
      %vm2010 = vc.u32 %v2008, %v2004
      %v2011 = vsel %vm2010, 1, 0
      %v2012 = vadd.s32 %v2008, %v2004
      %v2013 = vadd.s32 %v2009, %v2011
      %v2014 = vadd.s32 %v2013, %v2003
      %v2015 = vadd.s32 %v2014, %v2005
      %v2016 = vshrl.u32 %v2015, 3
      %v2017 = vmul.u32 %v2016, 10
      %v2018 = vsub.s32 %v1994, %v2017
      %v2019 = vsub.s32 0, %v2018
      %v2020 = vsel %vm1992, %v2019, %v2018
      %vm2021 = vcmp.lt.s32.totalorder %v1871, 0
      %v2022 = vsub.s32 0, %v1871
      %v2023 = vsel %vm2021, %v2022, %v1871
      %v2024 = vand.u32 %v2023, 65535
      %v2025 = vshrl.u32 %v2023, 16
      %v2027 = vmul.u32 %v2024, 52429
      %v2028 = vmul.u32 %v2024, 52428
      %v2029 = vmul.u32 %v2025, 52429
      %v2030 = vmul.u32 %v2025, 52428
      %v2031 = vshll.u32 %v2028, 16
      %v2032 = vshrl.u32 %v2028, 16
      %v2033 = vshll.u32 %v2029, 16
      %v2034 = vshrl.u32 %v2029, 16
      %vm2035 = vc.u32 %v2027, %v2031
      %v2036 = vsel %vm2035, 1, 0
      %v2037 = vadd.s32 %v2027, %v2031
      %v2038 = vadd.s32 %v2030, %v2036
      %vm2039 = vc.u32 %v2037, %v2033
      %v2040 = vsel %vm2039, 1, 0
      %v2041 = vadd.s32 %v2037, %v2033
      %v2042 = vadd.s32 %v2038, %v2040
      %v2043 = vadd.s32 %v2042, %v2032
      %v2044 = vadd.s32 %v2043, %v2034
      %v2045 = vshrl.u32 %v2044, 3
      %v2046 = vmul.u32 %v2045, 10
      %v2047 = vsub.s32 %v2023, %v2046
      %v2048 = vsub.s32 0, %v2047
      %v2049 = vsel %vm2021, %v2048, %v2047
      %vm2050 = vcmp.lt.s32.totalorder %v1872, 0
      %v2051 = vsub.s32 0, %v1872
      %v2052 = vsel %vm2050, %v2051, %v1872
      %v2053 = vand.u32 %v2052, 65535
      %v2054 = vshrl.u32 %v2052, 16
      %v2056 = vmul.u32 %v2053, 52429
      %v2057 = vmul.u32 %v2053, 52428
      %v2058 = vmul.u32 %v2054, 52429
      %v2059 = vmul.u32 %v2054, 52428
      %v2060 = vshll.u32 %v2057, 16
      %v2061 = vshrl.u32 %v2057, 16
      %v2062 = vshll.u32 %v2058, 16
      %v2063 = vshrl.u32 %v2058, 16
      %vm2064 = vc.u32 %v2056, %v2060
      %v2065 = vsel %vm2064, 1, 0
      %v2066 = vadd.s32 %v2056, %v2060
      %v2067 = vadd.s32 %v2059, %v2065
      %vm2068 = vc.u32 %v2066, %v2062
      %v2069 = vsel %vm2068, 1, 0
      %v2070 = vadd.s32 %v2066, %v2062
      %v2071 = vadd.s32 %v2067, %v2069
      %v2072 = vadd.s32 %v2071, %v2061
      %v2073 = vadd.s32 %v2072, %v2063
      %v2074 = vshrl.u32 %v2073, 3
      %v2075 = vmul.u32 %v2074, 10
      %v2076 = vsub.s32 %v2052, %v2075
      %v2077 = vsub.s32 0, %v2076
      %v2078 = vsel %vm2050, %v2077, %v2076
      %vm2079 = vcmp.lt.s32.totalorder %v1873, 0
      %v2080 = vsub.s32 0, %v1873
      %v2081 = vsel %vm2079, %v2080, %v1873
      %v2082 = vand.u32 %v2081, 65535
      %v2083 = vshrl.u32 %v2081, 16
      %v2085 = vmul.u32 %v2082, 52429
      %v2086 = vmul.u32 %v2082, 52428
      %v2087 = vmul.u32 %v2083, 52429
      %v2088 = vmul.u32 %v2083, 52428
      %v2089 = vshll.u32 %v2086, 16
      %v2090 = vshrl.u32 %v2086, 16
      %v2091 = vshll.u32 %v2087, 16
      %v2092 = vshrl.u32 %v2087, 16
      %vm2093 = vc.u32 %v2085, %v2089
      %v2094 = vsel %vm2093, 1, 0
      %v2095 = vadd.s32 %v2085, %v2089
      %v2096 = vadd.s32 %v2088, %v2094
      %vm2097 = vc.u32 %v2095, %v2091
      %v2098 = vsel %vm2097, 1, 0
      %v2099 = vadd.s32 %v2095, %v2091
      %v2100 = vadd.s32 %v2096, %v2098
      %v2101 = vadd.s32 %v2100, %v2090
      %v2102 = vadd.s32 %v2101, %v2092
      %v2103 = vshrl.u32 %v2102, 3
      %v2104 = vmul.u32 %v2103, 10
      %v2105 = vsub.s32 %v2081, %v2104
      %v2106 = vsub.s32 0, %v2105
      %v2107 = vsel %vm2079, %v2106, %v2105
      %vm2108 = vcmp.lt.s32.totalorder %v1874, 0
      %v2109 = vsub.s32 0, %v1874
      %v2110 = vsel %vm2108, %v2109, %v1874
      %v2111 = vand.u32 %v2110, 65535
      %v2112 = vshrl.u32 %v2110, 16
      %v2114 = vmul.u32 %v2111, 52429
      %v2115 = vmul.u32 %v2111, 52428
      %v2116 = vmul.u32 %v2112, 52429
      %v2117 = vmul.u32 %v2112, 52428
      %v2118 = vshll.u32 %v2115, 16
      %v2119 = vshrl.u32 %v2115, 16
      %v2120 = vshll.u32 %v2116, 16
      %v2121 = vshrl.u32 %v2116, 16
      %vm2122 = vc.u32 %v2114, %v2118
      %v2123 = vsel %vm2122, 1, 0
      %v2124 = vadd.s32 %v2114, %v2118
      %v2125 = vadd.s32 %v2117, %v2123
      %vm2126 = vc.u32 %v2124, %v2120
      %v2127 = vsel %vm2126, 1, 0
      %v2128 = vadd.s32 %v2124, %v2120
      %v2129 = vadd.s32 %v2125, %v2127
      %v2130 = vadd.s32 %v2129, %v2119
      %v2131 = vadd.s32 %v2130, %v2121
      %v2132 = vshrl.u32 %v2131, 3
      %v2133 = vmul.u32 %v2132, 10
      %v2134 = vsub.s32 %v2110, %v2133
      %v2135 = vsub.s32 0, %v2134
      %v2136 = vsel %vm2108, %v2135, %v2134
      %vm2137 = vcmp.lt.s32.totalorder %v1875, 0
      %v2138 = vsub.s32 0, %v1875
      %v2139 = vsel %vm2137, %v2138, %v1875
      %v2140 = vand.u32 %v2139, 65535
      %v2141 = vshrl.u32 %v2139, 16
      %v2143 = vmul.u32 %v2140, 52429
      %v2144 = vmul.u32 %v2140, 52428
      %v2145 = vmul.u32 %v2141, 52429
      %v2146 = vmul.u32 %v2141, 52428
      %v2147 = vshll.u32 %v2144, 16
      %v2148 = vshrl.u32 %v2144, 16
      %v2149 = vshll.u32 %v2145, 16
      %v2150 = vshrl.u32 %v2145, 16
      %vm2151 = vc.u32 %v2143, %v2147
      %v2152 = vsel %vm2151, 1, 0
      %v2153 = vadd.s32 %v2143, %v2147
      %v2154 = vadd.s32 %v2146, %v2152
      %vm2155 = vc.u32 %v2153, %v2149
      %v2156 = vsel %vm2155, 1, 0
      %v2157 = vadd.s32 %v2153, %v2149
      %v2158 = vadd.s32 %v2154, %v2156
      %v2159 = vadd.s32 %v2158, %v2148
      %v2160 = vadd.s32 %v2159, %v2150
      %v2161 = vshrl.u32 %v2160, 3
      %v2162 = vmul.u32 %v2161, 10
      %v2163 = vsub.s32 %v2139, %v2162
      %v2164 = vsub.s32 0, %v2163
      %v2165 = vsel %vm2137, %v2164, %v2163
      %vm2166 = vcmp.ne.s32.totalorder %v1904, 0
      %vm2167 = vcmp.ne.s32.totalorder %v1933, 0
      %vm2168 = vcmp.ne.s32.totalorder %v1962, 0
      %vm2169 = vcmp.ne.s32.totalorder %v1991, 0
      %vm2170 = vcmp.ne.s32.totalorder %v2020, 0
      %vm2171 = vcmp.ne.s32.totalorder %v2049, 0
      %vm2172 = vcmp.ne.s32.totalorder %v2078, 0
      %vm2173 = vcmp.ne.s32.totalorder %v2107, 0
      %vm2174 = vcmp.ne.s32.totalorder %v2136, 0
      %vm2175 = vcmp.ne.s32.totalorder %v2165, 0
      %vm2176 = vcmp.lt.s32.totalorder %v1904, 0
      %vm2177 = vcmp.lt.s32.totalorder %v1933, 0
      %vm2178 = vcmp.lt.s32.totalorder %v1962, 0
      %vm2179 = vcmp.lt.s32.totalorder %v1991, 0
      %vm2180 = vcmp.lt.s32.totalorder %v2020, 0
      %vm2181 = vcmp.lt.s32.totalorder %v2049, 0
      %vm2182 = vcmp.lt.s32.totalorder %v2078, 0
      %vm2183 = vcmp.lt.s32.totalorder %v2107, 0
      %vm2184 = vcmp.lt.s32.totalorder %v2136, 0
      %vm2185 = vcmp.lt.s32.totalorder %v2165, 0
      %vm2186 = vmand %vm2176, %vm2166
      %vm2187 = vmand %vm2177, %vm2167
      %vm2188 = vmand %vm2178, %vm2168
      %vm2189 = vmand %vm2179, %vm2169
      %vm2190 = vmand %vm2180, %vm2170
      %vm2191 = vmand %vm2181, %vm2171
      %vm2192 = vmand %vm2182, %vm2172
      %vm2193 = vmand %vm2183, %vm2173
      %vm2194 = vmand %vm2184, %vm2174
      %vm2195 = vmand %vm2185, %vm2175
      %v2196 = vadd.s32 %v1904, 10
      %v2197 = vadd.s32 %v1933, 10
      %v2198 = vadd.s32 %v1962, 10
      %v2199 = vadd.s32 %v1991, 10
      %v2200 = vadd.s32 %v2020, 10
      %v2201 = vadd.s32 %v2049, 10
      %v2202 = vadd.s32 %v2078, 10
      %v2203 = vadd.s32 %v2107, 10
      %v2204 = vadd.s32 %v2136, 10
      %v2205 = vadd.s32 %v2165, 10
      %v2206 = vsel %vm2186, %v2196, %v1904
      %v2207 = vsel %vm2187, %v2197, %v1933
      %v2208 = vsel %vm2188, %v2198, %v1962
      %v2209 = vsel %vm2189, %v2199, %v1991
      %v2210 = vsel %vm2190, %v2200, %v2020
      %v2211 = vsel %vm2191, %v2201, %v2049
      %v2212 = vsel %vm2192, %v2202, %v2078
      %v2213 = vsel %vm2193, %v2203, %v2107
      %v2214 = vsel %vm2194, %v2204, %v2136
      %v2215 = vsel %vm2195, %v2205, %v2165
      %vm2216 = vcmp.lt.s32.totalorder %v2206, 8
      %vm2217 = vcmp.lt.s32.totalorder %v2207, 8
      %vm2218 = vcmp.lt.s32.totalorder %v2208, 8
      %vm2219 = vcmp.lt.s32.totalorder %v2209, 8
      %vm2220 = vcmp.lt.s32.totalorder %v2210, 8
      %vm2221 = vcmp.lt.s32.totalorder %v2211, 8
      %vm2222 = vcmp.lt.s32.totalorder %v2212, 8
      %vm2223 = vcmp.lt.s32.totalorder %v2213, 8
      %vm2224 = vcmp.lt.s32.totalorder %v2214, 8
      %vm2225 = vcmp.lt.s32.totalorder %v2215, 8
      %v2226 = vsel %vm2216, %v1855, 0.0
      %v2227 = vsel %vm2217, %v1856, 0.0
      %v2228 = vsel %vm2218, %v1857, 0.0
      %v2229 = vsel %vm2219, %v1858, 0.0
      %v2230 = vsel %vm2220, %v1859, 0.0
      %v2231 = vsel %vm2221, %v1860, 0.0
      %v2232 = vsel %vm2222, %v1861, 0.0
      %v2233 = vsel %vm2223, %v1862, 0.0
      %v2234 = vsel %vm2224, %v1863, 0.0
      %v2235 = vsel %vm2225, %v1864, 0.0
      %v2236 = vpack.c.bf16 %v2226, %v2226
      %v2237 = vpack.c.bf16 %v2227, %v2227
      %v2238 = vpack.c.bf16 %v2228, %v2228
      %v2239 = vpack.c.bf16 %v2229, %v2229
      %v2240 = vpack.c.bf16 %v2230, %v2230
      %v2241 = vpack.c.bf16 %v2231, %v2231
      %v2242 = vpack.c.bf16 %v2232, %v2232
      %v2243 = vpack.c.bf16 %v2233, %v2233
      %v2244 = vpack.c.bf16 %v2234, %v2234
      %v2245 = vpack.c.bf16 %v2235, %v2235
      %vm2246 = vcmask 519168
      %2247 = vst.msk [vmem:[%s170] sm:$0xf] %vm2246, %v2236
      %2248 = vst.msk [vmem:[%s170 + $0x4] sm:$0xf] %vm2246, %v2237
      %2249 = vst.msk [vmem:[%s170 + $0x8] sm:$0xf] %vm2246, %v2238
      %2250 = vst.msk [vmem:[%s170 + $0xc] sm:$0xf] %vm2246, %v2239
      %2251 = vst.msk [vmem:[%s170 + $0x10] sm:$0xf] %vm2246, %v2240
      %2252 = vst.msk [vmem:[%s170 + $0x14] sm:$0xf] %vm2246, %v2241
      %2253 = vst.msk [vmem:[%s170 + $0x18] sm:$0xf] %vm2246, %v2242
      %2254 = vst.msk [vmem:[%s170 + $0x1c] sm:$0xf] %vm2246, %v2243
      %2255 = vst.msk [vmem:[%s170 + $0x20] sm:$0xf] %vm2246, %v2244
      %2256 = vst.msk [vmem:[%s170 + $0x24] sm:$0xf] %vm2246, %v2245
      %p2257 = scmp.lt.s32.totalorder %s14, 1
      %s2258 = scalar_select %p2257, %s14, 1
      %s2259 = smul.addr %s2258, 10
      %s2260 = smul.addr %s2259, 4
      %s2261 = scalar_lea.vmem %s3, %s2260
      // Predicated region
      $region33: #{block35_forward.8} parent=31 // pred_check
        %p2262 = pneg %p100
      $region34: #{block35_forward.8} parent=31 // pred_check_branch
        %2264 = sbr.rel (%p2262) target = $region36
      $region35: #{block35_forward.8} parent=31 // pred_region
        _
      $region36: #{block35_forward.8} parent=31 // pred_fallthru
        _
    $region32: #{block35_forward.8} parent=5 // pred_fallthru
      _
    %p2265 = scmp.le.s32.totalorder 2, %s9
    // Predicated region
    $region37: #{block35_forward.8} parent=5 // pred_check
      %p2266 = pneg %p2265
    $region38: #{block35_forward.8} parent=5 // pred_check_branch
      %2268 = sbr.rel (%p2266) target = $region40
    $region39: #{block35_forward.8} parent=5 // pred_region
      %s2269 = ssub.s32 %s9, 2
      // Predicated region
      $region41: #{block35_forward.8} parent=39 // pred_check
        %p2270 = pneg %p106
      $region42: #{block35_forward.8} parent=39 // pred_check_branch
        %2272 = sbr.rel (%p2270) target = $region44
      $region43: #{block35_forward.8} parent=39 // pred_region
        %p2273 = scmp.lt.s32.totalorder %s15, 1
        %s2274 = scalar_select %p2273, %s15, 1
        %s2275 = smul.addr %s2274, 10
        %s2276 = smul.addr %s2275, 4
        %s2277 = scalar_lea.vmem %s3, %s2276
      $region44: #{block35_forward.8} parent=39 // pred_fallthru
        _
    $region40: #{block35_forward.8} parent=5 // pred_fallthru
      _
  $region6: #{block35_forward.8} parent=0 // loop_footer
    %s13 = sadd.s32 1, %s9
  $region7: #{block35_forward.8} parent=0 // loop_footer_branch
    %8 = sbr.rel target = $region3
  $region8: #{block35_forward.8} parent=0 // loop_exit
    _

// kernel: block35_forward.6
$region0: #{block35_forward.6}
  #allocation0 [shape = 'u32[]', space=smem, size = 0x4, offset = 0x4, fixed_abs, tag = 'smem constant byte address 0x4 - core index']
  #allocation1 [shape = 'u32[72,128]{1,0:T(1,128)}', space=vmem, size = 0x9000, scoped, tag = 'internal scratch']
  #allocation2 [shape = 'bf16[80,288]{1,0:T(8,128)(2,1)}', space=vmem, size = 0xf000, scoped, tag = 'scratch operand']
  %s0 = inlined_call_operand.vmem [shape: bf16[2,112,32], index: 0, kind: input, shape index: {}]
  %s1 = inlined_call_operand.vmem [shape: bf16[288,32], index: 1, kind: input, shape index: {}]
  %s2 = inlined_call_operand.vmem [shape: f32[1,32], index: 2, kind: input, shape index: {}]
  %s3 = inlined_call_operand.vmem [shape: bf16[2,80,32], index: 3, kind: output, shape index: {}]
  %s4 = sld [smem:[#allocation0]]
  $region45: #{block35_forward.6} parent=0
    _
  %s6 = ssub.s32 1, %s4
  %s7 = scalar_select 0, %s6, %s4
  loop: start=0, step=1, limit=4
  $region2: #{block35_forward.6} parent=0 // loop_pre_header
    _
  $region3: #{block35_forward.6} parent=0 // loop_header
    %s9 = sphi 0, %s13
    %p10 = scmp.ge.s32.totalorder %s9, 4
    %s19 = sphi 0, %s21
    %s22 = sphi 0, %s19
    %s23 = sphi 0, %s22
    %s39 = sphi 0, %s23
    %s43 = sphi 0, %s43
    %s45 = sphi 0, %s43
    %s46 = sphi 0, %s45
    %s60 = sphi 0, %s46
    %s64 = sphi 0, %s64
    %s66 = sphi 0, %s64
    %s67 = sphi 0, %s66
    %s81 = sphi 0, %s67
    %s87 = sphi 0, %s89
    %s90 = sphi 0, %s87
    %s91 = sphi 0, %s90
    %s107 = sphi 0, %s91
  $region4: #{block35_forward.6} parent=0 // loop_header_branch
    %12 = sbr.rel (%p10) target = $region8
  $region5: #{block35_forward.6} parent=0 // loop_body
    %s14 = ssub.s32 %s9, 1
    %s15 = ssub.s32 %s9, 2
    %s16 = sadd.s32 %s9, 1
    %s17 = ssub.s32 %s9, %s16
    %p18 = scmp.eq.s32.totalorder %s17, 0
    %s20 = sadd.s32 %s19, 1
    %s21 = scalar_select %p18, %s19, %s20
    %p24 = pneg %p18
    %p25 = scmp.eq.s32.totalorder %s9, 1
    %p26 = por %p24, %p25
    %p27 = scmp.ne.s32.totalorder %s19, %s22
    %p28 = scmp.eq.s32.totalorder %s9, 0
    %p29 = por %p27, %p28
    %p30 = scmp.ne.s32.totalorder %s19, %s22
    %p31 = scmp.eq.s32.totalorder %s14, 1
    %p32 = por %p30, %p31
    %p33 = scmp.ne.s32.totalorder %s22, %s23
    %p34 = scmp.eq.s32.totalorder %s14, 0
    %p35 = por %p33, %p34
    %p36 = scmp.ne.s32.totalorder %s22, %s23
    %p37 = scmp.eq.s32.totalorder %s15, 1
    %p38 = por %p36, %p37
    %p40 = scmp.ne.s32.totalorder %s23, %s39
    %p41 = scmp.eq.s32.totalorder %s15, 0
    %p42 = por %p40, %p41
    %s44 = sadd.s32 %s43, 1
    %p47 = scmp.eq.s32.totalorder %s9, 1
    %p48 = scmp.ne.s32.totalorder %s43, %s45
    %p49 = scmp.eq.s32.totalorder %s9, 0
    %p50 = por %p48, %p49
    %p51 = scmp.ne.s32.totalorder %s43, %s45
    %p52 = scmp.eq.s32.totalorder %s14, 1
    %p53 = por %p51, %p52
    %p54 = scmp.ne.s32.totalorder %s45, %s46
    %p55 = scmp.eq.s32.totalorder %s14, 0
    %p56 = por %p54, %p55
    %p57 = scmp.ne.s32.totalorder %s45, %s46
    %p58 = scmp.eq.s32.totalorder %s15, 1
    %p59 = por %p57, %p58
    %p61 = scmp.ne.s32.totalorder %s46, %s60
    %p62 = scmp.eq.s32.totalorder %s15, 0
    %p63 = por %p61, %p62
    %s65 = sadd.s32 %s64, 1
    %p68 = scmp.eq.s32.totalorder %s9, 1
    %p69 = scmp.ne.s32.totalorder %s64, %s66
    %p70 = scmp.eq.s32.totalorder %s9, 0
    %p71 = por %p69, %p70
    %p72 = scmp.ne.s32.totalorder %s64, %s66
    %p73 = scmp.eq.s32.totalorder %s14, 1
    %p74 = por %p72, %p73
    %p75 = scmp.ne.s32.totalorder %s66, %s67
    %p76 = scmp.eq.s32.totalorder %s14, 0
    %p77 = por %p75, %p76
    %p78 = scmp.ne.s32.totalorder %s66, %s67
    %p79 = scmp.eq.s32.totalorder %s15, 1
    %p80 = por %p78, %p79
    %p82 = scmp.ne.s32.totalorder %s67, %s81
    %p83 = scmp.eq.s32.totalorder %s15, 0
    %p84 = por %p82, %p83
    %s85 = ssub.s32 %s9, %s16
    %p86 = scmp.eq.s32.totalorder %s85, 0
    %s88 = sadd.s32 %s87, 1
    %s89 = scalar_select %p86, %s87, %s88
    %p92 = pneg %p86
    %p93 = scmp.eq.s32.totalorder %s9, 1
    %p94 = por %p92, %p93
    %p95 = scmp.ne.s32.totalorder %s87, %s90
    %p96 = scmp.eq.s32.totalorder %s9, 0
    %p97 = por %p95, %p96
    %p98 = scmp.ne.s32.totalorder %s87, %s90
    %p99 = scmp.eq.s32.totalorder %s14, 1
    %p100 = por %p98, %p99
    %p101 = scmp.ne.s32.totalorder %s90, %s91
    %p102 = scmp.eq.s32.totalorder %s14, 0
    %p103 = por %p101, %p102
    %p104 = scmp.ne.s32.totalorder %s90, %s91
    %p105 = scmp.eq.s32.totalorder %s15, 1
    %p106 = por %p104, %p105
    %p108 = scmp.ne.s32.totalorder %s91, %s107
    %p109 = scmp.eq.s32.totalorder %s15, 0
    %p110 = por %p108, %p109
    %p111 = scmp.le.s32.totalorder 1, %s9
    %p112 = scmp.lt.s32.totalorder %s9, 3
    %p113 = pnand %p111, %p112
    %p114 = pneg %p113
    // Predicated region
    $region9: #{block35_forward.6} parent=5 // pred_check
      _
    $region10: #{block35_forward.6} parent=5 // pred_check_branch
      %116 = sbr.rel (%p113) target = $region12
    $region11: #{block35_forward.6} parent=5 // pred_region
      %s117 = ssub.s32 %s9, 1
      // Predicated region
      $region13: #{block35_forward.6} parent=11 // pred_check
        %p118 = pneg %p56
      $region14: #{block35_forward.6} parent=11 // pred_check_branch
        %120 = sbr.rel (%p118) target = $region16
      $region15: #{block35_forward.6} parent=11 // pred_region
        _
      $region16: #{block35_forward.6} parent=11 // pred_fallthru
        _
      // Predicated region
      $region17: #{block35_forward.6} parent=11 // pred_check
        %p121 = pneg %p77
      $region18: #{block35_forward.6} parent=11 // pred_check_branch
        %123 = sbr.rel (%p121) target = $region20
      $region19: #{block35_forward.6} parent=11 // pred_region
        _
      $region20: #{block35_forward.6} parent=11 // pred_fallthru
        _
    $region12: #{block35_forward.6} parent=5 // pred_fallthru
      _
    %p124 = scmp.lt.s32.totalorder %s9, 2
    // Predicated region
    $region21: #{block35_forward.6} parent=5 // pred_check
      %p125 = pneg %p124
    $region22: #{block35_forward.6} parent=5 // pred_check_branch
      %127 = sbr.rel (%p125) target = $region24
    $region23: #{block35_forward.6} parent=5 // pred_region
      // Predicated region
      $region25: #{block35_forward.6} parent=23 // pred_check
        %p128 = pneg %p29
      $region26: #{block35_forward.6} parent=23 // pred_check_branch
        %130 = sbr.rel (%p128) target = $region28
      $region27: #{block35_forward.6} parent=23 // pred_region
        %p131 = scmp.lt.s32.totalorder %s9, 1
        %s132 = scalar_select %p131, %s9, 1
        %s133 = smul.addr %s132, 14
        %s134 = smul.addr %s133, 4
        %s135 = scalar_lea.vmem %s0, %s134
      $region28: #{block35_forward.6} parent=23 // pred_fallthru
        _
    $region24: #{block35_forward.6} parent=5 // pred_fallthru
      _
    %p136 = scmp.le.s32.totalorder 1, %s9
    %p137 = scmp.lt.s32.totalorder %s9, 3
    %p138 = pnand %p136, %p137
    %p139 = pneg %p138
    // Predicated region
    $region29: #{block35_forward.6} parent=5 // pred_check
      _
    $region30: #{block35_forward.6} parent=5 // pred_check_branch
      %141 = sbr.rel (%p138) target = $region32
    $region31: #{block35_forward.6} parent=5 // pred_region
      %s142 = ssub.s32 %s9, 1
      %p143 = scmp.lt.s32.totalorder %s14, 1
      %s144 = scalar_select %p143, %s14, 1
      %s145 = smul.addr %s144, 14
      %s146 = smul.addr %s145, 4
      %s147 = scalar_lea.vmem %s0, %s146
      %p148 = pneg %p35
      %p149 = pneg %p32
      %p150 = pneg %p56
      %p151 = pneg %p53
      %p152 = pneg %p77
      %p153 = pneg %p74
      %p154 = pneg %p103
      %p155 = pneg %p100
      %p156 = scmp.lt.s32.totalorder %s14, 1
      %s157 = scalar_select %p156, %s14, 1
      %s158 = smul.addr %s157, 10
      %s159 = smul.addr %s158, 4
      %s160 = scalar_lea.vmem %s3, %s159
      %p161 = scmp.lt.s32.totalorder %s14, 1
      %s162 = scalar_select %p161, %s14, 1
      %s163 = smul.addr %s162, 14
      %s164 = smul.addr %s163, 4
      %s165 = scalar_lea.vmem %s0, %s164
      %p166 = scmp.lt.s32.totalorder %s14, 1
      %s167 = scalar_select %p166, %s14, 1
      %s168 = smul.addr %s167, 10
      %s169 = smul.addr %s168, 4
      %s170 = scalar_lea.vmem %s3, %s169
      %v172 = vld [vmem:[%s1] sm:$0xf]
      %v173 = vld [vmem:[%s1 + $0x4] sm:$0xf]
      %v174 = vld [vmem:[%s1 + $0x8] sm:$0xf]
      %v175 = vld [vmem:[%s1 + $0xc] sm:$0xf]
      %v176 = vld [vmem:[%s1 + $0x10] sm:$0xf]
      %v177 = vld [vmem:[%s1 + $0x14] sm:$0xf]
      %v178 = vld [vmem:[%s1 + $0x18] sm:$0xf]
      %v179 = vld [vmem:[%s1 + $0x1c] sm:$0xf]
      %v180 = vld [vmem:[%s1 + $0x20] sm:$0xf]
      %v181 = vld [vmem:[%s1 + $0x24] sm:$0xf]
      %v182 = vld [vmem:[%s1 + $0x28] sm:$0xf]
      %v183 = vld [vmem:[%s1 + $0x2c] sm:$0xf]
      %v184 = vld [vmem:[%s1 + $0x30] sm:$0xf]
      %v185 = vld [vmem:[%s1 + $0x34] sm:$0xf]
      %v186 = vld [vmem:[%s1 + $0x38] sm:$0xf]
      %v187 = vld [vmem:[%s1 + $0x3c] sm:$0xf]
      %v188 = vld [vmem:[%s1 + $0x40] sm:$0xf]
      %v189 = vld [vmem:[%s1 + $0x44] sm:$0xf]
      %v190 = vld [vmem:[%s1 + $0x48] sm:$0xf]
      %v191 = vld [vmem:[%s1 + $0x4c] sm:$0xf]
      %v192 = vld [vmem:[%s1 + $0x50] sm:$0xf]
      %v193 = vld [vmem:[%s1 + $0x54] sm:$0xf]
      %v194 = vld [vmem:[%s1 + $0x58] sm:$0xf]
      %v195 = vld [vmem:[%s1 + $0x5c] sm:$0xf]
      %v196 = vld [vmem:[%s1 + $0x60] sm:$0xf]
      %v197 = vld [vmem:[%s1 + $0x64] sm:$0xf]
      %v198 = vld [vmem:[%s1 + $0x68] sm:$0xf]
      %v199 = vld [vmem:[%s1 + $0x6c] sm:$0xf]
      %v200 = vld [vmem:[%s1 + $0x70] sm:$0xf]
      %v201 = vld [vmem:[%s1 + $0x74] sm:$0xf]
      %v202 = vld [vmem:[%s1 + $0x78] sm:$0xf]
      %v203 = vld [vmem:[%s1 + $0x7c] sm:$0xf]
      %v204 = vld [vmem:[%s1 + $0x80] sm:$0xf]
      %v205 = vld [vmem:[%s1 + $0x84] sm:$0xf]
      %v206 = vld [vmem:[%s1 + $0x88] sm:$0xf]
      %v207 = vld [vmem:[%s1 + $0x8c] sm:$0xf]
      %v208 = vld [vmem:[%s2] sm:$0x1]
      %v209 = vld [vmem:[%s165] sm:$0xc]
      %v210 = vld [vmem:[%s165 + $0x4] sm:$0xf]
      %v211 = vld [vmem:[%s165 + $0x8] sm:$0xf]
      %v212 = vld [vmem:[%s165 + $0xc] sm:$0xf]
      %v213 = vld [vmem:[%s165 + $0x10] sm:$0xf]
      %v214 = vld [vmem:[%s165 + $0x14] sm:$0xf]
      %v215 = vld [vmem:[%s165 + $0x18] sm:$0xf]
      %v216 = vld [vmem:[%s165 + $0x1c] sm:$0xf]
      %v217 = vld [vmem:[%s165 + $0x20] sm:$0xf]
      %v218 = vld [vmem:[%s165 + $0x24] sm:$0xf]
      %v219 = vld [vmem:[%s165 + $0x28] sm:$0x7]
      %vm220 = vsmask.f32 1280
      %vm221 = vsmask.f32 5392
      %vm222 = vmor %vm220, %vm221
      %v224 = vshrl.u32 %v209, 16
      %v226 = vrot.slane %v224, 6
      %v227 = vshll.u32 %v209, 16
      %v229 = vrot.slane %v227, 7
      %v230 = vor.u32 %v226, %v229
      %v231 = vrot.slane %v230, 4
      %v233 = vshrl.u32 %v210, 16
      %v235 = vrot.slane %v233, 6
      %v236 = vshll.u32 %v210, 16
      %v238 = vrot.slane %v236, 7
      %v239 = vor.u32 %v235, %v238
      %v240 = vsel %vm222, %v231, %v239
      %v241 = vrot.slane %v239, 4
      %v243 = vshrl.u32 %v211, 16
      %v245 = vrot.slane %v243, 6
      %v246 = vshll.u32 %v211, 16
      %v248 = vrot.slane %v246, 7
      %v249 = vor.u32 %v245, %v248
      %v250 = vsel %vm222, %v241, %v249
      %v251 = vrot.slane %v249, 4
      %v253 = vshrl.u32 %v212, 16
      %v255 = vrot.slane %v253, 6
      %v256 = vshll.u32 %v212, 16
      %v258 = vrot.slane %v256, 7
      %v259 = vor.u32 %v255, %v258
      %v260 = vsel %vm222, %v251, %v259
      %v261 = vrot.slane %v259, 4
      %v263 = vshrl.u32 %v213, 16
      %v265 = vrot.slane %v263, 6
      %v266 = vshll.u32 %v213, 16
      %v268 = vrot.slane %v266, 7
      %v269 = vor.u32 %v265, %v268
      %v270 = vsel %vm222, %v261, %v269
      %v271 = vrot.slane %v269, 4
      %v273 = vshrl.u32 %v214, 16
      %v275 = vrot.slane %v273, 6
      %v276 = vshll.u32 %v214, 16
      %v278 = vrot.slane %v276, 7
      %v279 = vor.u32 %v275, %v278
      %v280 = vsel %vm222, %v271, %v279
      %v281 = vrot.slane %v279, 4
      %v283 = vshrl.u32 %v215, 16
      %v285 = vrot.slane %v283, 6
      %v286 = vshll.u32 %v215, 16
      %v288 = vrot.slane %v286, 7
      %v289 = vor.u32 %v285, %v288
      %v290 = vsel %vm222, %v281, %v289
      %v291 = vrot.slane %v289, 4
      %v293 = vshrl.u32 %v216, 16
      %v295 = vrot.slane %v293, 6
      %v296 = vshll.u32 %v216, 16
      %v298 = vrot.slane %v296, 7
      %v299 = vor.u32 %v295, %v298
      %v300 = vsel %vm222, %v291, %v299
      %v301 = vrot.slane %v299, 4
      %v303 = vshrl.u32 %v217, 16
      %v305 = vrot.slane %v303, 6
      %v306 = vshll.u32 %v217, 16
      %v308 = vrot.slane %v306, 7
      %v309 = vor.u32 %v305, %v308
      %v310 = vsel %vm222, %v301, %v309
      %v311 = vrot.slane %v309, 4
      %v313 = vshrl.u32 %v218, 16
      %v315 = vrot.slane %v313, 6
      %v316 = vshll.u32 %v218, 16
      %v318 = vrot.slane %v316, 7
      %v319 = vor.u32 %v315, %v318
      %v320 = vsel %vm222, %v311, %v319
      %v321 = vrot.slane %v319, 4
      %v323 = vshrl.u32 %v219, 16
      %v325 = vrot.slane %v323, 6
      %v326 = vshll.u32 %v219, 16
      %v328 = vrot.slane %v326, 7
      %v329 = vor.u32 %v325, %v328
      %v330 = vsel %vm222, %v321, %v329
      %vm341 = vcmask 257024
      %342 = vst.msk [vmem:[#allocation2] sm:$0xf] %vm341, %v240
      %343 = vst.msk [vmem:[#allocation2 + $0xc] sm:$0xf] %vm341, %v250
      %344 = vst.msk [vmem:[#allocation2 + $0x18] sm:$0xf] %vm341, %v260
      %345 = vst.msk [vmem:[#allocation2 + $0x24] sm:$0xf] %vm341, %v270
      %346 = vst.msk [vmem:[#allocation2 + $0x30] sm:$0xf] %vm341, %v280
      %347 = vst.msk [vmem:[#allocation2 + $0x3c] sm:$0xf] %vm341, %v290
      %348 = vst.msk [vmem:[#allocation2 + $0x48] sm:$0xf] %vm341, %v300
      %349 = vst.msk [vmem:[#allocation2 + $0x54] sm:$0xf] %vm341, %v310
      %350 = vst.msk [vmem:[#allocation2 + $0x60] sm:$0xf] %vm341, %v320
      %351 = vst.msk [vmem:[#allocation2 + $0x6c] sm:$0xf] %vm341, %v330
      %v352 = vld [vmem:[%s165] sm:$0x8]
      %v353 = vld [vmem:[%s165 + $0x4] sm:$0xf]
      %v354 = vld [vmem:[%s165 + $0x8] sm:$0xf]
      %v355 = vld [vmem:[%s165 + $0xc] sm:$0xf]
      %v356 = vld [vmem:[%s165 + $0x10] sm:$0xf]
      %v357 = vld [vmem:[%s165 + $0x14] sm:$0xf]
      %v358 = vld [vmem:[%s165 + $0x18] sm:$0xf]
      %v359 = vld [vmem:[%s165 + $0x1c] sm:$0xf]
      %v360 = vld [vmem:[%s165 + $0x20] sm:$0xf]
      %v361 = vld [vmem:[%s165 + $0x24] sm:$0xf]
      %v362 = vld [vmem:[%s165 + $0x28] sm:$0x7]
      %vm374 = vcmask 1040384
      %vm375 = vcmask 1044484
      %vm376 = vmor %vm374, %vm375
      %v377 = vrot.slane %v352, 7
      %v378 = vrot.slane %v377, 4
      %v379 = vrot.slane %v353, 7
      %v380 = vsel %vm376, %v378, %v379
      %v381 = vrot.slane %v379, 4
      %v382 = vrot.slane %v354, 7
      %v383 = vsel %vm376, %v381, %v382
      %v384 = vrot.slane %v382, 4
      %v385 = vrot.slane %v355, 7
      %v386 = vsel %vm376, %v384, %v385
      %v387 = vrot.slane %v385, 4
      %v388 = vrot.slane %v356, 7
      %v389 = vsel %vm376, %v387, %v388
      %v390 = vrot.slane %v388, 4
      %v391 = vrot.slane %v357, 7
      %v392 = vsel %vm376, %v390, %v391
      %v393 = vrot.slane %v391, 4
      %v394 = vrot.slane %v358, 7
      %v395 = vsel %vm376, %v393, %v394
      %v396 = vrot.slane %v394, 4
      %v397 = vrot.slane %v359, 7
      %v398 = vsel %vm376, %v396, %v397
      %v399 = vrot.slane %v397, 4
      %v400 = vrot.slane %v360, 7
      %v401 = vsel %vm376, %v399, %v400
      %v402 = vrot.slane %v400, 4
      %v403 = vrot.slane %v361, 7
      %v404 = vsel %vm376, %v402, %v403
      %v405 = vrot.slane %v403, 4
      %v406 = vrot.slane %v362, 7
      %v407 = vsel %vm376, %v405, %v406
      %408 = vrot.lane.b32.xlu0 %v380, 32
      %v409 = vpop.permute.xlu0 %408
      %410 = vrot.lane.b32.xlu0 %v383, 32
      %v411 = vpop.permute.xlu0 %410
      %412 = vrot.lane.b32.xlu0 %v386, 32
      %v413 = vpop.permute.xlu0 %412
      %414 = vrot.lane.b32.xlu0 %v389, 32
      %v415 = vpop.permute.xlu0 %414
      %416 = vrot.lane.b32.xlu0 %v392, 32
      %v417 = vpop.permute.xlu0 %416
      %418 = vrot.lane.b32.xlu0 %v395, 32
      %v419 = vpop.permute.xlu0 %418
      %420 = vrot.lane.b32.xlu0 %v398, 32
      %v421 = vpop.permute.xlu0 %420
      %422 = vrot.lane.b32.xlu0 %v401, 32
      %v423 = vpop.permute.xlu0 %422
      %424 = vrot.lane.b32.xlu0 %v404, 32
      %v425 = vpop.permute.xlu0 %424
      %426 = vrot.lane.b32.xlu0 %v407, 32
      %v427 = vpop.permute.xlu0 %426
      %vm438 = vcmask 519424
      %439 = vst.msk [vmem:[#allocation2] sm:$0xf] %vm438, %v409
      %440 = vst.msk [vmem:[#allocation2 + $0xc] sm:$0xf] %vm438, %v411
      %441 = vst.msk [vmem:[#allocation2 + $0x18] sm:$0xf] %vm438, %v413
      %442 = vst.msk [vmem:[#allocation2 + $0x24] sm:$0xf] %vm438, %v415
      %443 = vst.msk [vmem:[#allocation2 + $0x30] sm:$0xf] %vm438, %v417
      %444 = vst.msk [vmem:[#allocation2 + $0x3c] sm:$0xf] %vm438, %v419
      %445 = vst.msk [vmem:[#allocation2 + $0x48] sm:$0xf] %vm438, %v421
      %446 = vst.msk [vmem:[#allocation2 + $0x54] sm:$0xf] %vm438, %v423
      %447 = vst.msk [vmem:[#allocation2 + $0x60] sm:$0xf] %vm438, %v425
      %448 = vst.msk [vmem:[#allocation2 + $0x6c] sm:$0xf] %vm438, %v427
      %v449 = vld [vmem:[%s165] sm:$0x8]
      %v450 = vld [vmem:[%s165 + $0x4] sm:$0xf]
      %v451 = vld [vmem:[%s165 + $0x8] sm:$0xf]
      %v452 = vld [vmem:[%s165 + $0xc] sm:$0xf]
      %v453 = vld [vmem:[%s165 + $0x10] sm:$0xf]
      %v454 = vld [vmem:[%s165 + $0x14] sm:$0xf]
      %v455 = vld [vmem:[%s165 + $0x18] sm:$0xf]
      %v456 = vld [vmem:[%s165 + $0x1c] sm:$0xf]
      %v457 = vld [vmem:[%s165 + $0x20] sm:$0xf]
      %v458 = vld [vmem:[%s165 + $0x24] sm:$0xf]
      %v459 = vld [vmem:[%s165 + $0x28] sm:$0xf]
      %vm460 = vsmask.f32 256
      %vm461 = vsmask.f32 4368
      %vm462 = vmor %vm460, %vm461
      %v464 = vshrl.u32 %v449, 16
      %v466 = vrot.slane %v464, 7
      %v467 = vrot.slane %v466, 4
      %v469 = vshrl.u32 %v450, 16
      %v471 = vrot.slane %v469, 7
      %v472 = vshll.u32 %v450, 16
      %v474 = vor.u32 %v471, %v472
      %v475 = vsel %vm462, %v467, %v474
      %v476 = vrot.slane %v471, 4
      %v478 = vshrl.u32 %v451, 16
      %v480 = vrot.slane %v478, 7
      %v481 = vshll.u32 %v451, 16
      %v483 = vor.u32 %v480, %v481
      %v484 = vsel %vm462, %v476, %v483
      %v485 = vrot.slane %v480, 4
      %v487 = vshrl.u32 %v452, 16
      %v489 = vrot.slane %v487, 7
      %v490 = vshll.u32 %v452, 16
      %v492 = vor.u32 %v489, %v490
      %v493 = vsel %vm462, %v485, %v492
      %v494 = vrot.slane %v489, 4
      %v496 = vshrl.u32 %v453, 16
      %v498 = vrot.slane %v496, 7
      %v499 = vshll.u32 %v453, 16
      %v501 = vor.u32 %v498, %v499
      %v502 = vsel %vm462, %v494, %v501
      %v503 = vrot.slane %v498, 4
      %v505 = vshrl.u32 %v454, 16
      %v507 = vrot.slane %v505, 7
      %v508 = vshll.u32 %v454, 16
      %v510 = vor.u32 %v507, %v508
      %v511 = vsel %vm462, %v503, %v510
      %v512 = vrot.slane %v507, 4
      %v514 = vshrl.u32 %v455, 16
      %v516 = vrot.slane %v514, 7
      %v517 = vshll.u32 %v455, 16
      %v519 = vor.u32 %v516, %v517
      %v520 = vsel %vm462, %v512, %v519
      %v521 = vrot.slane %v516, 4
      %v523 = vshrl.u32 %v456, 16
      %v525 = vrot.slane %v523, 7
      %v526 = vshll.u32 %v456, 16
      %v528 = vor.u32 %v525, %v526
      %v529 = vsel %vm462, %v521, %v528
      %v530 = vrot.slane %v525, 4
      %v532 = vshrl.u32 %v457, 16
      %v534 = vrot.slane %v532, 7
      %v535 = vshll.u32 %v457, 16
      %v537 = vor.u32 %v534, %v535
      %v538 = vsel %vm462, %v530, %v537
      %v539 = vrot.slane %v534, 4
      %v541 = vshrl.u32 %v458, 16
      %v543 = vrot.slane %v541, 7
      %v544 = vshll.u32 %v458, 16
      %v546 = vor.u32 %v543, %v544
      %v547 = vsel %vm462, %v539, %v546
      %v548 = vrot.slane %v543, 4
      %v550 = vshrl.u32 %v459, 16
      %v552 = vrot.slane %v550, 7
      %v553 = vshll.u32 %v459, 16
      %v555 = vor.u32 %v552, %v553
      %v556 = vsel %vm462, %v548, %v555
      %557 = vrot.lane.b32.xlu0 %v475, 64
      %v558 = vpop.permute.xlu0 %557
      %559 = vrot.lane.b32.xlu0 %v484, 64
      %v560 = vpop.permute.xlu0 %559
      %561 = vrot.lane.b32.xlu0 %v493, 64
      %v562 = vpop.permute.xlu0 %561
      %563 = vrot.lane.b32.xlu0 %v502, 64
      %v564 = vpop.permute.xlu0 %563
      %565 = vrot.lane.b32.xlu0 %v511, 64
      %v566 = vpop.permute.xlu0 %565
      %567 = vrot.lane.b32.xlu0 %v520, 64
      %v568 = vpop.permute.xlu0 %567
      %569 = vrot.lane.b32.xlu0 %v529, 64
      %v570 = vpop.permute.xlu0 %569
      %571 = vrot.lane.b32.xlu0 %v538, 64
      %v572 = vpop.permute.xlu0 %571
      %573 = vrot.lane.b32.xlu0 %v547, 64
      %v574 = vpop.permute.xlu0 %573
      %575 = vrot.lane.b32.xlu0 %v556, 64
      %v576 = vpop.permute.xlu0 %575
      %vm587 = vcmask 781824
      %588 = vst.msk [vmem:[#allocation2] sm:$0xf] %vm587, %v558
      %589 = vst.msk [vmem:[#allocation2 + $0xc] sm:$0xf] %vm587, %v560
      %590 = vst.msk [vmem:[#allocation2 + $0x18] sm:$0xf] %vm587, %v562
      %591 = vst.msk [vmem:[#allocation2 + $0x24] sm:$0xf] %vm587, %v564
      %592 = vst.msk [vmem:[#allocation2 + $0x30] sm:$0xf] %vm587, %v566
      %593 = vst.msk [vmem:[#allocation2 + $0x3c] sm:$0xf] %vm587, %v568
      %594 = vst.msk [vmem:[#allocation2 + $0x48] sm:$0xf] %vm587, %v570
      %595 = vst.msk [vmem:[#allocation2 + $0x54] sm:$0xf] %vm587, %v572
      %596 = vst.msk [vmem:[#allocation2 + $0x60] sm:$0xf] %vm587, %v574
      %597 = vst.msk [vmem:[#allocation2 + $0x6c] sm:$0xf] %vm587, %v576
      %v598 = vld [vmem:[%s165 + $0x4] sm:$0x8]
      %v599 = vld [vmem:[%s165 + $0x8] sm:$0xf]
      %v600 = vld [vmem:[%s165 + $0xc] sm:$0xf]
      %v601 = vld [vmem:[%s165 + $0x10] sm:$0xf]
      %v602 = vld [vmem:[%s165 + $0x14] sm:$0xf]
      %v603 = vld [vmem:[%s165 + $0x18] sm:$0xf]
      %v604 = vld [vmem:[%s165 + $0x1c] sm:$0xf]
      %v605 = vld [vmem:[%s165 + $0x20] sm:$0xf]
      %v606 = vld [vmem:[%s165 + $0x24] sm:$0xf]
      %v607 = vld [vmem:[%s165 + $0x28] sm:$0xf]
      %v608 = vld [vmem:[%s165 + $0x2c] sm:$0xf]
      %v610 = vshrl.u32 %v598, 16
      %v612 = vrot.slane %v610, 7
      %v613 = vrot.slane %v612, 4
      %v615 = vshrl.u32 %v599, 16
      %v617 = vrot.slane %v615, 7
      %v618 = vshll.u32 %v599, 16
      %v620 = vor.u32 %v617, %v618
      %v621 = vsel %vm462, %v613, %v620
      %v622 = vrot.slane %v617, 4
      %v624 = vshrl.u32 %v600, 16
      %v626 = vrot.slane %v624, 7
      %v627 = vshll.u32 %v600, 16
      %v629 = vor.u32 %v626, %v627
      %v630 = vsel %vm462, %v622, %v629
      %v631 = vrot.slane %v626, 4
      %v633 = vshrl.u32 %v601, 16
      %v635 = vrot.slane %v633, 7
      %v636 = vshll.u32 %v601, 16
      %v638 = vor.u32 %v635, %v636
      %v639 = vsel %vm462, %v631, %v638
      %v640 = vrot.slane %v635, 4
      %v642 = vshrl.u32 %v602, 16
      %v644 = vrot.slane %v642, 7
      %v645 = vshll.u32 %v602, 16
      %v647 = vor.u32 %v644, %v645
      %v648 = vsel %vm462, %v640, %v647
      %v649 = vrot.slane %v644, 4
      %v651 = vshrl.u32 %v603, 16
      %v653 = vrot.slane %v651, 7
      %v654 = vshll.u32 %v603, 16
      %v656 = vor.u32 %v653, %v654
      %v657 = vsel %vm462, %v649, %v656
      %v658 = vrot.slane %v653, 4
      %v660 = vshrl.u32 %v604, 16
      %v662 = vrot.slane %v660, 7
      %v663 = vshll.u32 %v604, 16
      %v665 = vor.u32 %v662, %v663
      %v666 = vsel %vm462, %v658, %v665
      %v667 = vrot.slane %v662, 4
      %v669 = vshrl.u32 %v605, 16
      %v671 = vrot.slane %v669, 7
      %v672 = vshll.u32 %v605, 16
      %v674 = vor.u32 %v671, %v672
      %v675 = vsel %vm462, %v667, %v674
      %v676 = vrot.slane %v671, 4
      %v678 = vshrl.u32 %v606, 16
      %v680 = vrot.slane %v678, 7
      %v681 = vshll.u32 %v606, 16
      %v683 = vor.u32 %v680, %v681
      %v684 = vsel %vm462, %v676, %v683
      %v685 = vrot.slane %v680, 4
      %v687 = vshrl.u32 %v607, 16
      %v689 = vrot.slane %v687, 7
      %v690 = vshll.u32 %v607, 16
      %v692 = vor.u32 %v689, %v690
      %v693 = vsel %vm462, %v685, %v692
      %v694 = vrot.slane %v689, 4
      %v696 = vshrl.u32 %v608, 16
      %v698 = vrot.slane %v696, 7
      %v699 = vshll.u32 %v608, 16
      %v701 = vor.u32 %v698, %v699
      %v702 = vsel %vm462, %v694, %v701
      %703 = vrot.lane.b32.xlu0 %v621, 96
      %v704 = vpop.permute.xlu0 %703
      %705 = vrot.lane.b32.xlu0 %v630, 96
      %v706 = vpop.permute.xlu0 %705
      %707 = vrot.lane.b32.xlu0 %v639, 96
      %v708 = vpop.permute.xlu0 %707
      %709 = vrot.lane.b32.xlu0 %v648, 96
      %v710 = vpop.permute.xlu0 %709
      %711 = vrot.lane.b32.xlu0 %v657, 96
      %v712 = vpop.permute.xlu0 %711
      %713 = vrot.lane.b32.xlu0 %v666, 96
      %v714 = vpop.permute.xlu0 %713
      %715 = vrot.lane.b32.xlu0 %v675, 96
      %v716 = vpop.permute.xlu0 %715
      %717 = vrot.lane.b32.xlu0 %v684, 96
      %v718 = vpop.permute.xlu0 %717
      %719 = vrot.lane.b32.xlu0 %v693, 96
      %v720 = vpop.permute.xlu0 %719
      %721 = vrot.lane.b32.xlu0 %v702, 96
      %v722 = vpop.permute.xlu0 %721
      %vm733 = vcmask 1044224
      %734 = vst.msk [vmem:[#allocation2] sm:$0xf] %vm733, %v704
      %735 = vst.msk [vmem:[#allocation2 + $0xc] sm:$0xf] %vm733, %v706
      %736 = vst.msk [vmem:[#allocation2 + $0x18] sm:$0xf] %vm733, %v708
      %737 = vst.msk [vmem:[#allocation2 + $0x24] sm:$0xf] %vm733, %v710
      %738 = vst.msk [vmem:[#allocation2 + $0x30] sm:$0xf] %vm733, %v712
      %739 = vst.msk [vmem:[#allocation2 + $0x3c] sm:$0xf] %vm733, %v714
      %740 = vst.msk [vmem:[#allocation2 + $0x48] sm:$0xf] %vm733, %v716
      %741 = vst.msk [vmem:[#allocation2 + $0x54] sm:$0xf] %vm733, %v718
      %742 = vst.msk [vmem:[#allocation2 + $0x60] sm:$0xf] %vm733, %v720
      %743 = vst.msk [vmem:[#allocation2 + $0x6c] sm:$0xf] %vm733, %v722
      %v744 = vld [vmem:[%s165 + $0x8] sm:$0xf]
      %v745 = vld [vmem:[%s165 + $0xc] sm:$0xf]
      %v746 = vld [vmem:[%s165 + $0x10] sm:$0xf]
      %v747 = vld [vmem:[%s165 + $0x14] sm:$0xf]
      %v748 = vld [vmem:[%s165 + $0x18] sm:$0xf]
      %v749 = vld [vmem:[%s165 + $0x1c] sm:$0xf]
      %v750 = vld [vmem:[%s165 + $0x20] sm:$0xf]
      %v751 = vld [vmem:[%s165 + $0x24] sm:$0xf]
      %v752 = vld [vmem:[%s165 + $0x28] sm:$0xf]
      %v753 = vld [vmem:[%s165 + $0x2c] sm:$0xf]
      %754 = vst.msk [vmem:[#allocation2 + $0x4] sm:$0xf] %vm341, %v744
      %755 = vst.msk [vmem:[#allocation2 + $0x10] sm:$0xf] %vm341, %v745
      %756 = vst.msk [vmem:[#allocation2 + $0x1c] sm:$0xf] %vm341, %v746
      %757 = vst.msk [vmem:[#allocation2 + $0x28] sm:$0xf] %vm341, %v747
      %758 = vst.msk [vmem:[#allocation2 + $0x34] sm:$0xf] %vm341, %v748
      %759 = vst.msk [vmem:[#allocation2 + $0x40] sm:$0xf] %vm341, %v749
      %760 = vst.msk [vmem:[#allocation2 + $0x4c] sm:$0xf] %vm341, %v750
      %761 = vst.msk [vmem:[#allocation2 + $0x58] sm:$0xf] %vm341, %v751
      %762 = vst.msk [vmem:[#allocation2 + $0x64] sm:$0xf] %vm341, %v752
      %763 = vst.msk [vmem:[#allocation2 + $0x70] sm:$0xf] %vm341, %v753
      %v764 = vld [vmem:[%s165 + $0x8] sm:$0xf]
      %v765 = vld [vmem:[%s165 + $0xc] sm:$0xf]
      %v766 = vld [vmem:[%s165 + $0x10] sm:$0xf]
      %v767 = vld [vmem:[%s165 + $0x14] sm:$0xf]
      %v768 = vld [vmem:[%s165 + $0x18] sm:$0xf]
      %v769 = vld [vmem:[%s165 + $0x1c] sm:$0xf]
      %v770 = vld [vmem:[%s165 + $0x20] sm:$0xf]
      %v771 = vld [vmem:[%s165 + $0x24] sm:$0xf]
      %v772 = vld [vmem:[%s165 + $0x28] sm:$0xf]
      %v773 = vld [vmem:[%s165 + $0x2c] sm:$0xf]
      %v774 = vld [vmem:[%s165 + $0x30] sm:$0x1]
      %vm775 = vsmask.f32 3328
      %vm776 = vsmask.f32 7440
      %vm777 = vmor %vm775, %vm776
      %v779 = vshrl.u32 %v764, 16
      %v781 = vrot.slane %v779, 4
      %v782 = vshll.u32 %v764, 16
      %v784 = vrot.slane %v782, 5
      %v785 = vor.u32 %v781, %v784
      %v786 = vrot.slane %v785, 4
      %v788 = vshll.u32 %v765, 16
      %v790 = vrot.slane %v788, 5
      %v791 = vsel %vm777, %v786, %v790
      %v792 = vshrl.u32 %v765, 16
      %v794 = vrot.slane %v792, 4
      %v795 = vor.u32 %v794, %v790
      %v796 = vrot.slane %v795, 4
      %v798 = vshll.u32 %v766, 16
      %v800 = vrot.slane %v798, 5
      %v801 = vsel %vm777, %v796, %v800
      %v802 = vshrl.u32 %v766, 16
      %v804 = vrot.slane %v802, 4
      %v805 = vor.u32 %v804, %v800
      %v806 = vrot.slane %v805, 4
      %v808 = vshll.u32 %v767, 16
      %v810 = vrot.slane %v808, 5
      %v811 = vsel %vm777, %v806, %v810
      %v812 = vshrl.u32 %v767, 16
      %v814 = vrot.slane %v812, 4
      %v815 = vor.u32 %v814, %v810
      %v816 = vrot.slane %v815, 4
      %v818 = vshll.u32 %v768, 16
      %v820 = vrot.slane %v818, 5
      %v821 = vsel %vm777, %v816, %v820
      %v822 = vshrl.u32 %v768, 16
      %v824 = vrot.slane %v822, 4
      %v825 = vor.u32 %v824, %v820
      %v826 = vrot.slane %v825, 4
      %v828 = vshll.u32 %v769, 16
      %v830 = vrot.slane %v828, 5
      %v831 = vsel %vm777, %v826, %v830
      %v832 = vshrl.u32 %v769, 16
      %v834 = vrot.slane %v832, 4
      %v835 = vor.u32 %v834, %v830
      %v836 = vrot.slane %v835, 4
      %v838 = vshll.u32 %v770, 16
      %v840 = vrot.slane %v838, 5
      %v841 = vsel %vm777, %v836, %v840
      %v842 = vshrl.u32 %v770, 16
      %v844 = vrot.slane %v842, 4
      %v845 = vor.u32 %v844, %v840
      %v846 = vrot.slane %v845, 4
      %v848 = vshll.u32 %v771, 16
      %v850 = vrot.slane %v848, 5
      %v851 = vsel %vm777, %v846, %v850
      %v852 = vshrl.u32 %v771, 16
      %v854 = vrot.slane %v852, 4
      %v855 = vor.u32 %v854, %v850
      %v856 = vrot.slane %v855, 4
      %v858 = vshll.u32 %v772, 16
      %v860 = vrot.slane %v858, 5
      %v861 = vsel %vm777, %v856, %v860
      %v862 = vshrl.u32 %v772, 16
      %v864 = vrot.slane %v862, 4
      %v865 = vor.u32 %v864, %v860
      %v866 = vrot.slane %v865, 4
      %v868 = vshll.u32 %v773, 16
      %v870 = vrot.slane %v868, 5
      %v871 = vsel %vm777, %v866, %v870
      %v872 = vshrl.u32 %v773, 16
      %v874 = vrot.slane %v872, 4
      %v875 = vor.u32 %v874, %v870
      %v876 = vrot.slane %v875, 4
      %v878 = vshll.u32 %v774, 16
      %v880 = vrot.slane %v878, 5
      %v881 = vsel %vm777, %v876, %v880
      %882 = vrot.lane.b32.xlu0 %v791, 32
      %v883 = vpop.permute.xlu0 %882
      %884 = vrot.lane.b32.xlu0 %v801, 32
      %v885 = vpop.permute.xlu0 %884
      %886 = vrot.lane.b32.xlu0 %v811, 32
      %v887 = vpop.permute.xlu0 %886
      %888 = vrot.lane.b32.xlu0 %v821, 32
      %v889 = vpop.permute.xlu0 %888
      %890 = vrot.lane.b32.xlu0 %v831, 32
      %v891 = vpop.permute.xlu0 %890
      %892 = vrot.lane.b32.xlu0 %v841, 32
      %v893 = vpop.permute.xlu0 %892
      %894 = vrot.lane.b32.xlu0 %v851, 32
      %v895 = vpop.permute.xlu0 %894
      %896 = vrot.lane.b32.xlu0 %v861, 32
      %v897 = vpop.permute.xlu0 %896
      %898 = vrot.lane.b32.xlu0 %v871, 32
      %v899 = vpop.permute.xlu0 %898
      %900 = vrot.lane.b32.xlu0 %v881, 32
      %v901 = vpop.permute.xlu0 %900
      %912 = vst.msk [vmem:[#allocation2 + $0x4] sm:$0xf] %vm438, %v883
      %913 = vst.msk [vmem:[#allocation2 + $0x10] sm:$0xf] %vm438, %v885
      %914 = vst.msk [vmem:[#allocation2 + $0x1c] sm:$0xf] %vm438, %v887
      %915 = vst.msk [vmem:[#allocation2 + $0x28] sm:$0xf] %vm438, %v889
      %916 = vst.msk [vmem:[#allocation2 + $0x34] sm:$0xf] %vm438, %v891
      %917 = vst.msk [vmem:[#allocation2 + $0x40] sm:$0xf] %vm438, %v893
      %918 = vst.msk [vmem:[#allocation2 + $0x4c] sm:$0xf] %vm438, %v895
      %919 = vst.msk [vmem:[#allocation2 + $0x58] sm:$0xf] %vm438, %v897
      %920 = vst.msk [vmem:[#allocation2 + $0x64] sm:$0xf] %vm438, %v899
      %921 = vst.msk [vmem:[#allocation2 + $0x70] sm:$0xf] %vm438, %v901
      %v922 = vld [vmem:[%s165 + $0xc] sm:$0xf]
      %v923 = vld [vmem:[%s165 + $0x10] sm:$0xf]
      %v924 = vld [vmem:[%s165 + $0x14] sm:$0xf]
      %v925 = vld [vmem:[%s165 + $0x18] sm:$0xf]
      %v926 = vld [vmem:[%s165 + $0x1c] sm:$0xf]
      %v927 = vld [vmem:[%s165 + $0x20] sm:$0xf]
      %v928 = vld [vmem:[%s165 + $0x24] sm:$0xf]
      %v929 = vld [vmem:[%s165 + $0x28] sm:$0xf]
      %v930 = vld [vmem:[%s165 + $0x2c] sm:$0xf]
      %v931 = vld [vmem:[%s165 + $0x30] sm:$0xf]
      %v932 = vld [vmem:[%s165 + $0x34] sm:$0x1]
      %v934 = vshrl.u32 %v922, 16
      %v936 = vrot.slane %v934, 4
      %v937 = vshll.u32 %v922, 16
      %v939 = vrot.slane %v937, 5
      %v940 = vor.u32 %v936, %v939
      %v941 = vrot.slane %v940, 4
      %v943 = vshll.u32 %v923, 16
      %v945 = vrot.slane %v943, 5
      %v946 = vsel %vm777, %v941, %v945
      %v947 = vshrl.u32 %v923, 16
      %v949 = vrot.slane %v947, 4
      %v950 = vor.u32 %v949, %v945
      %v951 = vrot.slane %v950, 4
      %v953 = vshll.u32 %v924, 16
      %v955 = vrot.slane %v953, 5
      %v956 = vsel %vm777, %v951, %v955
      %v957 = vshrl.u32 %v924, 16
      %v959 = vrot.slane %v957, 4
      %v960 = vor.u32 %v959, %v955
      %v961 = vrot.slane %v960, 4
      %v963 = vshll.u32 %v925, 16
      %v965 = vrot.slane %v963, 5
      %v966 = vsel %vm777, %v961, %v965
      %v967 = vshrl.u32 %v925, 16
      %v969 = vrot.slane %v967, 4
      %v970 = vor.u32 %v969, %v965
      %v971 = vrot.slane %v970, 4
      %v973 = vshll.u32 %v926, 16
      %v975 = vrot.slane %v973, 5
      %v976 = vsel %vm777, %v971, %v975
      %v977 = vshrl.u32 %v926, 16
      %v979 = vrot.slane %v977, 4
      %v980 = vor.u32 %v979, %v975
      %v981 = vrot.slane %v980, 4
      %v983 = vshll.u32 %v927, 16
      %v985 = vrot.slane %v983, 5
      %v986 = vsel %vm777, %v981, %v985
      %v987 = vshrl.u32 %v927, 16
      %v989 = vrot.slane %v987, 4
      %v990 = vor.u32 %v989, %v985
      %v991 = vrot.slane %v990, 4
      %v993 = vshll.u32 %v928, 16
      %v995 = vrot.slane %v993, 5
      %v996 = vsel %vm777, %v991, %v995
      %v997 = vshrl.u32 %v928, 16
      %v999 = vrot.slane %v997, 4
      %v1000 = vor.u32 %v999, %v995
      %v1001 = vrot.slane %v1000, 4
      %v1003 = vshll.u32 %v929, 16
      %v1005 = vrot.slane %v1003, 5
      %v1006 = vsel %vm777, %v1001, %v1005
      %v1007 = vshrl.u32 %v929, 16
      %v1009 = vrot.slane %v1007, 4
      %v1010 = vor.u32 %v1009, %v1005
      %v1011 = vrot.slane %v1010, 4
      %v1013 = vshll.u32 %v930, 16
      %v1015 = vrot.slane %v1013, 5
      %v1016 = vsel %vm777, %v1011, %v1015
      %v1017 = vshrl.u32 %v930, 16
      %v1019 = vrot.slane %v1017, 4
      %v1020 = vor.u32 %v1019, %v1015
      %v1021 = vrot.slane %v1020, 4
      %v1023 = vshll.u32 %v931, 16
      %v1025 = vrot.slane %v1023, 5
      %v1026 = vsel %vm777, %v1021, %v1025
      %v1027 = vshrl.u32 %v931, 16
      %v1029 = vrot.slane %v1027, 4
      %v1030 = vor.u32 %v1029, %v1025
      %v1031 = vrot.slane %v1030, 4
      %v1033 = vshll.u32 %v932, 16
      %v1035 = vrot.slane %v1033, 5
      %v1036 = vsel %vm777, %v1031, %v1035
      %1037 = vrot.lane.b32.xlu0 %v946, 64
      %v1038 = vpop.permute.xlu0 %1037
      %1039 = vrot.lane.b32.xlu0 %v956, 64
      %v1040 = vpop.permute.xlu0 %1039
      %1041 = vrot.lane.b32.xlu0 %v966, 64
      %v1042 = vpop.permute.xlu0 %1041
      %1043 = vrot.lane.b32.xlu0 %v976, 64
      %v1044 = vpop.permute.xlu0 %1043
      %1045 = vrot.lane.b32.xlu0 %v986, 64
      %v1046 = vpop.permute.xlu0 %1045
      %1047 = vrot.lane.b32.xlu0 %v996, 64
      %v1048 = vpop.permute.xlu0 %1047
      %1049 = vrot.lane.b32.xlu0 %v1006, 64
      %v1050 = vpop.permute.xlu0 %1049
      %1051 = vrot.lane.b32.xlu0 %v1016, 64
      %v1052 = vpop.permute.xlu0 %1051
      %1053 = vrot.lane.b32.xlu0 %v1026, 64
      %v1054 = vpop.permute.xlu0 %1053
      %1055 = vrot.lane.b32.xlu0 %v1036, 64
      %v1056 = vpop.permute.xlu0 %1055
      %1067 = vst.msk [vmem:[#allocation2 + $0x4] sm:$0xf] %vm587, %v1038
      %1068 = vst.msk [vmem:[#allocation2 + $0x10] sm:$0xf] %vm587, %v1040
      %1069 = vst.msk [vmem:[#allocation2 + $0x1c] sm:$0xf] %vm587, %v1042
      %1070 = vst.msk [vmem:[#allocation2 + $0x28] sm:$0xf] %vm587, %v1044
      %1071 = vst.msk [vmem:[#allocation2 + $0x34] sm:$0xf] %vm587, %v1046
      %1072 = vst.msk [vmem:[#allocation2 + $0x40] sm:$0xf] %vm587, %v1048
      %1073 = vst.msk [vmem:[#allocation2 + $0x4c] sm:$0xf] %vm587, %v1050
      %1074 = vst.msk [vmem:[#allocation2 + $0x58] sm:$0xf] %vm587, %v1052
      %1075 = vst.msk [vmem:[#allocation2 + $0x64] sm:$0xf] %vm587, %v1054
      %1076 = vst.msk [vmem:[#allocation2 + $0x70] sm:$0xf] %vm587, %v1056
      %v1077 = vld [vmem:[%s165 + $0xc] sm:$0xe]
      %v1078 = vld [vmem:[%s165 + $0x10] sm:$0xf]
      %v1079 = vld [vmem:[%s165 + $0x14] sm:$0xf]
      %v1080 = vld [vmem:[%s165 + $0x18] sm:$0xf]
      %v1081 = vld [vmem:[%s165 + $0x1c] sm:$0xf]
      %v1082 = vld [vmem:[%s165 + $0x20] sm:$0xf]
      %v1083 = vld [vmem:[%s165 + $0x24] sm:$0xf]
      %v1084 = vld [vmem:[%s165 + $0x28] sm:$0xf]
      %v1085 = vld [vmem:[%s165 + $0x2c] sm:$0xf]
      %v1086 = vld [vmem:[%s165 + $0x30] sm:$0xf]
      %v1087 = vld [vmem:[%s165 + $0x34] sm:$0x1]
      %vm1099 = vcmask 1042432
      %vm1100 = vcmask 1046532
      %vm1101 = vmor %vm1099, %vm1100
      %v1102 = vrot.slane %v1077, 5
      %v1103 = vrot.slane %v1102, 4
      %v1104 = vrot.slane %v1078, 5
      %v1105 = vsel %vm1101, %v1103, %v1104
      %v1106 = vrot.slane %v1104, 4
      %v1107 = vrot.slane %v1079, 5
      %v1108 = vsel %vm1101, %v1106, %v1107
      %v1109 = vrot.slane %v1107, 4
      %v1110 = vrot.slane %v1080, 5
      %v1111 = vsel %vm1101, %v1109, %v1110
      %v1112 = vrot.slane %v1110, 4
      %v1113 = vrot.slane %v1081, 5
      %v1114 = vsel %vm1101, %v1112, %v1113
      %v1115 = vrot.slane %v1113, 4
      %v1116 = vrot.slane %v1082, 5
      %v1117 = vsel %vm1101, %v1115, %v1116
      %v1118 = vrot.slane %v1116, 4
      %v1119 = vrot.slane %v1083, 5
      %v1120 = vsel %vm1101, %v1118, %v1119
      %v1121 = vrot.slane %v1119, 4
      %v1122 = vrot.slane %v1084, 5
      %v1123 = vsel %vm1101, %v1121, %v1122
      %v1124 = vrot.slane %v1122, 4
      %v1125 = vrot.slane %v1085, 5
      %v1126 = vsel %vm1101, %v1124, %v1125
      %v1127 = vrot.slane %v1125, 4
      %v1128 = vrot.slane %v1086, 5
      %v1129 = vsel %vm1101, %v1127, %v1128
      %v1130 = vrot.slane %v1128, 4
      %v1131 = vrot.slane %v1087, 5
      %v1132 = vsel %vm1101, %v1130, %v1131
      %1133 = vrot.lane.b32.xlu0 %v1105, 96
      %v1134 = vpop.permute.xlu0 %1133
      %1135 = vrot.lane.b32.xlu0 %v1108, 96
      %v1136 = vpop.permute.xlu0 %1135
      %1137 = vrot.lane.b32.xlu0 %v1111, 96
      %v1138 = vpop.permute.xlu0 %1137
      %1139 = vrot.lane.b32.xlu0 %v1114, 96
      %v1140 = vpop.permute.xlu0 %1139
      %1141 = vrot.lane.b32.xlu0 %v1117, 96
      %v1142 = vpop.permute.xlu0 %1141
      %1143 = vrot.lane.b32.xlu0 %v1120, 96
      %v1144 = vpop.permute.xlu0 %1143
      %1145 = vrot.lane.b32.xlu0 %v1123, 96
      %v1146 = vpop.permute.xlu0 %1145
      %1147 = vrot.lane.b32.xlu0 %v1126, 96
      %v1148 = vpop.permute.xlu0 %1147
      %1149 = vrot.lane.b32.xlu0 %v1129, 96
      %v1150 = vpop.permute.xlu0 %1149
      %1151 = vrot.lane.b32.xlu0 %v1132, 96
      %v1152 = vpop.permute.xlu0 %1151
      %1163 = vst.msk [vmem:[#allocation2 + $0x4] sm:$0xf] %vm733, %v1134
      %1164 = vst.msk [vmem:[#allocation2 + $0x10] sm:$0xf] %vm733, %v1136
      %1165 = vst.msk [vmem:[#allocation2 + $0x1c] sm:$0xf] %vm733, %v1138
      %1166 = vst.msk [vmem:[#allocation2 + $0x28] sm:$0xf] %vm733, %v1140
      %1167 = vst.msk [vmem:[#allocation2 + $0x34] sm:$0xf] %vm733, %v1142
      %1168 = vst.msk [vmem:[#allocation2 + $0x40] sm:$0xf] %vm733, %v1144
      %1169 = vst.msk [vmem:[#allocation2 + $0x4c] sm:$0xf] %vm733, %v1146
      %1170 = vst.msk [vmem:[#allocation2 + $0x58] sm:$0xf] %vm733, %v1148
      %1171 = vst.msk [vmem:[#allocation2 + $0x64] sm:$0xf] %vm733, %v1150
      %1172 = vst.msk [vmem:[#allocation2 + $0x70] sm:$0xf] %vm733, %v1152
      %v1173 = vld [vmem:[%s165 + $0xc] sm:$0xe]
      %v1174 = vld [vmem:[%s165 + $0x10] sm:$0xf]
      %v1175 = vld [vmem:[%s165 + $0x14] sm:$0xf]
      %v1176 = vld [vmem:[%s165 + $0x18] sm:$0xf]
      %v1177 = vld [vmem:[%s165 + $0x1c] sm:$0xf]
      %v1178 = vld [vmem:[%s165 + $0x20] sm:$0xf]
      %v1179 = vld [vmem:[%s165 + $0x24] sm:$0xf]
      %v1180 = vld [vmem:[%s165 + $0x28] sm:$0xf]
      %v1181 = vld [vmem:[%s165 + $0x2c] sm:$0xf]
      %v1182 = vld [vmem:[%s165 + $0x30] sm:$0xf]
      %v1183 = vld [vmem:[%s165 + $0x34] sm:$0x3]
      %vm1184 = vsmask.f32 2304
      %vm1185 = vsmask.f32 6416
      %vm1186 = vmor %vm1184, %vm1185
      %v1188 = vshrl.u32 %v1173, 16
      %v1190 = vrot.slane %v1188, 5
      %v1191 = vshll.u32 %v1173, 16
      %v1193 = vrot.slane %v1191, 6
      %v1194 = vor.u32 %v1190, %v1193
      %v1195 = vrot.slane %v1194, 4
      %v1197 = vshrl.u32 %v1174, 16
      %v1199 = vrot.slane %v1197, 5
      %v1200 = vshll.u32 %v1174, 16
      %v1202 = vrot.slane %v1200, 6
      %v1203 = vor.u32 %v1199, %v1202
      %v1204 = vsel %vm1186, %v1195, %v1203
      %v1205 = vrot.slane %v1203, 4
      %v1207 = vshrl.u32 %v1175, 16
      %v1209 = vrot.slane %v1207, 5
      %v1210 = vshll.u32 %v1175, 16
      %v1212 = vrot.slane %v1210, 6
      %v1213 = vor.u32 %v1209, %v1212
      %v1214 = vsel %vm1186, %v1205, %v1213
      %v1215 = vrot.slane %v1213, 4
      %v1217 = vshrl.u32 %v1176, 16
      %v1219 = vrot.slane %v1217, 5
      %v1220 = vshll.u32 %v1176, 16
      %v1222 = vrot.slane %v1220, 6
      %v1223 = vor.u32 %v1219, %v1222
      %v1224 = vsel %vm1186, %v1215, %v1223
      %v1225 = vrot.slane %v1223, 4
      %v1227 = vshrl.u32 %v1177, 16
      %v1229 = vrot.slane %v1227, 5
      %v1230 = vshll.u32 %v1177, 16
      %v1232 = vrot.slane %v1230, 6
      %v1233 = vor.u32 %v1229, %v1232
      %v1234 = vsel %vm1186, %v1225, %v1233
      %v1235 = vrot.slane %v1233, 4
      %v1237 = vshrl.u32 %v1178, 16
      %v1239 = vrot.slane %v1237, 5
      %v1240 = vshll.u32 %v1178, 16
      %v1242 = vrot.slane %v1240, 6
      %v1243 = vor.u32 %v1239, %v1242
      %v1244 = vsel %vm1186, %v1235, %v1243
      %v1245 = vrot.slane %v1243, 4
      %v1247 = vshrl.u32 %v1179, 16
      %v1249 = vrot.slane %v1247, 5
      %v1250 = vshll.u32 %v1179, 16
      %v1252 = vrot.slane %v1250, 6
      %v1253 = vor.u32 %v1249, %v1252
      %v1254 = vsel %vm1186, %v1245, %v1253
      %v1255 = vrot.slane %v1253, 4
      %v1257 = vshrl.u32 %v1180, 16
      %v1259 = vrot.slane %v1257, 5
      %v1260 = vshll.u32 %v1180, 16
      %v1262 = vrot.slane %v1260, 6
      %v1263 = vor.u32 %v1259, %v1262
      %v1264 = vsel %vm1186, %v1255, %v1263
      %v1265 = vrot.slane %v1263, 4
      %v1267 = vshrl.u32 %v1181, 16
      %v1269 = vrot.slane %v1267, 5
      %v1270 = vshll.u32 %v1181, 16
      %v1272 = vrot.slane %v1270, 6
      %v1273 = vor.u32 %v1269, %v1272
      %v1274 = vsel %vm1186, %v1265, %v1273
      %v1275 = vrot.slane %v1273, 4
      %v1277 = vshrl.u32 %v1182, 16
      %v1279 = vrot.slane %v1277, 5
      %v1280 = vshll.u32 %v1182, 16
      %v1282 = vrot.slane %v1280, 6
      %v1283 = vor.u32 %v1279, %v1282
      %v1284 = vsel %vm1186, %v1275, %v1283
      %v1285 = vrot.slane %v1283, 4
      %v1287 = vshrl.u32 %v1183, 16
      %v1289 = vrot.slane %v1287, 5
      %v1290 = vshll.u32 %v1183, 16
      %v1292 = vrot.slane %v1290, 6
      %v1293 = vor.u32 %v1289, %v1292
      %v1294 = vsel %vm1186, %v1285, %v1293
      %1305 = vst.msk [vmem:[#allocation2 + $0x8] sm:$0xf] %vm341, %v1204
      %1306 = vst.msk [vmem:[#allocation2 + $0x14] sm:$0xf] %vm341, %v1214
      %1307 = vst.msk [vmem:[#allocation2 + $0x20] sm:$0xf] %vm341, %v1224
      %1308 = vst.msk [vmem:[#allocation2 + $0x2c] sm:$0xf] %vm341, %v1234
      %1309 = vst.msk [vmem:[#allocation2 + $0x38] sm:$0xf] %vm341, %v1244
      %1310 = vst.msk [vmem:[#allocation2 + $0x44] sm:$0xf] %vm341, %v1254
      %1311 = vst.msk [vmem:[#allocation2 + $0x50] sm:$0xf] %vm341, %v1264
      %1312 = vst.msk [vmem:[#allocation2 + $0x5c] sm:$0xf] %vm341, %v1274
      %1313 = vst.msk [vmem:[#allocation2 + $0x68] sm:$0xf] %vm341, %v1284
      %1314 = vst.msk [vmem:[#allocation2 + $0x74] sm:$0xf] %vm341, %v1294
      %v1315 = vld [vmem:[#allocation2] sm:$0xff]
      %v1316 = vld [vmem:[#allocation2 + $0x8] sm:$0xf]
      %v1317 = vld [vmem:[#allocation2 + $0xc] sm:$0xff]
      %v1318 = vld [vmem:[#allocation2 + $0x14] sm:$0xf]
      %v1319 = vld [vmem:[#allocation2 + $0x18] sm:$0xff]
      %v1320 = vld [vmem:[#allocation2 + $0x20] sm:$0xf]
      %v1321 = vld [vmem:[#allocation2 + $0x24] sm:$0xff]
      %v1322 = vld [vmem:[#allocation2 + $0x2c] sm:$0xf]
      %v1323 = vld [vmem:[#allocation2 + $0x30] sm:$0xff]
      %v1324 = vld [vmem:[#allocation2 + $0x38] sm:$0xf]
      %v1325 = vld [vmem:[#allocation2 + $0x3c] sm:$0xff]
      %v1326 = vld [vmem:[#allocation2 + $0x44] sm:$0xf]
      %v1327 = vld [vmem:[#allocation2 + $0x48] sm:$0xff]
      %v1328 = vld [vmem:[#allocation2 + $0x50] sm:$0xf]
      %v1329 = vld [vmem:[#allocation2 + $0x54] sm:$0xff]
      %v1330 = vld [vmem:[#allocation2 + $0x5c] sm:$0xf]
      %v1331 = vld [vmem:[#allocation2 + $0x60] sm:$0xff]
      %v1332 = vld [vmem:[#allocation2 + $0x68] sm:$0xf]
      %v1333 = vld [vmem:[#allocation2 + $0x6c] sm:$0xff]
      %v1334 = vld [vmem:[#allocation2 + $0x74] sm:$0xf]
      %v1336 = vperm.slane %v208, 0
      %v1358 = vunpack.c.l.b16 %v1315
      %v1359 = vunpack.c.h.b16 %v1315
      %v1360 = vunpack.c.l.b16 %v1316
      %v1361 = vunpack.c.l.b16 %v1317
      %v1362 = vunpack.c.h.b16 %v1317
      %v1363 = vunpack.c.l.b16 %v1318
      %v1364 = vunpack.c.l.b16 %v1319
      %v1365 = vunpack.c.h.b16 %v1319
      %v1366 = vunpack.c.l.b16 %v1320
      %v1367 = vunpack.c.l.b16 %v1321
      %v1368 = vunpack.c.h.b16 %v1321
      %v1369 = vunpack.c.l.b16 %v1322
      %v1370 = vunpack.c.l.b16 %v1323
      %v1371 = vunpack.c.h.b16 %v1323
      %v1372 = vunpack.c.l.b16 %v1324
      %v1373 = vunpack.c.l.b16 %v1325
      %v1374 = vunpack.c.h.b16 %v1325
      %v1375 = vunpack.c.l.b16 %v1326
      %v1376 = vunpack.c.l.b16 %v1327
      %v1377 = vunpack.c.h.b16 %v1327
      %v1378 = vunpack.c.l.b16 %v1328
      %v1379 = vunpack.c.l.b16 %v1329
      %v1380 = vunpack.c.h.b16 %v1329
      %v1381 = vunpack.c.l.b16 %v1330
      %v1382 = vunpack.c.l.b16 %v1331
      %v1383 = vunpack.c.h.b16 %v1331
      %v1384 = vunpack.c.l.b16 %v1332
      %v1385 = vunpack.c.l.b16 %v1333
      %v1386 = vunpack.c.h.b16 %v1333
      %v1387 = vunpack.c.l.b16 %v1334
      %v1388 = vpack.c.b16 %v1361, %v1358
      %v1389 = vpack.c.b16 %v1362, %v1359
      %v1390 = vpack.c.b16 %v1363, %v1360
      %v1391 = vpack.c.b16 %v1367, %v1364
      %v1392 = vpack.c.b16 %v1368, %v1365
      %v1393 = vpack.c.b16 %v1369, %v1366
      %v1394 = vpack.c.b16 %v1373, %v1370
      %v1395 = vpack.c.b16 %v1374, %v1371
      %v1396 = vpack.c.b16 %v1375, %v1372
      %v1397 = vpack.c.b16 %v1379, %v1376
      %v1398 = vpack.c.b16 %v1380, %v1377
      %v1399 = vpack.c.b16 %v1381, %v1378
      %v1400 = vpack.c.b16 %v1385, %v1382
      %v1401 = vpack.c.b16 %v1386, %v1383
      %v1402 = vpack.c.b16 %v1387, %v1384
      %v1449 = vunpack.c.l.b16 %v172
      %v1450 = vunpack.c.l.b16 %v173
      %v1451 = vunpack.c.l.b16 %v174
      %v1452 = vunpack.c.l.b16 %v175
      %v1453 = vunpack.c.l.b16 %v176
      %v1454 = vunpack.c.l.b16 %v177
      %v1455 = vunpack.c.l.b16 %v178
      %v1456 = vunpack.c.l.b16 %v179
      %v1457 = vunpack.c.l.b16 %v180
      %v1458 = vunpack.c.l.b16 %v181
      %v1459 = vunpack.c.l.b16 %v182
      %v1460 = vunpack.c.l.b16 %v183
      %v1461 = vunpack.c.l.b16 %v184
      %v1462 = vunpack.c.l.b16 %v185
      %v1463 = vunpack.c.l.b16 %v186
      %v1464 = vunpack.c.l.b16 %v187
      %v1465 = vunpack.c.l.b16 %v188
      %v1466 = vunpack.c.l.b16 %v189
      %v1467 = vunpack.c.l.b16 %v190
      %v1468 = vunpack.c.l.b16 %v191
      %v1469 = vunpack.c.l.b16 %v192
      %v1470 = vunpack.c.l.b16 %v193
      %v1471 = vunpack.c.l.b16 %v194
      %v1472 = vunpack.c.l.b16 %v195
      %v1473 = vunpack.c.l.b16 %v196
      %v1474 = vunpack.c.l.b16 %v197
      %v1475 = vunpack.c.l.b16 %v198
      %v1476 = vunpack.c.l.b16 %v199
      %v1477 = vunpack.c.l.b16 %v200
      %v1478 = vunpack.c.l.b16 %v201
      %v1479 = vunpack.c.l.b16 %v202
      %v1480 = vunpack.c.l.b16 %v203
      %v1481 = vunpack.c.l.b16 %v204
      %v1482 = vunpack.c.l.b16 %v205
      %v1483 = vunpack.c.l.b16 %v206
      %v1484 = vunpack.c.l.b16 %v207
      %v1485 = vpack.c.b16 %v1450, %v1449
      %v1486 = vpack.c.b16 %v1452, %v1451
      %v1487 = vpack.c.b16 %v1454, %v1453
      %v1488 = vpack.c.b16 %v1456, %v1455
      %v1489 = vpack.c.b16 %v1458, %v1457
      %v1490 = vpack.c.b16 %v1460, %v1459
      %v1491 = vpack.c.b16 %v1462, %v1461
      %v1492 = vpack.c.b16 %v1464, %v1463
      %v1493 = vpack.c.b16 %v1466, %v1465
      %v1494 = vpack.c.b16 %v1468, %v1467
      %v1495 = vpack.c.b16 %v1470, %v1469
      %v1496 = vpack.c.b16 %v1472, %v1471
      %v1497 = vpack.c.b16 %v1474, %v1473
      %v1498 = vpack.c.b16 %v1476, %v1475
      %v1499 = vpack.c.b16 %v1478, %v1477
      %v1500 = vpack.c.b16 %v1480, %v1479
      %v1501 = vpack.c.b16 %v1482, %v1481
      %v1502 = vpack.c.b16 %v1484, %v1483
      %vm1521 = vcmask 261120
      %v1523 = vsel %vm1521, %v1390, 0
      %v1526 = vsel %vm1521, %v1393, 0
      %v1529 = vsel %vm1521, %v1396, 0
      %v1532 = vsel %vm1521, %v1399, 0
      %v1535 = vsel %vm1521, %v1402, 0
      %1537 = vmatpush.bf16.msra.mxu0 %v1492
      %1538 = vmatpush.bf16.msra.mxu0 %v1491
      %1539 = vmatpush.bf16.msra.mxu0 %v1490
      %1540 = vmatpush.bf16.msra.mxu0 %v1489
      %1541 = vmatpush.bf16.msra.mxu0 %v1488
      %1542 = vmatpush.bf16.msra.mxu0 %v1487
      %1543 = vmatpush.bf16.msra.mxu0 %v1486
      %1544 = vmatpush.bf16.msra.mxu0 %v1485
      %1545 = vmatmul.bf16.gmra.mxu0 %v1388
      %v1546 = vpop.f32.mrf.mxu0
      %v1547 = vadd.f32 %v1336, %v1546
      %v1548 = vpop.f32.mrf.mxu0
      %v1549 = vadd.f32 %v1336, %v1548
      %1550 = vmatmul.bf16.gmra.mxu0 %v1391
      %v1551 = vpop.f32.mrf.mxu0
      %v1552 = vadd.f32 %v1336, %v1551
      %v1553 = vpop.f32.mrf.mxu0
      %v1554 = vadd.f32 %v1336, %v1553
      %1555 = vmatmul.bf16.gmra.mxu0 %v1394
      %v1556 = vpop.f32.mrf.mxu0
      %v1557 = vadd.f32 %v1336, %v1556
      %v1558 = vpop.f32.mrf.mxu0
      %v1559 = vadd.f32 %v1336, %v1558
      %1560 = vmatmul.bf16.gmra.mxu0 %v1397
      %v1561 = vpop.f32.mrf.mxu0
      %v1562 = vadd.f32 %v1336, %v1561
      %v1563 = vpop.f32.mrf.mxu0
      %v1564 = vadd.f32 %v1336, %v1563
      %1565 = vmatmul.bf16.gmra.mxu0 %v1400
      %v1566 = vpop.f32.mrf.mxu0
      %v1567 = vadd.f32 %v1336, %v1566
      %v1568 = vpop.f32.mrf.mxu0
      %v1569 = vadd.f32 %v1336, %v1568
      %1570 = vdwg.mxu0
      %1571 = vmatpush.bf16.msra.mxu0 %v1500
      %1572 = vmatpush.bf16.msra.mxu0 %v1499
      %1573 = vmatpush.bf16.msra.mxu0 %v1498
      %1574 = vmatpush.bf16.msra.mxu0 %v1497
      %1575 = vmatpush.bf16.msra.mxu0 %v1496
      %1576 = vmatpush.bf16.msra.mxu0 %v1495
      %1577 = vmatpush.bf16.msra.mxu0 %v1494
      %1578 = vmatpush.bf16.msra.mxu0 %v1493
      %1579 = vmatmul.bf16.gmra.mxu0 %v1389
      %v1580 = vpop.f32.mrf.mxu0
      %v1581 = vadd.f32 %v1547, %v1580
      %v1582 = vpop.f32.mrf.mxu0
      %v1583 = vadd.f32 %v1549, %v1582
      %1584 = vmatmul.bf16.gmra.mxu0 %v1392
      %v1585 = vpop.f32.mrf.mxu0
      %v1586 = vadd.f32 %v1552, %v1585
      %v1587 = vpop.f32.mrf.mxu0
      %v1588 = vadd.f32 %v1554, %v1587
      %1589 = vmatmul.bf16.gmra.mxu0 %v1395
      %v1590 = vpop.f32.mrf.mxu0
      %v1591 = vadd.f32 %v1557, %v1590
      %v1592 = vpop.f32.mrf.mxu0
      %v1593 = vadd.f32 %v1559, %v1592
      %1594 = vmatmul.bf16.gmra.mxu0 %v1398
      %v1595 = vpop.f32.mrf.mxu0
      %v1596 = vadd.f32 %v1562, %v1595
      %v1597 = vpop.f32.mrf.mxu0
      %v1598 = vadd.f32 %v1564, %v1597
      %1599 = vmatmul.bf16.gmra.mxu0 %v1401
      %v1600 = vpop.f32.mrf.mxu0
      %v1601 = vadd.f32 %v1567, %v1600
      %v1602 = vpop.f32.mrf.mxu0
      %v1603 = vadd.f32 %v1569, %v1602
      %1604 = vdwg.mxu0
      %1605 = vmatpush.bf16.msra.mxu0 0
      %1606 = vmatpush.bf16.msra.mxu0 0
      %1607 = vmatpush.bf16.msra.mxu0 0
      %1608 = vmatpush.bf16.msra.mxu0 0
      %1609 = vmatpush.bf16.msra.mxu0 0
      %1610 = vmatpush.bf16.msra.mxu0 0
      %1611 = vmatpush.bf16.msra.mxu0 %v1502
      %1612 = vmatpush.bf16.msra.mxu0 %v1501
      %1613 = vmatmul.bf16.gmra.mxu0 %v1523
      %v1614 = vpop.f32.mrf.mxu0
      %v1615 = vadd.f32 %v1581, %v1614
      %v1616 = vpop.f32.mrf.mxu0
      %v1617 = vadd.f32 %v1583, %v1616
      %1618 = vmatmul.bf16.gmra.mxu0 %v1526
      %v1619 = vpop.f32.mrf.mxu0
      %v1620 = vadd.f32 %v1586, %v1619
      %v1621 = vpop.f32.mrf.mxu0
      %v1622 = vadd.f32 %v1588, %v1621
      %1623 = vmatmul.bf16.gmra.mxu0 %v1529
      %v1624 = vpop.f32.mrf.mxu0
      %v1625 = vadd.f32 %v1591, %v1624
      %v1626 = vpop.f32.mrf.mxu0
      %v1627 = vadd.f32 %v1593, %v1626
      %1628 = vmatmul.bf16.gmra.mxu0 %v1532
      %v1629 = vpop.f32.mrf.mxu0
      %v1630 = vadd.f32 %v1596, %v1629
      %v1631 = vpop.f32.mrf.mxu0
      %v1632 = vadd.f32 %v1598, %v1631
      %1633 = vmatmul.bf16.gmra.mxu0 %v1535
      %v1634 = vpop.f32.mrf.mxu0
      %v1635 = vadd.f32 %v1601, %v1634
      %v1636 = vpop.f32.mrf.mxu0
      %v1637 = vadd.f32 %v1603, %v1636
      %1638 = vdwg.mxu0
      %v1639 = vmax.f32 %v1615, 0.0
      %v1640 = vmax.f32 %v1617, 0.0
      %v1641 = vmax.f32 %v1620, 0.0
      %v1642 = vmax.f32 %v1622, 0.0
      %v1643 = vmax.f32 %v1625, 0.0
      %v1644 = vmax.f32 %v1627, 0.0
      %v1645 = vmax.f32 %v1630, 0.0
      %v1646 = vmax.f32 %v1632, 0.0
      %v1647 = vmax.f32 %v1635, 0.0
      %v1648 = vmax.f32 %v1637, 0.0
      %v1649 = vlaneseq
      %v1650 = vshrl.u32 %v1649, 7
      %v1651 = vadd.s32 %v1650, 8
      %v1652 = vadd.s32 %v1650, 16
      %v1653 = vadd.s32 %v1650, 24
      %v1654 = vadd.s32 %v1650, 32
      %v1655 = vadd.s32 %v1650, 40
      %v1656 = vadd.s32 %v1650, 48
      %v1657 = vadd.s32 %v1650, 56
      %v1658 = vadd.s32 %v1650, 64
      %v1659 = vadd.s32 %v1650, 72
      %vm1660 = vcmp.lt.s32.totalorder %v1650, 0
      %v1661 = vsub.s32 0, %v1650
      %v1662 = vsel %vm1660, %v1661, %v1650
      %v1663 = vand.u32 %v1662, 65535
      %v1664 = vshrl.u32 %v1662, 16
      %v1666 = vmul.u32 %v1663, 52429
      %v1667 = vmul.u32 %v1663, 52428
      %v1668 = vmul.u32 %v1664, 52429
      %v1669 = vmul.u32 %v1664, 52428
      %v1670 = vshll.u32 %v1667, 16
      %v1671 = vshrl.u32 %v1667, 16
      %v1672 = vshll.u32 %v1668, 16
      %v1673 = vshrl.u32 %v1668, 16
      %vm1674 = vc.u32 %v1666, %v1670
      %v1675 = vsel %vm1674, 1, 0
      %v1676 = vadd.s32 %v1666, %v1670
      %v1677 = vadd.s32 %v1669, %v1675
      %vm1678 = vc.u32 %v1676, %v1672
      %v1679 = vsel %vm1678, 1, 0
      %v1680 = vadd.s32 %v1676, %v1672
      %v1681 = vadd.s32 %v1677, %v1679
      %v1682 = vadd.s32 %v1681, %v1671
      %v1683 = vadd.s32 %v1682, %v1673
      %v1684 = vshrl.u32 %v1683, 3
      %v1685 = vmul.u32 %v1684, 10
      %v1686 = vsub.s32 %v1662, %v1685
      %v1687 = vsub.s32 0, %v1686
      %v1688 = vsel %vm1660, %v1687, %v1686
      %vm1689 = vcmp.lt.s32.totalorder %v1651, 0
      %v1690 = vsub.s32 0, %v1651
      %v1691 = vsel %vm1689, %v1690, %v1651
      %v1692 = vand.u32 %v1691, 65535
      %v1693 = vshrl.u32 %v1691, 16
      %v1695 = vmul.u32 %v1692, 52429
      %v1696 = vmul.u32 %v1692, 52428
      %v1697 = vmul.u32 %v1693, 52429
      %v1698 = vmul.u32 %v1693, 52428
      %v1699 = vshll.u32 %v1696, 16
      %v1700 = vshrl.u32 %v1696, 16
      %v1701 = vshll.u32 %v1697, 16
      %v1702 = vshrl.u32 %v1697, 16
      %vm1703 = vc.u32 %v1695, %v1699
      %v1704 = vsel %vm1703, 1, 0
      %v1705 = vadd.s32 %v1695, %v1699
      %v1706 = vadd.s32 %v1698, %v1704
      %vm1707 = vc.u32 %v1705, %v1701
      %v1708 = vsel %vm1707, 1, 0
      %v1709 = vadd.s32 %v1705, %v1701
      %v1710 = vadd.s32 %v1706, %v1708
      %v1711 = vadd.s32 %v1710, %v1700
      %v1712 = vadd.s32 %v1711, %v1702
      %v1713 = vshrl.u32 %v1712, 3
      %v1714 = vmul.u32 %v1713, 10
      %v1715 = vsub.s32 %v1691, %v1714
      %v1716 = vsub.s32 0, %v1715
      %v1717 = vsel %vm1689, %v1716, %v1715
      %vm1718 = vcmp.lt.s32.totalorder %v1652, 0
      %v1719 = vsub.s32 0, %v1652
      %v1720 = vsel %vm1718, %v1719, %v1652
      %v1721 = vand.u32 %v1720, 65535
      %v1722 = vshrl.u32 %v1720, 16
      %v1724 = vmul.u32 %v1721, 52429
      %v1725 = vmul.u32 %v1721, 52428
      %v1726 = vmul.u32 %v1722, 52429
      %v1727 = vmul.u32 %v1722, 52428
      %v1728 = vshll.u32 %v1725, 16
      %v1729 = vshrl.u32 %v1725, 16
      %v1730 = vshll.u32 %v1726, 16
      %v1731 = vshrl.u32 %v1726, 16
      %vm1732 = vc.u32 %v1724, %v1728
      %v1733 = vsel %vm1732, 1, 0
      %v1734 = vadd.s32 %v1724, %v1728
      %v1735 = vadd.s32 %v1727, %v1733
      %vm1736 = vc.u32 %v1734, %v1730
      %v1737 = vsel %vm1736, 1, 0
      %v1738 = vadd.s32 %v1734, %v1730
      %v1739 = vadd.s32 %v1735, %v1737
      %v1740 = vadd.s32 %v1739, %v1729
      %v1741 = vadd.s32 %v1740, %v1731
      %v1742 = vshrl.u32 %v1741, 3
      %v1743 = vmul.u32 %v1742, 10
      %v1744 = vsub.s32 %v1720, %v1743
      %v1745 = vsub.s32 0, %v1744
      %v1746 = vsel %vm1718, %v1745, %v1744
      %vm1747 = vcmp.lt.s32.totalorder %v1653, 0
      %v1748 = vsub.s32 0, %v1653
      %v1749 = vsel %vm1747, %v1748, %v1653
      %v1750 = vand.u32 %v1749, 65535
      %v1751 = vshrl.u32 %v1749, 16
      %v1753 = vmul.u32 %v1750, 52429
      %v1754 = vmul.u32 %v1750, 52428
      %v1755 = vmul.u32 %v1751, 52429
      %v1756 = vmul.u32 %v1751, 52428
      %v1757 = vshll.u32 %v1754, 16
      %v1758 = vshrl.u32 %v1754, 16
      %v1759 = vshll.u32 %v1755, 16
      %v1760 = vshrl.u32 %v1755, 16
      %vm1761 = vc.u32 %v1753, %v1757
      %v1762 = vsel %vm1761, 1, 0
      %v1763 = vadd.s32 %v1753, %v1757
      %v1764 = vadd.s32 %v1756, %v1762
      %vm1765 = vc.u32 %v1763, %v1759
      %v1766 = vsel %vm1765, 1, 0
      %v1767 = vadd.s32 %v1763, %v1759
      %v1768 = vadd.s32 %v1764, %v1766
      %v1769 = vadd.s32 %v1768, %v1758
      %v1770 = vadd.s32 %v1769, %v1760
      %v1771 = vshrl.u32 %v1770, 3
      %v1772 = vmul.u32 %v1771, 10
      %v1773 = vsub.s32 %v1749, %v1772
      %v1774 = vsub.s32 0, %v1773
      %v1775 = vsel %vm1747, %v1774, %v1773
      %vm1776 = vcmp.lt.s32.totalorder %v1654, 0
      %v1777 = vsub.s32 0, %v1654
      %v1778 = vsel %vm1776, %v1777, %v1654
      %v1779 = vand.u32 %v1778, 65535
      %v1780 = vshrl.u32 %v1778, 16
      %v1782 = vmul.u32 %v1779, 52429
      %v1783 = vmul.u32 %v1779, 52428
      %v1784 = vmul.u32 %v1780, 52429
      %v1785 = vmul.u32 %v1780, 52428
      %v1786 = vshll.u32 %v1783, 16
      %v1787 = vshrl.u32 %v1783, 16
      %v1788 = vshll.u32 %v1784, 16
      %v1789 = vshrl.u32 %v1784, 16
      %vm1790 = vc.u32 %v1782, %v1786
      %v1791 = vsel %vm1790, 1, 0
      %v1792 = vadd.s32 %v1782, %v1786
      %v1793 = vadd.s32 %v1785, %v1791
      %vm1794 = vc.u32 %v1792, %v1788
      %v1795 = vsel %vm1794, 1, 0
      %v1796 = vadd.s32 %v1792, %v1788
      %v1797 = vadd.s32 %v1793, %v1795
      %v1798 = vadd.s32 %v1797, %v1787
      %v1799 = vadd.s32 %v1798, %v1789
      %v1800 = vshrl.u32 %v1799, 3
      %v1801 = vmul.u32 %v1800, 10
      %v1802 = vsub.s32 %v1778, %v1801
      %v1803 = vsub.s32 0, %v1802
      %v1804 = vsel %vm1776, %v1803, %v1802
      %vm1805 = vcmp.lt.s32.totalorder %v1655, 0
      %v1806 = vsub.s32 0, %v1655
      %v1807 = vsel %vm1805, %v1806, %v1655
      %v1808 = vand.u32 %v1807, 65535
      %v1809 = vshrl.u32 %v1807, 16
      %v1811 = vmul.u32 %v1808, 52429
      %v1812 = vmul.u32 %v1808, 52428
      %v1813 = vmul.u32 %v1809, 52429
      %v1814 = vmul.u32 %v1809, 52428
      %v1815 = vshll.u32 %v1812, 16
      %v1816 = vshrl.u32 %v1812, 16
      %v1817 = vshll.u32 %v1813, 16
      %v1818 = vshrl.u32 %v1813, 16
      %vm1819 = vc.u32 %v1811, %v1815
      %v1820 = vsel %vm1819, 1, 0
      %v1821 = vadd.s32 %v1811, %v1815
      %v1822 = vadd.s32 %v1814, %v1820
      %vm1823 = vc.u32 %v1821, %v1817
      %v1824 = vsel %vm1823, 1, 0
      %v1825 = vadd.s32 %v1821, %v1817
      %v1826 = vadd.s32 %v1822, %v1824
      %v1827 = vadd.s32 %v1826, %v1816
      %v1828 = vadd.s32 %v1827, %v1818
      %v1829 = vshrl.u32 %v1828, 3
      %v1830 = vmul.u32 %v1829, 10
      %v1831 = vsub.s32 %v1807, %v1830
      %v1832 = vsub.s32 0, %v1831
      %v1833 = vsel %vm1805, %v1832, %v1831
      %vm1834 = vcmp.lt.s32.totalorder %v1656, 0
      %v1835 = vsub.s32 0, %v1656
      %v1836 = vsel %vm1834, %v1835, %v1656
      %v1837 = vand.u32 %v1836, 65535
      %v1838 = vshrl.u32 %v1836, 16
      %v1840 = vmul.u32 %v1837, 52429
      %v1841 = vmul.u32 %v1837, 52428
      %v1842 = vmul.u32 %v1838, 52429
      %v1843 = vmul.u32 %v1838, 52428
      %v1844 = vshll.u32 %v1841, 16
      %v1845 = vshrl.u32 %v1841, 16
      %v1846 = vshll.u32 %v1842, 16
      %v1847 = vshrl.u32 %v1842, 16
      %vm1848 = vc.u32 %v1840, %v1844
      %v1849 = vsel %vm1848, 1, 0
      %v1850 = vadd.s32 %v1840, %v1844
      %v1851 = vadd.s32 %v1843, %v1849
      %vm1852 = vc.u32 %v1850, %v1846
      %v1853 = vsel %vm1852, 1, 0
      %v1854 = vadd.s32 %v1850, %v1846
      %v1855 = vadd.s32 %v1851, %v1853
      %v1856 = vadd.s32 %v1855, %v1845
      %v1857 = vadd.s32 %v1856, %v1847
      %v1858 = vshrl.u32 %v1857, 3
      %v1859 = vmul.u32 %v1858, 10
      %v1860 = vsub.s32 %v1836, %v1859
      %v1861 = vsub.s32 0, %v1860
      %v1862 = vsel %vm1834, %v1861, %v1860
      %vm1863 = vcmp.lt.s32.totalorder %v1657, 0
      %v1864 = vsub.s32 0, %v1657
      %v1865 = vsel %vm1863, %v1864, %v1657
      %v1866 = vand.u32 %v1865, 65535
      %v1867 = vshrl.u32 %v1865, 16
      %v1869 = vmul.u32 %v1866, 52429
      %v1870 = vmul.u32 %v1866, 52428
      %v1871 = vmul.u32 %v1867, 52429
      %v1872 = vmul.u32 %v1867, 52428
      %v1873 = vshll.u32 %v1870, 16
      %v1874 = vshrl.u32 %v1870, 16
      %v1875 = vshll.u32 %v1871, 16
      %v1876 = vshrl.u32 %v1871, 16
      %vm1877 = vc.u32 %v1869, %v1873
      %v1878 = vsel %vm1877, 1, 0
      %v1879 = vadd.s32 %v1869, %v1873
      %v1880 = vadd.s32 %v1872, %v1878
      %vm1881 = vc.u32 %v1879, %v1875
      %v1882 = vsel %vm1881, 1, 0
      %v1883 = vadd.s32 %v1879, %v1875
      %v1884 = vadd.s32 %v1880, %v1882
      %v1885 = vadd.s32 %v1884, %v1874
      %v1886 = vadd.s32 %v1885, %v1876
      %v1887 = vshrl.u32 %v1886, 3
      %v1888 = vmul.u32 %v1887, 10
      %v1889 = vsub.s32 %v1865, %v1888
      %v1890 = vsub.s32 0, %v1889
      %v1891 = vsel %vm1863, %v1890, %v1889
      %vm1892 = vcmp.lt.s32.totalorder %v1658, 0
      %v1893 = vsub.s32 0, %v1658
      %v1894 = vsel %vm1892, %v1893, %v1658
      %v1895 = vand.u32 %v1894, 65535
      %v1896 = vshrl.u32 %v1894, 16
      %v1898 = vmul.u32 %v1895, 52429
      %v1899 = vmul.u32 %v1895, 52428
      %v1900 = vmul.u32 %v1896, 52429
      %v1901 = vmul.u32 %v1896, 52428
      %v1902 = vshll.u32 %v1899, 16
      %v1903 = vshrl.u32 %v1899, 16
      %v1904 = vshll.u32 %v1900, 16
      %v1905 = vshrl.u32 %v1900, 16
      %vm1906 = vc.u32 %v1898, %v1902
      %v1907 = vsel %vm1906, 1, 0
      %v1908 = vadd.s32 %v1898, %v1902
      %v1909 = vadd.s32 %v1901, %v1907
      %vm1910 = vc.u32 %v1908, %v1904
      %v1911 = vsel %vm1910, 1, 0
      %v1912 = vadd.s32 %v1908, %v1904
      %v1913 = vadd.s32 %v1909, %v1911
      %v1914 = vadd.s32 %v1913, %v1903
      %v1915 = vadd.s32 %v1914, %v1905
      %v1916 = vshrl.u32 %v1915, 3
      %v1917 = vmul.u32 %v1916, 10
      %v1918 = vsub.s32 %v1894, %v1917
      %v1919 = vsub.s32 0, %v1918
      %v1920 = vsel %vm1892, %v1919, %v1918
      %vm1921 = vcmp.lt.s32.totalorder %v1659, 0
      %v1922 = vsub.s32 0, %v1659
      %v1923 = vsel %vm1921, %v1922, %v1659
      %v1924 = vand.u32 %v1923, 65535
      %v1925 = vshrl.u32 %v1923, 16
      %v1927 = vmul.u32 %v1924, 52429
      %v1928 = vmul.u32 %v1924, 52428
      %v1929 = vmul.u32 %v1925, 52429
      %v1930 = vmul.u32 %v1925, 52428
      %v1931 = vshll.u32 %v1928, 16
      %v1932 = vshrl.u32 %v1928, 16
      %v1933 = vshll.u32 %v1929, 16
      %v1934 = vshrl.u32 %v1929, 16
      %vm1935 = vc.u32 %v1927, %v1931
      %v1936 = vsel %vm1935, 1, 0
      %v1937 = vadd.s32 %v1927, %v1931
      %v1938 = vadd.s32 %v1930, %v1936
      %vm1939 = vc.u32 %v1937, %v1933
      %v1940 = vsel %vm1939, 1, 0
      %v1941 = vadd.s32 %v1937, %v1933
      %v1942 = vadd.s32 %v1938, %v1940
      %v1943 = vadd.s32 %v1942, %v1932
      %v1944 = vadd.s32 %v1943, %v1934
      %v1945 = vshrl.u32 %v1944, 3
      %v1946 = vmul.u32 %v1945, 10
      %v1947 = vsub.s32 %v1923, %v1946
      %v1948 = vsub.s32 0, %v1947
      %v1949 = vsel %vm1921, %v1948, %v1947
      %vm1950 = vcmp.ne.s32.totalorder %v1688, 0
      %vm1951 = vcmp.ne.s32.totalorder %v1717, 0
      %vm1952 = vcmp.ne.s32.totalorder %v1746, 0
      %vm1953 = vcmp.ne.s32.totalorder %v1775, 0
      %vm1954 = vcmp.ne.s32.totalorder %v1804, 0
      %vm1955 = vcmp.ne.s32.totalorder %v1833, 0
      %vm1956 = vcmp.ne.s32.totalorder %v1862, 0
      %vm1957 = vcmp.ne.s32.totalorder %v1891, 0
      %vm1958 = vcmp.ne.s32.totalorder %v1920, 0
      %vm1959 = vcmp.ne.s32.totalorder %v1949, 0
      %vm1960 = vcmp.lt.s32.totalorder %v1688, 0
      %vm1961 = vcmp.lt.s32.totalorder %v1717, 0
      %vm1962 = vcmp.lt.s32.totalorder %v1746, 0
      %vm1963 = vcmp.lt.s32.totalorder %v1775, 0
      %vm1964 = vcmp.lt.s32.totalorder %v1804, 0
      %vm1965 = vcmp.lt.s32.totalorder %v1833, 0
      %vm1966 = vcmp.lt.s32.totalorder %v1862, 0
      %vm1967 = vcmp.lt.s32.totalorder %v1891, 0
      %vm1968 = vcmp.lt.s32.totalorder %v1920, 0
      %vm1969 = vcmp.lt.s32.totalorder %v1949, 0
      %vm1970 = vmand %vm1960, %vm1950
      %vm1971 = vmand %vm1961, %vm1951
      %vm1972 = vmand %vm1962, %vm1952
      %vm1973 = vmand %vm1963, %vm1953
      %vm1974 = vmand %vm1964, %vm1954
      %vm1975 = vmand %vm1965, %vm1955
      %vm1976 = vmand %vm1966, %vm1956
      %vm1977 = vmand %vm1967, %vm1957
      %vm1978 = vmand %vm1968, %vm1958
      %vm1979 = vmand %vm1969, %vm1959
      %v1980 = vadd.s32 %v1688, 10
      %v1981 = vadd.s32 %v1717, 10
      %v1982 = vadd.s32 %v1746, 10
      %v1983 = vadd.s32 %v1775, 10
      %v1984 = vadd.s32 %v1804, 10
      %v1985 = vadd.s32 %v1833, 10
      %v1986 = vadd.s32 %v1862, 10
      %v1987 = vadd.s32 %v1891, 10
      %v1988 = vadd.s32 %v1920, 10
      %v1989 = vadd.s32 %v1949, 10
      %v1990 = vsel %vm1970, %v1980, %v1688
      %v1991 = vsel %vm1971, %v1981, %v1717
      %v1992 = vsel %vm1972, %v1982, %v1746
      %v1993 = vsel %vm1973, %v1983, %v1775
      %v1994 = vsel %vm1974, %v1984, %v1804
      %v1995 = vsel %vm1975, %v1985, %v1833
      %v1996 = vsel %vm1976, %v1986, %v1862
      %v1997 = vsel %vm1977, %v1987, %v1891
      %v1998 = vsel %vm1978, %v1988, %v1920
      %v1999 = vsel %vm1979, %v1989, %v1949
      %vm2000 = vcmp.lt.s32.totalorder %v1990, 8
      %vm2001 = vcmp.lt.s32.totalorder %v1991, 8
      %vm2002 = vcmp.lt.s32.totalorder %v1992, 8
      %vm2003 = vcmp.lt.s32.totalorder %v1993, 8
      %vm2004 = vcmp.lt.s32.totalorder %v1994, 8
      %vm2005 = vcmp.lt.s32.totalorder %v1995, 8
      %vm2006 = vcmp.lt.s32.totalorder %v1996, 8
      %vm2007 = vcmp.lt.s32.totalorder %v1997, 8
      %vm2008 = vcmp.lt.s32.totalorder %v1998, 8
      %vm2009 = vcmp.lt.s32.totalorder %v1999, 8
      %v2010 = vsel %vm2000, %v1639, 0.0
      %v2011 = vsel %vm2001, %v1640, 0.0
      %v2012 = vsel %vm2002, %v1641, 0.0
      %v2013 = vsel %vm2003, %v1642, 0.0
      %v2014 = vsel %vm2004, %v1643, 0.0
      %v2015 = vsel %vm2005, %v1644, 0.0
      %v2016 = vsel %vm2006, %v1645, 0.0
      %v2017 = vsel %vm2007, %v1646, 0.0
      %v2018 = vsel %vm2008, %v1647, 0.0
      %v2019 = vsel %vm2009, %v1648, 0.0
      %v2020 = vpack.c.bf16 %v2010, %v2010
      %v2021 = vpack.c.bf16 %v2011, %v2011
      %v2022 = vpack.c.bf16 %v2012, %v2012
      %v2023 = vpack.c.bf16 %v2013, %v2013
      %v2024 = vpack.c.bf16 %v2014, %v2014
      %v2025 = vpack.c.bf16 %v2015, %v2015
      %v2026 = vpack.c.bf16 %v2016, %v2016
      %v2027 = vpack.c.bf16 %v2017, %v2017
      %v2028 = vpack.c.bf16 %v2018, %v2018
      %v2029 = vpack.c.bf16 %v2019, %v2019
      %2030 = vst.msk [vmem:[%s170] sm:$0xf] %vm341, %v2020
      %2031 = vst.msk [vmem:[%s170 + $0x4] sm:$0xf] %vm341, %v2021
      %2032 = vst.msk [vmem:[%s170 + $0x8] sm:$0xf] %vm341, %v2022
      %2033 = vst.msk [vmem:[%s170 + $0xc] sm:$0xf] %vm341, %v2023
      %2034 = vst.msk [vmem:[%s170 + $0x10] sm:$0xf] %vm341, %v2024
      %2035 = vst.msk [vmem:[%s170 + $0x14] sm:$0xf] %vm341, %v2025
      %2036 = vst.msk [vmem:[%s170 + $0x18] sm:$0xf] %vm341, %v2026
      %2037 = vst.msk [vmem:[%s170 + $0x1c] sm:$0xf] %vm341, %v2027
      %2038 = vst.msk [vmem:[%s170 + $0x20] sm:$0xf] %vm341, %v2028
      %2039 = vst.msk [vmem:[%s170 + $0x24] sm:$0xf] %vm341, %v2029
      %p2040 = scmp.lt.s32.totalorder %s14, 1
      %s2041 = scalar_select %p2040, %s14, 1
      %s2042 = smul.addr %s2041, 10
      %s2043 = smul.addr %s2042, 4
      %s2044 = scalar_lea.vmem %s3, %s2043
      // Predicated region
      $region33: #{block35_forward.6} parent=31 // pred_check
        %p2045 = pneg %p100
      $region34: #{block35_forward.6} parent=31 // pred_check_branch
        %2047 = sbr.rel (%p2045) target = $region36
      $region35: #{block35_forward.6} parent=31 // pred_region
        _
      $region36: #{block35_forward.6} parent=31 // pred_fallthru
        _
    $region32: #{block35_forward.6} parent=5 // pred_fallthru
      _
    %p2048 = scmp.le.s32.totalorder 2, %s9
    // Predicated region
    $region37: #{block35_forward.6} parent=5 // pred_check
      %p2049 = pneg %p2048
    $region38: #{block35_forward.6} parent=5 // pred_check_branch
      %2051 = sbr.rel (%p2049) target = $region40
    $region39: #{block35_forward.6} parent=5 // pred_region
      %s2052 = ssub.s32 %s9, 2
      // Predicated region
      $region41: #{block35_forward.6} parent=39 // pred_check
        %p2053 = pneg %p106
      $region42: #{block35_forward.6} parent=39 // pred_check_branch
        %2055 = sbr.rel (%p2053) target = $region44
      $region43: #{block35_forward.6} parent=39 // pred_region
        %p2056 = scmp.lt.s32.totalorder %s15, 1
        %s2057 = scalar_select %p2056, %s15, 1
        %s2058 = smul.addr %s2057, 10
        %s2059 = smul.addr %s2058, 4
        %s2060 = scalar_lea.vmem %s3, %s2059
      $region44: #{block35_forward.6} parent=39 // pred_fallthru
        _
    $region40: #{block35_forward.6} parent=5 // pred_fallthru
      _
  $region6: #{block35_forward.6} parent=0 // loop_footer
    %s13 = sadd.s32 1, %s9
  $region7: #{block35_forward.6} parent=0 // loop_footer_branch
    %8 = sbr.rel target = $region3
  $region8: #{block35_forward.6} parent=0 // loop_exit
    _

// kernel: block35_forward.9
$region0: #{block35_forward.9}
  #allocation0 [shape = 'u32[]', space=smem, size = 0x4, offset = 0x4, fixed_abs, tag = 'smem constant byte address 0x4 - core index']
  #allocation1 [shape = 'u32[72,128]{1,0:T(1,128)}', space=vmem, size = 0x9000, scoped, tag = 'internal scratch']
  %s0 = inlined_call_operand.vmem [shape: bf16[128,128], index: 0, kind: input, shape index: {}]
  %s1 = inlined_call_operand.vmem [shape: bf16[128,32], index: 1, kind: input, shape index: {}]
  %s2 = inlined_call_operand.vmem [shape: bf16[128,64], index: 2, kind: input, shape index: {}]
  %s3 = inlined_call_operand.vmem [shape: bf16[128,320], index: 3, kind: input, shape index: {}]
  %s4 = inlined_call_operand.vmem [shape: bf16[128,320], index: 4, kind: input, shape index: {}]
  %s5 = inlined_call_operand.vmem [shape: bf16[32,320], index: 5, kind: input, shape index: {}]
  %s6 = inlined_call_operand.vmem [shape: bf16[64,320], index: 6, kind: input, shape index: {}]
  %s7 = inlined_call_operand.vmem [shape: f32[1,320], index: 7, kind: input, shape index: {}]
  %s8 = inlined_call_operand.hbm [shape: f32[128,320], index: 8, kind: output, shape index: {}]
  %s9 = sld [smem:[#allocation0]]
  $region65: #{block35_forward.9} parent=0
    _
  %s11 = ssub.s32 1, %s9
  %s12 = scalar_select 0, %s11, %s9
  $region1: #{block35_forward.9} parent=0
    #allocation2 [shape = 'u8[98304]{0}', space=vmem, size = 0x18000, scoped, tag = 'output window, operand 0']
    #allocation3 [shape = 's32[2]{0}', space=sflag, size = 0x8, scoped, tag = 'scoped memory for block35_forward.9']
    %13 = vsyncpa [#allocation3], 0
    %s14 = scalar_lea.sflag [#allocation3], 1
    %15 = vsyncpa %s14, 0
    loop: start=0, step=1, limit=6
    $region2: #{block35_forward.9} parent=1 // loop_pre_header
      _
    $region3: #{block35_forward.9} parent=1 // loop_header
      %s17 = sphi 0, %s21
      %p18 = scmp.ge.s32.totalorder %s17, 6
      %s27 = sphi 0, %s29
      %s30 = sphi 0, %s27
      %s31 = sphi 0, %s30
      %s47 = sphi 0, %s31
      %s53 = sphi 0, %s55
      %s56 = sphi 0, %s53
      %s57 = sphi 0, %s56
      %s73 = sphi 0, %s57
      %s79 = sphi 0, %s81
      %s82 = sphi 0, %s79
      %s83 = sphi 0, %s82
      %s99 = sphi 0, %s83
      %s105 = sphi 0, %s107
      %s108 = sphi 0, %s105
      %s109 = sphi 0, %s108
      %s125 = sphi 0, %s109
      %s129 = sphi 0, %s129
      %s131 = sphi 0, %s129
      %s132 = sphi 0, %s131
      %s146 = sphi 0, %s132
      %s150 = sphi 0, %s150
      %s152 = sphi 0, %s150
      %s153 = sphi 0, %s152
      %s167 = sphi 0, %s153
      %s171 = sphi 0, %s171
      %s173 = sphi 0, %s171
      %s174 = sphi 0, %s173
      %s188 = sphi 0, %s174
      %s192 = sphi 0, %s192
      %s194 = sphi 0, %s192
      %s195 = sphi 0, %s194
      %s209 = sphi 0, %s195
      %s215 = sphi 0, %s217
      %s218 = sphi 0, %s215
      %s219 = sphi 0, %s218
      %s235 = sphi 0, %s219
    $region4: #{block35_forward.9} parent=1 // loop_header_branch
      %20 = sbr.rel (%p18) target = $region8
    $region5: #{block35_forward.9} parent=1 // loop_body
      %s22 = ssub.s32 %s17, 1
      %s23 = ssub.s32 %s17, 2
      %s24 = sadd.s32 %s17, 1
      %s25 = ssub.s32 %s17, %s24
      %p26 = scmp.eq.s32.totalorder %s25, 0
      %s28 = sadd.s32 %s27, 1
      %s29 = scalar_select %p26, %s27, %s28
      %p32 = pneg %p26
      %p33 = scmp.eq.s32.totalorder %s17, 3
      %p34 = por %p32, %p33
      %p35 = scmp.ne.s32.totalorder %s27, %s30
      %p36 = scmp.eq.s32.totalorder %s17, 0
      %p37 = por %p35, %p36
      %p38 = scmp.ne.s32.totalorder %s27, %s30
      %p39 = scmp.eq.s32.totalorder %s22, 3
      %p40 = por %p38, %p39
      %p41 = scmp.ne.s32.totalorder %s30, %s31
      %p42 = scmp.eq.s32.totalorder %s22, 0
      %p43 = por %p41, %p42
      %p44 = scmp.ne.s32.totalorder %s30, %s31
      %p45 = scmp.eq.s32.totalorder %s23, 3
      %p46 = por %p44, %p45
      %p48 = scmp.ne.s32.totalorder %s31, %s47
      %p49 = scmp.eq.s32.totalorder %s23, 0
      %p50 = por %p48, %p49
      %s51 = ssub.s32 %s17, %s24
      %p52 = scmp.eq.s32.totalorder %s51, 0
      %s54 = sadd.s32 %s53, 1
      %s55 = scalar_select %p52, %s53, %s54
      %p58 = pneg %p52
      %p59 = scmp.eq.s32.totalorder %s17, 3
      %p60 = por %p58, %p59
      %p61 = scmp.ne.s32.totalorder %s53, %s56
      %p62 = scmp.eq.s32.totalorder %s17, 0
      %p63 = por %p61, %p62
      %p64 = scmp.ne.s32.totalorder %s53, %s56
      %p65 = scmp.eq.s32.totalorder %s22, 3
      %p66 = por %p64, %p65
      %p67 = scmp.ne.s32.totalorder %s56, %s57
      %p68 = scmp.eq.s32.totalorder %s22, 0
      %p69 = por %p67, %p68
      %p70 = scmp.ne.s32.totalorder %s56, %s57
      %p71 = scmp.eq.s32.totalorder %s23, 3
      %p72 = por %p70, %p71
      %p74 = scmp.ne.s32.totalorder %s57, %s73
      %p75 = scmp.eq.s32.totalorder %s23, 0
      %p76 = por %p74, %p75
      %s77 = ssub.s32 %s17, %s24
      %p78 = scmp.eq.s32.totalorder %s77, 0
      %s80 = sadd.s32 %s79, 1
      %s81 = scalar_select %p78, %s79, %s80
      %p84 = pneg %p78
      %p85 = scmp.eq.s32.totalorder %s17, 3
      %p86 = por %p84, %p85
      %p87 = scmp.ne.s32.totalorder %s79, %s82
      %p88 = scmp.eq.s32.totalorder %s17, 0
      %p89 = por %p87, %p88
      %p90 = scmp.ne.s32.totalorder %s79, %s82
      %p91 = scmp.eq.s32.totalorder %s22, 3
      %p92 = por %p90, %p91
      %p93 = scmp.ne.s32.totalorder %s82, %s83
      %p94 = scmp.eq.s32.totalorder %s22, 0
      %p95 = por %p93, %p94
      %p96 = scmp.ne.s32.totalorder %s82, %s83
      %p97 = scmp.eq.s32.totalorder %s23, 3
      %p98 = por %p96, %p97
      %p100 = scmp.ne.s32.totalorder %s83, %s99
      %p101 = scmp.eq.s32.totalorder %s23, 0
      %p102 = por %p100, %p101
      %s103 = ssub.s32 %s17, %s24
      %p104 = scmp.eq.s32.totalorder %s103, 0
      %s106 = sadd.s32 %s105, 1
      %s107 = scalar_select %p104, %s105, %s106
      %p110 = pneg %p104
      %p111 = scmp.eq.s32.totalorder %s17, 3
      %p112 = por %p110, %p111
      %p113 = scmp.ne.s32.totalorder %s105, %s108
      %p114 = scmp.eq.s32.totalorder %s17, 0
      %p115 = por %p113, %p114
      %p116 = scmp.ne.s32.totalorder %s105, %s108
      %p117 = scmp.eq.s32.totalorder %s22, 3
      %p118 = por %p116, %p117
      %p119 = scmp.ne.s32.totalorder %s108, %s109
      %p120 = scmp.eq.s32.totalorder %s22, 0
      %p121 = por %p119, %p120
      %p122 = scmp.ne.s32.totalorder %s108, %s109
      %p123 = scmp.eq.s32.totalorder %s23, 3
      %p124 = por %p122, %p123
      %p126 = scmp.ne.s32.totalorder %s109, %s125
      %p127 = scmp.eq.s32.totalorder %s23, 0
      %p128 = por %p126, %p127
      %s130 = sadd.s32 %s129, 1
      %p133 = scmp.eq.s32.totalorder %s17, 3
      %p134 = scmp.ne.s32.totalorder %s129, %s131
      %p135 = scmp.eq.s32.totalorder %s17, 0
      %p136 = por %p134, %p135
      %p137 = scmp.ne.s32.totalorder %s129, %s131
      %p138 = scmp.eq.s32.totalorder %s22, 3
      %p139 = por %p137, %p138
      %p140 = scmp.ne.s32.totalorder %s131, %s132
      %p141 = scmp.eq.s32.totalorder %s22, 0
      %p142 = por %p140, %p141
      %p143 = scmp.ne.s32.totalorder %s131, %s132
      %p144 = scmp.eq.s32.totalorder %s23, 3
      %p145 = por %p143, %p144
      %p147 = scmp.ne.s32.totalorder %s132, %s146
      %p148 = scmp.eq.s32.totalorder %s23, 0
      %p149 = por %p147, %p148
      %s151 = sadd.s32 %s150, 1
      %p154 = scmp.eq.s32.totalorder %s17, 3
      %p155 = scmp.ne.s32.totalorder %s150, %s152
      %p156 = scmp.eq.s32.totalorder %s17, 0
      %p157 = por %p155, %p156
      %p158 = scmp.ne.s32.totalorder %s150, %s152
      %p159 = scmp.eq.s32.totalorder %s22, 3
      %p160 = por %p158, %p159
      %p161 = scmp.ne.s32.totalorder %s152, %s153
      %p162 = scmp.eq.s32.totalorder %s22, 0
      %p163 = por %p161, %p162
      %p164 = scmp.ne.s32.totalorder %s152, %s153
      %p165 = scmp.eq.s32.totalorder %s23, 3
      %p166 = por %p164, %p165
      %p168 = scmp.ne.s32.totalorder %s153, %s167
      %p169 = scmp.eq.s32.totalorder %s23, 0
      %p170 = por %p168, %p169
      %s172 = sadd.s32 %s171, 1
      %p175 = scmp.eq.s32.totalorder %s17, 3
      %p176 = scmp.ne.s32.totalorder %s171, %s173
      %p177 = scmp.eq.s32.totalorder %s17, 0
      %p178 = por %p176, %p177
      %p179 = scmp.ne.s32.totalorder %s171, %s173
      %p180 = scmp.eq.s32.totalorder %s22, 3
      %p181 = por %p179, %p180
      %p182 = scmp.ne.s32.totalorder %s173, %s174
      %p183 = scmp.eq.s32.totalorder %s22, 0
      %p184 = por %p182, %p183
      %p185 = scmp.ne.s32.totalorder %s173, %s174
      %p186 = scmp.eq.s32.totalorder %s23, 3
      %p187 = por %p185, %p186
      %p189 = scmp.ne.s32.totalorder %s174, %s188
      %p190 = scmp.eq.s32.totalorder %s23, 0
      %p191 = por %p189, %p190
      %s193 = sadd.s32 %s192, 1
      %p196 = scmp.eq.s32.totalorder %s17, 3
      %p197 = scmp.ne.s32.totalorder %s192, %s194
      %p198 = scmp.eq.s32.totalorder %s17, 0
      %p199 = por %p197, %p198
      %p200 = scmp.ne.s32.totalorder %s192, %s194
      %p201 = scmp.eq.s32.totalorder %s22, 3
      %p202 = por %p200, %p201
      %p203 = scmp.ne.s32.totalorder %s194, %s195
      %p204 = scmp.eq.s32.totalorder %s22, 0
      %p205 = por %p203, %p204
      %p206 = scmp.ne.s32.totalorder %s194, %s195
      %p207 = scmp.eq.s32.totalorder %s23, 3
      %p208 = por %p206, %p207
      %p210 = scmp.ne.s32.totalorder %s195, %s209
      %p211 = scmp.eq.s32.totalorder %s23, 0
      %p212 = por %p210, %p211
      %s213 = ssub.s32 %s17, %s24
      %p214 = scmp.eq.s32.totalorder %s213, 0
      %s216 = sadd.s32 %s215, 1
      %s217 = scalar_select %p214, %s215, %s216
      %p220 = pneg %p214
      %p221 = scmp.eq.s32.totalorder %s17, 3
      %p222 = por %p220, %p221
      %p223 = scmp.ne.s32.totalorder %s215, %s218
      %p224 = scmp.eq.s32.totalorder %s17, 0
      %p225 = por %p223, %p224
      %p226 = scmp.ne.s32.totalorder %s215, %s218
      %p227 = scmp.eq.s32.totalorder %s22, 3
      %p228 = por %p226, %p227
      %p229 = scmp.ne.s32.totalorder %s218, %s219
      %p230 = scmp.eq.s32.totalorder %s22, 0
      %p231 = por %p229, %p230
      %p232 = scmp.ne.s32.totalorder %s218, %s219
      %p233 = scmp.eq.s32.totalorder %s23, 3
      %p234 = por %p232, %p233
      %p236 = scmp.ne.s32.totalorder %s219, %s235
      %p237 = scmp.eq.s32.totalorder %s23, 0
      %p238 = por %p236, %p237
      %p239 = scmp.le.s32.totalorder 1, %s17
      %p240 = scmp.lt.s32.totalorder %s17, 5
      %p241 = pnand %p239, %p240
      %p242 = pneg %p241
      // Predicated region
      $region9: #{block35_forward.9} parent=5 // pred_check
        _
      $region10: #{block35_forward.9} parent=5 // pred_check_branch
        %244 = sbr.rel (%p241) target = $region12
      $region11: #{block35_forward.9} parent=5 // pred_region
        %s245 = ssub.s32 %s17, 1
        // Predicated region
        $region13: #{block35_forward.9} parent=11 // pred_check
          %p246 = pneg %p142
        $region14: #{block35_forward.9} parent=11 // pred_check_branch
          %248 = sbr.rel (%p246) target = $region16
        $region15: #{block35_forward.9} parent=11 // pred_region
          _
        $region16: #{block35_forward.9} parent=11 // pred_fallthru
          _
        // Predicated region
        $region17: #{block35_forward.9} parent=11 // pred_check
          %p249 = pneg %p163
        $region18: #{block35_forward.9} parent=11 // pred_check_branch
          %251 = sbr.rel (%p249) target = $region20
        $region19: #{block35_forward.9} parent=11 // pred_region
          _
        $region20: #{block35_forward.9} parent=11 // pred_fallthru
          _
        // Predicated region
        $region21: #{block35_forward.9} parent=11 // pred_check
          %p252 = pneg %p184
        $region22: #{block35_forward.9} parent=11 // pred_check_branch
          %254 = sbr.rel (%p252) target = $region24
        $region23: #{block35_forward.9} parent=11 // pred_region
          _
        $region24: #{block35_forward.9} parent=11 // pred_fallthru
          _
        // Predicated region
        $region25: #{block35_forward.9} parent=11 // pred_check
          %p255 = pneg %p205
        $region26: #{block35_forward.9} parent=11 // pred_check_branch
          %257 = sbr.rel (%p255) target = $region28
        $region27: #{block35_forward.9} parent=11 // pred_region
          _
        $region28: #{block35_forward.9} parent=11 // pred_fallthru
          _
      $region12: #{block35_forward.9} parent=5 // pred_fallthru
        _
      %p258 = scmp.lt.s32.totalorder %s17, 4
      // Predicated region
      $region29: #{block35_forward.9} parent=5 // pred_check
        %p259 = pneg %p258
      $region30: #{block35_forward.9} parent=5 // pred_check_branch
        %261 = sbr.rel (%p259) target = $region32
      $region31: #{block35_forward.9} parent=5 // pred_region
        // Predicated region
        $region33: #{block35_forward.9} parent=31 // pred_check
          %p262 = pneg %p37
        $region34: #{block35_forward.9} parent=31 // pred_check_branch
          %264 = sbr.rel (%p262) target = $region36
        $region35: #{block35_forward.9} parent=31 // pred_region
          %s265 = smul.u32 4, %s17
          %p266 = scmp.lt.s32.totalorder %s265, 15
          %s267 = scalar_select %p266, %s265, 15
          %s268 = smul.addr %s267, 4
          %s269 = scalar_lea.vmem %s0, %s268
          %s270 = smul.u32 4, %s17
        $region36: #{block35_forward.9} parent=31 // pred_fallthru
          _
        // Predicated region
        $region37: #{block35_forward.9} parent=31 // pred_check
          %p271 = pneg %p63
        $region38: #{block35_forward.9} parent=31 // pred_check_branch
          %273 = sbr.rel (%p271) target = $region40
        $region39: #{block35_forward.9} parent=31 // pred_region
          %s274 = smul.u32 4, %s17
          %p275 = scmp.lt.s32.totalorder %s274, 15
          %s276 = scalar_select %p275, %s274, 15
          %s277 = smul.addr %s276, 4
          %s278 = scalar_lea.vmem %s1, %s277
          %s279 = smul.u32 4, %s17
        $region40: #{block35_forward.9} parent=31 // pred_fallthru
          _
        // Predicated region
        $region41: #{block35_forward.9} parent=31 // pred_check
          %p280 = pneg %p89
        $region42: #{block35_forward.9} parent=31 // pred_check_branch
          %282 = sbr.rel (%p280) target = $region44
        $region43: #{block35_forward.9} parent=31 // pred_region
          %s283 = smul.u32 4, %s17
          %p284 = scmp.lt.s32.totalorder %s283, 15
          %s285 = scalar_select %p284, %s283, 15
          %s286 = smul.addr %s285, 4
          %s287 = scalar_lea.vmem %s2, %s286
          %s288 = smul.u32 4, %s17
        $region44: #{block35_forward.9} parent=31 // pred_fallthru
          _
        // Predicated region
        $region45: #{block35_forward.9} parent=31 // pred_check
          %p289 = pneg %p115
        $region46: #{block35_forward.9} parent=31 // pred_check_branch
          %291 = sbr.rel (%p289) target = $region48
        $region47: #{block35_forward.9} parent=31 // pred_region
          %s292 = smul.u32 4, %s17
          %p293 = scmp.lt.s32.totalorder %s292, 15
          %s294 = scalar_select %p293, %s292, 15
          %s295 = smul.addr %s294, 3
          %s296 = smul.addr %s295, 4
          %s297 = scalar_lea.vmem %s3, %s296
          %s298 = smul.u32 4, %s17
        $region48: #{block35_forward.9} parent=31 // pred_fallthru
          _
      $region32: #{block35_forward.9} parent=5 // pred_fallthru
        _
      %p299 = scmp.le.s32.totalorder 1, %s17
      %p300 = scmp.lt.s32.totalorder %s17, 5
      %p301 = pnand %p299, %p300
      %p302 = pneg %p301
      // Predicated region
      $region49: #{block35_forward.9} parent=5 // pred_check
        _
      $region50: #{block35_forward.9} parent=5 // pred_check_branch
        %304 = sbr.rel (%p301) target = $region52
      $region51: #{block35_forward.9} parent=5 // pred_region
        %s305 = ssub.s32 %s17, 1
        %s306 = smul.u32 4, %s22
        %p307 = scmp.lt.s32.totalorder %s306, 15
        %s308 = scalar_select %p307, %s306, 15
        %s309 = smul.addr %s308, 4
        %s310 = scalar_lea.vmem %s0, %s309
        %p311 = pneg %p43
        %p312 = pneg %p40
        %s313 = smul.u32 4, %s22
        %p314 = scmp.lt.s32.totalorder %s313, 15
        %s315 = scalar_select %p314, %s313, 15
        %s316 = smul.addr %s315, 4
        %s317 = scalar_lea.vmem %s1, %s316
        %p318 = pneg %p69
        %p319 = pneg %p66
        %s320 = smul.u32 4, %s22
        %p321 = scmp.lt.s32.totalorder %s320, 15
        %s322 = scalar_select %p321, %s320, 15
        %s323 = smul.addr %s322, 4
        %s324 = scalar_lea.vmem %s2, %s323
        %p325 = pneg %p95
        %p326 = pneg %p92
        %s327 = smul.u32 4, %s22
        %p328 = scmp.lt.s32.totalorder %s327, 15
        %s329 = scalar_select %p328, %s327, 15
        %s330 = smul.addr %s329, 3
        %s331 = smul.addr %s330, 4
        %s332 = scalar_lea.vmem %s3, %s331
        %p333 = pneg %p121
        %p334 = pneg %p118
        %p335 = pneg %p142
        %p336 = pneg %p139
        %p337 = pneg %p163
        %p338 = pneg %p160
        %p339 = pneg %p184
        %p340 = pneg %p181
        %p341 = pneg %p205
        %p342 = pneg %p202
        %p343 = pneg %p231
        %p344 = pneg %p228
        %s345 = sand.u32 %s218, 1
        %s346 = scalar_lea.sflag [#allocation3], %s345
        %s347 = sand.u32 %s218, 1
        %s348 = smul.addr %s347, 96
        %s349 = scalar_lea.vmem [#allocation2], %s348
        %s350 = smul.u32 4, %s22
        %p351 = scmp.lt.s32.totalorder %s350, 15
        %s352 = scalar_select %p351, %s350, 15
        %s353 = smul.addr %s352, 4
        %s354 = scalar_lea.vmem %s0, %s353
        %s355 = smul.u32 4, %s22
        %s356 = smul.u32 4, %s22
        %p357 = scmp.lt.s32.totalorder %s356, 15
        %s358 = scalar_select %p357, %s356, 15
        %s359 = smul.addr %s358, 4
        %s360 = scalar_lea.vmem %s1, %s359
        %s361 = smul.u32 4, %s22
        %s362 = smul.u32 4, %s22
        %p363 = scmp.lt.s32.totalorder %s362, 15
        %s364 = scalar_select %p363, %s362, 15
        %s365 = smul.addr %s364, 4
        %s366 = scalar_lea.vmem %s2, %s365
        %s367 = smul.u32 4, %s22
        %s368 = smul.u32 4, %s22
        %p369 = scmp.lt.s32.totalorder %s368, 15
        %s370 = scalar_select %p369, %s368, 15
        %s371 = smul.addr %s370, 3
        %s372 = smul.addr %s371, 4
        %s373 = scalar_lea.vmem %s3, %s372
        %s374 = smul.u32 4, %s22
        %s375 = smul.u32 4, %s22
        %v377 = vld [vmem:[%s354] sm:$0xf]
        %v378 = vld [vmem:[%s354 + $0x4] sm:$0xf]
        %v379 = vld [vmem:[%s354 + $0x8] sm:$0xf]
        %v380 = vld [vmem:[%s354 + $0xc] sm:$0xf]
        %v381 = vld [vmem:[%s4] sm:$0xff]
        %v382 = vld [vmem:[%s4 + $0x8] sm:$0xf]
        %v383 = vld [vmem:[%s4 + $0xc] sm:$0xff]
        %v384 = vld [vmem:[%s4 + $0x14] sm:$0xf]
        %v385 = vld [vmem:[%s4 + $0x18] sm:$0xff]
        %v386 = vld [vmem:[%s4 + $0x20] sm:$0xf]
        %v387 = vld [vmem:[%s4 + $0x24] sm:$0xff]
        %v388 = vld [vmem:[%s4 + $0x2c] sm:$0xf]
        %v389 = vld [vmem:[%s4 + $0x30] sm:$0xff]
        %v390 = vld [vmem:[%s4 + $0x38] sm:$0xf]
        %v391 = vld [vmem:[%s4 + $0x3c] sm:$0xff]
        %v392 = vld [vmem:[%s4 + $0x44] sm:$0xf]
        %v393 = vld [vmem:[%s4 + $0x48] sm:$0xff]
        %v394 = vld [vmem:[%s4 + $0x50] sm:$0xf]
        %v395 = vld [vmem:[%s4 + $0x54] sm:$0xff]
        %v396 = vld [vmem:[%s4 + $0x5c] sm:$0xf]
        %v397 = vld [vmem:[%s4 + $0x60] sm:$0xff]
        %v398 = vld [vmem:[%s4 + $0x68] sm:$0xf]
        %v399 = vld [vmem:[%s4 + $0x6c] sm:$0xff]
        %v400 = vld [vmem:[%s4 + $0x74] sm:$0xf]
        %v401 = vld [vmem:[%s4 + $0x78] sm:$0xff]
        %v402 = vld [vmem:[%s4 + $0x80] sm:$0xf]
        %v403 = vld [vmem:[%s4 + $0x84] sm:$0xff]
        %v404 = vld [vmem:[%s4 + $0x8c] sm:$0xf]
        %v405 = vld [vmem:[%s4 + $0x90] sm:$0xff]
        %v406 = vld [vmem:[%s4 + $0x98] sm:$0xf]
        %v407 = vld [vmem:[%s4 + $0x9c] sm:$0xff]
        %v408 = vld [vmem:[%s4 + $0xa4] sm:$0xf]
        %v409 = vld [vmem:[%s4 + $0xa8] sm:$0xff]
        %v410 = vld [vmem:[%s4 + $0xb0] sm:$0xf]
        %v411 = vld [vmem:[%s4 + $0xb4] sm:$0xff]
        %v412 = vld [vmem:[%s4 + $0xbc] sm:$0xf]
        %v413 = vld [vmem:[%s360] sm:$0xf]
        %v414 = vld [vmem:[%s360 + $0x4] sm:$0xf]
        %v415 = vld [vmem:[%s360 + $0x8] sm:$0xf]
        %v416 = vld [vmem:[%s360 + $0xc] sm:$0xf]
        %v417 = vld [vmem:[%s5] sm:$0xff]
        %v418 = vld [vmem:[%s5 + $0x8] sm:$0xf]
        %v419 = vld [vmem:[%s5 + $0xc] sm:$0xff]
        %v420 = vld [vmem:[%s5 + $0x14] sm:$0xf]
        %v421 = vld [vmem:[%s5 + $0x18] sm:$0xff]
        %v422 = vld [vmem:[%s5 + $0x20] sm:$0xf]
        %v423 = vld [vmem:[%s5 + $0x24] sm:$0xff]
        %v424 = vld [vmem:[%s5 + $0x2c] sm:$0xf]
        %v429 = vunpack.c.l.b16 %v413
        %v430 = vunpack.c.l.b16 %v414
        %v431 = vunpack.c.l.b16 %v415
        %v432 = vunpack.c.l.b16 %v416
        %v433 = vpack.c.b16 %v430, %v429
        %v434 = vpack.c.b16 %v432, %v431
        %v443 = vunpack.c.l.b16 %v417
        %v444 = vunpack.c.h.b16 %v417
        %v445 = vunpack.c.l.b16 %v418
        %v446 = vunpack.c.l.b16 %v419
        %v447 = vunpack.c.h.b16 %v419
        %v448 = vunpack.c.l.b16 %v420
        %v449 = vunpack.c.l.b16 %v421
        %v450 = vunpack.c.h.b16 %v421
        %v451 = vunpack.c.l.b16 %v422
        %v452 = vunpack.c.l.b16 %v423
        %v453 = vunpack.c.h.b16 %v423
        %v454 = vunpack.c.l.b16 %v424
        %v455 = vpack.c.b16 %v446, %v443
        %v456 = vpack.c.b16 %v447, %v444
        %v457 = vpack.c.b16 %v448, %v445
        %v458 = vpack.c.b16 %v452, %v449
        %v459 = vpack.c.b16 %v453, %v450
        %v460 = vpack.c.b16 %v454, %v451
        %vm467 = vcmask 261120
        %v469 = vsel %vm467, %v433, 0
        %v472 = vsel %vm467, %v434, 0
        %474 = vmatpush.bf16.msra.mxu0 0
        %475 = vmatpush.bf16.msra.mxu0 0
        %476 = vmatpush.bf16.msra.mxu0 0
        %477 = vmatpush.bf16.msra.mxu0 0
        %478 = vmatpush.bf16.msra.mxu0 0
        %479 = vmatpush.bf16.msra.mxu0 0
        %480 = vmatpush.bf16.msra.mxu0 %v458
        %481 = vmatpush.bf16.msra.mxu0 %v455
        %482 = vmatmul.bf16.gmra.mxu0 %v469
        %v483 = vpop.f32.mrf.mxu0
        %v484 = vadd.f32 0.0, %v483
        %v485 = vpop.f32.mrf.mxu0
        %v486 = vadd.f32 0.0, %v485
        %487 = vmatmul.bf16.gmra.mxu0 %v472
        %v488 = vpop.f32.mrf.mxu0
        %v489 = vadd.f32 0.0, %v488
        %v490 = vpop.f32.mrf.mxu0
        %v491 = vadd.f32 0.0, %v490
        %492 = vdwg.mxu0
        %493 = vmatpush.bf16.msra.mxu0 0
        %494 = vmatpush.bf16.msra.mxu0 0
        %495 = vmatpush.bf16.msra.mxu0 0
        %496 = vmatpush.bf16.msra.mxu0 0
        %497 = vmatpush.bf16.msra.mxu0 0
        %498 = vmatpush.bf16.msra.mxu0 0
        %499 = vmatpush.bf16.msra.mxu0 %v459
        %500 = vmatpush.bf16.msra.mxu0 %v456
        %501 = vmatmul.bf16.gmra.mxu0 %v469
        %v502 = vpop.f32.mrf.mxu0
        %v503 = vadd.f32 0.0, %v502
        %v504 = vpop.f32.mrf.mxu0
        %v505 = vadd.f32 0.0, %v504
        %506 = vmatmul.bf16.gmra.mxu0 %v472
        %v507 = vpop.f32.mrf.mxu0
        %v508 = vadd.f32 0.0, %v507
        %v509 = vpop.f32.mrf.mxu0
        %v510 = vadd.f32 0.0, %v509
        %511 = vdwg.mxu0
        %512 = vmatpush.bf16.msra.mxu0 0
        %513 = vmatpush.bf16.msra.mxu0 0
        %514 = vmatpush.bf16.msra.mxu0 0
        %515 = vmatpush.bf16.msra.mxu0 0
        %516 = vmatpush.bf16.msra.mxu0 0
        %517 = vmatpush.bf16.msra.mxu0 0
        %518 = vmatpush.bf16.msra.mxu0 %v460
        %519 = vmatpush.bf16.msra.mxu0 %v457
        %520 = vmatmul.bf16.gmra.mxu0 %v469
        %v521 = vpop.f32.mrf.mxu0
        %v522 = vadd.f32 0.0, %v521
        %v523 = vpop.f32.mrf.mxu0
        %v524 = vadd.f32 0.0, %v523
        %525 = vmatmul.bf16.gmra.mxu0 %v472
        %v526 = vpop.f32.mrf.mxu0
        %v527 = vadd.f32 0.0, %v526
        %v528 = vpop.f32.mrf.mxu0
        %v529 = vadd.f32 0.0, %v528
        %530 = vdwg.mxu0
        %v535 = vunpack.c.l.b16 %v377
        %v536 = vunpack.c.l.b16 %v378
        %v537 = vunpack.c.l.b16 %v379
        %v538 = vunpack.c.l.b16 %v380
        %v539 = vpack.c.b16 %v536, %v535
        %v540 = vpack.c.b16 %v538, %v537
        %v575 = vunpack.c.l.b16 %v381
        %v576 = vunpack.c.h.b16 %v381
        %v577 = vunpack.c.l.b16 %v382
        %v578 = vunpack.c.l.b16 %v383
        %v579 = vunpack.c.h.b16 %v383
        %v580 = vunpack.c.l.b16 %v384
        %v581 = vunpack.c.l.b16 %v385
        %v582 = vunpack.c.h.b16 %v385
        %v583 = vunpack.c.l.b16 %v386
        %v584 = vunpack.c.l.b16 %v387
        %v585 = vunpack.c.h.b16 %v387
        %v586 = vunpack.c.l.b16 %v388
        %v587 = vunpack.c.l.b16 %v389
        %v588 = vunpack.c.h.b16 %v389
        %v589 = vunpack.c.l.b16 %v390
        %v590 = vunpack.c.l.b16 %v391
        %v591 = vunpack.c.h.b16 %v391
        %v592 = vunpack.c.l.b16 %v392
        %v593 = vunpack.c.l.b16 %v393
        %v594 = vunpack.c.h.b16 %v393
        %v595 = vunpack.c.l.b16 %v394
        %v596 = vunpack.c.l.b16 %v395
        %v597 = vunpack.c.h.b16 %v395
        %v598 = vunpack.c.l.b16 %v396
        %v599 = vunpack.c.l.b16 %v397
        %v600 = vunpack.c.h.b16 %v397
        %v601 = vunpack.c.l.b16 %v398
        %v602 = vunpack.c.l.b16 %v399
        %v603 = vunpack.c.h.b16 %v399
        %v604 = vunpack.c.l.b16 %v400
        %v605 = vunpack.c.l.b16 %v401
        %v606 = vunpack.c.h.b16 %v401
        %v607 = vunpack.c.l.b16 %v402
        %v608 = vunpack.c.l.b16 %v403
        %v609 = vunpack.c.h.b16 %v403
        %v610 = vunpack.c.l.b16 %v404
        %v611 = vunpack.c.l.b16 %v405
        %v612 = vunpack.c.h.b16 %v405
        %v613 = vunpack.c.l.b16 %v406
        %v614 = vunpack.c.l.b16 %v407
        %v615 = vunpack.c.h.b16 %v407
        %v616 = vunpack.c.l.b16 %v408
        %v617 = vunpack.c.l.b16 %v409
        %v618 = vunpack.c.h.b16 %v409
        %v619 = vunpack.c.l.b16 %v410
        %v620 = vunpack.c.l.b16 %v411
        %v621 = vunpack.c.h.b16 %v411
        %v622 = vunpack.c.l.b16 %v412
        %v623 = vpack.c.b16 %v578, %v575
        %v624 = vpack.c.b16 %v579, %v576
        %v625 = vpack.c.b16 %v580, %v577
        %v626 = vpack.c.b16 %v584, %v581
        %v627 = vpack.c.b16 %v585, %v582
        %v628 = vpack.c.b16 %v586, %v583
        %v629 = vpack.c.b16 %v590, %v587
        %v630 = vpack.c.b16 %v591, %v588
        %v631 = vpack.c.b16 %v592, %v589
        %v632 = vpack.c.b16 %v596, %v593
        %v633 = vpack.c.b16 %v597, %v594
        %v634 = vpack.c.b16 %v598, %v595
        %v635 = vpack.c.b16 %v602, %v599
        %v636 = vpack.c.b16 %v603, %v600
        %v637 = vpack.c.b16 %v604, %v601
        %v638 = vpack.c.b16 %v608, %v605
        %v639 = vpack.c.b16 %v609, %v606
        %v640 = vpack.c.b16 %v610, %v607
        %v641 = vpack.c.b16 %v614, %v611
        %v642 = vpack.c.b16 %v615, %v612
        %v643 = vpack.c.b16 %v616, %v613
        %v644 = vpack.c.b16 %v620, %v617
        %v645 = vpack.c.b16 %v621, %v618
        %v646 = vpack.c.b16 %v622, %v619
        %671 = vmatpush.bf16.msra.mxu0 %v644
        %672 = vmatpush.bf16.msra.mxu0 %v641
        %673 = vmatpush.bf16.msra.mxu0 %v638
        %674 = vmatpush.bf16.msra.mxu0 %v635
        %675 = vmatpush.bf16.msra.mxu0 %v632
        %676 = vmatpush.bf16.msra.mxu0 %v629
        %677 = vmatpush.bf16.msra.mxu0 %v626
        %678 = vmatpush.bf16.msra.mxu0 %v623
        %679 = vmatmul.bf16.gmra.mxu0 %v539
        %v680 = vpop.f32.mrf.mxu0
        %v681 = vadd.f32 %v484, %v680
        %v682 = vpop.f32.mrf.mxu0
        %v683 = vadd.f32 %v486, %v682
        %684 = vmatmul.bf16.gmra.mxu0 %v540
        %v685 = vpop.f32.mrf.mxu0
        %v686 = vadd.f32 %v489, %v685
        %v687 = vpop.f32.mrf.mxu0
        %v688 = vadd.f32 %v491, %v687
        %689 = vdwg.mxu0
        %690 = vmatpush.bf16.msra.mxu0 %v645
        %691 = vmatpush.bf16.msra.mxu0 %v642
        %692 = vmatpush.bf16.msra.mxu0 %v639
        %693 = vmatpush.bf16.msra.mxu0 %v636
        %694 = vmatpush.bf16.msra.mxu0 %v633
        %695 = vmatpush.bf16.msra.mxu0 %v630
        %696 = vmatpush.bf16.msra.mxu0 %v627
        %697 = vmatpush.bf16.msra.mxu0 %v624
        %698 = vmatmul.bf16.gmra.mxu0 %v539
        %v699 = vpop.f32.mrf.mxu0
        %v700 = vadd.f32 %v503, %v699
        %v701 = vpop.f32.mrf.mxu0
        %v702 = vadd.f32 %v505, %v701
        %703 = vmatmul.bf16.gmra.mxu0 %v540
        %v704 = vpop.f32.mrf.mxu0
        %v705 = vadd.f32 %v508, %v704
        %v706 = vpop.f32.mrf.mxu0
        %v707 = vadd.f32 %v510, %v706
        %708 = vdwg.mxu0
        %709 = vmatpush.bf16.msra.mxu0 %v646
        %710 = vmatpush.bf16.msra.mxu0 %v643
        %711 = vmatpush.bf16.msra.mxu0 %v640
        %712 = vmatpush.bf16.msra.mxu0 %v637
        %713 = vmatpush.bf16.msra.mxu0 %v634
        %714 = vmatpush.bf16.msra.mxu0 %v631
        %715 = vmatpush.bf16.msra.mxu0 %v628
        %716 = vmatpush.bf16.msra.mxu0 %v625
        %717 = vmatmul.bf16.gmra.mxu0 %v539
        %v718 = vpop.f32.mrf.mxu0
        %v719 = vadd.f32 %v522, %v718
        %v720 = vpop.f32.mrf.mxu0
        %v721 = vadd.f32 %v524, %v720
        %722 = vmatmul.bf16.gmra.mxu0 %v540
        %v723 = vpop.f32.mrf.mxu0
        %v724 = vadd.f32 %v527, %v723
        %v725 = vpop.f32.mrf.mxu0
        %v726 = vadd.f32 %v529, %v725
        %727 = vdwg.mxu0
        %v728 = vld [vmem:[%s366] sm:$0xf]
        %v729 = vld [vmem:[%s366 + $0x4] sm:$0xf]
        %v730 = vld [vmem:[%s366 + $0x8] sm:$0xf]
        %v731 = vld [vmem:[%s366 + $0xc] sm:$0xf]
        %v732 = vld [vmem:[%s6] sm:$0xff]
        %v733 = vld [vmem:[%s6 + $0x8] sm:$0xf]
        %v734 = vld [vmem:[%s6 + $0xc] sm:$0xff]
        %v735 = vld [vmem:[%s6 + $0x14] sm:$0xf]
        %v736 = vld [vmem:[%s6 + $0x18] sm:$0xff]
        %v737 = vld [vmem:[%s6 + $0x20] sm:$0xf]
        %v738 = vld [vmem:[%s6 + $0x24] sm:$0xff]
        %v739 = vld [vmem:[%s6 + $0x2c] sm:$0xf]
        %v740 = vld [vmem:[%s6 + $0x30] sm:$0xff]
        %v741 = vld [vmem:[%s6 + $0x38] sm:$0xf]
        %v742 = vld [vmem:[%s6 + $0x3c] sm:$0xff]
        %v743 = vld [vmem:[%s6 + $0x44] sm:$0xf]
        %v744 = vld [vmem:[%s6 + $0x48] sm:$0xff]
        %v745 = vld [vmem:[%s6 + $0x50] sm:$0xf]
        %v746 = vld [vmem:[%s6 + $0x54] sm:$0xff]
        %v747 = vld [vmem:[%s6 + $0x5c] sm:$0xf]
        %v752 = vunpack.c.l.b16 %v728
        %v753 = vunpack.c.l.b16 %v729
        %v754 = vunpack.c.l.b16 %v730
        %v755 = vunpack.c.l.b16 %v731
        %v756 = vpack.c.b16 %v753, %v752
        %v757 = vpack.c.b16 %v755, %v754
        %v774 = vunpack.c.l.b16 %v732
        %v775 = vunpack.c.h.b16 %v732
        %v776 = vunpack.c.l.b16 %v733
        %v777 = vunpack.c.l.b16 %v734
        %v778 = vunpack.c.h.b16 %v734
        %v779 = vunpack.c.l.b16 %v735
        %v780 = vunpack.c.l.b16 %v736
        %v781 = vunpack.c.h.b16 %v736
        %v782 = vunpack.c.l.b16 %v737
        %v783 = vunpack.c.l.b16 %v738
        %v784 = vunpack.c.h.b16 %v738
        %v785 = vunpack.c.l.b16 %v739
        %v786 = vunpack.c.l.b16 %v740
        %v787 = vunpack.c.h.b16 %v740
        %v788 = vunpack.c.l.b16 %v741
        %v789 = vunpack.c.l.b16 %v742
        %v790 = vunpack.c.h.b16 %v742
        %v791 = vunpack.c.l.b16 %v743
        %v792 = vunpack.c.l.b16 %v744
        %v793 = vunpack.c.h.b16 %v744
        %v794 = vunpack.c.l.b16 %v745
        %v795 = vunpack.c.l.b16 %v746
        %v796 = vunpack.c.h.b16 %v746
        %v797 = vunpack.c.l.b16 %v747
        %v798 = vpack.c.b16 %v777, %v774
        %v799 = vpack.c.b16 %v778, %v775
        %v800 = vpack.c.b16 %v779, %v776
        %v801 = vpack.c.b16 %v783, %v780
        %v802 = vpack.c.b16 %v784, %v781
        %v803 = vpack.c.b16 %v785, %v782
        %v804 = vpack.c.b16 %v789, %v786
        %v805 = vpack.c.b16 %v790, %v787
        %v806 = vpack.c.b16 %v791, %v788
        %v807 = vpack.c.b16 %v795, %v792
        %v808 = vpack.c.b16 %v796, %v793
        %v809 = vpack.c.b16 %v797, %v794
        %vm822 = vcmask 523264
        %v824 = vsel %vm822, %v756, 0
        %v827 = vsel %vm822, %v757, 0
        %829 = vmatpush.bf16.msra.mxu0 0
        %830 = vmatpush.bf16.msra.mxu0 0
        %831 = vmatpush.bf16.msra.mxu0 0
        %832 = vmatpush.bf16.msra.mxu0 0
        %833 = vmatpush.bf16.msra.mxu0 %v807
        %834 = vmatpush.bf16.msra.mxu0 %v804
        %835 = vmatpush.bf16.msra.mxu0 %v801
        %836 = vmatpush.bf16.msra.mxu0 %v798
        %837 = vmatmul.bf16.gmra.mxu0 %v824
        %v838 = vpop.f32.mrf.mxu0
        %v839 = vadd.f32 0.0, %v838
        %v840 = vpop.f32.mrf.mxu0
        %v841 = vadd.f32 0.0, %v840
        %842 = vmatmul.bf16.gmra.mxu0 %v827
        %v843 = vpop.f32.mrf.mxu0
        %v844 = vadd.f32 0.0, %v843
        %v845 = vpop.f32.mrf.mxu0
        %v846 = vadd.f32 0.0, %v845
        %847 = vdwg.mxu0
        %848 = vmatpush.bf16.msra.mxu0 0
        %849 = vmatpush.bf16.msra.mxu0 0
        %850 = vmatpush.bf16.msra.mxu0 0
        %851 = vmatpush.bf16.msra.mxu0 0
        %852 = vmatpush.bf16.msra.mxu0 %v808
        %853 = vmatpush.bf16.msra.mxu0 %v805
        %854 = vmatpush.bf16.msra.mxu0 %v802
        %855 = vmatpush.bf16.msra.mxu0 %v799
        %856 = vmatmul.bf16.gmra.mxu0 %v824
        %v857 = vpop.f32.mrf.mxu0
        %v858 = vadd.f32 0.0, %v857
        %v859 = vpop.f32.mrf.mxu0
        %v860 = vadd.f32 0.0, %v859
        %861 = vmatmul.bf16.gmra.mxu0 %v827
        %v862 = vpop.f32.mrf.mxu0
        %v863 = vadd.f32 0.0, %v862
        %v864 = vpop.f32.mrf.mxu0
        %v865 = vadd.f32 0.0, %v864
        %866 = vdwg.mxu0
        %867 = vmatpush.bf16.msra.mxu0 0
        %868 = vmatpush.bf16.msra.mxu0 0
        %869 = vmatpush.bf16.msra.mxu0 0
        %870 = vmatpush.bf16.msra.mxu0 0
        %871 = vmatpush.bf16.msra.mxu0 %v809
        %872 = vmatpush.bf16.msra.mxu0 %v806
        %873 = vmatpush.bf16.msra.mxu0 %v803
        %874 = vmatpush.bf16.msra.mxu0 %v800
        %875 = vmatmul.bf16.gmra.mxu0 %v824
        %v876 = vpop.f32.mrf.mxu0
        %v877 = vadd.f32 0.0, %v876
        %v878 = vpop.f32.mrf.mxu0
        %v879 = vadd.f32 0.0, %v878
        %880 = vmatmul.bf16.gmra.mxu0 %v827
        %v881 = vpop.f32.mrf.mxu0
        %v882 = vadd.f32 0.0, %v881
        %v883 = vpop.f32.mrf.mxu0
        %v884 = vadd.f32 0.0, %v883
        %885 = vdwg.mxu0
        %v886 = vadd.f32 %v681, %v839
        %v887 = vadd.f32 %v700, %v858
        %v888 = vadd.f32 %v719, %v877
        %v889 = vadd.f32 %v683, %v841
        %v890 = vadd.f32 %v702, %v860
        %v891 = vadd.f32 %v721, %v879
        %v892 = vadd.f32 %v686, %v844
        %v893 = vadd.f32 %v705, %v863
        %v894 = vadd.f32 %v724, %v882
        %v895 = vadd.f32 %v688, %v846
        %v896 = vadd.f32 %v707, %v865
        %v897 = vadd.f32 %v726, %v884
        %v898 = vld [vmem:[%s7] sm:$0x7]
        %v900 = vperm.slane %v898, 0
        %v901 = vperm.slane %v898, 1
        %v902 = vperm.slane %v898, 2
        %v906 = vadd.f32 %v886, %v900
        %v907 = vadd.f32 %v887, %v901
        %v908 = vadd.f32 %v888, %v902
        %v909 = vadd.f32 %v889, %v900
        %v910 = vadd.f32 %v890, %v901
        %v911 = vadd.f32 %v891, %v902
        %v912 = vadd.f32 %v892, %v900
        %v913 = vadd.f32 %v893, %v901
        %v914 = vadd.f32 %v894, %v902
        %v915 = vadd.f32 %v895, %v900
        %v916 = vadd.f32 %v896, %v901
        %v917 = vadd.f32 %v897, %v902
        %v918 = vmul.f32 %v906, 0.17
        %v919 = vmul.f32 %v907, 0.17
        %v920 = vmul.f32 %v908, 0.17
        %v921 = vmul.f32 %v909, 0.17
        %v922 = vmul.f32 %v910, 0.17
        %v923 = vmul.f32 %v911, 0.17
        %v924 = vmul.f32 %v912, 0.17
        %v925 = vmul.f32 %v913, 0.17
        %v926 = vmul.f32 %v914, 0.17
        %v927 = vmul.f32 %v915, 0.17
        %v928 = vmul.f32 %v916, 0.17
        %v929 = vmul.f32 %v917, 0.17
        %v930 = vld [vmem:[%s373] sm:$0xff]
        %v931 = vld [vmem:[%s373 + $0x8] sm:$0xf]
        %v932 = vld [vmem:[%s373 + $0xc] sm:$0xff]
        %v933 = vld [vmem:[%s373 + $0x14] sm:$0xf]
        %v934 = vld [vmem:[%s373 + $0x18] sm:$0xff]
        %v935 = vld [vmem:[%s373 + $0x20] sm:$0xf]
        %v936 = vld [vmem:[%s373 + $0x24] sm:$0xff]
        %v937 = vld [vmem:[%s373 + $0x2c] sm:$0xf]
        %v938 = vunpack.c.l.bf16 %v930
        %v939 = vunpack.c.h.bf16 %v930
        %v940 = vunpack.c.l.bf16 %v931
        %v941 = vunpack.c.l.bf16 %v932
        %v942 = vunpack.c.h.bf16 %v932
        %v943 = vunpack.c.l.bf16 %v933
        %v944 = vunpack.c.l.bf16 %v934
        %v945 = vunpack.c.h.bf16 %v934
        %v946 = vunpack.c.l.bf16 %v935
        %v947 = vunpack.c.l.bf16 %v936
        %v948 = vunpack.c.h.bf16 %v936
        %v949 = vunpack.c.l.bf16 %v937
        %v950 = vadd.f32 %v918, %v938
        %v951 = vadd.f32 %v919, %v939
        %v952 = vadd.f32 %v920, %v940
        %v953 = vadd.f32 %v921, %v941
        %v954 = vadd.f32 %v922, %v942
        %v955 = vadd.f32 %v923, %v943
        %v956 = vadd.f32 %v924, %v944
        %v957 = vadd.f32 %v925, %v945
        %v958 = vadd.f32 %v926, %v946
        %v959 = vadd.f32 %v927, %v947
        %v960 = vadd.f32 %v928, %v948
        %v961 = vadd.f32 %v929, %v949
        %v962 = vmax.f32 %v950, 0.0
        %v963 = vmax.f32 %v951, 0.0
        %v964 = vmax.f32 %v952, 0.0
        %v965 = vmax.f32 %v953, 0.0
        %v966 = vmax.f32 %v954, 0.0
        %v967 = vmax.f32 %v955, 0.0
        %v968 = vmax.f32 %v956, 0.0
        %v969 = vmax.f32 %v957, 0.0
        %v970 = vmax.f32 %v958, 0.0
        %v971 = vmax.f32 %v959, 0.0
        %v972 = vmax.f32 %v960, 0.0
        %v973 = vmax.f32 %v961, 0.0
        %974 = vst [vmem:[%s349] sm:$0xff] %v962
        %975 = vst [vmem:[%s349 + $0x8] sm:$0xff] %v963
        %976 = vst.msk [vmem:[%s349 + $0x10] sm:$0xff] %vm822, %v964
        %977 = vst [vmem:[%s349 + $0x18] sm:$0xff] %v965
        %978 = vst [vmem:[%s349 + $0x20] sm:$0xff] %v966
        %979 = vst.msk [vmem:[%s349 + $0x28] sm:$0xff] %vm822, %v967
        %980 = vst [vmem:[%s349 + $0x30] sm:$0xff] %v968
        %981 = vst [vmem:[%s349 + $0x38] sm:$0xff] %v969
        %982 = vst.msk [vmem:[%s349 + $0x40] sm:$0xff] %vm822, %v970
        %983 = vst [vmem:[%s349 + $0x48] sm:$0xff] %v971
        %984 = vst [vmem:[%s349 + $0x50] sm:$0xff] %v972
        %985 = vst.msk [vmem:[%s349 + $0x58] sm:$0xff] %vm822, %v973
        %s986 = sand.u32 %s218, 1
        %s987 = scalar_lea.sflag [#allocation3], %s986
        %s988 = sand.u32 %s218, 1
        %s989 = smul.addr %s988, 96
        %s990 = scalar_lea.vmem [#allocation2], %s989
        // Predicated region
        $region53: #{block35_forward.9} parent=51 // pred_check
          %p991 = pneg %p228
        $region54: #{block35_forward.9} parent=51 // pred_check_branch
          %993 = sbr.rel (%p991) target = $region56
        $region55: #{block35_forward.9} parent=51 // pred_region
          %s994 = smul.u32 4, %s22
          %996 = vsyncadd %s987, 0
          %s997 = smul.addr %s994, 3
          %s998 = smul.addr %s997, 8
          %s999 = scalar_lea.hbm %s8, %s998
          %s1000 = sshll.u32 %s990, 4
          %s1001 = int_to_ptr.vmem [resolvable:$true] %s1000
          %s1002 = sshll.u32 %s999, 4
          %s1003 = int_to_ptr.hbm [resolvable:$true] %s1002
          %1008 = dma.vmem_to_hbm [thread:$0]  %s1001, 1536, %s1003, %s987, 384, 384, 24
        $region56: #{block35_forward.9} parent=51 // pred_fallthru
          _
      $region52: #{block35_forward.9} parent=5 // pred_fallthru
        _
      %p1009 = scmp.le.s32.totalorder 2, %s17
      // Predicated region
      $region57: #{block35_forward.9} parent=5 // pred_check
        %p1010 = pneg %p1009
      $region58: #{block35_forward.9} parent=5 // pred_check_branch
        %1012 = sbr.rel (%p1010) target = $region60
      $region59: #{block35_forward.9} parent=5 // pred_region
        %s1013 = ssub.s32 %s17, 2
        // Predicated region
        $region61: #{block35_forward.9} parent=59 // pred_check
          %p1014 = pneg %p234
        $region62: #{block35_forward.9} parent=59 // pred_check_branch
          %1016 = sbr.rel (%p1014) target = $region64
        $region63: #{block35_forward.9} parent=59 // pred_region
          %s1017 = sand.u32 %s219, 1
          %s1018 = scalar_lea.sflag [#allocation3], %s1017
          %s1019 = sand.u32 %s219, 1
          %s1020 = smul.addr %s1019, 96
          %s1021 = scalar_lea.vmem [#allocation2], %s1020
          %1023 = dma.done %s1018, 1536
        $region64: #{block35_forward.9} parent=59 // pred_fallthru
          _
      $region60: #{block35_forward.9} parent=5 // pred_fallthru
        _
    $region6: #{block35_forward.9} parent=1 // loop_footer
      %s21 = sadd.s32 1, %s17
    $region7: #{block35_forward.9} parent=1 // loop_footer_branch
      %16 = sbr.rel target = $region3
    $region8: #{block35_forward.9} parent=1 // loop_exit
      _
    %1024 = vsyncpa [#allocation3], 1
    %s1025 = scalar_lea.sflag [#allocation3], 1
    %1026 = vsyncpa %s1025, 1

</llo_original>
